<compile_context>
chip_gen: v7x
topology: tpu7x:2x2x1
jax: 0.10.0
libtpu: 0.0.40
codegen_flags: <defaults>
</compile_context>

<pallas_src>
import math
import functools

import jax
import jax.numpy as jnp
from jax.experimental import pallas as pl
from jax.experimental.pallas import tpu as pltpu

EPS = 1e-6


def _layernorm(x, alpha, bias):
    # torch: x.mean(-1), x.std(-1) (unbiased / N-1), eps added to std.
    mean = jnp.mean(x, axis=-1, keepdims=True)
    var = jnp.sum((x - mean) ** 2, axis=-1, keepdims=True) / (x.shape[-1] - 1)
    std = jnp.sqrt(var)
    return alpha * (x - mean) / (std + EPS) + bias


def encoder_block_kernel(x_ref, bias_ref,
                         ln1_a_ref, ln1_b_ref,
                         wqkv_ref, wo_ref,
                         ln2_a_ref, ln2_b_ref,
                         w1_ref, b1_ref, w2_ref, b2_ref,
                         o_ref, *, num_heads, compute_dtype):
    x = x_ref[0]                      # (S, D) f32
    mask_bias = bias_ref[0]           # (1, S) f32 additive bias (0 / -1e9)
    S, D = x.shape
    H = num_heads
    dk = D // H
    scale = 1.0 / math.sqrt(dk)

    # MXU operand cast for activations (weights are already in compute_dtype).
    cast = lambda a: a.astype(compute_dtype)

    # ---- residual connection 0:  x + SelfAttention(LN1(x)) ----
    y = _layernorm(x, ln1_a_ref[0], ln1_b_ref[0])                       # (S, D)
    # Fused QKV: one (S, D) x (D, 3D) MXU pass.
    qkv = jnp.dot(cast(y), wqkv_ref[...],
                  preferred_element_type=jnp.float32)                   # (S, 3D)

    def to_heads(t):                  # (S, D) -> (H, S, dk), minor dim stays dk
        return jnp.transpose(t.reshape(S, H, dk), (1, 0, 2))

    q = to_heads(qkv[:, 0:D])
    k = to_heads(qkv[:, D:2 * D])
    v = to_heads(qkv[:, 2 * D:3 * D])

    # Heads-batched attention (H is a leading batch dim).
    scores = jnp.einsum('hqd,hkd->hqk', cast(q), cast(k),
                        preferred_element_type=jnp.float32) * scale     # (H,S,S)
    scores = scores + mask_bias[None, :, :]
    m = jnp.max(scores, axis=-1, keepdims=True)
    e = jnp.exp(scores - m)
    # Normalize with an EUP approximate reciprocal (frees VALU slots).
    p = e * pl.reciprocal(jnp.sum(e, axis=-1, keepdims=True), approx=True)
    ctx = jnp.einsum('hqk,hkd->hqd', cast(p), cast(v),
                     preferred_element_type=jnp.float32)                # (H,S,dk)
    attn = jnp.transpose(ctx, (1, 0, 2)).reshape(S, D)                  # (S, D)
    attn = jnp.dot(cast(attn), wo_ref[...],
                   preferred_element_type=jnp.float32)
    x1 = x + attn                     # dropout == identity (inference)

    # ---- residual connection 1:  x1 + FeedForward(LN2(x1)) ----
    y2 = _layernorm(x1, ln2_a_ref[0], ln2_b_ref[0])
    h1 = jnp.dot(cast(y2), w1_ref[...],
                 preferred_element_type=jnp.float32) + b1_ref[0]
    h1 = jnp.maximum(h1, 0.0)         # ReLU
    ff = jnp.dot(cast(h1), w2_ref[...],
                 preferred_element_type=jnp.float32) + b2_ref[0]

    o_ref[0] = x1 + ff


def encoder_block(x, src_mask, params, *, num_heads,
                  compute_dtype=jnp.float32):
    B, S, D = x.shape
    F = params["w1"].shape[1]

    # Fuse the three projection weights once (one wide MXU matmul in-kernel)
    # and pre-cast all matmul weights to the MXU operand dtype (halves weight
    # DMA on the bf16 path; a no-op for f32).
    wqkv = jnp.concatenate(
        [params["wq"], params["wk"], params["wv"]], axis=1
    ).astype(compute_dtype)                                            # (D, 3D)
    wo = params["wo"].astype(compute_dtype)
    w1 = params["w1"].astype(compute_dtype)
    w2 = params["w2"].astype(compute_dtype)

    # Additive mask bias computed once outside the kernel (tiny (B, 1, S) op).
    mask_bias = jnp.where(src_mask == 0, -1e9, 0.0).astype(jnp.float32)

    per_batch = lambda shape: pl.BlockSpec(shape, lambda b: (b,) + (0,) * (len(shape) - 1))
    shared = lambda shape: pl.BlockSpec(shape, lambda b: (0,) * len(shape))

    in_specs = [
        per_batch((1, S, D)),        # x
        per_batch((1, 1, S)),        # additive mask bias
        shared((1, D)), shared((1, D)),          # ln1 alpha, bias
        shared((D, 3 * D)),                      # fused Wqkv
        shared((D, D)),                          # Wo
        shared((1, D)), shared((1, D)),          # ln2 alpha, bias
        shared((D, F)), shared((1, F)),          # W1, b1
        shared((F, D)), shared((1, D)),          # W2, b2
    ]

    kernel = functools.partial(encoder_block_kernel,
                               num_heads=num_heads,
                               compute_dtype=compute_dtype)
    return pl.pallas_call(
        kernel,
        out_shape=jax.ShapeDtypeStruct((B, S, D), jnp.float32),
        grid_spec=pltpu.PrefetchScalarGridSpec(
            num_scalar_prefetch=0,
            grid=(B,),
            in_specs=in_specs,
            out_specs=per_batch((1, S, D)),
        ),
        compiler_params=pltpu.CompilerParams(
            dimension_semantics=("parallel",),
            vmem_limit_bytes=32 * 1024 * 1024,
        ),
    )(
        x, mask_bias,
        params["ln1_a"], params["ln1_b"],
        wqkv, wo,
        params["ln2_a"], params["ln2_b"],
        w1, params["b1"], w2, params["b2"],
    )


# ---------------- pure-JAX reference (mirrors the PyTorch forward) -------------
def reference(x, src_mask, params, *, num_heads):
    B, S, D = x.shape
    dk = D // num_heads

    def ln(x, a, b):
        mean = jnp.mean(x, axis=-1, keepdims=True)
        var = jnp.sum((x - mean) ** 2, axis=-1, keepdims=True) / (D - 1)
        return a * (x - mean) / (jnp.sqrt(var) + EPS) + b

    y = ln(x, params["ln1_a"][0], params["ln1_b"][0])
    q = y @ params["wq"]
    k = y @ params["wk"]
    v = y @ params["wv"]
    q = q.reshape(B, S, num_heads, dk).transpose(0, 2, 1, 3)
    k = k.reshape(B, S, num_heads, dk).transpose(0, 2, 1, 3)
    v = v.reshape(B, S, num_heads, dk).transpose(0, 2, 1, 3)
    scores = (q @ k.transpose(0, 1, 3, 2)) / math.sqrt(dk)
    scores = jnp.where(src_mask[:, None, :, :] == 0, -1e9, scores)
    p = jax.nn.softmax(scores, axis=-1)
    attn = (p @ v).transpose(0, 2, 1, 3).reshape(B, S, D) @ params["wo"]
    x1 = x + attn
    y2 = ln(x1, params["ln2_a"][0], params["ln2_b"][0])
    h1 = jax.nn.relu(y2 @ params["w1"] + params["b1"][0])
    return x1 + h1 @ params["w2"] + params["b2"][0]


if __name__ == "__main__":
    # Lane-dense small shapes: D, 3D, dk, F, S all multiples of 128.
    B, S, D, H, F = 2, 128, 256, 2, 512

    key = jax.random.PRNGKey(0)
    ks = jax.random.split(key, 8)
    init = lambda k, shape: (0.02 * jax.random.normal(k, shape)).astype(jnp.float32)

    params = {
        "ln1_a": jnp.ones((1, D), jnp.float32),
        "ln1_b": jnp.zeros((1, D), jnp.float32),
        "wq": init(ks[0], (D, D)),
        "wk": init(ks[1], (D, D)),
        "wv": init(ks[2], (D, D)),
        "wo": init(ks[3], (D, D)),
        "ln2_a": jnp.ones((1, D), jnp.float32),
        "ln2_b": jnp.zeros((1, D), jnp.float32),
        "w1": init(ks[4], (D, F)),
        "b1": jnp.zeros((1, F), jnp.float32),
        "w2": init(ks[5], (F, D)),
        "b2": jnp.zeros((1, D), jnp.float32),
    }

    x = jax.random.normal(ks[6], (B, S, D), jnp.float32)
    # src_mask: last few key positions of batch 1 are masked out.
    src_mask = jnp.ones((B, 1, S), jnp.int32).at[1, 0, S - 5:].set(0)

    out = encoder_block(x, src_mask, params, num_heads=H)
    jax.block_until_ready(out)

    ref = reference(x, src_mask, params, num_heads=H)
    assert out.shape == (B, S, D)
    assert jnp.allclose(out, ref, atol=1e-4, rtol=1e-4), (
        "mismatch vs reference, max err = "
        f"{float(jnp.max(jnp.abs(out - ref)))}")

    # bf16 MXU-operand fast path (v6e/v7x); f32 accumulation, loose tolerance.
    out_bf16 = encoder_block(x, src_mask, params, num_heads=H,
                             compute_dtype=jnp.bfloat16)
    jax.block_until_ready(out_bf16)
    assert jnp.allclose(out_bf16, ref, atol=5e-2, rtol=5e-2), (
        "bf16 path mismatch, max err = "
        f"{float(jnp.max(jnp.abs(out_bf16 - ref)))}")

    print("KERNEL_OK")
</pallas_src>

<mosaic_0001>
module attributes {stable_mosaic.version = 11 : i64} {
  func.func @encoder_block_kernel(%arg0: i32, %arg1: memref<1x128x256xf32, #tpu.memory_space<vmem>>, %arg2: memref<1x1x128xf32, #tpu.memory_space<vmem>>, %arg3: memref<1x256xf32, #tpu.memory_space<vmem>>, %arg4: memref<1x256xf32, #tpu.memory_space<vmem>>, %arg5: memref<256x768xf32, #tpu.memory_space<vmem>>, %arg6: memref<256x256xf32, #tpu.memory_space<vmem>>, %arg7: memref<1x256xf32, #tpu.memory_space<vmem>>, %arg8: memref<1x256xf32, #tpu.memory_space<vmem>>, %arg9: memref<256x512xf32, #tpu.memory_space<vmem>>, %arg10: memref<1x512xf32, #tpu.memory_space<vmem>>, %arg11: memref<512x256xf32, #tpu.memory_space<vmem>>, %arg12: memref<1x256xf32, #tpu.memory_space<vmem>>, %arg13: memref<1x128x256xf32, #tpu.memory_space<vmem>>) attributes {dimension_semantics = [#tpu.dimension_semantics<parallel>], iteration_bounds = array<i64: 2>, scalar_prefetch = 0 : i64, scratch_operands = 0 : i64, tpu.core_type = #tpu.core_type<tc>, window_params = [{transform_indices = @transform_0, window_bounds = array<i64: 1, 128, 256>}, {transform_indices = @transform_1, window_bounds = array<i64: 1, 1, 128>}, {pipeline_mode = #tpu.pipeline_mode<synchronous>, transform_indices = @transform_2, window_bounds = array<i64: 1, 256>}, {pipeline_mode = #tpu.pipeline_mode<synchronous>, transform_indices = @transform_3, window_bounds = array<i64: 1, 256>}, {pipeline_mode = #tpu.pipeline_mode<synchronous>, transform_indices = @transform_4, window_bounds = array<i64: 256, 768>}, {pipeline_mode = #tpu.pipeline_mode<synchronous>, transform_indices = @transform_5, window_bounds = array<i64: 256, 256>}, {pipeline_mode = #tpu.pipeline_mode<synchronous>, transform_indices = @transform_6, window_bounds = array<i64: 1, 256>}, {pipeline_mode = #tpu.pipeline_mode<synchronous>, transform_indices = @transform_7, window_bounds = array<i64: 1, 256>}, {pipeline_mode = #tpu.pipeline_mode<synchronous>, transform_indices = @transform_8, window_bounds = array<i64: 256, 512>}, {pipeline_mode = #tpu.pipeline_mode<synchronous>, transform_indices = @transform_9, window_bounds = array<i64: 1, 512>}, {pipeline_mode = #tpu.pipeline_mode<synchronous>, transform_indices = @transform_10, window_bounds = array<i64: 512, 256>}, {pipeline_mode = #tpu.pipeline_mode<synchronous>, transform_indices = @transform_11, window_bounds = array<i64: 1, 256>}, {transform_indices = @transform_12, window_bounds = array<i64: 1, 128, 256>}]} {
    %c0 = arith.constant 0 : index
    %c0_0 = arith.constant 0 : index
    %c0_1 = arith.constant 0 : index
    %0 = vector.load %arg1[%c0, %c0_0, %c0_1] : memref<1x128x256xf32, #tpu.memory_space<vmem>>, vector<1x128x256xf32>
    %1 = vector.shape_cast %0 : vector<1x128x256xf32> to vector<128x256xf32>
    %c0_2 = arith.constant 0 : index
    %c0_3 = arith.constant 0 : index
    %c0_4 = arith.constant 0 : index
    %2 = vector.load %arg2[%c0_2, %c0_3, %c0_4] : memref<1x1x128xf32, #tpu.memory_space<vmem>>, vector<1x1x128xf32>
    %3 = vector.shape_cast %2 : vector<1x1x128xf32> to vector<1x128xf32>
    %c0_5 = arith.constant 0 : index
    %c0_6 = arith.constant 0 : index
    %4 = vector.load %arg3[%c0_5, %c0_6] : memref<1x256xf32, #tpu.memory_space<vmem>>, vector<1x256xf32>
    %5 = vector.shape_cast %4 : vector<1x256xf32> to vector<256xf32>
    %c0_7 = arith.constant 0 : index
    %c0_8 = arith.constant 0 : index
    %6 = vector.load %arg4[%c0_7, %c0_8] : memref<1x256xf32, #tpu.memory_space<vmem>>, vector<1x256xf32>
    %7 = vector.shape_cast %6 : vector<1x256xf32> to vector<256xf32>
    %cst = arith.constant dense<0.000000e+00> : vector<128xf32>
    %8 = vector.multi_reduction <add>, %1, %cst [1] : vector<128x256xf32> to vector<128xf32>
    %9 = vector.shape_cast %8 : vector<128xf32> to vector<128x1xf32>
    %cst_9 = arith.constant 2.560000e+02 : f32
    %10 = vector.broadcast %cst_9 : f32 to vector<128x1xf32>
    %11 = arith.divf %9, %10 : vector<128x1xf32>
    %12 = vector.broadcast %11 : vector<128x1xf32> to vector<128x256xf32>
    %13 = arith.subf %1, %12 : vector<128x256xf32>
    %14 = arith.mulf %13, %13 : vector<128x256xf32>
    %cst_10 = arith.constant dense<0.000000e+00> : vector<128xf32>
    %15 = vector.multi_reduction <add>, %14, %cst_10 [1] : vector<128x256xf32> to vector<128xf32>
    %16 = vector.shape_cast %15 : vector<128xf32> to vector<128x1xf32>
    %cst_11 = arith.constant 2.550000e+02 : f32
    %17 = vector.broadcast %cst_11 : f32 to vector<128x1xf32>
    %18 = arith.divf %16, %17 : vector<128x1xf32>
    %19 = math.sqrt %18 : vector<128x1xf32>
    %20 = vector.broadcast %11 : vector<128x1xf32> to vector<128x256xf32>
    %21 = arith.subf %1, %20 : vector<128x256xf32>
    %22 = vector.shape_cast %5 : vector<256xf32> to vector<1x256xf32>
    %23 = vector.broadcast %22 : vector<1x256xf32> to vector<128x256xf32>
    %24 = arith.mulf %23, %21 : vector<128x256xf32>
    %cst_12 = arith.constant 9.99999997E-7 : f32
    %25 = vector.broadcast %cst_12 : f32 to vector<128x1xf32>
    %26 = arith.addf %19, %25 : vector<128x1xf32>
    %27 = vector.broadcast %26 : vector<128x1xf32> to vector<128x256xf32>
    %28 = arith.divf %24, %27 : vector<128x256xf32>
    %29 = vector.shape_cast %7 : vector<256xf32> to vector<1x256xf32>
    %30 = vector.broadcast %29 : vector<1x256xf32> to vector<128x256xf32>
    %31 = arith.addf %28, %30 : vector<128x256xf32>
    %c0_13 = arith.constant 0 : index
    %c0_14 = arith.constant 0 : index
    %32 = vector.load %arg5[%c0_13, %c0_14] : memref<256x768xf32, #tpu.memory_space<vmem>>, vector<256x768xf32>
    %cst_15 = arith.constant dense<0.000000e+00> : vector<128x768xf32>
    %33 = tpu.matmul %31, %32, %cst_15 {dimension_numbers = #tpu.dot_dimension_numbers<[1], [0], [0], [1], [0, 0, 1, 1], [], []>} : vector<128x256xf32>, vector<256x768xf32>, vector<128x768xf32> -> vector<128x768xf32>
    %34 = vector.extract_strided_slice %33 {offsets = [0, 0], sizes = [128, 256], strides = [1, 1]} : vector<128x768xf32> to vector<128x256xf32>
    %35 = vector.shape_cast %34 : vector<128x256xf32> to vector<128x2x128xf32>
    %36 = tpu.transpose %35, [1, 0, 2] : vector<128x2x128xf32> -> vector<2x128x128xf32>
    %37 = vector.extract_strided_slice %33 {offsets = [0, 256], sizes = [128, 256], strides = [1, 1]} : vector<128x768xf32> to vector<128x256xf32>
    %38 = vector.shape_cast %37 : vector<128x256xf32> to vector<128x2x128xf32>
    %39 = tpu.transpose %38, [1, 0, 2] : vector<128x2x128xf32> -> vector<2x128x128xf32>
    %40 = vector.extract_strided_slice %33 {offsets = [0, 512], sizes = [128, 256], strides = [1, 1]} : vector<128x768xf32> to vector<128x256xf32>
    %41 = vector.shape_cast %40 : vector<128x256xf32> to vector<128x2x128xf32>
    %42 = tpu.transpose %41, [1, 0, 2] : vector<128x2x128xf32> -> vector<2x128x128xf32>
    "tpu.trace_start"() <{level = 10 : i32, message = "hqd,hkd->hqk"}> : () -> ()
    %cst_16 = arith.constant dense<0.000000e+00> : vector<2x128x128xf32>
    %43 = tpu.matmul %36, %39, %cst_16 {dimension_numbers = #tpu.dot_dimension_numbers<[2], [2], [1], [1], [0, 0, 0, 1, 1, 1], [0], [0]>} : vector<2x128x128xf32>, vector<2x128x128xf32>, vector<2x128x128xf32> -> vector<2x128x128xf32>
    "tpu.trace_stop"() : () -> ()
    %cst_17 = arith.constant 0.0883883461 : f32
    %44 = vector.broadcast %cst_17 : f32 to vector<2x128x128xf32>
    %45 = arith.mulf %43, %44 : vector<2x128x128xf32>
    %46 = vector.shape_cast %3 : vector<1x128xf32> to vector<1x1x128xf32>
    %47 = vector.broadcast %46 : vector<1x1x128xf32> to vector<2x128x128xf32>
    %48 = arith.addf %45, %47 : vector<2x128x128xf32>
    %cst_18 = arith.constant dense<0xFF800000> : vector<2x128xf32>
    %49 = vector.multi_reduction <maximumf>, %48, %cst_18 [2] : vector<2x128x128xf32> to vector<2x128xf32>
    %50 = vector.shape_cast %49 : vector<2x128xf32> to vector<2x128x1xf32>
    %51 = vector.broadcast %50 : vector<2x128x1xf32> to vector<2x128x128xf32>
    %52 = arith.subf %48, %51 : vector<2x128x128xf32>
    %53 = math.exp %52 : vector<2x128x128xf32>
    %cst_19 = arith.constant dense<0.000000e+00> : vector<2x128xf32>
    %54 = vector.multi_reduction <add>, %53, %cst_19 [2] : vector<2x128x128xf32> to vector<2x128xf32>
    %55 = vector.shape_cast %54 : vector<2x128xf32> to vector<2x128x1xf32>
    %56 = tpu.reciprocal %55 {approx = true} : vector<2x128x1xf32> -> vector<2x128x1xf32>
    %57 = vector.broadcast %56 : vector<2x128x1xf32> to vector<2x128x128xf32>
    %58 = arith.mulf %53, %57 : vector<2x128x128xf32>
    "tpu.trace_start"() <{level = 10 : i32, message = "hqk,hkd->hqd"}> : () -> ()
    %cst_20 = arith.constant dense<0.000000e+00> : vector<2x128x128xf32>
    %59 = tpu.matmul %58, %42, %cst_20 {dimension_numbers = #tpu.dot_dimension_numbers<[2], [1], [1], [2], [0, 0, 0, 1, 1, 2], [0], [0]>} : vector<2x128x128xf32>, vector<2x128x128xf32>, vector<2x128x128xf32> -> vector<2x128x128xf32>
    "tpu.trace_stop"() : () -> ()
    %60 = tpu.transpose %59, [1, 0, 2] : vector<2x128x128xf32> -> vector<128x2x128xf32>
    %61 = vector.shape_cast %60 : vector<128x2x128xf32> to vector<128x256xf32>
    %c0_21 = arith.constant 0 : index
    %c0_22 = arith.constant 0 : index
    %62 = vector.load %arg6[%c0_21, %c0_22] : memref<256x256xf32, #tpu.memory_space<vmem>>, vector<256x256xf32>
    %cst_23 = arith.constant dense<0.000000e+00> : vector<128x256xf32>
    %63 = tpu.matmul %61, %62, %cst_23 {dimension_numbers = #tpu.dot_dimension_numbers<[1], [0], [0], [1], [0, 0, 1, 1], [], []>} : vector<128x256xf32>, vector<256x256xf32>, vector<128x256xf32> -> vector<128x256xf32>
    %64 = arith.addf %1, %63 : vector<128x256xf32>
    %c0_24 = arith.constant 0 : index
    %c0_25 = arith.constant 0 : index
    %65 = vector.load %arg7[%c0_24, %c0_25] : memref<1x256xf32, #tpu.memory_space<vmem>>, vector<1x256xf32>
    %66 = vector.shape_cast %65 : vector<1x256xf32> to vector<256xf32>
    %c0_26 = arith.constant 0 : index
    %c0_27 = arith.constant 0 : index
    %67 = vector.load %arg8[%c0_26, %c0_27] : memref<1x256xf32, #tpu.memory_space<vmem>>, vector<1x256xf32>
    %68 = vector.shape_cast %67 : vector<1x256xf32> to vector<256xf32>
    %cst_28 = arith.constant dense<0.000000e+00> : vector<128xf32>
    %69 = vector.multi_reduction <add>, %64, %cst_28 [1] : vector<128x256xf32> to vector<128xf32>
    %70 = vector.shape_cast %69 : vector<128xf32> to vector<128x1xf32>
    %cst_29 = arith.constant 2.560000e+02 : f32
    %71 = vector.broadcast %cst_29 : f32 to vector<128x1xf32>
    %72 = arith.divf %70, %71 : vector<128x1xf32>
    %73 = vector.broadcast %72 : vector<128x1xf32> to vector<128x256xf32>
    %74 = arith.subf %64, %73 : vector<128x256xf32>
    %75 = arith.mulf %74, %74 : vector<128x256xf32>
    %cst_30 = arith.constant dense<0.000000e+00> : vector<128xf32>
    %76 = vector.multi_reduction <add>, %75, %cst_30 [1] : vector<128x256xf32> to vector<128xf32>
    %77 = vector.shape_cast %76 : vector<128xf32> to vector<128x1xf32>
    %cst_31 = arith.constant 2.550000e+02 : f32
    %78 = vector.broadcast %cst_31 : f32 to vector<128x1xf32>
    %79 = arith.divf %77, %78 : vector<128x1xf32>
    %80 = math.sqrt %79 : vector<128x1xf32>
    %81 = vector.broadcast %72 : vector<128x1xf32> to vector<128x256xf32>
    %82 = arith.subf %64, %81 : vector<128x256xf32>
    %83 = vector.shape_cast %66 : vector<256xf32> to vector<1x256xf32>
    %84 = vector.broadcast %83 : vector<1x256xf32> to vector<128x256xf32>
    %85 = arith.mulf %84, %82 : vector<128x256xf32>
    %cst_32 = arith.constant 9.99999997E-7 : f32
    %86 = vector.broadcast %cst_32 : f32 to vector<128x1xf32>
    %87 = arith.addf %80, %86 : vector<128x1xf32>
    %88 = vector.broadcast %87 : vector<128x1xf32> to vector<128x256xf32>
    %89 = arith.divf %85, %88 : vector<128x256xf32>
    %90 = vector.shape_cast %68 : vector<256xf32> to vector<1x256xf32>
    %91 = vector.broadcast %90 : vector<1x256xf32> to vector<128x256xf32>
    %92 = arith.addf %89, %91 : vector<128x256xf32>
    %c0_33 = arith.constant 0 : index
    %c0_34 = arith.constant 0 : index
    %93 = vector.load %arg9[%c0_33, %c0_34] : memref<256x512xf32, #tpu.memory_space<vmem>>, vector<256x512xf32>
    %cst_35 = arith.constant dense<0.000000e+00> : vector<128x512xf32>
    %94 = tpu.matmul %92, %93, %cst_35 {dimension_numbers = #tpu.dot_dimension_numbers<[1], [0], [0], [1], [0, 0, 1, 1], [], []>} : vector<128x256xf32>, vector<256x512xf32>, vector<128x512xf32> -> vector<128x512xf32>
    %c0_36 = arith.constant 0 : index
    %c0_37 = arith.constant 0 : index
    %95 = vector.load %arg10[%c0_36, %c0_37] : memref<1x512xf32, #tpu.memory_space<vmem>>, vector<1x512xf32>
    %96 = vector.shape_cast %95 : vector<1x512xf32> to vector<512xf32>
    %97 = vector.shape_cast %96 : vector<512xf32> to vector<1x512xf32>
    %98 = vector.broadcast %97 : vector<1x512xf32> to vector<128x512xf32>
    %99 = arith.addf %94, %98 : vector<128x512xf32>
    %cst_38 = arith.constant 0.000000e+00 : f32
    %100 = vector.broadcast %cst_38 : f32 to vector<128x512xf32>
    %101 = arith.maximumf %99, %100 : vector<128x512xf32>
    %c0_39 = arith.constant 0 : index
    %c0_40 = arith.constant 0 : index
    %102 = vector.load %arg11[%c0_39, %c0_40] : memref<512x256xf32, #tpu.memory_space<vmem>>, vector<512x256xf32>
    %cst_41 = arith.constant dense<0.000000e+00> : vector<128x256xf32>
    %103 = tpu.matmul %101, %102, %cst_41 {dimension_numbers = #tpu.dot_dimension_numbers<[1], [0], [0], [1], [0, 0, 1, 1], [], []>} : vector<128x512xf32>, vector<512x256xf32>, vector<128x256xf32> -> vector<128x256xf32>
    %c0_42 = arith.constant 0 : index
    %c0_43 = arith.constant 0 : index
    %104 = vector.load %arg12[%c0_42, %c0_43] : memref<1x256xf32, #tpu.memory_space<vmem>>, vector<1x256xf32>
    %105 = vector.shape_cast %104 : vector<1x256xf32> to vector<256xf32>
    %106 = vector.shape_cast %105 : vector<256xf32> to vector<1x256xf32>
    %107 = vector.broadcast %106 : vector<1x256xf32> to vector<128x256xf32>
    %108 = arith.addf %103, %107 : vector<128x256xf32>
    %109 = arith.addf %64, %108 : vector<128x256xf32>
    %c0_44 = arith.constant 0 : index
    %c0_45 = arith.constant 0 : index
    %c0_46 = arith.constant 0 : index
    %110 = vector.load %arg13[%c0_44, %c0_45, %c0_46] : memref<1x128x256xf32, #tpu.memory_space<vmem>>, vector<1x128x256xf32>
    %111 = vector.shape_cast %110 : vector<1x128x256xf32> to vector<128x256xf32>
    %112 = vector.shape_cast %109 : vector<128x256xf32> to vector<1x128x256xf32>
    tpu.vector_store %arg13[%c0_44, %c0_45, %c0_46], %112 {strides = array<i32>} : memref<1x128x256xf32, #tpu.memory_space<vmem>>, vector<1x128x256xf32>,
    return
  }
  func.func @transform_0(%arg0: i32) -> (i32, i32, i32) {
    %c0_i32 = arith.constant 0 : i32
    %c0_i32_0 = arith.constant 0 : i32
    %c0_i32_1 = arith.constant 0 : i32
    return %arg0, %c0_i32, %c0_i32_0 : i32, i32, i32
  }
  func.func @transform_1(%arg0: i32) -> (i32, i32, i32) {
    %c0_i32 = arith.constant 0 : i32
    %c0_i32_0 = arith.constant 0 : i32
    %c0_i32_1 = arith.constant 0 : i32
    return %arg0, %c0_i32, %c0_i32_0 : i32, i32, i32
  }
  func.func @transform_2(%arg0: i32) -> (i32, i32) {
    %c0_i32 = arith.constant 0 : i32
    %c0_i32_0 = arith.constant 0 : i32
    %c0_i32_1 = arith.constant 0 : i32
    return %c0_i32, %c0_i32_0 : i32, i32
  }
  func.func @transform_3(%arg0: i32) -> (i32, i32) {
    %c0_i32 = arith.constant 0 : i32
    %c0_i32_0 = arith.constant 0 : i32
    %c0_i32_1 = arith.constant 0 : i32
    return %c0_i32, %c0_i32_0 : i32, i32
  }
  func.func @transform_4(%arg0: i32) -> (i32, i32) {
    %c0_i32 = arith.constant 0 : i32
    %c0_i32_0 = arith.constant 0 : i32
    %c0_i32_1 = arith.constant 0 : i32
    return %c0_i32, %c0_i32_0 : i32, i32
  }
  func.func @transform_5(%arg0: i32) -> (i32, i32) {
    %c0_i32 = arith.constant 0 : i32
    %c0_i32_0 = arith.constant 0 : i32
    %c0_i32_1 = arith.constant 0 : i32
    return %c0_i32, %c0_i32_0 : i32, i32
  }
  func.func @transform_6(%arg0: i32) -> (i32, i32) {
    %c0_i32 = arith.constant 0 : i32
    %c0_i32_0 = arith.constant 0 : i32
    %c0_i32_1 = arith.constant 0 : i32
    return %c0_i32, %c0_i32_0 : i32, i32
  }
  func.func @transform_7(%arg0: i32) -> (i32, i32) {
    %c0_i32 = arith.constant 0 : i32
    %c0_i32_0 = arith.constant 0 : i32
    %c0_i32_1 = arith.constant 0 : i32
    return %c0_i32, %c0_i32_0 : i32, i32
  }
  func.func @transform_8(%arg0: i32) -> (i32, i32) {
    %c0_i32 = arith.constant 0 : i32
    %c0_i32_0 = arith.constant 0 : i32
    %c0_i32_1 = arith.constant 0 : i32
    return %c0_i32, %c0_i32_0 : i32, i32
  }
  func.func @transform_9(%arg0: i32) -> (i32, i32) {
    %c0_i32 = arith.constant 0 : i32
    %c0_i32_0 = arith.constant 0 : i32
    %c0_i32_1 = arith.constant 0 : i32
    return %c0_i32, %c0_i32_0 : i32, i32
  }
  func.func @transform_10(%arg0: i32) -> (i32, i32) {
    %c0_i32 = arith.constant 0 : i32
    %c0_i32_0 = arith.constant 0 : i32
    %c0_i32_1 = arith.constant 0 : i32
    return %c0_i32, %c0_i32_0 : i32, i32
  }
  func.func @transform_11(%arg0: i32) -> (i32, i32) {
    %c0_i32 = arith.constant 0 : i32
    %c0_i32_0 = arith.constant 0 : i32
    %c0_i32_1 = arith.constant 0 : i32
    return %c0_i32, %c0_i32_0 : i32, i32
  }
  func.func @transform_12(%arg0: i32) -> (i32, i32, i32) {
    %c0_i32 = arith.constant 0 : i32
    %c0_i32_0 = arith.constant 0 : i32
    %c0_i32_1 = arith.constant 0 : i32
    return %arg0, %c0_i32, %c0_i32_0 : i32, i32, i32
  }
}

</mosaic_0001>

<llo_original>
// kernel: tpu_custom_call.1
$region0: #{tpu_custom_call.1}
  #allocation0 [shape = 'u32[]', space=smem, size = 0x4, offset = 0x4, fixed_abs, tag = 'smem constant byte address 0x4 - core index']
  #allocation1 [shape = 'u32[144,128]{1,0:T(1,128)}', space=vmem, size = 0x12000, scoped, tag = 'internal scratch']
  %s0 = inlined_call_operand.hbm [shape: f32[2,128,256], index: 0, kind: input, shape index: {}]
  %s1 = inlined_call_operand.vmem [shape: f32[2,1,128], index: 1, kind: input, shape index: {}]
  %s2 = inlined_call_operand.hbm [shape: f32[1,256], index: 2, kind: input, shape index: {}]
  %s3 = inlined_call_operand.vmem [shape: f32[1,256], index: 3, kind: input, shape index: {}]
  %s4 = inlined_call_operand.hbm [shape: f32[256,768], index: 4, kind: input, shape index: {}]
  %s5 = inlined_call_operand.hbm [shape: f32[256,256], index: 5, kind: input, shape index: {}]
  %s6 = inlined_call_operand.vmem [shape: f32[1,256], index: 6, kind: input, shape index: {}]
  %s7 = inlined_call_operand.vmem [shape: f32[1,256], index: 7, kind: input, shape index: {}]
  %s8 = inlined_call_operand.hbm [shape: f32[256,512], index: 8, kind: input, shape index: {}]
  %s9 = inlined_call_operand.vmem [shape: f32[1,512], index: 9, kind: input, shape index: {}]
  %s10 = inlined_call_operand.hbm [shape: f32[512,256], index: 10, kind: input, shape index: {}]
  %s11 = inlined_call_operand.vmem [shape: f32[1,256], index: 11, kind: input, shape index: {}]
  %s12 = inlined_call_operand.hbm [shape: f32[2,128,256], index: 12, kind: output, shape index: {}]
  %s13 = sld [smem:[#allocation0]]
  $region105: #{tpu_custom_call.1} parent=0
    _
  %s15 = ssub.s32 1, %s13
  %s16 = scalar_select 0, %s15, %s13
  $region1: #{tpu_custom_call.1} parent=0
    #allocation2 [shape = 'u8[262144]{0}', space=vmem, size = 0x40000, scoped, tag = 'input window, operand 0']
    #allocation3 [shape = 's32[2]{0}', space=sflag, size = 0x8, scoped, tag = 'scoped memory for tpu_custom_call.1']
    #allocation4 [shape = 's32[2]{0}', space=sflag, size = 0x8, scoped, tag = 'scoped memory for tpu_custom_call.1']
    #allocation5 [shape = 'u8[1024]{0}', space=vmem, size = 0x400, scoped, tag = 'input window, operand 2, single buffered']
    #allocation6 [shape = 's32[1]{0}', space=sflag, size = 0x4, scoped, tag = 'scoped memory for tpu_custom_call.1']
    #allocation7 [shape = 'u8[786432]{0}', space=vmem, size = 0xc0000, scoped, tag = 'input window, operand 4, single buffered']
    #allocation8 [shape = 'u8[262144]{0}', space=vmem, size = 0x40000, scoped, tag = 'input window, operand 5, single buffered']
    #allocation9 [shape = 's32[1]{0}', space=sflag, size = 0x4, scoped, tag = 'scoped memory for tpu_custom_call.1']
    #allocation10 [shape = 'u8[524288]{0}', space=vmem, size = 0x80000, scoped, tag = 'input window, operand 8, single buffered']
    #allocation11 [shape = 'u8[524288]{0}', space=vmem, size = 0x80000, scoped, tag = 'input window, operand 10, single buffered']
    #allocation12 [shape = 's32[1]{0}', space=sflag, size = 0x4, scoped, tag = 'scoped memory for tpu_custom_call.1']
    #allocation13 [shape = 'u8[262144]{0}', space=vmem, size = 0x40000, scoped, tag = 'output window, operand 0']
    %17 = vsyncpa [#allocation3], 0
    %s18 = scalar_lea.sflag [#allocation3], 1
    %19 = vsyncpa %s18, 0
    %20 = vsyncpa [#allocation6], 0
    %21 = vsyncpa [#allocation9], 0
    %22 = vsyncpa [#allocation12], 0
    %23 = vsyncpa [#allocation4], 0
    %s24 = scalar_lea.sflag [#allocation4], 1
    %25 = vsyncpa %s24, 0
    loop: start=0, step=1, limit=4
    $region2: #{tpu_custom_call.1} parent=1 // loop_pre_header
      _
    $region3: #{tpu_custom_call.1} parent=1 // loop_header
      %s27 = sphi 0, %s31
      %p28 = scmp.ge.s32.totalorder %s27, 4
      %s37 = sphi 0, %s39
      %s40 = sphi 0, %s37
      %s41 = sphi 0, %s40
      %s57 = sphi 0, %s41
      %s63 = sphi 0, %s65
      %s66 = sphi 0, %s63
      %s67 = sphi 0, %s66
      %s83 = sphi 0, %s67
      %s87 = sphi 0, %s87
      %s89 = sphi 0, %s87
      %s90 = sphi 0, %s89
      %s104 = sphi 0, %s90
      %s108 = sphi 0, %s108
      %s110 = sphi 0, %s108
      %s111 = sphi 0, %s110
      %s125 = sphi 0, %s111
      %s129 = sphi 0, %s129
      %s131 = sphi 0, %s129
      %s132 = sphi 0, %s131
      %s146 = sphi 0, %s132
      %s150 = sphi 0, %s150
      %s152 = sphi 0, %s150
      %s153 = sphi 0, %s152
      %s167 = sphi 0, %s153
      %s171 = sphi 0, %s171
      %s173 = sphi 0, %s171
      %s174 = sphi 0, %s173
      %s188 = sphi 0, %s174
      %s192 = sphi 0, %s192
      %s194 = sphi 0, %s192
      %s195 = sphi 0, %s194
      %s209 = sphi 0, %s195
      %s213 = sphi 0, %s213
      %s215 = sphi 0, %s213
      %s216 = sphi 0, %s215
      %s230 = sphi 0, %s216
      %s234 = sphi 0, %s234
      %s236 = sphi 0, %s234
      %s237 = sphi 0, %s236
      %s251 = sphi 0, %s237
      %s255 = sphi 0, %s255
      %s257 = sphi 0, %s255
      %s258 = sphi 0, %s257
      %s272 = sphi 0, %s258
      %s276 = sphi 0, %s276
      %s278 = sphi 0, %s276
      %s279 = sphi 0, %s278
      %s293 = sphi 0, %s279
      %s299 = sphi 0, %s301
      %s302 = sphi 0, %s299
      %s303 = sphi 0, %s302
      %s319 = sphi 0, %s303
    $region4: #{tpu_custom_call.1} parent=1 // loop_header_branch
      %30 = sbr.rel (%p28) target = $region8
    $region5: #{tpu_custom_call.1} parent=1 // loop_body
      %s32 = ssub.s32 %s27, 1
      %s33 = ssub.s32 %s27, 2
      %s34 = sadd.s32 %s27, 1
      %s35 = ssub.s32 %s27, %s34
      %p36 = scmp.eq.s32.totalorder %s35, 0
      %s38 = sadd.s32 %s37, 1
      %s39 = scalar_select %p36, %s37, %s38
      %p42 = pneg %p36
      %p43 = scmp.eq.s32.totalorder %s27, 1
      %p44 = por %p42, %p43
      %p45 = scmp.ne.s32.totalorder %s37, %s40
      %p46 = scmp.eq.s32.totalorder %s27, 0
      %p47 = por %p45, %p46
      %p48 = scmp.ne.s32.totalorder %s37, %s40
      %p49 = scmp.eq.s32.totalorder %s32, 1
      %p50 = por %p48, %p49
      %p51 = scmp.ne.s32.totalorder %s40, %s41
      %p52 = scmp.eq.s32.totalorder %s32, 0
      %p53 = por %p51, %p52
      %p54 = scmp.ne.s32.totalorder %s40, %s41
      %p55 = scmp.eq.s32.totalorder %s33, 1
      %p56 = por %p54, %p55
      %p58 = scmp.ne.s32.totalorder %s41, %s57
      %p59 = scmp.eq.s32.totalorder %s33, 0
      %p60 = por %p58, %p59
      %s61 = ssub.s32 %s27, %s34
      %p62 = scmp.eq.s32.totalorder %s61, 0
      %s64 = sadd.s32 %s63, 1
      %s65 = scalar_select %p62, %s63, %s64
      %p68 = pneg %p62
      %p69 = scmp.eq.s32.totalorder %s27, 1
      %p70 = por %p68, %p69
      %p71 = scmp.ne.s32.totalorder %s63, %s66
      %p72 = scmp.eq.s32.totalorder %s27, 0
      %p73 = por %p71, %p72
      %p74 = scmp.ne.s32.totalorder %s63, %s66
      %p75 = scmp.eq.s32.totalorder %s32, 1
      %p76 = por %p74, %p75
      %p77 = scmp.ne.s32.totalorder %s66, %s67
      %p78 = scmp.eq.s32.totalorder %s32, 0
      %p79 = por %p77, %p78
      %p80 = scmp.ne.s32.totalorder %s66, %s67
      %p81 = scmp.eq.s32.totalorder %s33, 1
      %p82 = por %p80, %p81
      %p84 = scmp.ne.s32.totalorder %s67, %s83
      %p85 = scmp.eq.s32.totalorder %s33, 0
      %p86 = por %p84, %p85
      %s88 = sadd.s32 %s87, 1
      %p91 = scmp.eq.s32.totalorder %s27, 1
      %p92 = scmp.ne.s32.totalorder %s87, %s89
      %p93 = scmp.eq.s32.totalorder %s27, 0
      %p94 = por %p92, %p93
      %p95 = scmp.ne.s32.totalorder %s87, %s89
      %p96 = scmp.eq.s32.totalorder %s32, 1
      %p97 = por %p95, %p96
      %p98 = scmp.ne.s32.totalorder %s89, %s90
      %p99 = scmp.eq.s32.totalorder %s32, 0
      %p100 = por %p98, %p99
      %p101 = scmp.ne.s32.totalorder %s89, %s90
      %p102 = scmp.eq.s32.totalorder %s33, 1
      %p103 = por %p101, %p102
      %p105 = scmp.ne.s32.totalorder %s90, %s104
      %p106 = scmp.eq.s32.totalorder %s33, 0
      %p107 = por %p105, %p106
      %s109 = sadd.s32 %s108, 1
      %p112 = scmp.eq.s32.totalorder %s27, 1
      %p113 = scmp.ne.s32.totalorder %s108, %s110
      %p114 = scmp.eq.s32.totalorder %s27, 0
      %p115 = por %p113, %p114
      %p116 = scmp.ne.s32.totalorder %s108, %s110
      %p117 = scmp.eq.s32.totalorder %s32, 1
      %p118 = por %p116, %p117
      %p119 = scmp.ne.s32.totalorder %s110, %s111
      %p120 = scmp.eq.s32.totalorder %s32, 0
      %p121 = por %p119, %p120
      %p122 = scmp.ne.s32.totalorder %s110, %s111
      %p123 = scmp.eq.s32.totalorder %s33, 1
      %p124 = por %p122, %p123
      %p126 = scmp.ne.s32.totalorder %s111, %s125
      %p127 = scmp.eq.s32.totalorder %s33, 0
      %p128 = por %p126, %p127
      %s130 = sadd.s32 %s129, 1
      %p133 = scmp.eq.s32.totalorder %s27, 1
      %p134 = scmp.ne.s32.totalorder %s129, %s131
      %p135 = scmp.eq.s32.totalorder %s27, 0
      %p136 = por %p134, %p135
      %p137 = scmp.ne.s32.totalorder %s129, %s131
      %p138 = scmp.eq.s32.totalorder %s32, 1
      %p139 = por %p137, %p138
      %p140 = scmp.ne.s32.totalorder %s131, %s132
      %p141 = scmp.eq.s32.totalorder %s32, 0
      %p142 = por %p140, %p141
      %p143 = scmp.ne.s32.totalorder %s131, %s132
      %p144 = scmp.eq.s32.totalorder %s33, 1
      %p145 = por %p143, %p144
      %p147 = scmp.ne.s32.totalorder %s132, %s146
      %p148 = scmp.eq.s32.totalorder %s33, 0
      %p149 = por %p147, %p148
      %s151 = sadd.s32 %s150, 1
      %p154 = scmp.eq.s32.totalorder %s27, 1
      %p155 = scmp.ne.s32.totalorder %s150, %s152
      %p156 = scmp.eq.s32.totalorder %s27, 0
      %p157 = por %p155, %p156
      %p158 = scmp.ne.s32.totalorder %s150, %s152
      %p159 = scmp.eq.s32.totalorder %s32, 1
      %p160 = por %p158, %p159
      %p161 = scmp.ne.s32.totalorder %s152, %s153
      %p162 = scmp.eq.s32.totalorder %s32, 0
      %p163 = por %p161, %p162
      %p164 = scmp.ne.s32.totalorder %s152, %s153
      %p165 = scmp.eq.s32.totalorder %s33, 1
      %p166 = por %p164, %p165
      %p168 = scmp.ne.s32.totalorder %s153, %s167
      %p169 = scmp.eq.s32.totalorder %s33, 0
      %p170 = por %p168, %p169
      %s172 = sadd.s32 %s171, 1
      %p175 = scmp.eq.s32.totalorder %s27, 1
      %p176 = scmp.ne.s32.totalorder %s171, %s173
      %p177 = scmp.eq.s32.totalorder %s27, 0
      %p178 = por %p176, %p177
      %p179 = scmp.ne.s32.totalorder %s171, %s173
      %p180 = scmp.eq.s32.totalorder %s32, 1
      %p181 = por %p179, %p180
      %p182 = scmp.ne.s32.totalorder %s173, %s174
      %p183 = scmp.eq.s32.totalorder %s32, 0
      %p184 = por %p182, %p183
      %p185 = scmp.ne.s32.totalorder %s173, %s174
      %p186 = scmp.eq.s32.totalorder %s33, 1
      %p187 = por %p185, %p186
      %p189 = scmp.ne.s32.totalorder %s174, %s188
      %p190 = scmp.eq.s32.totalorder %s33, 0
      %p191 = por %p189, %p190
      %s193 = sadd.s32 %s192, 1
      %p196 = scmp.eq.s32.totalorder %s27, 1
      %p197 = scmp.ne.s32.totalorder %s192, %s194
      %p198 = scmp.eq.s32.totalorder %s27, 0
      %p199 = por %p197, %p198
      %p200 = scmp.ne.s32.totalorder %s192, %s194
      %p201 = scmp.eq.s32.totalorder %s32, 1
      %p202 = por %p200, %p201
      %p203 = scmp.ne.s32.totalorder %s194, %s195
      %p204 = scmp.eq.s32.totalorder %s32, 0
      %p205 = por %p203, %p204
      %p206 = scmp.ne.s32.totalorder %s194, %s195
      %p207 = scmp.eq.s32.totalorder %s33, 1
      %p208 = por %p206, %p207
      %p210 = scmp.ne.s32.totalorder %s195, %s209
      %p211 = scmp.eq.s32.totalorder %s33, 0
      %p212 = por %p210, %p211
      %s214 = sadd.s32 %s213, 1
      %p217 = scmp.eq.s32.totalorder %s27, 1
      %p218 = scmp.ne.s32.totalorder %s213, %s215
      %p219 = scmp.eq.s32.totalorder %s27, 0
      %p220 = por %p218, %p219
      %p221 = scmp.ne.s32.totalorder %s213, %s215
      %p222 = scmp.eq.s32.totalorder %s32, 1
      %p223 = por %p221, %p222
      %p224 = scmp.ne.s32.totalorder %s215, %s216
      %p225 = scmp.eq.s32.totalorder %s32, 0
      %p226 = por %p224, %p225
      %p227 = scmp.ne.s32.totalorder %s215, %s216
      %p228 = scmp.eq.s32.totalorder %s33, 1
      %p229 = por %p227, %p228
      %p231 = scmp.ne.s32.totalorder %s216, %s230
      %p232 = scmp.eq.s32.totalorder %s33, 0
      %p233 = por %p231, %p232
      %s235 = sadd.s32 %s234, 1
      %p238 = scmp.eq.s32.totalorder %s27, 1
      %p239 = scmp.ne.s32.totalorder %s234, %s236
      %p240 = scmp.eq.s32.totalorder %s27, 0
      %p241 = por %p239, %p240
      %p242 = scmp.ne.s32.totalorder %s234, %s236
      %p243 = scmp.eq.s32.totalorder %s32, 1
      %p244 = por %p242, %p243
      %p245 = scmp.ne.s32.totalorder %s236, %s237
      %p246 = scmp.eq.s32.totalorder %s32, 0
      %p247 = por %p245, %p246
      %p248 = scmp.ne.s32.totalorder %s236, %s237
      %p249 = scmp.eq.s32.totalorder %s33, 1
      %p250 = por %p248, %p249
      %p252 = scmp.ne.s32.totalorder %s237, %s251
      %p253 = scmp.eq.s32.totalorder %s33, 0
      %p254 = por %p252, %p253
      %s256 = sadd.s32 %s255, 1
      %p259 = scmp.eq.s32.totalorder %s27, 1
      %p260 = scmp.ne.s32.totalorder %s255, %s257
      %p261 = scmp.eq.s32.totalorder %s27, 0
      %p262 = por %p260, %p261
      %p263 = scmp.ne.s32.totalorder %s255, %s257
      %p264 = scmp.eq.s32.totalorder %s32, 1
      %p265 = por %p263, %p264
      %p266 = scmp.ne.s32.totalorder %s257, %s258
      %p267 = scmp.eq.s32.totalorder %s32, 0
      %p268 = por %p266, %p267
      %p269 = scmp.ne.s32.totalorder %s257, %s258
      %p270 = scmp.eq.s32.totalorder %s33, 1
      %p271 = por %p269, %p270
      %p273 = scmp.ne.s32.totalorder %s258, %s272
      %p274 = scmp.eq.s32.totalorder %s33, 0
      %p275 = por %p273, %p274
      %s277 = sadd.s32 %s276, 1
      %p280 = scmp.eq.s32.totalorder %s27, 1
      %p281 = scmp.ne.s32.totalorder %s276, %s278
      %p282 = scmp.eq.s32.totalorder %s27, 0
      %p283 = por %p281, %p282
      %p284 = scmp.ne.s32.totalorder %s276, %s278
      %p285 = scmp.eq.s32.totalorder %s32, 1
      %p286 = por %p284, %p285
      %p287 = scmp.ne.s32.totalorder %s278, %s279
      %p288 = scmp.eq.s32.totalorder %s32, 0
      %p289 = por %p287, %p288
      %p290 = scmp.ne.s32.totalorder %s278, %s279
      %p291 = scmp.eq.s32.totalorder %s33, 1
      %p292 = por %p290, %p291
      %p294 = scmp.ne.s32.totalorder %s279, %s293
      %p295 = scmp.eq.s32.totalorder %s33, 0
      %p296 = por %p294, %p295
      %s297 = ssub.s32 %s27, %s34
      %p298 = scmp.eq.s32.totalorder %s297, 0
      %s300 = sadd.s32 %s299, 1
      %s301 = scalar_select %p298, %s299, %s300
      %p304 = pneg %p298
      %p305 = scmp.eq.s32.totalorder %s27, 1
      %p306 = por %p304, %p305
      %p307 = scmp.ne.s32.totalorder %s299, %s302
      %p308 = scmp.eq.s32.totalorder %s27, 0
      %p309 = por %p307, %p308
      %p310 = scmp.ne.s32.totalorder %s299, %s302
      %p311 = scmp.eq.s32.totalorder %s32, 1
      %p312 = por %p310, %p311
      %p313 = scmp.ne.s32.totalorder %s302, %s303
      %p314 = scmp.eq.s32.totalorder %s32, 0
      %p315 = por %p313, %p314
      %p316 = scmp.ne.s32.totalorder %s302, %s303
      %p317 = scmp.eq.s32.totalorder %s33, 1
      %p318 = por %p316, %p317
      %p320 = scmp.ne.s32.totalorder %s303, %s319
      %p321 = scmp.eq.s32.totalorder %s33, 0
      %p322 = por %p320, %p321
      %p323 = scmp.le.s32.totalorder 1, %s27
      %p324 = scmp.lt.s32.totalorder %s27, 3
      %p325 = pnand %p323, %p324
      %p326 = pneg %p325
      // Predicated region
      $region9: #{tpu_custom_call.1} parent=5 // pred_check
        _
      $region10: #{tpu_custom_call.1} parent=5 // pred_check_branch
        %328 = sbr.rel (%p325) target = $region12
      $region11: #{tpu_custom_call.1} parent=5 // pred_region
        %s329 = ssub.s32 %s27, 1
        // Predicated region
        $region13: #{tpu_custom_call.1} parent=11 // pred_check
          %p330 = pneg %p100
        $region14: #{tpu_custom_call.1} parent=11 // pred_check_branch
          %332 = sbr.rel (%p330) target = $region16
        $region15: #{tpu_custom_call.1} parent=11 // pred_region
          %s334 = ssub.s32 32, 32
          %335 = vsyncadd [#allocation6], %s334
          %s337 = sshll.u32 [#allocation5], 4
          %s338 = int_to_ptr.vmem [resolvable:$true] %s337
          %340 = dma.hbm_to_vmem [thread:$0]  %s2, 32, %s338, [#allocation6]
        $region16: #{tpu_custom_call.1} parent=11 // pred_fallthru
          _
        // Predicated region
        $region17: #{tpu_custom_call.1} parent=11 // pred_check
          %p341 = pneg %p121
        $region18: #{tpu_custom_call.1} parent=11 // pred_check_branch
          %343 = sbr.rel (%p341) target = $region20
        $region19: #{tpu_custom_call.1} parent=11 // pred_region
          _
        $region20: #{tpu_custom_call.1} parent=11 // pred_fallthru
          _
        // Predicated region
        $region21: #{tpu_custom_call.1} parent=11 // pred_check
          %p344 = pneg %p142
        $region22: #{tpu_custom_call.1} parent=11 // pred_check_branch
          %346 = sbr.rel (%p344) target = $region24
        $region23: #{tpu_custom_call.1} parent=11 // pred_region
          %s348 = ssub.s32 24576, 24576
          %349 = vsyncadd [#allocation6], %s348
          %s350 = sshll.u32 [#allocation7], 4
          %s351 = int_to_ptr.vmem [resolvable:$true] %s350
          %356 = dma.hbm_to_vmem [thread:$0]  %s4, 24576, %s351, [#allocation6], 768, 768, 48
        $region24: #{tpu_custom_call.1} parent=11 // pred_fallthru
          _
        // Predicated region
        $region25: #{tpu_custom_call.1} parent=11 // pred_check
          %p357 = pneg %p163
        $region26: #{tpu_custom_call.1} parent=11 // pred_check_branch
          %359 = sbr.rel (%p357) target = $region28
        $region27: #{tpu_custom_call.1} parent=11 // pred_region
          %s361 = ssub.s32 8192, 8192
          %362 = vsyncadd [#allocation9], %s361
          %s363 = sshll.u32 [#allocation8], 4
          %s364 = int_to_ptr.vmem [resolvable:$true] %s363
          %369 = dma.hbm_to_vmem [thread:$0]  %s5, 8192, %s364, [#allocation9], 256, 256, 16
        $region28: #{tpu_custom_call.1} parent=11 // pred_fallthru
          _
        // Predicated region
        $region29: #{tpu_custom_call.1} parent=11 // pred_check
          %p370 = pneg %p184
        $region30: #{tpu_custom_call.1} parent=11 // pred_check_branch
          %372 = sbr.rel (%p370) target = $region32
        $region31: #{tpu_custom_call.1} parent=11 // pred_region
          _
        $region32: #{tpu_custom_call.1} parent=11 // pred_fallthru
          _
        // Predicated region
        $region33: #{tpu_custom_call.1} parent=11 // pred_check
          %p373 = pneg %p205
        $region34: #{tpu_custom_call.1} parent=11 // pred_check_branch
          %375 = sbr.rel (%p373) target = $region36
        $region35: #{tpu_custom_call.1} parent=11 // pred_region
          _
        $region36: #{tpu_custom_call.1} parent=11 // pred_fallthru
          _
        // Predicated region
        $region37: #{tpu_custom_call.1} parent=11 // pred_check
          %p376 = pneg %p226
        $region38: #{tpu_custom_call.1} parent=11 // pred_check_branch
          %378 = sbr.rel (%p376) target = $region40
        $region39: #{tpu_custom_call.1} parent=11 // pred_region
          %s380 = ssub.s32 16384, 16384
          %381 = vsyncadd [#allocation9], %s380
          %s382 = sshll.u32 [#allocation10], 4
          %s383 = int_to_ptr.vmem [resolvable:$true] %s382
          %388 = dma.hbm_to_vmem [thread:$0]  %s8, 16384, %s383, [#allocation9], 512, 512, 32
        $region40: #{tpu_custom_call.1} parent=11 // pred_fallthru
          _
        // Predicated region
        $region41: #{tpu_custom_call.1} parent=11 // pred_check
          %p389 = pneg %p247
        $region42: #{tpu_custom_call.1} parent=11 // pred_check_branch
          %391 = sbr.rel (%p389) target = $region44
        $region43: #{tpu_custom_call.1} parent=11 // pred_region
          _
        $region44: #{tpu_custom_call.1} parent=11 // pred_fallthru
          _
        // Predicated region
        $region45: #{tpu_custom_call.1} parent=11 // pred_check
          %p392 = pneg %p268
        $region46: #{tpu_custom_call.1} parent=11 // pred_check_branch
          %394 = sbr.rel (%p392) target = $region48
        $region47: #{tpu_custom_call.1} parent=11 // pred_region
          %s396 = ssub.s32 16384, 16384
          %397 = vsyncadd [#allocation12], %s396
          %s398 = sshll.u32 [#allocation11], 4
          %s399 = int_to_ptr.vmem [resolvable:$true] %s398
          %404 = dma.hbm_to_vmem [thread:$0]  %s10, 16384, %s399, [#allocation12], 256, 256, 16
        $region48: #{tpu_custom_call.1} parent=11 // pred_fallthru
          _
        // Predicated region
        $region49: #{tpu_custom_call.1} parent=11 // pred_check
          %p405 = pneg %p289
        $region50: #{tpu_custom_call.1} parent=11 // pred_check_branch
          %407 = sbr.rel (%p405) target = $region52
        $region51: #{tpu_custom_call.1} parent=11 // pred_region
          _
        $region52: #{tpu_custom_call.1} parent=11 // pred_fallthru
          _
      $region12: #{tpu_custom_call.1} parent=5 // pred_fallthru
        _
      %p408 = scmp.lt.s32.totalorder %s27, 2
      // Predicated region
      $region53: #{tpu_custom_call.1} parent=5 // pred_check
        %p409 = pneg %p408
      $region54: #{tpu_custom_call.1} parent=5 // pred_check_branch
        %411 = sbr.rel (%p409) target = $region56
      $region55: #{tpu_custom_call.1} parent=5 // pred_region
        // Predicated region
        $region57: #{tpu_custom_call.1} parent=55 // pred_check
          %p412 = pneg %p47
        $region58: #{tpu_custom_call.1} parent=55 // pred_check_branch
          %414 = sbr.rel (%p412) target = $region60
        $region59: #{tpu_custom_call.1} parent=55 // pred_region
          %s415 = sand.u32 %s37, 1
          %s416 = scalar_lea.sflag [#allocation3], %s415
          %s417 = sand.u32 %s37, 1
          %s418 = smul.addr %s417, 256
          %s419 = scalar_lea.vmem [#allocation2], %s418
          %s421 = ssub.s32 4096, 4096
          %422 = vsyncadd %s416, %s421
          %s423 = smul.addr %s27, 32
          %s424 = smul.addr %s423, 128
          %s425 = scalar_lea.hbm %s0, %s424
          %s426 = sshll.u32 %s419, 4
          %s427 = int_to_ptr.vmem [resolvable:$true] %s426
          %432 = dma.hbm_to_vmem [thread:$0]  %s425, 4096, %s427, %s416, 256, 256, 16
        $region60: #{tpu_custom_call.1} parent=55 // pred_fallthru
          _
        // Predicated region
        $region61: #{tpu_custom_call.1} parent=55 // pred_check
          %p433 = pneg %p73
        $region62: #{tpu_custom_call.1} parent=55 // pred_check_branch
          %435 = sbr.rel (%p433) target = $region64
        $region63: #{tpu_custom_call.1} parent=55 // pred_region
          %p436 = scmp.lt.s32.totalorder %s27, 1
          %s437 = scalar_select %p436, %s27, 1
          %s438 = scalar_lea.vmem %s1, %s437
        $region64: #{tpu_custom_call.1} parent=55 // pred_fallthru
          _
      $region56: #{tpu_custom_call.1} parent=5 // pred_fallthru
        _
      %p439 = scmp.le.s32.totalorder 1, %s27
      %p440 = scmp.lt.s32.totalorder %s27, 3
      %p441 = pnand %p439, %p440
      %p442 = pneg %p441
      // Predicated region
      $region65: #{tpu_custom_call.1} parent=5 // pred_check
        _
      $region66: #{tpu_custom_call.1} parent=5 // pred_check_branch
        %444 = sbr.rel (%p441) target = $region68
      $region67: #{tpu_custom_call.1} parent=5 // pred_region
        %s445 = ssub.s32 %s27, 1
        %s446 = sand.u32 %s40, 1
        %s447 = scalar_lea.sflag [#allocation3], %s446
        %s448 = sand.u32 %s40, 1
        %s449 = smul.addr %s448, 256
        %s450 = scalar_lea.vmem [#allocation2], %s449
        // Predicated region
        $region69: #{tpu_custom_call.1} parent=67 // pred_check
          %p451 = pneg %p53
        $region70: #{tpu_custom_call.1} parent=67 // pred_check_branch
          %453 = sbr.rel (%p451) target = $region72
        $region71: #{tpu_custom_call.1} parent=67 // pred_region
          %454 = dma.done %s447, 4096
        $region72: #{tpu_custom_call.1} parent=67 // pred_fallthru
          _
        // Predicated region
        $region73: #{tpu_custom_call.1} parent=67 // pred_check
          %p455 = pneg %p100
        $region74: #{tpu_custom_call.1} parent=67 // pred_check_branch
          %457 = sbr.rel (%p455) target = $region76
        $region75: #{tpu_custom_call.1} parent=67 // pred_region
          %458 = dma.done [#allocation6], 32
        $region76: #{tpu_custom_call.1} parent=67 // pred_fallthru
          _
        // Predicated region
        $region77: #{tpu_custom_call.1} parent=67 // pred_check
          %p459 = pneg %p142
        $region78: #{tpu_custom_call.1} parent=67 // pred_check_branch
          %461 = sbr.rel (%p459) target = $region80
        $region79: #{tpu_custom_call.1} parent=67 // pred_region
          %462 = dma.done [#allocation6], 24576
        $region80: #{tpu_custom_call.1} parent=67 // pred_fallthru
          _
        // Predicated region
        $region81: #{tpu_custom_call.1} parent=67 // pred_check
          %p463 = pneg %p163
        $region82: #{tpu_custom_call.1} parent=67 // pred_check_branch
          %465 = sbr.rel (%p463) target = $region84
        $region83: #{tpu_custom_call.1} parent=67 // pred_region
          %466 = dma.done [#allocation9], 8192
        $region84: #{tpu_custom_call.1} parent=67 // pred_fallthru
          _
        // Predicated region
        $region85: #{tpu_custom_call.1} parent=67 // pred_check
          %p467 = pneg %p226
        $region86: #{tpu_custom_call.1} parent=67 // pred_check_branch
          %469 = sbr.rel (%p467) target = $region88
        $region87: #{tpu_custom_call.1} parent=67 // pred_region
          %470 = dma.done [#allocation9], 16384
        $region88: #{tpu_custom_call.1} parent=67 // pred_fallthru
          _
        // Predicated region
        $region89: #{tpu_custom_call.1} parent=67 // pred_check
          %p471 = pneg %p268
        $region90: #{tpu_custom_call.1} parent=67 // pred_check_branch
          %473 = sbr.rel (%p471) target = $region92
        $region91: #{tpu_custom_call.1} parent=67 // pred_region
          %474 = dma.done [#allocation12], 16384
        $region92: #{tpu_custom_call.1} parent=67 // pred_fallthru
          _
        %s475 = sand.u32 %s40, 1
        %s476 = scalar_lea.sflag [#allocation3], %s475
        %s477 = sand.u32 %s40, 1
        %s478 = smul.addr %s477, 256
        %s479 = scalar_lea.vmem [#allocation2], %s478
        %p480 = pneg %p53
        %p481 = pneg %p50
        %p482 = scmp.lt.s32.totalorder %s32, 1
        %s483 = scalar_select %p482, %s32, 1
        %s484 = scalar_lea.vmem %s1, %s483
        %p485 = pneg %p79
        %p486 = pneg %p76
        %p487 = pneg %p100
        %p488 = pneg %p97
        %p489 = pneg %p121
        %p490 = pneg %p118
        %p491 = pneg %p142
        %p492 = pneg %p139
        %p493 = pneg %p163
        %p494 = pneg %p160
        %p495 = pneg %p184
        %p496 = pneg %p181
        %p497 = pneg %p205
        %p498 = pneg %p202
        %p499 = pneg %p226
        %p500 = pneg %p223
        %p501 = pneg %p247
        %p502 = pneg %p244
        %p503 = pneg %p268
        %p504 = pneg %p265
        %p505 = pneg %p289
        %p506 = pneg %p286
        %p507 = pneg %p315
        %p508 = pneg %p312
        %s509 = sand.u32 %s302, 1
        %s510 = scalar_lea.sflag [#allocation4], %s509
        %s511 = sand.u32 %s302, 1
        %s512 = smul.addr %s511, 256
        %s513 = scalar_lea.vmem [#allocation13], %s512
        %p514 = scmp.lt.s32.totalorder %s32, 1
        %s515 = scalar_select %p514, %s32, 1
        %s516 = scalar_lea.vmem %s1, %s515
        %v517 = vld [vmem:[%s450] sm:$0xff]
        %v518 = vld [vmem:[%s450 + $0x8] sm:$0xff]
        %v519 = vld [vmem:[%s450 + $0x10] sm:$0xff]
        %v520 = vld [vmem:[%s450 + $0x18] sm:$0xff]
        %v521 = vld [vmem:[%s450 + $0x20] sm:$0xff]
        %v522 = vld [vmem:[%s450 + $0x28] sm:$0xff]
        %v523 = vld [vmem:[%s450 + $0x30] sm:$0xff]
        %v524 = vld [vmem:[%s450 + $0x38] sm:$0xff]
        %v525 = vld [vmem:[%s450 + $0x40] sm:$0xff]
        %v526 = vld [vmem:[%s450 + $0x48] sm:$0xff]
        %v527 = vld [vmem:[%s450 + $0x50] sm:$0xff]
        %v528 = vld [vmem:[%s450 + $0x58] sm:$0xff]
        %v529 = vld [vmem:[%s450 + $0x60] sm:$0xff]
        %v530 = vld [vmem:[%s450 + $0x68] sm:$0xff]
        %v531 = vld [vmem:[%s450 + $0x70] sm:$0xff]
        %v532 = vld [vmem:[%s450 + $0x78] sm:$0xff]
        %v533 = vld [vmem:[%s450 + $0x80] sm:$0xff]
        %v534 = vld [vmem:[%s450 + $0x88] sm:$0xff]
        %v535 = vld [vmem:[%s450 + $0x90] sm:$0xff]
        %v536 = vld [vmem:[%s450 + $0x98] sm:$0xff]
        %v537 = vld [vmem:[%s450 + $0xa0] sm:$0xff]
        %v538 = vld [vmem:[%s450 + $0xa8] sm:$0xff]
        %v539 = vld [vmem:[%s450 + $0xb0] sm:$0xff]
        %v540 = vld [vmem:[%s450 + $0xb8] sm:$0xff]
        %v541 = vld [vmem:[%s450 + $0xc0] sm:$0xff]
        %v542 = vld [vmem:[%s450 + $0xc8] sm:$0xff]
        %v543 = vld [vmem:[%s450 + $0xd0] sm:$0xff]
        %v544 = vld [vmem:[%s450 + $0xd8] sm:$0xff]
        %v545 = vld [vmem:[%s450 + $0xe0] sm:$0xff]
        %v546 = vld [vmem:[%s450 + $0xe8] sm:$0xff]
        %v547 = vld [vmem:[%s450 + $0xf0] sm:$0xff]
        %v548 = vld [vmem:[%s450 + $0xf8] sm:$0xff]
        %v549 = vld [vmem:[%s516] sm:$0x1]
        %v550 = vld [vmem:[#allocation5] sm:$0x3]
        %v551 = vld [vmem:[%s3] sm:$0x3]
        %v552 = vadd.f32 %v517, %v518
        %553 = vadd.xlane.f32.xlu0 %v552
        %v554 = vpop.xlane.xlu0 %553
        %v555 = vadd.f32 %v519, %v520
        %556 = vadd.xlane.f32.xlu0 %v555
        %v557 = vpop.xlane.xlu0 %556
        %v558 = vadd.f32 %v521, %v522
        %559 = vadd.xlane.f32.xlu0 %v558
        %v560 = vpop.xlane.xlu0 %559
        %v561 = vadd.f32 %v523, %v524
        %562 = vadd.xlane.f32.xlu0 %v561
        %v563 = vpop.xlane.xlu0 %562
        %v564 = vadd.f32 %v525, %v526
        %565 = vadd.xlane.f32.xlu0 %v564
        %v566 = vpop.xlane.xlu0 %565
        %v567 = vadd.f32 %v527, %v528
        %568 = vadd.xlane.f32.xlu0 %v567
        %v569 = vpop.xlane.xlu0 %568
        %v570 = vadd.f32 %v529, %v530
        %571 = vadd.xlane.f32.xlu0 %v570
        %v572 = vpop.xlane.xlu0 %571
        %v573 = vadd.f32 %v531, %v532
        %574 = vadd.xlane.f32.xlu0 %v573
        %v575 = vpop.xlane.xlu0 %574
        %v576 = vadd.f32 %v533, %v534
        %577 = vadd.xlane.f32.xlu0 %v576
        %v578 = vpop.xlane.xlu0 %577
        %v579 = vadd.f32 %v535, %v536
        %580 = vadd.xlane.f32.xlu0 %v579
        %v581 = vpop.xlane.xlu0 %580
        %v582 = vadd.f32 %v537, %v538
        %583 = vadd.xlane.f32.xlu0 %v582
        %v584 = vpop.xlane.xlu0 %583
        %v585 = vadd.f32 %v539, %v540
        %586 = vadd.xlane.f32.xlu0 %v585
        %v587 = vpop.xlane.xlu0 %586
        %v588 = vadd.f32 %v541, %v542
        %589 = vadd.xlane.f32.xlu0 %v588
        %v590 = vpop.xlane.xlu0 %589
        %v591 = vadd.f32 %v543, %v544
        %592 = vadd.xlane.f32.xlu0 %v591
        %v593 = vpop.xlane.xlu0 %592
        %v594 = vadd.f32 %v545, %v546
        %595 = vadd.xlane.f32.xlu0 %v594
        %v596 = vpop.xlane.xlu0 %595
        %v597 = vadd.f32 %v547, %v548
        %598 = vadd.xlane.f32.xlu0 %v597
        %v599 = vpop.xlane.xlu0 %598
        %v600 = vrcp.pop 256.0
        %v601 = vmul.f32 %v554, %v600
        %v602 = vmul.f32 %v557, %v600
        %v603 = vmul.f32 %v560, %v600
        %v604 = vmul.f32 %v563, %v600
        %v605 = vmul.f32 %v566, %v600
        %v606 = vmul.f32 %v569, %v600
        %v607 = vmul.f32 %v572, %v600
        %v608 = vmul.f32 %v575, %v600
        %v609 = vmul.f32 %v578, %v600
        %v610 = vmul.f32 %v581, %v600
        %v611 = vmul.f32 %v584, %v600
        %v612 = vmul.f32 %v587, %v600
        %v613 = vmul.f32 %v590, %v600
        %v614 = vmul.f32 %v593, %v600
        %v615 = vmul.f32 %v596, %v600
        %v616 = vmul.f32 %v599, %v600
        %v617 = vsub.f32 %v517, %v601
        %v618 = vsub.f32 %v518, %v601
        %v619 = vsub.f32 %v519, %v602
        %v620 = vsub.f32 %v520, %v602
        %v621 = vsub.f32 %v521, %v603
        %v622 = vsub.f32 %v522, %v603
        %v623 = vsub.f32 %v523, %v604
        %v624 = vsub.f32 %v524, %v604
        %v625 = vsub.f32 %v525, %v605
        %v626 = vsub.f32 %v526, %v605
        %v627 = vsub.f32 %v527, %v606
        %v628 = vsub.f32 %v528, %v606
        %v629 = vsub.f32 %v529, %v607
        %v630 = vsub.f32 %v530, %v607
        %v631 = vsub.f32 %v531, %v608
        %v632 = vsub.f32 %v532, %v608
        %v633 = vsub.f32 %v533, %v609
        %v634 = vsub.f32 %v534, %v609
        %v635 = vsub.f32 %v535, %v610
        %v636 = vsub.f32 %v536, %v610
        %v637 = vsub.f32 %v537, %v611
        %v638 = vsub.f32 %v538, %v611
        %v639 = vsub.f32 %v539, %v612
        %v640 = vsub.f32 %v540, %v612
        %v641 = vsub.f32 %v541, %v613
        %v642 = vsub.f32 %v542, %v613
        %v643 = vsub.f32 %v543, %v614
        %v644 = vsub.f32 %v544, %v614
        %v645 = vsub.f32 %v545, %v615
        %v646 = vsub.f32 %v546, %v615
        %v647 = vsub.f32 %v547, %v616
        %v648 = vsub.f32 %v548, %v616
        %v649 = vmul.f32 %v617, %v617
        %v650 = vmul.f32 %v618, %v618
        %v651 = vmul.f32 %v619, %v619
        %v652 = vmul.f32 %v620, %v620
        %v653 = vmul.f32 %v621, %v621
        %v654 = vmul.f32 %v622, %v622
        %v655 = vmul.f32 %v623, %v623
        %v656 = vmul.f32 %v624, %v624
        %v657 = vmul.f32 %v625, %v625
        %v658 = vmul.f32 %v626, %v626
        %v659 = vmul.f32 %v627, %v627
        %v660 = vmul.f32 %v628, %v628
        %v661 = vmul.f32 %v629, %v629
        %v662 = vmul.f32 %v630, %v630
        %v663 = vmul.f32 %v631, %v631
        %v664 = vmul.f32 %v632, %v632
        %v665 = vmul.f32 %v633, %v633
        %v666 = vmul.f32 %v634, %v634
        %v667 = vmul.f32 %v635, %v635
        %v668 = vmul.f32 %v636, %v636
        %v669 = vmul.f32 %v637, %v637
        %v670 = vmul.f32 %v638, %v638
        %v671 = vmul.f32 %v639, %v639
        %v672 = vmul.f32 %v640, %v640
        %v673 = vmul.f32 %v641, %v641
        %v674 = vmul.f32 %v642, %v642
        %v675 = vmul.f32 %v643, %v643
        %v676 = vmul.f32 %v644, %v644
        %v677 = vmul.f32 %v645, %v645
        %v678 = vmul.f32 %v646, %v646
        %v679 = vmul.f32 %v647, %v647
        %v680 = vmul.f32 %v648, %v648
        %v681 = vadd.f32 %v649, %v650
        %682 = vadd.xlane.f32.xlu0 %v681
        %v683 = vpop.xlane.xlu0 %682
        %v684 = vadd.f32 %v651, %v652
        %685 = vadd.xlane.f32.xlu0 %v684
        %v686 = vpop.xlane.xlu0 %685
        %v687 = vadd.f32 %v653, %v654
        %688 = vadd.xlane.f32.xlu0 %v687
        %v689 = vpop.xlane.xlu0 %688
        %v690 = vadd.f32 %v655, %v656
        %691 = vadd.xlane.f32.xlu0 %v690
        %v692 = vpop.xlane.xlu0 %691
        %v693 = vadd.f32 %v657, %v658
        %694 = vadd.xlane.f32.xlu0 %v693
        %v695 = vpop.xlane.xlu0 %694
        %v696 = vadd.f32 %v659, %v660
        %697 = vadd.xlane.f32.xlu0 %v696
        %v698 = vpop.xlane.xlu0 %697
        %v699 = vadd.f32 %v661, %v662
        %700 = vadd.xlane.f32.xlu0 %v699
        %v701 = vpop.xlane.xlu0 %700
        %v702 = vadd.f32 %v663, %v664
        %703 = vadd.xlane.f32.xlu0 %v702
        %v704 = vpop.xlane.xlu0 %703
        %v705 = vadd.f32 %v665, %v666
        %706 = vadd.xlane.f32.xlu0 %v705
        %v707 = vpop.xlane.xlu0 %706
        %v708 = vadd.f32 %v667, %v668
        %709 = vadd.xlane.f32.xlu0 %v708
        %v710 = vpop.xlane.xlu0 %709
        %v711 = vadd.f32 %v669, %v670
        %712 = vadd.xlane.f32.xlu0 %v711
        %v713 = vpop.xlane.xlu0 %712
        %v714 = vadd.f32 %v671, %v672
        %715 = vadd.xlane.f32.xlu0 %v714
        %v716 = vpop.xlane.xlu0 %715
        %v717 = vadd.f32 %v673, %v674
        %718 = vadd.xlane.f32.xlu0 %v717
        %v719 = vpop.xlane.xlu0 %718
        %v720 = vadd.f32 %v675, %v676
        %721 = vadd.xlane.f32.xlu0 %v720
        %v722 = vpop.xlane.xlu0 %721
        %v723 = vadd.f32 %v677, %v678
        %724 = vadd.xlane.f32.xlu0 %v723
        %v725 = vpop.xlane.xlu0 %724
        %v726 = vadd.f32 %v679, %v680
        %727 = vadd.xlane.f32.xlu0 %v726
        %v728 = vpop.xlane.xlu0 %727
        %v729 = vrcp.pop 255.0
        %v730 = vmul.f32 %v683, %v729
        %v731 = vmul.f32 %v686, %v729
        %v732 = vmul.f32 %v689, %v729
        %v733 = vmul.f32 %v692, %v729
        %v734 = vmul.f32 %v695, %v729
        %v735 = vmul.f32 %v698, %v729
        %v736 = vmul.f32 %v701, %v729
        %v737 = vmul.f32 %v704, %v729
        %v738 = vmul.f32 %v707, %v729
        %v739 = vmul.f32 %v710, %v729
        %v740 = vmul.f32 %v713, %v729
        %v741 = vmul.f32 %v716, %v729
        %v742 = vmul.f32 %v719, %v729
        %v743 = vmul.f32 %v722, %v729
        %v744 = vmul.f32 %v725, %v729
        %v745 = vmul.f32 %v728, %v729
        %v746 = vrsqrt.pop %v730
        %v747 = vmul.f32 %v730, %v746
        %vm748 = vcmp.eq.f32.partialorder %v730, inf
        %v749 = vsel %vm748, %v730, %v747
        %vm750 = vcmp.eq.f32.partialorder %v730, 0.0
        %v751 = vand.u32 %v730, 2147483648
        %v752 = vsel %vm750, %v751, %v749
        %v753 = vrsqrt.pop %v731
        %v754 = vmul.f32 %v731, %v753
        %vm755 = vcmp.eq.f32.partialorder %v731, inf
        %v756 = vsel %vm755, %v731, %v754
        %vm757 = vcmp.eq.f32.partialorder %v731, 0.0
        %v758 = vand.u32 %v731, 2147483648
        %v759 = vsel %vm757, %v758, %v756
        %v760 = vrsqrt.pop %v732
        %v761 = vmul.f32 %v732, %v760
        %vm762 = vcmp.eq.f32.partialorder %v732, inf
        %v763 = vsel %vm762, %v732, %v761
        %vm764 = vcmp.eq.f32.partialorder %v732, 0.0
        %v765 = vand.u32 %v732, 2147483648
        %v766 = vsel %vm764, %v765, %v763
        %v767 = vrsqrt.pop %v733
        %v768 = vmul.f32 %v733, %v767
        %vm769 = vcmp.eq.f32.partialorder %v733, inf
        %v770 = vsel %vm769, %v733, %v768
        %vm771 = vcmp.eq.f32.partialorder %v733, 0.0
        %v772 = vand.u32 %v733, 2147483648
        %v773 = vsel %vm771, %v772, %v770
        %v774 = vrsqrt.pop %v734
        %v775 = vmul.f32 %v734, %v774
        %vm776 = vcmp.eq.f32.partialorder %v734, inf
        %v777 = vsel %vm776, %v734, %v775
        %vm778 = vcmp.eq.f32.partialorder %v734, 0.0
        %v779 = vand.u32 %v734, 2147483648
        %v780 = vsel %vm778, %v779, %v777
        %v781 = vrsqrt.pop %v735
        %v782 = vmul.f32 %v735, %v781
        %vm783 = vcmp.eq.f32.partialorder %v735, inf
        %v784 = vsel %vm783, %v735, %v782
        %vm785 = vcmp.eq.f32.partialorder %v735, 0.0
        %v786 = vand.u32 %v735, 2147483648
        %v787 = vsel %vm785, %v786, %v784
        %v788 = vrsqrt.pop %v736
        %v789 = vmul.f32 %v736, %v788
        %vm790 = vcmp.eq.f32.partialorder %v736, inf
        %v791 = vsel %vm790, %v736, %v789
        %vm792 = vcmp.eq.f32.partialorder %v736, 0.0
        %v793 = vand.u32 %v736, 2147483648
        %v794 = vsel %vm792, %v793, %v791
        %v795 = vrsqrt.pop %v737
        %v796 = vmul.f32 %v737, %v795
        %vm797 = vcmp.eq.f32.partialorder %v737, inf
        %v798 = vsel %vm797, %v737, %v796
        %vm799 = vcmp.eq.f32.partialorder %v737, 0.0
        %v800 = vand.u32 %v737, 2147483648
        %v801 = vsel %vm799, %v800, %v798
        %v802 = vrsqrt.pop %v738
        %v803 = vmul.f32 %v738, %v802
        %vm804 = vcmp.eq.f32.partialorder %v738, inf
        %v805 = vsel %vm804, %v738, %v803
        %vm806 = vcmp.eq.f32.partialorder %v738, 0.0
        %v807 = vand.u32 %v738, 2147483648
        %v808 = vsel %vm806, %v807, %v805
        %v809 = vrsqrt.pop %v739
        %v810 = vmul.f32 %v739, %v809
        %vm811 = vcmp.eq.f32.partialorder %v739, inf
        %v812 = vsel %vm811, %v739, %v810
        %vm813 = vcmp.eq.f32.partialorder %v739, 0.0
        %v814 = vand.u32 %v739, 2147483648
        %v815 = vsel %vm813, %v814, %v812
        %v816 = vrsqrt.pop %v740
        %v817 = vmul.f32 %v740, %v816
        %vm818 = vcmp.eq.f32.partialorder %v740, inf
        %v819 = vsel %vm818, %v740, %v817
        %vm820 = vcmp.eq.f32.partialorder %v740, 0.0
        %v821 = vand.u32 %v740, 2147483648
        %v822 = vsel %vm820, %v821, %v819
        %v823 = vrsqrt.pop %v741
        %v824 = vmul.f32 %v741, %v823
        %vm825 = vcmp.eq.f32.partialorder %v741, inf
        %v826 = vsel %vm825, %v741, %v824
        %vm827 = vcmp.eq.f32.partialorder %v741, 0.0
        %v828 = vand.u32 %v741, 2147483648
        %v829 = vsel %vm827, %v828, %v826
        %v830 = vrsqrt.pop %v742
        %v831 = vmul.f32 %v742, %v830
        %vm832 = vcmp.eq.f32.partialorder %v742, inf
        %v833 = vsel %vm832, %v742, %v831
        %vm834 = vcmp.eq.f32.partialorder %v742, 0.0
        %v835 = vand.u32 %v742, 2147483648
        %v836 = vsel %vm834, %v835, %v833
        %v837 = vrsqrt.pop %v743
        %v838 = vmul.f32 %v743, %v837
        %vm839 = vcmp.eq.f32.partialorder %v743, inf
        %v840 = vsel %vm839, %v743, %v838
        %vm841 = vcmp.eq.f32.partialorder %v743, 0.0
        %v842 = vand.u32 %v743, 2147483648
        %v843 = vsel %vm841, %v842, %v840
        %v844 = vrsqrt.pop %v744
        %v845 = vmul.f32 %v744, %v844
        %vm846 = vcmp.eq.f32.partialorder %v744, inf
        %v847 = vsel %vm846, %v744, %v845
        %vm848 = vcmp.eq.f32.partialorder %v744, 0.0
        %v849 = vand.u32 %v744, 2147483648
        %v850 = vsel %vm848, %v849, %v847
        %v851 = vrsqrt.pop %v745
        %v852 = vmul.f32 %v745, %v851
        %vm853 = vcmp.eq.f32.partialorder %v745, inf
        %v854 = vsel %vm853, %v745, %v852
        %vm855 = vcmp.eq.f32.partialorder %v745, 0.0
        %v856 = vand.u32 %v745, 2147483648
        %v857 = vsel %vm855, %v856, %v854
        %v859 = vlaneseq
        %v860 = vshrl.u32 %v859, 7
        %v861 = vsub.s32 0, %v860
        %v862 = vrot.slane %v550, %v861
        %v863 = vlaneseq
        %v864 = vshrl.u32 %v863, 7
        %v865 = vsub.s32 1, %v864
        %v866 = vrot.slane %v550, %v865
        %v869 = vmul.f32 %v862, %v617
        %v870 = vmul.f32 %v866, %v618
        %v871 = vmul.f32 %v862, %v619
        %v872 = vmul.f32 %v866, %v620
        %v873 = vmul.f32 %v862, %v621
        %v874 = vmul.f32 %v866, %v622
        %v875 = vmul.f32 %v862, %v623
        %v876 = vmul.f32 %v866, %v624
        %v877 = vmul.f32 %v862, %v625
        %v878 = vmul.f32 %v866, %v626
        %v879 = vmul.f32 %v862, %v627
        %v880 = vmul.f32 %v866, %v628
        %v881 = vmul.f32 %v862, %v629
        %v882 = vmul.f32 %v866, %v630
        %v883 = vmul.f32 %v862, %v631
        %v884 = vmul.f32 %v866, %v632
        %v885 = vmul.f32 %v862, %v633
        %v886 = vmul.f32 %v866, %v634
        %v887 = vmul.f32 %v862, %v635
        %v888 = vmul.f32 %v866, %v636
        %v889 = vmul.f32 %v862, %v637
        %v890 = vmul.f32 %v866, %v638
        %v891 = vmul.f32 %v862, %v639
        %v892 = vmul.f32 %v866, %v640
        %v893 = vmul.f32 %v862, %v641
        %v894 = vmul.f32 %v866, %v642
        %v895 = vmul.f32 %v862, %v643
        %v896 = vmul.f32 %v866, %v644
        %v897 = vmul.f32 %v862, %v645
        %v898 = vmul.f32 %v866, %v646
        %v899 = vmul.f32 %v862, %v647
        %v900 = vmul.f32 %v866, %v648
        %v901 = vadd.f32 %v752, 1e-06
        %v902 = vadd.f32 %v759, 1e-06
        %v903 = vadd.f32 %v766, 1e-06
        %v904 = vadd.f32 %v773, 1e-06
        %v905 = vadd.f32 %v780, 1e-06
        %v906 = vadd.f32 %v787, 1e-06
        %v907 = vadd.f32 %v794, 1e-06
        %v908 = vadd.f32 %v801, 1e-06
        %v909 = vadd.f32 %v808, 1e-06
        %v910 = vadd.f32 %v815, 1e-06
        %v911 = vadd.f32 %v822, 1e-06
        %v912 = vadd.f32 %v829, 1e-06
        %v913 = vadd.f32 %v836, 1e-06
        %v914 = vadd.f32 %v843, 1e-06
        %v915 = vadd.f32 %v850, 1e-06
        %v916 = vadd.f32 %v857, 1e-06
        %v917 = vrcp.pop %v901
        %v918 = vmul.f32 %v869, %v917
        %v919 = vmul.f32 %v870, %v917
        %v920 = vrcp.pop %v902
        %v921 = vmul.f32 %v871, %v920
        %v922 = vmul.f32 %v872, %v920
        %v923 = vrcp.pop %v903
        %v924 = vmul.f32 %v873, %v923
        %v925 = vmul.f32 %v874, %v923
        %v926 = vrcp.pop %v904
        %v927 = vmul.f32 %v875, %v926
        %v928 = vmul.f32 %v876, %v926
        %v929 = vrcp.pop %v905
        %v930 = vmul.f32 %v877, %v929
        %v931 = vmul.f32 %v878, %v929
        %v932 = vrcp.pop %v906
        %v933 = vmul.f32 %v879, %v932
        %v934 = vmul.f32 %v880, %v932
        %v935 = vrcp.pop %v907
        %v936 = vmul.f32 %v881, %v935
        %v937 = vmul.f32 %v882, %v935
        %v938 = vrcp.pop %v908
        %v939 = vmul.f32 %v883, %v938
        %v940 = vmul.f32 %v884, %v938
        %v941 = vrcp.pop %v909
        %v942 = vmul.f32 %v885, %v941
        %v943 = vmul.f32 %v886, %v941
        %v944 = vrcp.pop %v910
        %v945 = vmul.f32 %v887, %v944
        %v946 = vmul.f32 %v888, %v944
        %v947 = vrcp.pop %v911
        %v948 = vmul.f32 %v889, %v947
        %v949 = vmul.f32 %v890, %v947
        %v950 = vrcp.pop %v912
        %v951 = vmul.f32 %v891, %v950
        %v952 = vmul.f32 %v892, %v950
        %v953 = vrcp.pop %v913
        %v954 = vmul.f32 %v893, %v953
        %v955 = vmul.f32 %v894, %v953
        %v956 = vrcp.pop %v914
        %v957 = vmul.f32 %v895, %v956
        %v958 = vmul.f32 %v896, %v956
        %v959 = vrcp.pop %v915
        %v960 = vmul.f32 %v897, %v959
        %v961 = vmul.f32 %v898, %v959
        %v962 = vrcp.pop %v916
        %v963 = vmul.f32 %v899, %v962
        %v964 = vmul.f32 %v900, %v962
        %v966 = vlaneseq
        %v967 = vshrl.u32 %v966, 7
        %v968 = vsub.s32 0, %v967
        %v969 = vrot.slane %v551, %v968
        %v970 = vlaneseq
        %v971 = vshrl.u32 %v970, 7
        %v972 = vsub.s32 1, %v971
        %v973 = vrot.slane %v551, %v972
        %v976 = vadd.f32 %v918, %v969
        %v977 = vadd.f32 %v919, %v973
        %v978 = vadd.f32 %v921, %v969
        %v979 = vadd.f32 %v922, %v973
        %v980 = vadd.f32 %v924, %v969
        %v981 = vadd.f32 %v925, %v973
        %v982 = vadd.f32 %v927, %v969
        %v983 = vadd.f32 %v928, %v973
        %v984 = vadd.f32 %v930, %v969
        %v985 = vadd.f32 %v931, %v973
        %v986 = vadd.f32 %v933, %v969
        %v987 = vadd.f32 %v934, %v973
        %v988 = vadd.f32 %v936, %v969
        %v989 = vadd.f32 %v937, %v973
        %v990 = vadd.f32 %v939, %v969
        %v991 = vadd.f32 %v940, %v973
        %v992 = vadd.f32 %v942, %v969
        %v993 = vadd.f32 %v943, %v973
        %v994 = vadd.f32 %v945, %v969
        %v995 = vadd.f32 %v946, %v973
        %v996 = vadd.f32 %v948, %v969
        %v997 = vadd.f32 %v949, %v973
        %v998 = vadd.f32 %v951, %v969
        %v999 = vadd.f32 %v952, %v973
        %v1000 = vadd.f32 %v954, %v969
        %v1001 = vadd.f32 %v955, %v973
        %v1002 = vadd.f32 %v957, %v969
        %v1003 = vadd.f32 %v958, %v973
        %v1004 = vadd.f32 %v960, %v969
        %v1005 = vadd.f32 %v961, %v973
        %v1006 = vadd.f32 %v963, %v969
        %v1007 = vadd.f32 %v964, %v973
        %v1008 = vld [vmem:[#allocation7] sm:$0xff]
        %v1009 = vld [vmem:[#allocation7 + $0x8] sm:$0xff]
        %v1010 = vld [vmem:[#allocation7 + $0x10] sm:$0xff]
        %v1011 = vld [vmem:[#allocation7 + $0x18] sm:$0xff]
        %v1012 = vld [vmem:[#allocation7 + $0x20] sm:$0xff]
        %v1013 = vld [vmem:[#allocation7 + $0x28] sm:$0xff]
        %v1014 = vld [vmem:[#allocation7 + $0x30] sm:$0xff]
        %v1015 = vld [vmem:[#allocation7 + $0x38] sm:$0xff]
        %v1016 = vld [vmem:[#allocation7 + $0x40] sm:$0xff]
        %v1017 = vld [vmem:[#allocation7 + $0x48] sm:$0xff]
        %v1018 = vld [vmem:[#allocation7 + $0x50] sm:$0xff]
        %v1019 = vld [vmem:[#allocation7 + $0x58] sm:$0xff]
        %v1020 = vld [vmem:[#allocation7 + $0x60] sm:$0xff]
        %v1021 = vld [vmem:[#allocation7 + $0x68] sm:$0xff]
        %v1022 = vld [vmem:[#allocation7 + $0x70] sm:$0xff]
        %v1023 = vld [vmem:[#allocation7 + $0x78] sm:$0xff]
        %v1024 = vld [vmem:[#allocation7 + $0x80] sm:$0xff]
        %v1025 = vld [vmem:[#allocation7 + $0x88] sm:$0xff]
        %v1026 = vld [vmem:[#allocation7 + $0x90] sm:$0xff]
        %v1027 = vld [vmem:[#allocation7 + $0x98] sm:$0xff]
        %v1028 = vld [vmem:[#allocation7 + $0xa0] sm:$0xff]
        %v1029 = vld [vmem:[#allocation7 + $0xa8] sm:$0xff]
        %v1030 = vld [vmem:[#allocation7 + $0xb0] sm:$0xff]
        %v1031 = vld [vmem:[#allocation7 + $0xb8] sm:$0xff]
        %v1032 = vld [vmem:[#allocation7 + $0xc0] sm:$0xff]
        %v1033 = vld [vmem:[#allocation7 + $0xc8] sm:$0xff]
        %v1034 = vld [vmem:[#allocation7 + $0xd0] sm:$0xff]
        %v1035 = vld [vmem:[#allocation7 + $0xd8] sm:$0xff]
        %v1036 = vld [vmem:[#allocation7 + $0xe0] sm:$0xff]
        %v1037 = vld [vmem:[#allocation7 + $0xe8] sm:$0xff]
        %v1038 = vld [vmem:[#allocation7 + $0xf0] sm:$0xff]
        %v1039 = vld [vmem:[#allocation7 + $0xf8] sm:$0xff]
        %v1040 = vld [vmem:[#allocation7 + $0x100] sm:$0xff]
        %v1041 = vld [vmem:[#allocation7 + $0x108] sm:$0xff]
        %v1042 = vld [vmem:[#allocation7 + $0x110] sm:$0xff]
        %v1043 = vld [vmem:[#allocation7 + $0x118] sm:$0xff]
        %v1044 = vld [vmem:[#allocation7 + $0x120] sm:$0xff]
        %v1045 = vld [vmem:[#allocation7 + $0x128] sm:$0xff]
        %v1046 = vld [vmem:[#allocation7 + $0x130] sm:$0xff]
        %v1047 = vld [vmem:[#allocation7 + $0x138] sm:$0xff]
        %v1048 = vld [vmem:[#allocation7 + $0x140] sm:$0xff]
        %v1049 = vld [vmem:[#allocation7 + $0x148] sm:$0xff]
        %v1050 = vld [vmem:[#allocation7 + $0x150] sm:$0xff]
        %v1051 = vld [vmem:[#allocation7 + $0x158] sm:$0xff]
        %v1052 = vld [vmem:[#allocation7 + $0x160] sm:$0xff]
        %v1053 = vld [vmem:[#allocation7 + $0x168] sm:$0xff]
        %v1054 = vld [vmem:[#allocation7 + $0x170] sm:$0xff]
        %v1055 = vld [vmem:[#allocation7 + $0x178] sm:$0xff]
        %v1056 = vld [vmem:[#allocation7 + $0x180] sm:$0xff]
        %v1057 = vld [vmem:[#allocation7 + $0x188] sm:$0xff]
        %v1058 = vld [vmem:[#allocation7 + $0x190] sm:$0xff]
        %v1059 = vld [vmem:[#allocation7 + $0x198] sm:$0xff]
        %v1060 = vld [vmem:[#allocation7 + $0x1a0] sm:$0xff]
        %v1061 = vld [vmem:[#allocation7 + $0x1a8] sm:$0xff]
        %v1062 = vld [vmem:[#allocation7 + $0x1b0] sm:$0xff]
        %v1063 = vld [vmem:[#allocation7 + $0x1b8] sm:$0xff]
        %v1064 = vld [vmem:[#allocation7 + $0x1c0] sm:$0xff]
        %v1065 = vld [vmem:[#allocation7 + $0x1c8] sm:$0xff]
        %v1066 = vld [vmem:[#allocation7 + $0x1d0] sm:$0xff]
        %v1067 = vld [vmem:[#allocation7 + $0x1d8] sm:$0xff]
        %v1068 = vld [vmem:[#allocation7 + $0x1e0] sm:$0xff]
        %v1069 = vld [vmem:[#allocation7 + $0x1e8] sm:$0xff]
        %v1070 = vld [vmem:[#allocation7 + $0x1f0] sm:$0xff]
        %v1071 = vld [vmem:[#allocation7 + $0x1f8] sm:$0xff]
        %v1072 = vld [vmem:[#allocation7 + $0x200] sm:$0xff]
        %v1073 = vld [vmem:[#allocation7 + $0x208] sm:$0xff]
        %v1074 = vld [vmem:[#allocation7 + $0x210] sm:$0xff]
        %v1075 = vld [vmem:[#allocation7 + $0x218] sm:$0xff]
        %v1076 = vld [vmem:[#allocation7 + $0x220] sm:$0xff]
        %v1077 = vld [vmem:[#allocation7 + $0x228] sm:$0xff]
        %v1078 = vld [vmem:[#allocation7 + $0x230] sm:$0xff]
        %v1079 = vld [vmem:[#allocation7 + $0x238] sm:$0xff]
        %v1080 = vld [vmem:[#allocation7 + $0x240] sm:$0xff]
        %v1081 = vld [vmem:[#allocation7 + $0x248] sm:$0xff]
        %v1082 = vld [vmem:[#allocation7 + $0x250] sm:$0xff]
        %v1083 = vld [vmem:[#allocation7 + $0x258] sm:$0xff]
        %v1084 = vld [vmem:[#allocation7 + $0x260] sm:$0xff]
        %v1085 = vld [vmem:[#allocation7 + $0x268] sm:$0xff]
        %v1086 = vld [vmem:[#allocation7 + $0x270] sm:$0xff]
        %v1087 = vld [vmem:[#allocation7 + $0x278] sm:$0xff]
        %v1088 = vld [vmem:[#allocation7 + $0x280] sm:$0xff]
        %v1089 = vld [vmem:[#allocation7 + $0x288] sm:$0xff]
        %v1090 = vld [vmem:[#allocation7 + $0x290] sm:$0xff]
        %v1091 = vld [vmem:[#allocation7 + $0x298] sm:$0xff]
        %v1092 = vld [vmem:[#allocation7 + $0x2a0] sm:$0xff]
        %v1093 = vld [vmem:[#allocation7 + $0x2a8] sm:$0xff]
        %v1094 = vld [vmem:[#allocation7 + $0x2b0] sm:$0xff]
        %v1095 = vld [vmem:[#allocation7 + $0x2b8] sm:$0xff]
        %v1096 = vld [vmem:[#allocation7 + $0x2c0] sm:$0xff]
        %v1097 = vld [vmem:[#allocation7 + $0x2c8] sm:$0xff]
        %v1098 = vld [vmem:[#allocation7 + $0x2d0] sm:$0xff]
        %v1099 = vld [vmem:[#allocation7 + $0x2d8] sm:$0xff]
        %v1100 = vld [vmem:[#allocation7 + $0x2e0] sm:$0xff]
        %v1101 = vld [vmem:[#allocation7 + $0x2e8] sm:$0xff]
        %v1102 = vld [vmem:[#allocation7 + $0x2f0] sm:$0xff]
        %v1103 = vld [vmem:[#allocation7 + $0x2f8] sm:$0xff]
        %v1104 = vld [vmem:[#allocation7 + $0x300] sm:$0xff]
        %v1105 = vld [vmem:[#allocation7 + $0x308] sm:$0xff]
        %v1106 = vld [vmem:[#allocation7 + $0x310] sm:$0xff]
        %v1107 = vld [vmem:[#allocation7 + $0x318] sm:$0xff]
        %v1108 = vld [vmem:[#allocation7 + $0x320] sm:$0xff]
        %v1109 = vld [vmem:[#allocation7 + $0x328] sm:$0xff]
        %v1110 = vld [vmem:[#allocation7 + $0x330] sm:$0xff]
        %v1111 = vld [vmem:[#allocation7 + $0x338] sm:$0xff]
        %v1112 = vld [vmem:[#allocation7 + $0x340] sm:$0xff]
        %v1113 = vld [vmem:[#allocation7 + $0x348] sm:$0xff]
        %v1114 = vld [vmem:[#allocation7 + $0x350] sm:$0xff]
        %v1115 = vld [vmem:[#allocation7 + $0x358] sm:$0xff]
        %v1116 = vld [vmem:[#allocation7 + $0x360] sm:$0xff]
        %v1117 = vld [vmem:[#allocation7 + $0x368] sm:$0xff]
        %v1118 = vld [vmem:[#allocation7 + $0x370] sm:$0xff]
        %v1119 = vld [vmem:[#allocation7 + $0x378] sm:$0xff]
        %v1120 = vld [vmem:[#allocation7 + $0x380] sm:$0xff]
        %v1121 = vld [vmem:[#allocation7 + $0x388] sm:$0xff]
        %v1122 = vld [vmem:[#allocation7 + $0x390] sm:$0xff]
        %v1123 = vld [vmem:[#allocation7 + $0x398] sm:$0xff]
        %v1124 = vld [vmem:[#allocation7 + $0x3a0] sm:$0xff]
        %v1125 = vld [vmem:[#allocation7 + $0x3a8] sm:$0xff]
        %v1126 = vld [vmem:[#allocation7 + $0x3b0] sm:$0xff]
        %v1127 = vld [vmem:[#allocation7 + $0x3b8] sm:$0xff]
        %v1128 = vld [vmem:[#allocation7 + $0x3c0] sm:$0xff]
        %v1129 = vld [vmem:[#allocation7 + $0x3c8] sm:$0xff]
        %v1130 = vld [vmem:[#allocation7 + $0x3d0] sm:$0xff]
        %v1131 = vld [vmem:[#allocation7 + $0x3d8] sm:$0xff]
        %v1132 = vld [vmem:[#allocation7 + $0x3e0] sm:$0xff]
        %v1133 = vld [vmem:[#allocation7 + $0x3e8] sm:$0xff]
        %v1134 = vld [vmem:[#allocation7 + $0x3f0] sm:$0xff]
        %v1135 = vld [vmem:[#allocation7 + $0x3f8] sm:$0xff]
        %v1136 = vld [vmem:[#allocation7 + $0x400] sm:$0xff]
        %v1137 = vld [vmem:[#allocation7 + $0x408] sm:$0xff]
        %v1138 = vld [vmem:[#allocation7 + $0x410] sm:$0xff]
        %v1139 = vld [vmem:[#allocation7 + $0x418] sm:$0xff]
        %v1140 = vld [vmem:[#allocation7 + $0x420] sm:$0xff]
        %v1141 = vld [vmem:[#allocation7 + $0x428] sm:$0xff]
        %v1142 = vld [vmem:[#allocation7 + $0x430] sm:$0xff]
        %v1143 = vld [vmem:[#allocation7 + $0x438] sm:$0xff]
        %v1144 = vld [vmem:[#allocation7 + $0x440] sm:$0xff]
        %v1145 = vld [vmem:[#allocation7 + $0x448] sm:$0xff]
        %v1146 = vld [vmem:[#allocation7 + $0x450] sm:$0xff]
        %v1147 = vld [vmem:[#allocation7 + $0x458] sm:$0xff]
        %v1148 = vld [vmem:[#allocation7 + $0x460] sm:$0xff]
        %v1149 = vld [vmem:[#allocation7 + $0x468] sm:$0xff]
        %v1150 = vld [vmem:[#allocation7 + $0x470] sm:$0xff]
        %v1151 = vld [vmem:[#allocation7 + $0x478] sm:$0xff]
        %v1152 = vld [vmem:[#allocation7 + $0x480] sm:$0xff]
        %v1153 = vld [vmem:[#allocation7 + $0x488] sm:$0xff]
        %v1154 = vld [vmem:[#allocation7 + $0x490] sm:$0xff]
        %v1155 = vld [vmem:[#allocation7 + $0x498] sm:$0xff]
        %v1156 = vld [vmem:[#allocation7 + $0x4a0] sm:$0xff]
        %v1157 = vld [vmem:[#allocation7 + $0x4a8] sm:$0xff]
        %v1158 = vld [vmem:[#allocation7 + $0x4b0] sm:$0xff]
        %v1159 = vld [vmem:[#allocation7 + $0x4b8] sm:$0xff]
        %v1160 = vld [vmem:[#allocation7 + $0x4c0] sm:$0xff]
        %v1161 = vld [vmem:[#allocation7 + $0x4c8] sm:$0xff]
        %v1162 = vld [vmem:[#allocation7 + $0x4d0] sm:$0xff]
        %v1163 = vld [vmem:[#allocation7 + $0x4d8] sm:$0xff]
        %v1164 = vld [vmem:[#allocation7 + $0x4e0] sm:$0xff]
        %v1165 = vld [vmem:[#allocation7 + $0x4e8] sm:$0xff]
        %v1166 = vld [vmem:[#allocation7 + $0x4f0] sm:$0xff]
        %v1167 = vld [vmem:[#allocation7 + $0x4f8] sm:$0xff]
        %v1168 = vld [vmem:[#allocation7 + $0x500] sm:$0xff]
        %v1169 = vld [vmem:[#allocation7 + $0x508] sm:$0xff]
        %v1170 = vld [vmem:[#allocation7 + $0x510] sm:$0xff]
        %v1171 = vld [vmem:[#allocation7 + $0x518] sm:$0xff]
        %v1172 = vld [vmem:[#allocation7 + $0x520] sm:$0xff]
        %v1173 = vld [vmem:[#allocation7 + $0x528] sm:$0xff]
        %v1174 = vld [vmem:[#allocation7 + $0x530] sm:$0xff]
        %v1175 = vld [vmem:[#allocation7 + $0x538] sm:$0xff]
        %v1176 = vld [vmem:[#allocation7 + $0x540] sm:$0xff]
        %v1177 = vld [vmem:[#allocation7 + $0x548] sm:$0xff]
        %v1178 = vld [vmem:[#allocation7 + $0x550] sm:$0xff]
        %v1179 = vld [vmem:[#allocation7 + $0x558] sm:$0xff]
        %v1180 = vld [vmem:[#allocation7 + $0x560] sm:$0xff]
        %v1181 = vld [vmem:[#allocation7 + $0x568] sm:$0xff]
        %v1182 = vld [vmem:[#allocation7 + $0x570] sm:$0xff]
        %v1183 = vld [vmem:[#allocation7 + $0x578] sm:$0xff]
        %v1184 = vld [vmem:[#allocation7 + $0x580] sm:$0xff]
        %v1185 = vld [vmem:[#allocation7 + $0x588] sm:$0xff]
        %v1186 = vld [vmem:[#allocation7 + $0x590] sm:$0xff]
        %v1187 = vld [vmem:[#allocation7 + $0x598] sm:$0xff]
        %v1188 = vld [vmem:[#allocation7 + $0x5a0] sm:$0xff]
        %v1189 = vld [vmem:[#allocation7 + $0x5a8] sm:$0xff]
        %v1190 = vld [vmem:[#allocation7 + $0x5b0] sm:$0xff]
        %v1191 = vld [vmem:[#allocation7 + $0x5b8] sm:$0xff]
        %v1192 = vld [vmem:[#allocation7 + $0x5c0] sm:$0xff]
        %v1193 = vld [vmem:[#allocation7 + $0x5c8] sm:$0xff]
        %v1194 = vld [vmem:[#allocation7 + $0x5d0] sm:$0xff]
        %v1195 = vld [vmem:[#allocation7 + $0x5d8] sm:$0xff]
        %v1196 = vld [vmem:[#allocation7 + $0x5e0] sm:$0xff]
        %v1197 = vld [vmem:[#allocation7 + $0x5e8] sm:$0xff]
        %v1198 = vld [vmem:[#allocation7 + $0x5f0] sm:$0xff]
        %v1199 = vld [vmem:[#allocation7 + $0x5f8] sm:$0xff]
        %1200 = vmatprep.subr.mxu0 %v1009
        %1201 = vmatpush1.msra.mxu0 %v1008
        %1202 = vmatprep.subr.mxu0 %v1015
        %1203 = vmatpush1.msra.mxu0 %v1014
        %1204 = vmatprep.subr.mxu0 %v1021
        %1205 = vmatpush1.msra.mxu0 %v1020
        %1206 = vmatprep.subr.mxu0 %v1027
        %1207 = vmatpush1.msra.mxu0 %v1026
        %1208 = vmatprep.subr.mxu0 %v1033
        %1209 = vmatpush1.msra.mxu0 %v1032
        %1210 = vmatprep.subr.mxu0 %v1039
        %1211 = vmatpush1.msra.mxu0 %v1038
        %1212 = vmatprep.subr.mxu0 %v1045
        %1213 = vmatpush1.msra.mxu0 %v1044
        %1214 = vmatprep.subr.mxu0 %v1051
        %1215 = vmatpush1.msra.mxu0 %v1050
        %1216 = vmatprep.subr.mxu0 %v1057
        %1217 = vmatpush1.msra.mxu0 %v1056
        %1218 = vmatprep.subr.mxu0 %v1063
        %1219 = vmatpush1.msra.mxu0 %v1062
        %1220 = vmatprep.subr.mxu0 %v1069
        %1221 = vmatpush1.msra.mxu0 %v1068
        %1222 = vmatprep.subr.mxu0 %v1075
        %1223 = vmatpush1.msra.mxu0 %v1074
        %1224 = vmatprep.subr.mxu0 %v1081
        %1225 = vmatpush1.msra.mxu0 %v1080
        %1226 = vmatprep.subr.mxu0 %v1087
        %1227 = vmatpush1.msra.mxu0 %v1086
        %1228 = vmatprep.subr.mxu0 %v1093
        %1229 = vmatpush1.msra.mxu0 %v1092
        %1230 = vmatprep.subr.mxu0 %v1099
        %1231 = vmatpush1.msra.mxu0 %v1098
        %1232 = vmatprep.subr.mxu0 %v1105
        %1233 = vmatpush1.msra.mxu0 %v1104
        %1234 = vmatprep.subr.mxu0 %v1111
        %1235 = vmatpush1.msra.mxu0 %v1110
        %1236 = vmatprep.subr.mxu0 %v1117
        %1237 = vmatpush1.msra.mxu0 %v1116
        %1238 = vmatprep.subr.mxu0 %v1123
        %1239 = vmatpush1.msra.mxu0 %v1122
        %1240 = vmatprep.subr.mxu0 %v1129
        %1241 = vmatpush1.msra.mxu0 %v1128
        %1242 = vmatprep.subr.mxu0 %v1135
        %1243 = vmatpush1.msra.mxu0 %v1134
        %1244 = vmatprep.subr.mxu0 %v1141
        %1245 = vmatpush1.msra.mxu0 %v1140
        %1246 = vmatprep.subr.mxu0 %v1147
        %1247 = vmatpush1.msra.mxu0 %v1146
        %1248 = vmatprep.subr.mxu0 %v1153
        %1249 = vmatpush1.msra.mxu0 %v1152
        %1250 = vmatprep.subr.mxu0 %v1159
        %1251 = vmatpush1.msra.mxu0 %v1158
        %1252 = vmatprep.subr.mxu0 %v1165
        %1253 = vmatpush1.msra.mxu0 %v1164
        %1254 = vmatprep.subr.mxu0 %v1171
        %1255 = vmatpush1.msra.mxu0 %v1170
        %1256 = vmatprep.subr.mxu0 %v1177
        %1257 = vmatpush1.msra.mxu0 %v1176
        %1258 = vmatprep.subr.mxu0 %v1183
        %1259 = vmatpush1.msra.mxu0 %v1182
        %1260 = vmatprep.subr.mxu0 %v1189
        %1261 = vmatpush1.msra.mxu0 %v1188
        %1262 = vmatprep.subr.mxu0 %v1195
        %1263 = vmatpush1.msra.mxu0 %v1194
        %1264 = vmatprep.mubr.f32.mxu0 %v977
        %1265 = vmatmul.mubr.f32.gmra.mrb[0].mxu0 %v976
        %v1266 = vpop.f32.mrb[0].mxu0
        %v1267 = vadd.f32 0.0, %v1266
        %v1268 = vpop.f32.mrb[0].mxu0
        %v1269 = vadd.f32 0.0, %v1268
        %1270 = vmatprep.mubr.f32.mxu0 %v979
        %1271 = vmatmul.mubr.f32.gmra.mrb[0].mxu0 %v978
        %v1272 = vpop.f32.mrb[0].mxu0
        %v1273 = vadd.f32 0.0, %v1272
        %v1274 = vpop.f32.mrb[0].mxu0
        %v1275 = vadd.f32 0.0, %v1274
        %1276 = vmatprep.mubr.f32.mxu0 %v981
        %1277 = vmatmul.mubr.f32.gmra.mrb[0].mxu0 %v980
        %v1278 = vpop.f32.mrb[0].mxu0
        %v1279 = vadd.f32 0.0, %v1278
        %v1280 = vpop.f32.mrb[0].mxu0
        %v1281 = vadd.f32 0.0, %v1280
        %1282 = vmatprep.mubr.f32.mxu0 %v983
        %1283 = vmatmul.mubr.f32.gmra.mrb[0].mxu0 %v982
        %v1284 = vpop.f32.mrb[0].mxu0
        %v1285 = vadd.f32 0.0, %v1284
        %v1286 = vpop.f32.mrb[0].mxu0
        %v1287 = vadd.f32 0.0, %v1286
        %1288 = vmatprep.mubr.f32.mxu0 %v985
        %1289 = vmatmul.mubr.f32.gmra.mrb[0].mxu0 %v984
        %v1290 = vpop.f32.mrb[0].mxu0
        %v1291 = vadd.f32 0.0, %v1290
        %v1292 = vpop.f32.mrb[0].mxu0
        %v1293 = vadd.f32 0.0, %v1292
        %1294 = vmatprep.mubr.f32.mxu0 %v987
        %1295 = vmatmul.mubr.f32.gmra.mrb[0].mxu0 %v986
        %v1296 = vpop.f32.mrb[0].mxu0
        %v1297 = vadd.f32 0.0, %v1296
        %v1298 = vpop.f32.mrb[0].mxu0
        %v1299 = vadd.f32 0.0, %v1298
        %1300 = vmatprep.mubr.f32.mxu0 %v989
        %1301 = vmatmul.mubr.f32.gmra.mrb[0].mxu0 %v988
        %v1302 = vpop.f32.mrb[0].mxu0
        %v1303 = vadd.f32 0.0, %v1302
        %v1304 = vpop.f32.mrb[0].mxu0
        %v1305 = vadd.f32 0.0, %v1304
        %1306 = vmatprep.mubr.f32.mxu0 %v991
        %1307 = vmatmul.mubr.f32.gmra.mrb[0].mxu0 %v990
        %v1308 = vpop.f32.mrb[0].mxu0
        %v1309 = vadd.f32 0.0, %v1308
        %v1310 = vpop.f32.mrb[0].mxu0
        %v1311 = vadd.f32 0.0, %v1310
        %1312 = vmatprep.mubr.f32.mxu0 %v993
        %1313 = vmatmul.mubr.f32.gmra.mrb[0].mxu0 %v992
        %v1314 = vpop.f32.mrb[0].mxu0
        %v1315 = vadd.f32 0.0, %v1314
        %v1316 = vpop.f32.mrb[0].mxu0
        %v1317 = vadd.f32 0.0, %v1316
        %1318 = vmatprep.mubr.f32.mxu0 %v995
        %1319 = vmatmul.mubr.f32.gmra.mrb[0].mxu0 %v994
        %v1320 = vpop.f32.mrb[0].mxu0
        %v1321 = vadd.f32 0.0, %v1320
        %v1322 = vpop.f32.mrb[0].mxu0
        %v1323 = vadd.f32 0.0, %v1322
        %1324 = vmatprep.mubr.f32.mxu0 %v997
        %1325 = vmatmul.mubr.f32.gmra.mrb[0].mxu0 %v996
        %v1326 = vpop.f32.mrb[0].mxu0
        %v1327 = vadd.f32 0.0, %v1326
        %v1328 = vpop.f32.mrb[0].mxu0
        %v1329 = vadd.f32 0.0, %v1328
        %1330 = vmatprep.mubr.f32.mxu0 %v999
        %1331 = vmatmul.mubr.f32.gmra.mrb[0].mxu0 %v998
        %v1332 = vpop.f32.mrb[0].mxu0
        %v1333 = vadd.f32 0.0, %v1332
        %v1334 = vpop.f32.mrb[0].mxu0
        %v1335 = vadd.f32 0.0, %v1334
        %1336 = vmatprep.mubr.f32.mxu0 %v1001
        %1337 = vmatmul.mubr.f32.gmra.mrb[0].mxu0 %v1000
        %v1338 = vpop.f32.mrb[0].mxu0
        %v1339 = vadd.f32 0.0, %v1338
        %v1340 = vpop.f32.mrb[0].mxu0
        %v1341 = vadd.f32 0.0, %v1340
        %1342 = vmatprep.mubr.f32.mxu0 %v1003
        %1343 = vmatmul.mubr.f32.gmra.mrb[0].mxu0 %v1002
        %v1344 = vpop.f32.mrb[0].mxu0
        %v1345 = vadd.f32 0.0, %v1344
        %v1346 = vpop.f32.mrb[0].mxu0
        %v1347 = vadd.f32 0.0, %v1346
        %1348 = vmatprep.mubr.f32.mxu0 %v1005
        %1349 = vmatmul.mubr.f32.gmra.mrb[0].mxu0 %v1004
        %v1350 = vpop.f32.mrb[0].mxu0
        %v1351 = vadd.f32 0.0, %v1350
        %v1352 = vpop.f32.mrb[0].mxu0
        %v1353 = vadd.f32 0.0, %v1352
        %1354 = vmatprep.mubr.f32.mxu0 %v1007
        %1355 = vmatmul.mubr.f32.gmra.mrb[0].mxu0 %v1006
        %v1356 = vpop.f32.mrb[0].mxu0
        %v1357 = vadd.f32 0.0, %v1356
        %v1358 = vpop.f32.mrb[0].mxu0
        %v1359 = vadd.f32 0.0, %v1358
        %1360 = vdwg.mxu0
        %1361 = vmatprep.subr.mxu0 %v1011
        %1362 = vmatpush1.msra.mxu0 %v1010
        %1363 = vmatprep.subr.mxu0 %v1017
        %1364 = vmatpush1.msra.mxu0 %v1016
        %1365 = vmatprep.subr.mxu0 %v1023
        %1366 = vmatpush1.msra.mxu0 %v1022
        %1367 = vmatprep.subr.mxu0 %v1029
        %1368 = vmatpush1.msra.mxu0 %v1028
        %1369 = vmatprep.subr.mxu0 %v1035
        %1370 = vmatpush1.msra.mxu0 %v1034
        %1371 = vmatprep.subr.mxu0 %v1041
        %1372 = vmatpush1.msra.mxu0 %v1040
        %1373 = vmatprep.subr.mxu0 %v1047
        %1374 = vmatpush1.msra.mxu0 %v1046
        %1375 = vmatprep.subr.mxu0 %v1053
        %1376 = vmatpush1.msra.mxu0 %v1052
        %1377 = vmatprep.subr.mxu0 %v1059
        %1378 = vmatpush1.msra.mxu0 %v1058
        %1379 = vmatprep.subr.mxu0 %v1065
        %1380 = vmatpush1.msra.mxu0 %v1064
        %1381 = vmatprep.subr.mxu0 %v1071
        %1382 = vmatpush1.msra.mxu0 %v1070
        %1383 = vmatprep.subr.mxu0 %v1077
        %1384 = vmatpush1.msra.mxu0 %v1076
        %1385 = vmatprep.subr.mxu0 %v1083
        %1386 = vmatpush1.msra.mxu0 %v1082
        %1387 = vmatprep.subr.mxu0 %v1089
        %1388 = vmatpush1.msra.mxu0 %v1088
        %1389 = vmatprep.subr.mxu0 %v1095
        %1390 = vmatpush1.msra.mxu0 %v1094
        %1391 = vmatprep.subr.mxu0 %v1101
        %1392 = vmatpush1.msra.mxu0 %v1100
        %1393 = vmatprep.subr.mxu0 %v1107
        %1394 = vmatpush1.msra.mxu0 %v1106
        %1395 = vmatprep.subr.mxu0 %v1113
        %1396 = vmatpush1.msra.mxu0 %v1112
        %1397 = vmatprep.subr.mxu0 %v1119
        %1398 = vmatpush1.msra.mxu0 %v1118
        %1399 = vmatprep.subr.mxu0 %v1125
        %1400 = vmatpush1.msra.mxu0 %v1124
        %1401 = vmatprep.subr.mxu0 %v1131
        %1402 = vmatpush1.msra.mxu0 %v1130
        %1403 = vmatprep.subr.mxu0 %v1137
        %1404 = vmatpush1.msra.mxu0 %v1136
        %1405 = vmatprep.subr.mxu0 %v1143
        %1406 = vmatpush1.msra.mxu0 %v1142
        %1407 = vmatprep.subr.mxu0 %v1149
        %1408 = vmatpush1.msra.mxu0 %v1148
        %1409 = vmatprep.subr.mxu0 %v1155
        %1410 = vmatpush1.msra.mxu0 %v1154
        %1411 = vmatprep.subr.mxu0 %v1161
        %1412 = vmatpush1.msra.mxu0 %v1160
        %1413 = vmatprep.subr.mxu0 %v1167
        %1414 = vmatpush1.msra.mxu0 %v1166
        %1415 = vmatprep.subr.mxu0 %v1173
        %1416 = vmatpush1.msra.mxu0 %v1172
        %1417 = vmatprep.subr.mxu0 %v1179
        %1418 = vmatpush1.msra.mxu0 %v1178
        %1419 = vmatprep.subr.mxu0 %v1185
        %1420 = vmatpush1.msra.mxu0 %v1184
        %1421 = vmatprep.subr.mxu0 %v1191
        %1422 = vmatpush1.msra.mxu0 %v1190
        %1423 = vmatprep.subr.mxu0 %v1197
        %1424 = vmatpush1.msra.mxu0 %v1196
        %1425 = vmatprep.mubr.f32.mxu0 %v977
        %1426 = vmatmul.mubr.f32.gmra.mrb[0].mxu0 %v976
        %v1427 = vpop.f32.mrb[0].mxu0
        %v1428 = vadd.f32 0.0, %v1427
        %v1429 = vpop.f32.mrb[0].mxu0
        %v1430 = vadd.f32 0.0, %v1429
        %1431 = vmatprep.mubr.f32.mxu0 %v979
        %1432 = vmatmul.mubr.f32.gmra.mrb[0].mxu0 %v978
        %v1433 = vpop.f32.mrb[0].mxu0
        %v1434 = vadd.f32 0.0, %v1433
        %v1435 = vpop.f32.mrb[0].mxu0
        %v1436 = vadd.f32 0.0, %v1435
        %1437 = vmatprep.mubr.f32.mxu0 %v981
        %1438 = vmatmul.mubr.f32.gmra.mrb[0].mxu0 %v980
        %v1439 = vpop.f32.mrb[0].mxu0
        %v1440 = vadd.f32 0.0, %v1439
        %v1441 = vpop.f32.mrb[0].mxu0
        %v1442 = vadd.f32 0.0, %v1441
        %1443 = vmatprep.mubr.f32.mxu0 %v983
        %1444 = vmatmul.mubr.f32.gmra.mrb[0].mxu0 %v982
        %v1445 = vpop.f32.mrb[0].mxu0
        %v1446 = vadd.f32 0.0, %v1445
        %v1447 = vpop.f32.mrb[0].mxu0
        %v1448 = vadd.f32 0.0, %v1447
        %1449 = vmatprep.mubr.f32.mxu0 %v985
        %1450 = vmatmul.mubr.f32.gmra.mrb[0].mxu0 %v984
        %v1451 = vpop.f32.mrb[0].mxu0
        %v1452 = vadd.f32 0.0, %v1451
        %v1453 = vpop.f32.mrb[0].mxu0
        %v1454 = vadd.f32 0.0, %v1453
        %1455 = vmatprep.mubr.f32.mxu0 %v987
        %1456 = vmatmul.mubr.f32.gmra.mrb[0].mxu0 %v986
        %v1457 = vpop.f32.mrb[0].mxu0
        %v1458 = vadd.f32 0.0, %v1457
        %v1459 = vpop.f32.mrb[0].mxu0
        %v1460 = vadd.f32 0.0, %v1459
        %1461 = vmatprep.mubr.f32.mxu0 %v989
        %1462 = vmatmul.mubr.f32.gmra.mrb[0].mxu0 %v988
        %v1463 = vpop.f32.mrb[0].mxu0
        %v1464 = vadd.f32 0.0, %v1463
        %v1465 = vpop.f32.mrb[0].mxu0
        %v1466 = vadd.f32 0.0, %v1465
        %1467 = vmatprep.mubr.f32.mxu0 %v991
        %1468 = vmatmul.mubr.f32.gmra.mrb[0].mxu0 %v990
        %v1469 = vpop.f32.mrb[0].mxu0
        %v1470 = vadd.f32 0.0, %v1469
        %v1471 = vpop.f32.mrb[0].mxu0
        %v1472 = vadd.f32 0.0, %v1471
        %1473 = vmatprep.mubr.f32.mxu0 %v993
        %1474 = vmatmul.mubr.f32.gmra.mrb[0].mxu0 %v992
        %v1475 = vpop.f32.mrb[0].mxu0
        %v1476 = vadd.f32 0.0, %v1475
        %v1477 = vpop.f32.mrb[0].mxu0
        %v1478 = vadd.f32 0.0, %v1477
        %1479 = vmatprep.mubr.f32.mxu0 %v995
        %1480 = vmatmul.mubr.f32.gmra.mrb[0].mxu0 %v994
        %v1481 = vpop.f32.mrb[0].mxu0
        %v1482 = vadd.f32 0.0, %v1481
        %v1483 = vpop.f32.mrb[0].mxu0
        %v1484 = vadd.f32 0.0, %v1483
        %1485 = vmatprep.mubr.f32.mxu0 %v997
        %1486 = vmatmul.mubr.f32.gmra.mrb[0].mxu0 %v996
        %v1487 = vpop.f32.mrb[0].mxu0
        %v1488 = vadd.f32 0.0, %v1487
        %v1489 = vpop.f32.mrb[0].mxu0
        %v1490 = vadd.f32 0.0, %v1489
        %1491 = vmatprep.mubr.f32.mxu0 %v999
        %1492 = vmatmul.mubr.f32.gmra.mrb[0].mxu0 %v998
        %v1493 = vpop.f32.mrb[0].mxu0
        %v1494 = vadd.f32 0.0, %v1493
        %v1495 = vpop.f32.mrb[0].mxu0
        %v1496 = vadd.f32 0.0, %v1495
        %1497 = vmatprep.mubr.f32.mxu0 %v1001
        %1498 = vmatmul.mubr.f32.gmra.mrb[0].mxu0 %v1000
        %v1499 = vpop.f32.mrb[0].mxu0
        %v1500 = vadd.f32 0.0, %v1499
        %v1501 = vpop.f32.mrb[0].mxu0
        %v1502 = vadd.f32 0.0, %v1501
        %1503 = vmatprep.mubr.f32.mxu0 %v1003
        %1504 = vmatmul.mubr.f32.gmra.mrb[0].mxu0 %v1002
        %v1505 = vpop.f32.mrb[0].mxu0
        %v1506 = vadd.f32 0.0, %v1505
        %v1507 = vpop.f32.mrb[0].mxu0
        %v1508 = vadd.f32 0.0, %v1507
        %1509 = vmatprep.mubr.f32.mxu0 %v1005
        %1510 = vmatmul.mubr.f32.gmra.mrb[0].mxu0 %v1004
        %v1511 = vpop.f32.mrb[0].mxu0
        %v1512 = vadd.f32 0.0, %v1511
        %v1513 = vpop.f32.mrb[0].mxu0
        %v1514 = vadd.f32 0.0, %v1513
        %1515 = vmatprep.mubr.f32.mxu0 %v1007
        %1516 = vmatmul.mubr.f32.gmra.mrb[0].mxu0 %v1006
        %v1517 = vpop.f32.mrb[0].mxu0
        %v1518 = vadd.f32 0.0, %v1517
        %v1519 = vpop.f32.mrb[0].mxu0
        %v1520 = vadd.f32 0.0, %v1519
        %1521 = vdwg.mxu0
        %1522 = vmatprep.subr.mxu0 %v1013
        %1523 = vmatpush1.msra.mxu0 %v1012
        %1524 = vmatprep.subr.mxu0 %v1019
        %1525 = vmatpush1.msra.mxu0 %v1018
        %1526 = vmatprep.subr.mxu0 %v1025
        %1527 = vmatpush1.msra.mxu0 %v1024
        %1528 = vmatprep.subr.mxu0 %v1031
        %1529 = vmatpush1.msra.mxu0 %v1030
        %1530 = vmatprep.subr.mxu0 %v1037
        %1531 = vmatpush1.msra.mxu0 %v1036
        %1532 = vmatprep.subr.mxu0 %v1043
        %1533 = vmatpush1.msra.mxu0 %v1042
        %1534 = vmatprep.subr.mxu0 %v1049
        %1535 = vmatpush1.msra.mxu0 %v1048
        %1536 = vmatprep.subr.mxu0 %v1055
        %1537 = vmatpush1.msra.mxu0 %v1054
        %1538 = vmatprep.subr.mxu0 %v1061
        %1539 = vmatpush1.msra.mxu0 %v1060
        %1540 = vmatprep.subr.mxu0 %v1067
        %1541 = vmatpush1.msra.mxu0 %v1066
        %1542 = vmatprep.subr.mxu0 %v1073
        %1543 = vmatpush1.msra.mxu0 %v1072
        %1544 = vmatprep.subr.mxu0 %v1079
        %1545 = vmatpush1.msra.mxu0 %v1078
        %1546 = vmatprep.subr.mxu0 %v1085
        %1547 = vmatpush1.msra.mxu0 %v1084
        %1548 = vmatprep.subr.mxu0 %v1091
        %1549 = vmatpush1.msra.mxu0 %v1090
        %1550 = vmatprep.subr.mxu0 %v1097
        %1551 = vmatpush1.msra.mxu0 %v1096
        %1552 = vmatprep.subr.mxu0 %v1103
        %1553 = vmatpush1.msra.mxu0 %v1102
        %1554 = vmatprep.subr.mxu0 %v1109
        %1555 = vmatpush1.msra.mxu0 %v1108
        %1556 = vmatprep.subr.mxu0 %v1115
        %1557 = vmatpush1.msra.mxu0 %v1114
        %1558 = vmatprep.subr.mxu0 %v1121
        %1559 = vmatpush1.msra.mxu0 %v1120
        %1560 = vmatprep.subr.mxu0 %v1127
        %1561 = vmatpush1.msra.mxu0 %v1126
        %1562 = vmatprep.subr.mxu0 %v1133
        %1563 = vmatpush1.msra.mxu0 %v1132
        %1564 = vmatprep.subr.mxu0 %v1139
        %1565 = vmatpush1.msra.mxu0 %v1138
        %1566 = vmatprep.subr.mxu0 %v1145
        %1567 = vmatpush1.msra.mxu0 %v1144
        %1568 = vmatprep.subr.mxu0 %v1151
        %1569 = vmatpush1.msra.mxu0 %v1150
        %1570 = vmatprep.subr.mxu0 %v1157
        %1571 = vmatpush1.msra.mxu0 %v1156
        %1572 = vmatprep.subr.mxu0 %v1163
        %1573 = vmatpush1.msra.mxu0 %v1162
        %1574 = vmatprep.subr.mxu0 %v1169
        %1575 = vmatpush1.msra.mxu0 %v1168
        %1576 = vmatprep.subr.mxu0 %v1175
        %1577 = vmatpush1.msra.mxu0 %v1174
        %1578 = vmatprep.subr.mxu0 %v1181
        %1579 = vmatpush1.msra.mxu0 %v1180
        %1580 = vmatprep.subr.mxu0 %v1187
        %1581 = vmatpush1.msra.mxu0 %v1186
        %1582 = vmatprep.subr.mxu0 %v1193
        %1583 = vmatpush1.msra.mxu0 %v1192
        %1584 = vmatprep.subr.mxu0 %v1199
        %1585 = vmatpush1.msra.mxu0 %v1198
        %1586 = vmatprep.mubr.f32.mxu0 %v977
        %1587 = vmatmul.mubr.f32.gmra.mrb[0].mxu0 %v976
        %v1588 = vpop.f32.mrb[0].mxu0
        %v1589 = vadd.f32 0.0, %v1588
        %v1590 = vpop.f32.mrb[0].mxu0
        %v1591 = vadd.f32 0.0, %v1590
        %1592 = vmatprep.mubr.f32.mxu0 %v979
        %1593 = vmatmul.mubr.f32.gmra.mrb[0].mxu0 %v978
        %v1594 = vpop.f32.mrb[0].mxu0
        %v1595 = vadd.f32 0.0, %v1594
        %v1596 = vpop.f32.mrb[0].mxu0
        %v1597 = vadd.f32 0.0, %v1596
        %1598 = vmatprep.mubr.f32.mxu0 %v981
        %1599 = vmatmul.mubr.f32.gmra.mrb[0].mxu0 %v980
        %v1600 = vpop.f32.mrb[0].mxu0
        %v1601 = vadd.f32 0.0, %v1600
        %v1602 = vpop.f32.mrb[0].mxu0
        %v1603 = vadd.f32 0.0, %v1602
        %1604 = vmatprep.mubr.f32.mxu0 %v983
        %1605 = vmatmul.mubr.f32.gmra.mrb[0].mxu0 %v982
        %v1606 = vpop.f32.mrb[0].mxu0
        %v1607 = vadd.f32 0.0, %v1606
        %v1608 = vpop.f32.mrb[0].mxu0
        %v1609 = vadd.f32 0.0, %v1608
        %1610 = vmatprep.mubr.f32.mxu0 %v985
        %1611 = vmatmul.mubr.f32.gmra.mrb[0].mxu0 %v984
        %v1612 = vpop.f32.mrb[0].mxu0
        %v1613 = vadd.f32 0.0, %v1612
        %v1614 = vpop.f32.mrb[0].mxu0
        %v1615 = vadd.f32 0.0, %v1614
        %1616 = vmatprep.mubr.f32.mxu0 %v987
        %1617 = vmatmul.mubr.f32.gmra.mrb[0].mxu0 %v986
        %v1618 = vpop.f32.mrb[0].mxu0
        %v1619 = vadd.f32 0.0, %v1618
        %v1620 = vpop.f32.mrb[0].mxu0
        %v1621 = vadd.f32 0.0, %v1620
        %1622 = vmatprep.mubr.f32.mxu0 %v989
        %1623 = vmatmul.mubr.f32.gmra.mrb[0].mxu0 %v988
        %v1624 = vpop.f32.mrb[0].mxu0
        %v1625 = vadd.f32 0.0, %v1624
        %v1626 = vpop.f32.mrb[0].mxu0
        %v1627 = vadd.f32 0.0, %v1626
        %1628 = vmatprep.mubr.f32.mxu0 %v991
        %1629 = vmatmul.mubr.f32.gmra.mrb[0].mxu0 %v990
        %v1630 = vpop.f32.mrb[0].mxu0
        %v1631 = vadd.f32 0.0, %v1630
        %v1632 = vpop.f32.mrb[0].mxu0
        %v1633 = vadd.f32 0.0, %v1632
        %1634 = vmatprep.mubr.f32.mxu0 %v993
        %1635 = vmatmul.mubr.f32.gmra.mrb[0].mxu0 %v992
        %v1636 = vpop.f32.mrb[0].mxu0
        %v1637 = vadd.f32 0.0, %v1636
        %v1638 = vpop.f32.mrb[0].mxu0
        %v1639 = vadd.f32 0.0, %v1638
        %1640 = vmatprep.mubr.f32.mxu0 %v995
        %1641 = vmatmul.mubr.f32.gmra.mrb[0].mxu0 %v994
        %v1642 = vpop.f32.mrb[0].mxu0
        %v1643 = vadd.f32 0.0, %v1642
        %v1644 = vpop.f32.mrb[0].mxu0
        %v1645 = vadd.f32 0.0, %v1644
        %1646 = vmatprep.mubr.f32.mxu0 %v997
        %1647 = vmatmul.mubr.f32.gmra.mrb[0].mxu0 %v996
        %v1648 = vpop.f32.mrb[0].mxu0
        %v1649 = vadd.f32 0.0, %v1648
        %v1650 = vpop.f32.mrb[0].mxu0
        %v1651 = vadd.f32 0.0, %v1650
        %1652 = vmatprep.mubr.f32.mxu0 %v999
        %1653 = vmatmul.mubr.f32.gmra.mrb[0].mxu0 %v998
        %v1654 = vpop.f32.mrb[0].mxu0
        %v1655 = vadd.f32 0.0, %v1654
        %v1656 = vpop.f32.mrb[0].mxu0
        %v1657 = vadd.f32 0.0, %v1656
        %1658 = vmatprep.mubr.f32.mxu0 %v1001
        %1659 = vmatmul.mubr.f32.gmra.mrb[0].mxu0 %v1000
        %v1660 = vpop.f32.mrb[0].mxu0
        %v1661 = vadd.f32 0.0, %v1660
        %v1662 = vpop.f32.mrb[0].mxu0
        %v1663 = vadd.f32 0.0, %v1662
        %1664 = vmatprep.mubr.f32.mxu0 %v1003
        %1665 = vmatmul.mubr.f32.gmra.mrb[0].mxu0 %v1002
        %v1666 = vpop.f32.mrb[0].mxu0
        %v1667 = vadd.f32 0.0, %v1666
        %v1668 = vpop.f32.mrb[0].mxu0
        %v1669 = vadd.f32 0.0, %v1668
        %1670 = vmatprep.mubr.f32.mxu0 %v1005
        %1671 = vmatmul.mubr.f32.gmra.mrb[0].mxu0 %v1004
        %v1672 = vpop.f32.mrb[0].mxu0
        %v1673 = vadd.f32 0.0, %v1672
        %v1674 = vpop.f32.mrb[0].mxu0
        %v1675 = vadd.f32 0.0, %v1674
        %1676 = vmatprep.mubr.f32.mxu0 %v1007
        %1677 = vmatmul.mubr.f32.gmra.mrb[0].mxu0 %v1006
        %v1678 = vpop.f32.mrb[0].mxu0
        %v1679 = vadd.f32 0.0, %v1678
        %v1680 = vpop.f32.mrb[0].mxu0
        %v1681 = vadd.f32 0.0, %v1680
        %1682 = vdwg.mxu0
        %v1683 = vcombine.high %v1267, 0.0
        %v1685 = vunpack.c.l.s4 1983009808
        %v1686 = vunpack.c.0.s8 %v1685
        %v1687 = vlaneseq
        %v1688 = vshrl.u32 %v1687, 7
        %v1689 = vsub.s32 %v1686, %v1688
        %v1690 = vrot.slane %v1267, %v1689
        %v1692 = vunpack.c.l.s4 1983009808
        %v1693 = vunpack.c.0.s8 %v1692
        %v1694 = vlaneseq
        %v1695 = vshrl.u32 %v1694, 7
        %v1696 = vsub.s32 %v1693, %v1695
        %v1697 = vrot.slane %v1683, %v1696
        %v1698 = vcombine.high %v1269, 0.0
        %v1700 = vunpack.c.l.s4 1983009808
        %v1701 = vunpack.c.0.s8 %v1700
        %v1702 = vlaneseq
        %v1703 = vshrl.u32 %v1702, 7
        %v1704 = vsub.s32 %v1701, %v1703
        %v1705 = vrot.slane %v1269, %v1704
        %v1707 = vunpack.c.l.s4 1983009808
        %v1708 = vunpack.c.0.s8 %v1707
        %v1709 = vlaneseq
        %v1710 = vshrl.u32 %v1709, 7
        %v1711 = vsub.s32 %v1708, %v1710
        %v1712 = vrot.slane %v1698, %v1711
        %v1713 = vcombine.low %v1690, %v1705
        %v1714 = vcombine.high %v1690, %v1705
        %v1716 = vunpack.c.l.s4 1934713408
        %v1717 = vunpack.c.0.s8 %v1716
        %v1718 = vlaneseq
        %v1719 = vshrl.u32 %v1718, 7
        %v1720 = vsub.s32 %v1717, %v1719
        %v1721 = vrot.slane %v1713, %v1720
        %v1723 = vunpack.c.l.s4 1934713408
        %v1724 = vunpack.c.0.s8 %v1723
        %v1725 = vlaneseq
        %v1726 = vshrl.u32 %v1725, 7
        %v1727 = vsub.s32 %v1724, %v1726
        %v1728 = vrot.slane %v1714, %v1727
        %v1729 = vcombine.low %v1697, %v1712
        %v1730 = vcombine.high %v1697, %v1712
        %v1732 = vunpack.c.l.s4 1934713408
        %v1733 = vunpack.c.0.s8 %v1732
        %v1734 = vlaneseq
        %v1735 = vshrl.u32 %v1734, 7
        %v1736 = vsub.s32 %v1733, %v1735
        %v1737 = vrot.slane %v1729, %v1736
        %v1739 = vunpack.c.l.s4 1934713408
        %v1740 = vunpack.c.0.s8 %v1739
        %v1741 = vlaneseq
        %v1742 = vshrl.u32 %v1741, 7
        %v1743 = vsub.s32 %v1740, %v1742
        %v1744 = vrot.slane %v1730, %v1743
        %v1745 = vcombine.high %v1721, 0.0
        %v1746 = vcombine.high %v1728, 0.0
        %v1747 = vcombine.high %v1737, 0.0
        %v1748 = vcombine.high %v1744, 0.0
        %v1749 = vcombine.high %v1273, 0.0
        %v1751 = vunpack.c.l.s4 1983009808
        %v1752 = vunpack.c.0.s8 %v1751
        %v1753 = vlaneseq
        %v1754 = vshrl.u32 %v1753, 7
        %v1755 = vsub.s32 %v1752, %v1754
        %v1756 = vrot.slane %v1273, %v1755
        %v1758 = vunpack.c.l.s4 1983009808
        %v1759 = vunpack.c.0.s8 %v1758
        %v1760 = vlaneseq
        %v1761 = vshrl.u32 %v1760, 7
        %v1762 = vsub.s32 %v1759, %v1761
        %v1763 = vrot.slane %v1749, %v1762
        %v1764 = vcombine.high %v1275, 0.0
        %v1766 = vunpack.c.l.s4 1983009808
        %v1767 = vunpack.c.0.s8 %v1766
        %v1768 = vlaneseq
        %v1769 = vshrl.u32 %v1768, 7
        %v1770 = vsub.s32 %v1767, %v1769
        %v1771 = vrot.slane %v1275, %v1770
        %v1773 = vunpack.c.l.s4 1983009808
        %v1774 = vunpack.c.0.s8 %v1773
        %v1775 = vlaneseq
        %v1776 = vshrl.u32 %v1775, 7
        %v1777 = vsub.s32 %v1774, %v1776
        %v1778 = vrot.slane %v1764, %v1777
        %v1779 = vcombine.low %v1756, %v1771
        %v1780 = vcombine.high %v1756, %v1771
        %v1782 = vunpack.c.l.s4 1934713408
        %v1783 = vunpack.c.0.s8 %v1782
        %v1784 = vlaneseq
        %v1785 = vshrl.u32 %v1784, 7
        %v1786 = vsub.s32 %v1783, %v1785
        %v1787 = vrot.slane %v1779, %v1786
        %v1789 = vunpack.c.l.s4 1934713408
        %v1790 = vunpack.c.0.s8 %v1789
        %v1791 = vlaneseq
        %v1792 = vshrl.u32 %v1791, 7
        %v1793 = vsub.s32 %v1790, %v1792
        %v1794 = vrot.slane %v1780, %v1793
        %v1795 = vcombine.low %v1763, %v1778
        %v1796 = vcombine.high %v1763, %v1778
        %v1798 = vunpack.c.l.s4 1934713408
        %v1799 = vunpack.c.0.s8 %v1798
        %v1800 = vlaneseq
        %v1801 = vshrl.u32 %v1800, 7
        %v1802 = vsub.s32 %v1799, %v1801
        %v1803 = vrot.slane %v1795, %v1802
        %v1805 = vunpack.c.l.s4 1934713408
        %v1806 = vunpack.c.0.s8 %v1805
        %v1807 = vlaneseq
        %v1808 = vshrl.u32 %v1807, 7
        %v1809 = vsub.s32 %v1806, %v1808
        %v1810 = vrot.slane %v1796, %v1809
        %v1811 = vcombine.high %v1787, 0.0
        %v1812 = vcombine.high %v1794, 0.0
        %v1813 = vcombine.high %v1803, 0.0
        %v1814 = vcombine.high %v1810, 0.0
        %v1815 = vcombine.high %v1279, 0.0
        %v1817 = vunpack.c.l.s4 1983009808
        %v1818 = vunpack.c.0.s8 %v1817
        %v1819 = vlaneseq
        %v1820 = vshrl.u32 %v1819, 7
        %v1821 = vsub.s32 %v1818, %v1820
        %v1822 = vrot.slane %v1279, %v1821
        %v1824 = vunpack.c.l.s4 1983009808
        %v1825 = vunpack.c.0.s8 %v1824
        %v1826 = vlaneseq
        %v1827 = vshrl.u32 %v1826, 7
        %v1828 = vsub.s32 %v1825, %v1827
        %v1829 = vrot.slane %v1815, %v1828
        %v1830 = vcombine.high %v1281, 0.0
        %v1832 = vunpack.c.l.s4 1983009808
        %v1833 = vunpack.c.0.s8 %v1832
        %v1834 = vlaneseq
        %v1835 = vshrl.u32 %v1834, 7
        %v1836 = vsub.s32 %v1833, %v1835
        %v1837 = vrot.slane %v1281, %v1836
        %v1839 = vunpack.c.l.s4 1983009808
        %v1840 = vunpack.c.0.s8 %v1839
        %v1841 = vlaneseq
        %v1842 = vshrl.u32 %v1841, 7
        %v1843 = vsub.s32 %v1840, %v1842
        %v1844 = vrot.slane %v1830, %v1843
        %v1845 = vcombine.low %v1822, %v1837
        %v1846 = vcombine.high %v1822, %v1837
        %v1848 = vunpack.c.l.s4 1934713408
        %v1849 = vunpack.c.0.s8 %v1848
        %v1850 = vlaneseq
        %v1851 = vshrl.u32 %v1850, 7
        %v1852 = vsub.s32 %v1849, %v1851
        %v1853 = vrot.slane %v1845, %v1852
        %v1855 = vunpack.c.l.s4 1934713408
        %v1856 = vunpack.c.0.s8 %v1855
        %v1857 = vlaneseq
        %v1858 = vshrl.u32 %v1857, 7
        %v1859 = vsub.s32 %v1856, %v1858
        %v1860 = vrot.slane %v1846, %v1859
        %v1861 = vcombine.low %v1829, %v1844
        %v1862 = vcombine.high %v1829, %v1844
        %v1864 = vunpack.c.l.s4 1934713408
        %v1865 = vunpack.c.0.s8 %v1864
        %v1866 = vlaneseq
        %v1867 = vshrl.u32 %v1866, 7
        %v1868 = vsub.s32 %v1865, %v1867
        %v1869 = vrot.slane %v1861, %v1868
        %v1871 = vunpack.c.l.s4 1934713408
        %v1872 = vunpack.c.0.s8 %v1871
        %v1873 = vlaneseq
        %v1874 = vshrl.u32 %v1873, 7
        %v1875 = vsub.s32 %v1872, %v1874
        %v1876 = vrot.slane %v1862, %v1875
        %v1877 = vcombine.high %v1853, 0.0
        %v1878 = vcombine.high %v1860, 0.0
        %v1879 = vcombine.high %v1869, 0.0
        %v1880 = vcombine.high %v1876, 0.0
        %v1881 = vcombine.high %v1285, 0.0
        %v1883 = vunpack.c.l.s4 1983009808
        %v1884 = vunpack.c.0.s8 %v1883
        %v1885 = vlaneseq
        %v1886 = vshrl.u32 %v1885, 7
        %v1887 = vsub.s32 %v1884, %v1886
        %v1888 = vrot.slane %v1285, %v1887
        %v1890 = vunpack.c.l.s4 1983009808
        %v1891 = vunpack.c.0.s8 %v1890
        %v1892 = vlaneseq
        %v1893 = vshrl.u32 %v1892, 7
        %v1894 = vsub.s32 %v1891, %v1893
        %v1895 = vrot.slane %v1881, %v1894
        %v1896 = vcombine.high %v1287, 0.0
        %v1898 = vunpack.c.l.s4 1983009808
        %v1899 = vunpack.c.0.s8 %v1898
        %v1900 = vlaneseq
        %v1901 = vshrl.u32 %v1900, 7
        %v1902 = vsub.s32 %v1899, %v1901
        %v1903 = vrot.slane %v1287, %v1902
        %v1905 = vunpack.c.l.s4 1983009808
        %v1906 = vunpack.c.0.s8 %v1905
        %v1907 = vlaneseq
        %v1908 = vshrl.u32 %v1907, 7
        %v1909 = vsub.s32 %v1906, %v1908
        %v1910 = vrot.slane %v1896, %v1909
        %v1911 = vcombine.low %v1888, %v1903
        %v1912 = vcombine.high %v1888, %v1903
        %v1914 = vunpack.c.l.s4 1934713408
        %v1915 = vunpack.c.0.s8 %v1914
        %v1916 = vlaneseq
        %v1917 = vshrl.u32 %v1916, 7
        %v1918 = vsub.s32 %v1915, %v1917
        %v1919 = vrot.slane %v1911, %v1918
        %v1921 = vunpack.c.l.s4 1934713408
        %v1922 = vunpack.c.0.s8 %v1921
        %v1923 = vlaneseq
        %v1924 = vshrl.u32 %v1923, 7
        %v1925 = vsub.s32 %v1922, %v1924
        %v1926 = vrot.slane %v1912, %v1925
        %v1927 = vcombine.low %v1895, %v1910
        %v1928 = vcombine.high %v1895, %v1910
        %v1930 = vunpack.c.l.s4 1934713408
        %v1931 = vunpack.c.0.s8 %v1930
        %v1932 = vlaneseq
        %v1933 = vshrl.u32 %v1932, 7
        %v1934 = vsub.s32 %v1931, %v1933
        %v1935 = vrot.slane %v1927, %v1934
        %v1937 = vunpack.c.l.s4 1934713408
        %v1938 = vunpack.c.0.s8 %v1937
        %v1939 = vlaneseq
        %v1940 = vshrl.u32 %v1939, 7
        %v1941 = vsub.s32 %v1938, %v1940
        %v1942 = vrot.slane %v1928, %v1941
        %v1943 = vcombine.high %v1919, 0.0
        %v1944 = vcombine.high %v1926, 0.0
        %v1945 = vcombine.high %v1935, 0.0
        %v1946 = vcombine.high %v1942, 0.0
        %v1947 = vcombine.high %v1291, 0.0
        %v1949 = vunpack.c.l.s4 1983009808
        %v1950 = vunpack.c.0.s8 %v1949
        %v1951 = vlaneseq
        %v1952 = vshrl.u32 %v1951, 7
        %v1953 = vsub.s32 %v1950, %v1952
        %v1954 = vrot.slane %v1291, %v1953
        %v1956 = vunpack.c.l.s4 1983009808
        %v1957 = vunpack.c.0.s8 %v1956
        %v1958 = vlaneseq
        %v1959 = vshrl.u32 %v1958, 7
        %v1960 = vsub.s32 %v1957, %v1959
        %v1961 = vrot.slane %v1947, %v1960
        %v1962 = vcombine.high %v1293, 0.0
        %v1964 = vunpack.c.l.s4 1983009808
        %v1965 = vunpack.c.0.s8 %v1964
        %v1966 = vlaneseq
        %v1967 = vshrl.u32 %v1966, 7
        %v1968 = vsub.s32 %v1965, %v1967
        %v1969 = vrot.slane %v1293, %v1968
        %v1971 = vunpack.c.l.s4 1983009808
        %v1972 = vunpack.c.0.s8 %v1971
        %v1973 = vlaneseq
        %v1974 = vshrl.u32 %v1973, 7
        %v1975 = vsub.s32 %v1972, %v1974
        %v1976 = vrot.slane %v1962, %v1975
        %v1977 = vcombine.low %v1954, %v1969
        %v1978 = vcombine.high %v1954, %v1969
        %v1980 = vunpack.c.l.s4 1934713408
        %v1981 = vunpack.c.0.s8 %v1980
        %v1982 = vlaneseq
        %v1983 = vshrl.u32 %v1982, 7
        %v1984 = vsub.s32 %v1981, %v1983
        %v1985 = vrot.slane %v1977, %v1984
        %v1987 = vunpack.c.l.s4 1934713408
        %v1988 = vunpack.c.0.s8 %v1987
        %v1989 = vlaneseq
        %v1990 = vshrl.u32 %v1989, 7
        %v1991 = vsub.s32 %v1988, %v1990
        %v1992 = vrot.slane %v1978, %v1991
        %v1993 = vcombine.low %v1961, %v1976
        %v1994 = vcombine.high %v1961, %v1976
        %v1996 = vunpack.c.l.s4 1934713408
        %v1997 = vunpack.c.0.s8 %v1996
        %v1998 = vlaneseq
        %v1999 = vshrl.u32 %v1998, 7
        %v2000 = vsub.s32 %v1997, %v1999
        %v2001 = vrot.slane %v1993, %v2000
        %v2003 = vunpack.c.l.s4 1934713408
        %v2004 = vunpack.c.0.s8 %v2003
        %v2005 = vlaneseq
        %v2006 = vshrl.u32 %v2005, 7
        %v2007 = vsub.s32 %v2004, %v2006
        %v2008 = vrot.slane %v1994, %v2007
        %v2009 = vcombine.high %v1985, 0.0
        %v2010 = vcombine.high %v1992, 0.0
        %v2011 = vcombine.high %v2001, 0.0
        %v2012 = vcombine.high %v2008, 0.0
        %v2013 = vcombine.high %v1297, 0.0
        %v2015 = vunpack.c.l.s4 1983009808
        %v2016 = vunpack.c.0.s8 %v2015
        %v2017 = vlaneseq
        %v2018 = vshrl.u32 %v2017, 7
        %v2019 = vsub.s32 %v2016, %v2018
        %v2020 = vrot.slane %v1297, %v2019
        %v2022 = vunpack.c.l.s4 1983009808
        %v2023 = vunpack.c.0.s8 %v2022
        %v2024 = vlaneseq
        %v2025 = vshrl.u32 %v2024, 7
        %v2026 = vsub.s32 %v2023, %v2025
        %v2027 = vrot.slane %v2013, %v2026
        %v2028 = vcombine.high %v1299, 0.0
        %v2030 = vunpack.c.l.s4 1983009808
        %v2031 = vunpack.c.0.s8 %v2030
        %v2032 = vlaneseq
        %v2033 = vshrl.u32 %v2032, 7
        %v2034 = vsub.s32 %v2031, %v2033
        %v2035 = vrot.slane %v1299, %v2034
        %v2037 = vunpack.c.l.s4 1983009808
        %v2038 = vunpack.c.0.s8 %v2037
        %v2039 = vlaneseq
        %v2040 = vshrl.u32 %v2039, 7
        %v2041 = vsub.s32 %v2038, %v2040
        %v2042 = vrot.slane %v2028, %v2041
        %v2043 = vcombine.low %v2020, %v2035
        %v2044 = vcombine.high %v2020, %v2035
        %v2046 = vunpack.c.l.s4 1934713408
        %v2047 = vunpack.c.0.s8 %v2046
        %v2048 = vlaneseq
        %v2049 = vshrl.u32 %v2048, 7
        %v2050 = vsub.s32 %v2047, %v2049
        %v2051 = vrot.slane %v2043, %v2050
        %v2053 = vunpack.c.l.s4 1934713408
        %v2054 = vunpack.c.0.s8 %v2053
        %v2055 = vlaneseq
        %v2056 = vshrl.u32 %v2055, 7
        %v2057 = vsub.s32 %v2054, %v2056
        %v2058 = vrot.slane %v2044, %v2057
        %v2059 = vcombine.low %v2027, %v2042
        %v2060 = vcombine.high %v2027, %v2042
        %v2062 = vunpack.c.l.s4 1934713408
        %v2063 = vunpack.c.0.s8 %v2062
        %v2064 = vlaneseq
        %v2065 = vshrl.u32 %v2064, 7
        %v2066 = vsub.s32 %v2063, %v2065
        %v2067 = vrot.slane %v2059, %v2066
        %v2069 = vunpack.c.l.s4 1934713408
        %v2070 = vunpack.c.0.s8 %v2069
        %v2071 = vlaneseq
        %v2072 = vshrl.u32 %v2071, 7
        %v2073 = vsub.s32 %v2070, %v2072
        %v2074 = vrot.slane %v2060, %v2073
        %v2075 = vcombine.high %v2051, 0.0
        %v2076 = vcombine.high %v2058, 0.0
        %v2077 = vcombine.high %v2067, 0.0
        %v2078 = vcombine.high %v2074, 0.0
        %v2079 = vcombine.high %v1303, 0.0
        %v2081 = vunpack.c.l.s4 1983009808
        %v2082 = vunpack.c.0.s8 %v2081
        %v2083 = vlaneseq
        %v2084 = vshrl.u32 %v2083, 7
        %v2085 = vsub.s32 %v2082, %v2084
        %v2086 = vrot.slane %v1303, %v2085
        %v2088 = vunpack.c.l.s4 1983009808
        %v2089 = vunpack.c.0.s8 %v2088
        %v2090 = vlaneseq
        %v2091 = vshrl.u32 %v2090, 7
        %v2092 = vsub.s32 %v2089, %v2091
        %v2093 = vrot.slane %v2079, %v2092
        %v2094 = vcombine.high %v1305, 0.0
        %v2096 = vunpack.c.l.s4 1983009808
        %v2097 = vunpack.c.0.s8 %v2096
        %v2098 = vlaneseq
        %v2099 = vshrl.u32 %v2098, 7
        %v2100 = vsub.s32 %v2097, %v2099
        %v2101 = vrot.slane %v1305, %v2100
        %v2103 = vunpack.c.l.s4 1983009808
        %v2104 = vunpack.c.0.s8 %v2103
        %v2105 = vlaneseq
        %v2106 = vshrl.u32 %v2105, 7
        %v2107 = vsub.s32 %v2104, %v2106
        %v2108 = vrot.slane %v2094, %v2107
        %v2109 = vcombine.low %v2086, %v2101
        %v2110 = vcombine.high %v2086, %v2101
        %v2112 = vunpack.c.l.s4 1934713408
        %v2113 = vunpack.c.0.s8 %v2112
        %v2114 = vlaneseq
        %v2115 = vshrl.u32 %v2114, 7
        %v2116 = vsub.s32 %v2113, %v2115
        %v2117 = vrot.slane %v2109, %v2116
        %v2119 = vunpack.c.l.s4 1934713408
        %v2120 = vunpack.c.0.s8 %v2119
        %v2121 = vlaneseq
        %v2122 = vshrl.u32 %v2121, 7
        %v2123 = vsub.s32 %v2120, %v2122
        %v2124 = vrot.slane %v2110, %v2123
        %v2125 = vcombine.low %v2093, %v2108
        %v2126 = vcombine.high %v2093, %v2108
        %v2128 = vunpack.c.l.s4 1934713408
        %v2129 = vunpack.c.0.s8 %v2128
        %v2130 = vlaneseq
        %v2131 = vshrl.u32 %v2130, 7
        %v2132 = vsub.s32 %v2129, %v2131
        %v2133 = vrot.slane %v2125, %v2132
        %v2135 = vunpack.c.l.s4 1934713408
        %v2136 = vunpack.c.0.s8 %v2135
        %v2137 = vlaneseq
        %v2138 = vshrl.u32 %v2137, 7
        %v2139 = vsub.s32 %v2136, %v2138
        %v2140 = vrot.slane %v2126, %v2139
        %v2141 = vcombine.high %v2117, 0.0
        %v2142 = vcombine.high %v2124, 0.0
        %v2143 = vcombine.high %v2133, 0.0
        %v2144 = vcombine.high %v2140, 0.0
        %v2145 = vcombine.high %v1309, 0.0
        %v2147 = vunpack.c.l.s4 1983009808
        %v2148 = vunpack.c.0.s8 %v2147
        %v2149 = vlaneseq
        %v2150 = vshrl.u32 %v2149, 7
        %v2151 = vsub.s32 %v2148, %v2150
        %v2152 = vrot.slane %v1309, %v2151
        %v2154 = vunpack.c.l.s4 1983009808
        %v2155 = vunpack.c.0.s8 %v2154
        %v2156 = vlaneseq
        %v2157 = vshrl.u32 %v2156, 7
        %v2158 = vsub.s32 %v2155, %v2157
        %v2159 = vrot.slane %v2145, %v2158
        %v2160 = vcombine.high %v1311, 0.0
        %v2162 = vunpack.c.l.s4 1983009808
        %v2163 = vunpack.c.0.s8 %v2162
        %v2164 = vlaneseq
        %v2165 = vshrl.u32 %v2164, 7
        %v2166 = vsub.s32 %v2163, %v2165
        %v2167 = vrot.slane %v1311, %v2166
        %v2169 = vunpack.c.l.s4 1983009808
        %v2170 = vunpack.c.0.s8 %v2169
        %v2171 = vlaneseq
        %v2172 = vshrl.u32 %v2171, 7
        %v2173 = vsub.s32 %v2170, %v2172
        %v2174 = vrot.slane %v2160, %v2173
        %v2175 = vcombine.low %v2152, %v2167
        %v2176 = vcombine.high %v2152, %v2167
        %v2178 = vunpack.c.l.s4 1934713408
        %v2179 = vunpack.c.0.s8 %v2178
        %v2180 = vlaneseq
        %v2181 = vshrl.u32 %v2180, 7
        %v2182 = vsub.s32 %v2179, %v2181
        %v2183 = vrot.slane %v2175, %v2182
        %v2185 = vunpack.c.l.s4 1934713408
        %v2186 = vunpack.c.0.s8 %v2185
        %v2187 = vlaneseq
        %v2188 = vshrl.u32 %v2187, 7
        %v2189 = vsub.s32 %v2186, %v2188
        %v2190 = vrot.slane %v2176, %v2189
        %v2191 = vcombine.low %v2159, %v2174
        %v2192 = vcombine.high %v2159, %v2174
        %v2194 = vunpack.c.l.s4 1934713408
        %v2195 = vunpack.c.0.s8 %v2194
        %v2196 = vlaneseq
        %v2197 = vshrl.u32 %v2196, 7
        %v2198 = vsub.s32 %v2195, %v2197
        %v2199 = vrot.slane %v2191, %v2198
        %v2201 = vunpack.c.l.s4 1934713408
        %v2202 = vunpack.c.0.s8 %v2201
        %v2203 = vlaneseq
        %v2204 = vshrl.u32 %v2203, 7
        %v2205 = vsub.s32 %v2202, %v2204
        %v2206 = vrot.slane %v2192, %v2205
        %v2207 = vcombine.high %v2183, 0.0
        %v2208 = vcombine.high %v2190, 0.0
        %v2209 = vcombine.high %v2199, 0.0
        %v2210 = vcombine.high %v2206, 0.0
        %v2211 = vcombine.high %v1315, 0.0
        %v2213 = vunpack.c.l.s4 1983009808
        %v2214 = vunpack.c.0.s8 %v2213
        %v2215 = vlaneseq
        %v2216 = vshrl.u32 %v2215, 7
        %v2217 = vsub.s32 %v2214, %v2216
        %v2218 = vrot.slane %v1315, %v2217
        %v2220 = vunpack.c.l.s4 1983009808
        %v2221 = vunpack.c.0.s8 %v2220
        %v2222 = vlaneseq
        %v2223 = vshrl.u32 %v2222, 7
        %v2224 = vsub.s32 %v2221, %v2223
        %v2225 = vrot.slane %v2211, %v2224
        %v2226 = vcombine.high %v1317, 0.0
        %v2228 = vunpack.c.l.s4 1983009808
        %v2229 = vunpack.c.0.s8 %v2228
        %v2230 = vlaneseq
        %v2231 = vshrl.u32 %v2230, 7
        %v2232 = vsub.s32 %v2229, %v2231
        %v2233 = vrot.slane %v1317, %v2232
        %v2235 = vunpack.c.l.s4 1983009808
        %v2236 = vunpack.c.0.s8 %v2235
        %v2237 = vlaneseq
        %v2238 = vshrl.u32 %v2237, 7
        %v2239 = vsub.s32 %v2236, %v2238
        %v2240 = vrot.slane %v2226, %v2239
        %v2241 = vcombine.low %v2218, %v2233
        %v2242 = vcombine.high %v2218, %v2233
        %v2244 = vunpack.c.l.s4 1934713408
        %v2245 = vunpack.c.0.s8 %v2244
        %v2246 = vlaneseq
        %v2247 = vshrl.u32 %v2246, 7
        %v2248 = vsub.s32 %v2245, %v2247
        %v2249 = vrot.slane %v2241, %v2248
        %v2251 = vunpack.c.l.s4 1934713408
        %v2252 = vunpack.c.0.s8 %v2251
        %v2253 = vlaneseq
        %v2254 = vshrl.u32 %v2253, 7
        %v2255 = vsub.s32 %v2252, %v2254
        %v2256 = vrot.slane %v2242, %v2255
        %v2257 = vcombine.low %v2225, %v2240
        %v2258 = vcombine.high %v2225, %v2240
        %v2260 = vunpack.c.l.s4 1934713408
        %v2261 = vunpack.c.0.s8 %v2260
        %v2262 = vlaneseq
        %v2263 = vshrl.u32 %v2262, 7
        %v2264 = vsub.s32 %v2261, %v2263
        %v2265 = vrot.slane %v2257, %v2264
        %v2267 = vunpack.c.l.s4 1934713408
        %v2268 = vunpack.c.0.s8 %v2267
        %v2269 = vlaneseq
        %v2270 = vshrl.u32 %v2269, 7
        %v2271 = vsub.s32 %v2268, %v2270
        %v2272 = vrot.slane %v2258, %v2271
        %v2273 = vcombine.high %v2249, 0.0
        %v2274 = vcombine.high %v2256, 0.0
        %v2275 = vcombine.high %v2265, 0.0
        %v2276 = vcombine.high %v2272, 0.0
        %v2277 = vcombine.high %v1321, 0.0
        %v2279 = vunpack.c.l.s4 1983009808
        %v2280 = vunpack.c.0.s8 %v2279
        %v2281 = vlaneseq
        %v2282 = vshrl.u32 %v2281, 7
        %v2283 = vsub.s32 %v2280, %v2282
        %v2284 = vrot.slane %v1321, %v2283
        %v2286 = vunpack.c.l.s4 1983009808
        %v2287 = vunpack.c.0.s8 %v2286
        %v2288 = vlaneseq
        %v2289 = vshrl.u32 %v2288, 7
        %v2290 = vsub.s32 %v2287, %v2289
        %v2291 = vrot.slane %v2277, %v2290
        %v2292 = vcombine.high %v1323, 0.0
        %v2294 = vunpack.c.l.s4 1983009808
        %v2295 = vunpack.c.0.s8 %v2294
        %v2296 = vlaneseq
        %v2297 = vshrl.u32 %v2296, 7
        %v2298 = vsub.s32 %v2295, %v2297
        %v2299 = vrot.slane %v1323, %v2298
        %v2301 = vunpack.c.l.s4 1983009808
        %v2302 = vunpack.c.0.s8 %v2301
        %v2303 = vlaneseq
        %v2304 = vshrl.u32 %v2303, 7
        %v2305 = vsub.s32 %v2302, %v2304
        %v2306 = vrot.slane %v2292, %v2305
        %v2307 = vcombine.low %v2284, %v2299
        %v2308 = vcombine.high %v2284, %v2299
        %v2310 = vunpack.c.l.s4 1934713408
        %v2311 = vunpack.c.0.s8 %v2310
        %v2312 = vlaneseq
        %v2313 = vshrl.u32 %v2312, 7
        %v2314 = vsub.s32 %v2311, %v2313
        %v2315 = vrot.slane %v2307, %v2314
        %v2317 = vunpack.c.l.s4 1934713408
        %v2318 = vunpack.c.0.s8 %v2317
        %v2319 = vlaneseq
        %v2320 = vshrl.u32 %v2319, 7
        %v2321 = vsub.s32 %v2318, %v2320
        %v2322 = vrot.slane %v2308, %v2321
        %v2323 = vcombine.low %v2291, %v2306
        %v2324 = vcombine.high %v2291, %v2306
        %v2326 = vunpack.c.l.s4 1934713408
        %v2327 = vunpack.c.0.s8 %v2326
        %v2328 = vlaneseq
        %v2329 = vshrl.u32 %v2328, 7
        %v2330 = vsub.s32 %v2327, %v2329
        %v2331 = vrot.slane %v2323, %v2330
        %v2333 = vunpack.c.l.s4 1934713408
        %v2334 = vunpack.c.0.s8 %v2333
        %v2335 = vlaneseq
        %v2336 = vshrl.u32 %v2335, 7
        %v2337 = vsub.s32 %v2334, %v2336
        %v2338 = vrot.slane %v2324, %v2337
        %v2339 = vcombine.high %v2315, 0.0
        %v2340 = vcombine.high %v2322, 0.0
        %v2341 = vcombine.high %v2331, 0.0
        %v2342 = vcombine.high %v2338, 0.0
        %v2343 = vcombine.high %v1327, 0.0
        %v2345 = vunpack.c.l.s4 1983009808
        %v2346 = vunpack.c.0.s8 %v2345
        %v2347 = vlaneseq
        %v2348 = vshrl.u32 %v2347, 7
        %v2349 = vsub.s32 %v2346, %v2348
        %v2350 = vrot.slane %v1327, %v2349
        %v2352 = vunpack.c.l.s4 1983009808
        %v2353 = vunpack.c.0.s8 %v2352
        %v2354 = vlaneseq
        %v2355 = vshrl.u32 %v2354, 7
        %v2356 = vsub.s32 %v2353, %v2355
        %v2357 = vrot.slane %v2343, %v2356
        %v2358 = vcombine.high %v1329, 0.0
        %v2360 = vunpack.c.l.s4 1983009808
        %v2361 = vunpack.c.0.s8 %v2360
        %v2362 = vlaneseq
        %v2363 = vshrl.u32 %v2362, 7
        %v2364 = vsub.s32 %v2361, %v2363
        %v2365 = vrot.slane %v1329, %v2364
        %v2367 = vunpack.c.l.s4 1983009808
        %v2368 = vunpack.c.0.s8 %v2367
        %v2369 = vlaneseq
        %v2370 = vshrl.u32 %v2369, 7
        %v2371 = vsub.s32 %v2368, %v2370
        %v2372 = vrot.slane %v2358, %v2371
        %v2373 = vcombine.low %v2350, %v2365
        %v2374 = vcombine.high %v2350, %v2365
        %v2376 = vunpack.c.l.s4 1934713408
        %v2377 = vunpack.c.0.s8 %v2376
        %v2378 = vlaneseq
        %v2379 = vshrl.u32 %v2378, 7
        %v2380 = vsub.s32 %v2377, %v2379
        %v2381 = vrot.slane %v2373, %v2380
        %v2383 = vunpack.c.l.s4 1934713408
        %v2384 = vunpack.c.0.s8 %v2383
        %v2385 = vlaneseq
        %v2386 = vshrl.u32 %v2385, 7
        %v2387 = vsub.s32 %v2384, %v2386
        %v2388 = vrot.slane %v2374, %v2387
        %v2389 = vcombine.low %v2357, %v2372
        %v2390 = vcombine.high %v2357, %v2372
        %v2392 = vunpack.c.l.s4 1934713408
        %v2393 = vunpack.c.0.s8 %v2392
        %v2394 = vlaneseq
        %v2395 = vshrl.u32 %v2394, 7
        %v2396 = vsub.s32 %v2393, %v2395
        %v2397 = vrot.slane %v2389, %v2396
        %v2399 = vunpack.c.l.s4 1934713408
        %v2400 = vunpack.c.0.s8 %v2399
        %v2401 = vlaneseq
        %v2402 = vshrl.u32 %v2401, 7
        %v2403 = vsub.s32 %v2400, %v2402
        %v2404 = vrot.slane %v2390, %v2403
        %v2405 = vcombine.high %v2381, 0.0
        %v2406 = vcombine.high %v2388, 0.0
        %v2407 = vcombine.high %v2397, 0.0
        %v2408 = vcombine.high %v2404, 0.0
        %v2409 = vcombine.high %v1333, 0.0
        %v2411 = vunpack.c.l.s4 1983009808
        %v2412 = vunpack.c.0.s8 %v2411
        %v2413 = vlaneseq
        %v2414 = vshrl.u32 %v2413, 7
        %v2415 = vsub.s32 %v2412, %v2414
        %v2416 = vrot.slane %v1333, %v2415
        %v2418 = vunpack.c.l.s4 1983009808
        %v2419 = vunpack.c.0.s8 %v2418
        %v2420 = vlaneseq
        %v2421 = vshrl.u32 %v2420, 7
        %v2422 = vsub.s32 %v2419, %v2421
        %v2423 = vrot.slane %v2409, %v2422
        %v2424 = vcombine.high %v1335, 0.0
        %v2426 = vunpack.c.l.s4 1983009808
        %v2427 = vunpack.c.0.s8 %v2426
        %v2428 = vlaneseq
        %v2429 = vshrl.u32 %v2428, 7
        %v2430 = vsub.s32 %v2427, %v2429
        %v2431 = vrot.slane %v1335, %v2430
        %v2433 = vunpack.c.l.s4 1983009808
        %v2434 = vunpack.c.0.s8 %v2433
        %v2435 = vlaneseq
        %v2436 = vshrl.u32 %v2435, 7
        %v2437 = vsub.s32 %v2434, %v2436
        %v2438 = vrot.slane %v2424, %v2437
        %v2439 = vcombine.low %v2416, %v2431
        %v2440 = vcombine.high %v2416, %v2431
        %v2442 = vunpack.c.l.s4 1934713408
        %v2443 = vunpack.c.0.s8 %v2442
        %v2444 = vlaneseq
        %v2445 = vshrl.u32 %v2444, 7
        %v2446 = vsub.s32 %v2443, %v2445
        %v2447 = vrot.slane %v2439, %v2446
        %v2449 = vunpack.c.l.s4 1934713408
        %v2450 = vunpack.c.0.s8 %v2449
        %v2451 = vlaneseq
        %v2452 = vshrl.u32 %v2451, 7
        %v2453 = vsub.s32 %v2450, %v2452
        %v2454 = vrot.slane %v2440, %v2453
        %v2455 = vcombine.low %v2423, %v2438
        %v2456 = vcombine.high %v2423, %v2438
        %v2458 = vunpack.c.l.s4 1934713408
        %v2459 = vunpack.c.0.s8 %v2458
        %v2460 = vlaneseq
        %v2461 = vshrl.u32 %v2460, 7
        %v2462 = vsub.s32 %v2459, %v2461
        %v2463 = vrot.slane %v2455, %v2462
        %v2465 = vunpack.c.l.s4 1934713408
        %v2466 = vunpack.c.0.s8 %v2465
        %v2467 = vlaneseq
        %v2468 = vshrl.u32 %v2467, 7
        %v2469 = vsub.s32 %v2466, %v2468
        %v2470 = vrot.slane %v2456, %v2469
        %v2471 = vcombine.high %v2447, 0.0
        %v2472 = vcombine.high %v2454, 0.0
        %v2473 = vcombine.high %v2463, 0.0
        %v2474 = vcombine.high %v2470, 0.0
        %v2475 = vcombine.high %v1339, 0.0
        %v2477 = vunpack.c.l.s4 1983009808
        %v2478 = vunpack.c.0.s8 %v2477
        %v2479 = vlaneseq
        %v2480 = vshrl.u32 %v2479, 7
        %v2481 = vsub.s32 %v2478, %v2480
        %v2482 = vrot.slane %v1339, %v2481
        %v2484 = vunpack.c.l.s4 1983009808
        %v2485 = vunpack.c.0.s8 %v2484
        %v2486 = vlaneseq
        %v2487 = vshrl.u32 %v2486, 7
        %v2488 = vsub.s32 %v2485, %v2487
        %v2489 = vrot.slane %v2475, %v2488
        %v2490 = vcombine.high %v1341, 0.0
        %v2492 = vunpack.c.l.s4 1983009808
        %v2493 = vunpack.c.0.s8 %v2492
        %v2494 = vlaneseq
        %v2495 = vshrl.u32 %v2494, 7
        %v2496 = vsub.s32 %v2493, %v2495
        %v2497 = vrot.slane %v1341, %v2496
        %v2499 = vunpack.c.l.s4 1983009808
        %v2500 = vunpack.c.0.s8 %v2499
        %v2501 = vlaneseq
        %v2502 = vshrl.u32 %v2501, 7
        %v2503 = vsub.s32 %v2500, %v2502
        %v2504 = vrot.slane %v2490, %v2503
        %v2505 = vcombine.low %v2482, %v2497
        %v2506 = vcombine.high %v2482, %v2497
        %v2508 = vunpack.c.l.s4 1934713408
        %v2509 = vunpack.c.0.s8 %v2508
        %v2510 = vlaneseq
        %v2511 = vshrl.u32 %v2510, 7
        %v2512 = vsub.s32 %v2509, %v2511
        %v2513 = vrot.slane %v2505, %v2512
        %v2515 = vunpack.c.l.s4 1934713408
        %v2516 = vunpack.c.0.s8 %v2515
        %v2517 = vlaneseq
        %v2518 = vshrl.u32 %v2517, 7
        %v2519 = vsub.s32 %v2516, %v2518
        %v2520 = vrot.slane %v2506, %v2519
        %v2521 = vcombine.low %v2489, %v2504
        %v2522 = vcombine.high %v2489, %v2504
        %v2524 = vunpack.c.l.s4 1934713408
        %v2525 = vunpack.c.0.s8 %v2524
        %v2526 = vlaneseq
        %v2527 = vshrl.u32 %v2526, 7
        %v2528 = vsub.s32 %v2525, %v2527
        %v2529 = vrot.slane %v2521, %v2528
        %v2531 = vunpack.c.l.s4 1934713408
        %v2532 = vunpack.c.0.s8 %v2531
        %v2533 = vlaneseq
        %v2534 = vshrl.u32 %v2533, 7
        %v2535 = vsub.s32 %v2532, %v2534
        %v2536 = vrot.slane %v2522, %v2535
        %v2537 = vcombine.high %v2513, 0.0
        %v2538 = vcombine.high %v2520, 0.0
        %v2539 = vcombine.high %v2529, 0.0
        %v2540 = vcombine.high %v2536, 0.0
        %v2541 = vcombine.high %v1345, 0.0
        %v2543 = vunpack.c.l.s4 1983009808
        %v2544 = vunpack.c.0.s8 %v2543
        %v2545 = vlaneseq
        %v2546 = vshrl.u32 %v2545, 7
        %v2547 = vsub.s32 %v2544, %v2546
        %v2548 = vrot.slane %v1345, %v2547
        %v2550 = vunpack.c.l.s4 1983009808
        %v2551 = vunpack.c.0.s8 %v2550
        %v2552 = vlaneseq
        %v2553 = vshrl.u32 %v2552, 7
        %v2554 = vsub.s32 %v2551, %v2553
        %v2555 = vrot.slane %v2541, %v2554
        %v2556 = vcombine.high %v1347, 0.0
        %v2558 = vunpack.c.l.s4 1983009808
        %v2559 = vunpack.c.0.s8 %v2558
        %v2560 = vlaneseq
        %v2561 = vshrl.u32 %v2560, 7
        %v2562 = vsub.s32 %v2559, %v2561
        %v2563 = vrot.slane %v1347, %v2562
        %v2565 = vunpack.c.l.s4 1983009808
        %v2566 = vunpack.c.0.s8 %v2565
        %v2567 = vlaneseq
        %v2568 = vshrl.u32 %v2567, 7
        %v2569 = vsub.s32 %v2566, %v2568
        %v2570 = vrot.slane %v2556, %v2569
        %v2571 = vcombine.low %v2548, %v2563
        %v2572 = vcombine.high %v2548, %v2563
        %v2574 = vunpack.c.l.s4 1934713408
        %v2575 = vunpack.c.0.s8 %v2574
        %v2576 = vlaneseq
        %v2577 = vshrl.u32 %v2576, 7
        %v2578 = vsub.s32 %v2575, %v2577
        %v2579 = vrot.slane %v2571, %v2578
        %v2581 = vunpack.c.l.s4 1934713408
        %v2582 = vunpack.c.0.s8 %v2581
        %v2583 = vlaneseq
        %v2584 = vshrl.u32 %v2583, 7
        %v2585 = vsub.s32 %v2582, %v2584
        %v2586 = vrot.slane %v2572, %v2585
        %v2587 = vcombine.low %v2555, %v2570
        %v2588 = vcombine.high %v2555, %v2570
        %v2590 = vunpack.c.l.s4 1934713408
        %v2591 = vunpack.c.0.s8 %v2590
        %v2592 = vlaneseq
        %v2593 = vshrl.u32 %v2592, 7
        %v2594 = vsub.s32 %v2591, %v2593
        %v2595 = vrot.slane %v2587, %v2594
        %v2597 = vunpack.c.l.s4 1934713408
        %v2598 = vunpack.c.0.s8 %v2597
        %v2599 = vlaneseq
        %v2600 = vshrl.u32 %v2599, 7
        %v2601 = vsub.s32 %v2598, %v2600
        %v2602 = vrot.slane %v2588, %v2601
        %v2603 = vcombine.high %v2579, 0.0
        %v2604 = vcombine.high %v2586, 0.0
        %v2605 = vcombine.high %v2595, 0.0
        %v2606 = vcombine.high %v2602, 0.0
        %v2607 = vcombine.high %v1351, 0.0
        %v2609 = vunpack.c.l.s4 1983009808
        %v2610 = vunpack.c.0.s8 %v2609
        %v2611 = vlaneseq
        %v2612 = vshrl.u32 %v2611, 7
        %v2613 = vsub.s32 %v2610, %v2612
        %v2614 = vrot.slane %v1351, %v2613
        %v2616 = vunpack.c.l.s4 1983009808
        %v2617 = vunpack.c.0.s8 %v2616
        %v2618 = vlaneseq
        %v2619 = vshrl.u32 %v2618, 7
        %v2620 = vsub.s32 %v2617, %v2619
        %v2621 = vrot.slane %v2607, %v2620
        %v2622 = vcombine.high %v1353, 0.0
        %v2624 = vunpack.c.l.s4 1983009808
        %v2625 = vunpack.c.0.s8 %v2624
        %v2626 = vlaneseq
        %v2627 = vshrl.u32 %v2626, 7
        %v2628 = vsub.s32 %v2625, %v2627
        %v2629 = vrot.slane %v1353, %v2628
        %v2631 = vunpack.c.l.s4 1983009808
        %v2632 = vunpack.c.0.s8 %v2631
        %v2633 = vlaneseq
        %v2634 = vshrl.u32 %v2633, 7
        %v2635 = vsub.s32 %v2632, %v2634
        %v2636 = vrot.slane %v2622, %v2635
        %v2637 = vcombine.low %v2614, %v2629
        %v2638 = vcombine.high %v2614, %v2629
        %v2640 = vunpack.c.l.s4 1934713408
        %v2641 = vunpack.c.0.s8 %v2640
        %v2642 = vlaneseq
        %v2643 = vshrl.u32 %v2642, 7
        %v2644 = vsub.s32 %v2641, %v2643
        %v2645 = vrot.slane %v2637, %v2644
        %v2647 = vunpack.c.l.s4 1934713408
        %v2648 = vunpack.c.0.s8 %v2647
        %v2649 = vlaneseq
        %v2650 = vshrl.u32 %v2649, 7
        %v2651 = vsub.s32 %v2648, %v2650
        %v2652 = vrot.slane %v2638, %v2651
        %v2653 = vcombine.low %v2621, %v2636
        %v2654 = vcombine.high %v2621, %v2636
        %v2656 = vunpack.c.l.s4 1934713408
        %v2657 = vunpack.c.0.s8 %v2656
        %v2658 = vlaneseq
        %v2659 = vshrl.u32 %v2658, 7
        %v2660 = vsub.s32 %v2657, %v2659
        %v2661 = vrot.slane %v2653, %v2660
        %v2663 = vunpack.c.l.s4 1934713408
        %v2664 = vunpack.c.0.s8 %v2663
        %v2665 = vlaneseq
        %v2666 = vshrl.u32 %v2665, 7
        %v2667 = vsub.s32 %v2664, %v2666
        %v2668 = vrot.slane %v2654, %v2667
        %v2669 = vcombine.high %v2645, 0.0
        %v2670 = vcombine.high %v2652, 0.0
        %v2671 = vcombine.high %v2661, 0.0
        %v2672 = vcombine.high %v2668, 0.0
        %v2673 = vcombine.high %v1357, 0.0
        %v2675 = vunpack.c.l.s4 1983009808
        %v2676 = vunpack.c.0.s8 %v2675
        %v2677 = vlaneseq
        %v2678 = vshrl.u32 %v2677, 7
        %v2679 = vsub.s32 %v2676, %v2678
        %v2680 = vrot.slane %v1357, %v2679
        %v2682 = vunpack.c.l.s4 1983009808
        %v2683 = vunpack.c.0.s8 %v2682
        %v2684 = vlaneseq
        %v2685 = vshrl.u32 %v2684, 7
        %v2686 = vsub.s32 %v2683, %v2685
        %v2687 = vrot.slane %v2673, %v2686
        %v2688 = vcombine.high %v1359, 0.0
        %v2690 = vunpack.c.l.s4 1983009808
        %v2691 = vunpack.c.0.s8 %v2690
        %v2692 = vlaneseq
        %v2693 = vshrl.u32 %v2692, 7
        %v2694 = vsub.s32 %v2691, %v2693
        %v2695 = vrot.slane %v1359, %v2694
        %v2697 = vunpack.c.l.s4 1983009808
        %v2698 = vunpack.c.0.s8 %v2697
        %v2699 = vlaneseq
        %v2700 = vshrl.u32 %v2699, 7
        %v2701 = vsub.s32 %v2698, %v2700
        %v2702 = vrot.slane %v2688, %v2701
        %v2703 = vcombine.low %v2680, %v2695
        %v2704 = vcombine.high %v2680, %v2695
        %v2706 = vunpack.c.l.s4 1934713408
        %v2707 = vunpack.c.0.s8 %v2706
        %v2708 = vlaneseq
        %v2709 = vshrl.u32 %v2708, 7
        %v2710 = vsub.s32 %v2707, %v2709
        %v2711 = vrot.slane %v2703, %v2710
        %v2713 = vunpack.c.l.s4 1934713408
        %v2714 = vunpack.c.0.s8 %v2713
        %v2715 = vlaneseq
        %v2716 = vshrl.u32 %v2715, 7
        %v2717 = vsub.s32 %v2714, %v2716
        %v2718 = vrot.slane %v2704, %v2717
        %v2719 = vcombine.low %v2687, %v2702
        %v2720 = vcombine.high %v2687, %v2702
        %v2722 = vunpack.c.l.s4 1934713408
        %v2723 = vunpack.c.0.s8 %v2722
        %v2724 = vlaneseq
        %v2725 = vshrl.u32 %v2724, 7
        %v2726 = vsub.s32 %v2723, %v2725
        %v2727 = vrot.slane %v2719, %v2726
        %v2729 = vunpack.c.l.s4 1934713408
        %v2730 = vunpack.c.0.s8 %v2729
        %v2731 = vlaneseq
        %v2732 = vshrl.u32 %v2731, 7
        %v2733 = vsub.s32 %v2730, %v2732
        %v2734 = vrot.slane %v2720, %v2733
        %v2735 = vcombine.high %v2711, 0.0
        %v2736 = vcombine.high %v2718, 0.0
        %v2737 = vcombine.high %v2727, 0.0
        %v2738 = vcombine.high %v2734, 0.0
        %v2739 = vcombine.low %v1721, %v1728
        %v2741 = vunpack.c.l.s4 1983009808
        %v2742 = vunpack.c.0.s8 %v2741
        %v2743 = vlaneseq
        %v2744 = vshrl.u32 %v2743, 7
        %v2745 = vsub.s32 %v2742, %v2744
        %v2746 = vrot.slane %v2739, %v2745
        %v2747 = vcombine.low %v1745, %v1746
        %v2749 = vunpack.c.l.s4 1983009808
        %v2750 = vunpack.c.0.s8 %v2749
        %v2751 = vlaneseq
        %v2752 = vshrl.u32 %v2751, 7
        %v2753 = vsub.s32 %v2750, %v2752
        %v2754 = vrot.slane %v2747, %v2753
        %v2755 = vcombine.low %v1737, %v1744
        %v2757 = vunpack.c.l.s4 1983009808
        %v2758 = vunpack.c.0.s8 %v2757
        %v2759 = vlaneseq
        %v2760 = vshrl.u32 %v2759, 7
        %v2761 = vsub.s32 %v2758, %v2760
        %v2762 = vrot.slane %v2755, %v2761
        %v2763 = vcombine.low %v1747, %v1748
        %v2765 = vunpack.c.l.s4 1983009808
        %v2766 = vunpack.c.0.s8 %v2765
        %v2767 = vlaneseq
        %v2768 = vshrl.u32 %v2767, 7
        %v2769 = vsub.s32 %v2766, %v2768
        %v2770 = vrot.slane %v2763, %v2769
        %v2771 = vcombine.low %v2746, %v2754
        %v2773 = vunpack.c.l.s4 1934713408
        %v2774 = vunpack.c.0.s8 %v2773
        %v2775 = vlaneseq
        %v2776 = vshrl.u32 %v2775, 7
        %v2777 = vsub.s32 %v2774, %v2776
        %v2778 = vrot.slane %v2771, %v2777
        %v2779 = vcombine.low %v2762, %v2770
        %v2781 = vunpack.c.l.s4 1934713408
        %v2782 = vunpack.c.0.s8 %v2781
        %v2783 = vlaneseq
        %v2784 = vshrl.u32 %v2783, 7
        %v2785 = vsub.s32 %v2782, %v2784
        %v2786 = vrot.slane %v2779, %v2785
        %v2787 = vcombine.low %v2778, %v2786
        %v2788 = vcombine.high %v2778, %v2786
        %v2789 = vcombine.low %v1787, %v1794
        %v2791 = vunpack.c.l.s4 1983009808
        %v2792 = vunpack.c.0.s8 %v2791
        %v2793 = vlaneseq
        %v2794 = vshrl.u32 %v2793, 7
        %v2795 = vsub.s32 %v2792, %v2794
        %v2796 = vrot.slane %v2789, %v2795
        %v2797 = vcombine.low %v1811, %v1812
        %v2799 = vunpack.c.l.s4 1983009808
        %v2800 = vunpack.c.0.s8 %v2799
        %v2801 = vlaneseq
        %v2802 = vshrl.u32 %v2801, 7
        %v2803 = vsub.s32 %v2800, %v2802
        %v2804 = vrot.slane %v2797, %v2803
        %v2805 = vcombine.low %v1803, %v1810
        %v2807 = vunpack.c.l.s4 1983009808
        %v2808 = vunpack.c.0.s8 %v2807
        %v2809 = vlaneseq
        %v2810 = vshrl.u32 %v2809, 7
        %v2811 = vsub.s32 %v2808, %v2810
        %v2812 = vrot.slane %v2805, %v2811
        %v2813 = vcombine.low %v1813, %v1814
        %v2815 = vunpack.c.l.s4 1983009808
        %v2816 = vunpack.c.0.s8 %v2815
        %v2817 = vlaneseq
        %v2818 = vshrl.u32 %v2817, 7
        %v2819 = vsub.s32 %v2816, %v2818
        %v2820 = vrot.slane %v2813, %v2819
        %v2821 = vcombine.low %v2796, %v2804
        %v2823 = vunpack.c.l.s4 1934713408
        %v2824 = vunpack.c.0.s8 %v2823
        %v2825 = vlaneseq
        %v2826 = vshrl.u32 %v2825, 7
        %v2827 = vsub.s32 %v2824, %v2826
        %v2828 = vrot.slane %v2821, %v2827
        %v2829 = vcombine.low %v2812, %v2820
        %v2831 = vunpack.c.l.s4 1934713408
        %v2832 = vunpack.c.0.s8 %v2831
        %v2833 = vlaneseq
        %v2834 = vshrl.u32 %v2833, 7
        %v2835 = vsub.s32 %v2832, %v2834
        %v2836 = vrot.slane %v2829, %v2835
        %v2837 = vcombine.low %v2828, %v2836
        %v2838 = vcombine.high %v2828, %v2836
        %v2839 = vcombine.low %v1853, %v1860
        %v2841 = vunpack.c.l.s4 1983009808
        %v2842 = vunpack.c.0.s8 %v2841
        %v2843 = vlaneseq
        %v2844 = vshrl.u32 %v2843, 7
        %v2845 = vsub.s32 %v2842, %v2844
        %v2846 = vrot.slane %v2839, %v2845
        %v2847 = vcombine.low %v1877, %v1878
        %v2849 = vunpack.c.l.s4 1983009808
        %v2850 = vunpack.c.0.s8 %v2849
        %v2851 = vlaneseq
        %v2852 = vshrl.u32 %v2851, 7
        %v2853 = vsub.s32 %v2850, %v2852
        %v2854 = vrot.slane %v2847, %v2853
        %v2855 = vcombine.low %v1869, %v1876
        %v2857 = vunpack.c.l.s4 1983009808
        %v2858 = vunpack.c.0.s8 %v2857
        %v2859 = vlaneseq
        %v2860 = vshrl.u32 %v2859, 7
        %v2861 = vsub.s32 %v2858, %v2860
        %v2862 = vrot.slane %v2855, %v2861
        %v2863 = vcombine.low %v1879, %v1880
        %v2865 = vunpack.c.l.s4 1983009808
        %v2866 = vunpack.c.0.s8 %v2865
        %v2867 = vlaneseq
        %v2868 = vshrl.u32 %v2867, 7
        %v2869 = vsub.s32 %v2866, %v2868
        %v2870 = vrot.slane %v2863, %v2869
        %v2871 = vcombine.low %v2846, %v2854
        %v2873 = vunpack.c.l.s4 1934713408
        %v2874 = vunpack.c.0.s8 %v2873
        %v2875 = vlaneseq
        %v2876 = vshrl.u32 %v2875, 7
        %v2877 = vsub.s32 %v2874, %v2876
        %v2878 = vrot.slane %v2871, %v2877
        %v2879 = vcombine.low %v2862, %v2870
        %v2881 = vunpack.c.l.s4 1934713408
        %v2882 = vunpack.c.0.s8 %v2881
        %v2883 = vlaneseq
        %v2884 = vshrl.u32 %v2883, 7
        %v2885 = vsub.s32 %v2882, %v2884
        %v2886 = vrot.slane %v2879, %v2885
        %v2887 = vcombine.low %v2878, %v2886
        %v2888 = vcombine.high %v2878, %v2886
        %v2889 = vcombine.low %v1919, %v1926
        %v2891 = vunpack.c.l.s4 1983009808
        %v2892 = vunpack.c.0.s8 %v2891
        %v2893 = vlaneseq
        %v2894 = vshrl.u32 %v2893, 7
        %v2895 = vsub.s32 %v2892, %v2894
        %v2896 = vrot.slane %v2889, %v2895
        %v2897 = vcombine.low %v1943, %v1944
        %v2899 = vunpack.c.l.s4 1983009808
        %v2900 = vunpack.c.0.s8 %v2899
        %v2901 = vlaneseq
        %v2902 = vshrl.u32 %v2901, 7
        %v2903 = vsub.s32 %v2900, %v2902
        %v2904 = vrot.slane %v2897, %v2903
        %v2905 = vcombine.low %v1935, %v1942
        %v2907 = vunpack.c.l.s4 1983009808
        %v2908 = vunpack.c.0.s8 %v2907
        %v2909 = vlaneseq
        %v2910 = vshrl.u32 %v2909, 7
        %v2911 = vsub.s32 %v2908, %v2910
        %v2912 = vrot.slane %v2905, %v2911
        %v2913 = vcombine.low %v1945, %v1946
        %v2915 = vunpack.c.l.s4 1983009808
        %v2916 = vunpack.c.0.s8 %v2915
        %v2917 = vlaneseq
        %v2918 = vshrl.u32 %v2917, 7
        %v2919 = vsub.s32 %v2916, %v2918
        %v2920 = vrot.slane %v2913, %v2919
        %v2921 = vcombine.low %v2896, %v2904
        %v2923 = vunpack.c.l.s4 1934713408
        %v2924 = vunpack.c.0.s8 %v2923
        %v2925 = vlaneseq
        %v2926 = vshrl.u32 %v2925, 7
        %v2927 = vsub.s32 %v2924, %v2926
        %v2928 = vrot.slane %v2921, %v2927
        %v2929 = vcombine.low %v2912, %v2920
        %v2931 = vunpack.c.l.s4 1934713408
        %v2932 = vunpack.c.0.s8 %v2931
        %v2933 = vlaneseq
        %v2934 = vshrl.u32 %v2933, 7
        %v2935 = vsub.s32 %v2932, %v2934
        %v2936 = vrot.slane %v2929, %v2935
        %v2937 = vcombine.low %v2928, %v2936
        %v2938 = vcombine.high %v2928, %v2936
        %v2939 = vcombine.low %v1985, %v1992
        %v2941 = vunpack.c.l.s4 1983009808
        %v2942 = vunpack.c.0.s8 %v2941
        %v2943 = vlaneseq
        %v2944 = vshrl.u32 %v2943, 7
        %v2945 = vsub.s32 %v2942, %v2944
        %v2946 = vrot.slane %v2939, %v2945
        %v2947 = vcombine.low %v2009, %v2010
        %v2949 = vunpack.c.l.s4 1983009808
        %v2950 = vunpack.c.0.s8 %v2949
        %v2951 = vlaneseq
        %v2952 = vshrl.u32 %v2951, 7
        %v2953 = vsub.s32 %v2950, %v2952
        %v2954 = vrot.slane %v2947, %v2953
        %v2955 = vcombine.low %v2001, %v2008
        %v2957 = vunpack.c.l.s4 1983009808
        %v2958 = vunpack.c.0.s8 %v2957
        %v2959 = vlaneseq
        %v2960 = vshrl.u32 %v2959, 7
        %v2961 = vsub.s32 %v2958, %v2960
        %v2962 = vrot.slane %v2955, %v2961
        %v2963 = vcombine.low %v2011, %v2012
        %v2965 = vunpack.c.l.s4 1983009808
        %v2966 = vunpack.c.0.s8 %v2965
        %v2967 = vlaneseq
        %v2968 = vshrl.u32 %v2967, 7
        %v2969 = vsub.s32 %v2966, %v2968
        %v2970 = vrot.slane %v2963, %v2969
        %v2971 = vcombine.low %v2946, %v2954
        %v2973 = vunpack.c.l.s4 1934713408
        %v2974 = vunpack.c.0.s8 %v2973
        %v2975 = vlaneseq
        %v2976 = vshrl.u32 %v2975, 7
        %v2977 = vsub.s32 %v2974, %v2976
        %v2978 = vrot.slane %v2971, %v2977
        %v2979 = vcombine.low %v2962, %v2970
        %v2981 = vunpack.c.l.s4 1934713408
        %v2982 = vunpack.c.0.s8 %v2981
        %v2983 = vlaneseq
        %v2984 = vshrl.u32 %v2983, 7
        %v2985 = vsub.s32 %v2982, %v2984
        %v2986 = vrot.slane %v2979, %v2985
        %v2987 = vcombine.low %v2978, %v2986
        %v2988 = vcombine.high %v2978, %v2986
        %v2989 = vcombine.low %v2051, %v2058
        %v2991 = vunpack.c.l.s4 1983009808
        %v2992 = vunpack.c.0.s8 %v2991
        %v2993 = vlaneseq
        %v2994 = vshrl.u32 %v2993, 7
        %v2995 = vsub.s32 %v2992, %v2994
        %v2996 = vrot.slane %v2989, %v2995
        %v2997 = vcombine.low %v2075, %v2076
        %v2999 = vunpack.c.l.s4 1983009808
        %v3000 = vunpack.c.0.s8 %v2999
        %v3001 = vlaneseq
        %v3002 = vshrl.u32 %v3001, 7
        %v3003 = vsub.s32 %v3000, %v3002
        %v3004 = vrot.slane %v2997, %v3003
        %v3005 = vcombine.low %v2067, %v2074
        %v3007 = vunpack.c.l.s4 1983009808
        %v3008 = vunpack.c.0.s8 %v3007
        %v3009 = vlaneseq
        %v3010 = vshrl.u32 %v3009, 7
        %v3011 = vsub.s32 %v3008, %v3010
        %v3012 = vrot.slane %v3005, %v3011
        %v3013 = vcombine.low %v2077, %v2078
        %v3015 = vunpack.c.l.s4 1983009808
        %v3016 = vunpack.c.0.s8 %v3015
        %v3017 = vlaneseq
        %v3018 = vshrl.u32 %v3017, 7
        %v3019 = vsub.s32 %v3016, %v3018
        %v3020 = vrot.slane %v3013, %v3019
        %v3021 = vcombine.low %v2996, %v3004
        %v3023 = vunpack.c.l.s4 1934713408
        %v3024 = vunpack.c.0.s8 %v3023
        %v3025 = vlaneseq
        %v3026 = vshrl.u32 %v3025, 7
        %v3027 = vsub.s32 %v3024, %v3026
        %v3028 = vrot.slane %v3021, %v3027
        %v3029 = vcombine.low %v3012, %v3020
        %v3031 = vunpack.c.l.s4 1934713408
        %v3032 = vunpack.c.0.s8 %v3031
        %v3033 = vlaneseq
        %v3034 = vshrl.u32 %v3033, 7
        %v3035 = vsub.s32 %v3032, %v3034
        %v3036 = vrot.slane %v3029, %v3035
        %v3037 = vcombine.low %v3028, %v3036
        %v3038 = vcombine.high %v3028, %v3036
        %v3039 = vcombine.low %v2117, %v2124
        %v3041 = vunpack.c.l.s4 1983009808
        %v3042 = vunpack.c.0.s8 %v3041
        %v3043 = vlaneseq
        %v3044 = vshrl.u32 %v3043, 7
        %v3045 = vsub.s32 %v3042, %v3044
        %v3046 = vrot.slane %v3039, %v3045
        %v3047 = vcombine.low %v2141, %v2142
        %v3049 = vunpack.c.l.s4 1983009808
        %v3050 = vunpack.c.0.s8 %v3049
        %v3051 = vlaneseq
        %v3052 = vshrl.u32 %v3051, 7
        %v3053 = vsub.s32 %v3050, %v3052
        %v3054 = vrot.slane %v3047, %v3053
        %v3055 = vcombine.low %v2133, %v2140
        %v3057 = vunpack.c.l.s4 1983009808
        %v3058 = vunpack.c.0.s8 %v3057
        %v3059 = vlaneseq
        %v3060 = vshrl.u32 %v3059, 7
        %v3061 = vsub.s32 %v3058, %v3060
        %v3062 = vrot.slane %v3055, %v3061
        %v3063 = vcombine.low %v2143, %v2144
        %v3065 = vunpack.c.l.s4 1983009808
        %v3066 = vunpack.c.0.s8 %v3065
        %v3067 = vlaneseq
        %v3068 = vshrl.u32 %v3067, 7
        %v3069 = vsub.s32 %v3066, %v3068
        %v3070 = vrot.slane %v3063, %v3069
        %v3071 = vcombine.low %v3046, %v3054
        %v3073 = vunpack.c.l.s4 1934713408
        %v3074 = vunpack.c.0.s8 %v3073
        %v3075 = vlaneseq
        %v3076 = vshrl.u32 %v3075, 7
        %v3077 = vsub.s32 %v3074, %v3076
        %v3078 = vrot.slane %v3071, %v3077
        %v3079 = vcombine.low %v3062, %v3070
        %v3081 = vunpack.c.l.s4 1934713408
        %v3082 = vunpack.c.0.s8 %v3081
        %v3083 = vlaneseq
        %v3084 = vshrl.u32 %v3083, 7
        %v3085 = vsub.s32 %v3082, %v3084
        %v3086 = vrot.slane %v3079, %v3085
        %v3087 = vcombine.low %v3078, %v3086
        %v3088 = vcombine.high %v3078, %v3086
        %v3089 = vcombine.low %v2183, %v2190
        %v3091 = vunpack.c.l.s4 1983009808
        %v3092 = vunpack.c.0.s8 %v3091
        %v3093 = vlaneseq
        %v3094 = vshrl.u32 %v3093, 7
        %v3095 = vsub.s32 %v3092, %v3094
        %v3096 = vrot.slane %v3089, %v3095
        %v3097 = vcombine.low %v2207, %v2208
        %v3099 = vunpack.c.l.s4 1983009808
        %v3100 = vunpack.c.0.s8 %v3099
        %v3101 = vlaneseq
        %v3102 = vshrl.u32 %v3101, 7
        %v3103 = vsub.s32 %v3100, %v3102
        %v3104 = vrot.slane %v3097, %v3103
        %v3105 = vcombine.low %v2199, %v2206
        %v3107 = vunpack.c.l.s4 1983009808
        %v3108 = vunpack.c.0.s8 %v3107
        %v3109 = vlaneseq
        %v3110 = vshrl.u32 %v3109, 7
        %v3111 = vsub.s32 %v3108, %v3110
        %v3112 = vrot.slane %v3105, %v3111
        %v3113 = vcombine.low %v2209, %v2210
        %v3115 = vunpack.c.l.s4 1983009808
        %v3116 = vunpack.c.0.s8 %v3115
        %v3117 = vlaneseq
        %v3118 = vshrl.u32 %v3117, 7
        %v3119 = vsub.s32 %v3116, %v3118
        %v3120 = vrot.slane %v3113, %v3119
        %v3121 = vcombine.low %v3096, %v3104
        %v3123 = vunpack.c.l.s4 1934713408
        %v3124 = vunpack.c.0.s8 %v3123
        %v3125 = vlaneseq
        %v3126 = vshrl.u32 %v3125, 7
        %v3127 = vsub.s32 %v3124, %v3126
        %v3128 = vrot.slane %v3121, %v3127
        %v3129 = vcombine.low %v3112, %v3120
        %v3131 = vunpack.c.l.s4 1934713408
        %v3132 = vunpack.c.0.s8 %v3131
        %v3133 = vlaneseq
        %v3134 = vshrl.u32 %v3133, 7
        %v3135 = vsub.s32 %v3132, %v3134
        %v3136 = vrot.slane %v3129, %v3135
        %v3137 = vcombine.low %v3128, %v3136
        %v3138 = vcombine.high %v3128, %v3136
        %v3139 = vcombine.low %v2249, %v2256
        %v3141 = vunpack.c.l.s4 1983009808
        %v3142 = vunpack.c.0.s8 %v3141
        %v3143 = vlaneseq
        %v3144 = vshrl.u32 %v3143, 7
        %v3145 = vsub.s32 %v3142, %v3144
        %v3146 = vrot.slane %v3139, %v3145
        %v3147 = vcombine.low %v2273, %v2274
        %v3149 = vunpack.c.l.s4 1983009808
        %v3150 = vunpack.c.0.s8 %v3149
        %v3151 = vlaneseq
        %v3152 = vshrl.u32 %v3151, 7
        %v3153 = vsub.s32 %v3150, %v3152
        %v3154 = vrot.slane %v3147, %v3153
        %v3155 = vcombine.low %v2265, %v2272
        %v3157 = vunpack.c.l.s4 1983009808
        %v3158 = vunpack.c.0.s8 %v3157
        %v3159 = vlaneseq
        %v3160 = vshrl.u32 %v3159, 7
        %v3161 = vsub.s32 %v3158, %v3160
        %v3162 = vrot.slane %v3155, %v3161
        %v3163 = vcombine.low %v2275, %v2276
        %v3165 = vunpack.c.l.s4 1983009808
        %v3166 = vunpack.c.0.s8 %v3165
        %v3167 = vlaneseq
        %v3168 = vshrl.u32 %v3167, 7
        %v3169 = vsub.s32 %v3166, %v3168
        %v3170 = vrot.slane %v3163, %v3169
        %v3171 = vcombine.low %v3146, %v3154
        %v3173 = vunpack.c.l.s4 1934713408
        %v3174 = vunpack.c.0.s8 %v3173
        %v3175 = vlaneseq
        %v3176 = vshrl.u32 %v3175, 7
        %v3177 = vsub.s32 %v3174, %v3176
        %v3178 = vrot.slane %v3171, %v3177
        %v3179 = vcombine.low %v3162, %v3170
        %v3181 = vunpack.c.l.s4 1934713408
        %v3182 = vunpack.c.0.s8 %v3181
        %v3183 = vlaneseq
        %v3184 = vshrl.u32 %v3183, 7
        %v3185 = vsub.s32 %v3182, %v3184
        %v3186 = vrot.slane %v3179, %v3185
        %v3187 = vcombine.low %v3178, %v3186
        %v3188 = vcombine.high %v3178, %v3186
        %v3189 = vcombine.low %v2315, %v2322
        %v3191 = vunpack.c.l.s4 1983009808
        %v3192 = vunpack.c.0.s8 %v3191
        %v3193 = vlaneseq
        %v3194 = vshrl.u32 %v3193, 7
        %v3195 = vsub.s32 %v3192, %v3194
        %v3196 = vrot.slane %v3189, %v3195
        %v3197 = vcombine.low %v2339, %v2340
        %v3199 = vunpack.c.l.s4 1983009808
        %v3200 = vunpack.c.0.s8 %v3199
        %v3201 = vlaneseq
        %v3202 = vshrl.u32 %v3201, 7
        %v3203 = vsub.s32 %v3200, %v3202
        %v3204 = vrot.slane %v3197, %v3203
        %v3205 = vcombine.low %v2331, %v2338
        %v3207 = vunpack.c.l.s4 1983009808
        %v3208 = vunpack.c.0.s8 %v3207
        %v3209 = vlaneseq
        %v3210 = vshrl.u32 %v3209, 7
        %v3211 = vsub.s32 %v3208, %v3210
        %v3212 = vrot.slane %v3205, %v3211
        %v3213 = vcombine.low %v2341, %v2342
        %v3215 = vunpack.c.l.s4 1983009808
        %v3216 = vunpack.c.0.s8 %v3215
        %v3217 = vlaneseq
        %v3218 = vshrl.u32 %v3217, 7
        %v3219 = vsub.s32 %v3216, %v3218
        %v3220 = vrot.slane %v3213, %v3219
        %v3221 = vcombine.low %v3196, %v3204
        %v3223 = vunpack.c.l.s4 1934713408
        %v3224 = vunpack.c.0.s8 %v3223
        %v3225 = vlaneseq
        %v3226 = vshrl.u32 %v3225, 7
        %v3227 = vsub.s32 %v3224, %v3226
        %v3228 = vrot.slane %v3221, %v3227
        %v3229 = vcombine.low %v3212, %v3220
        %v3231 = vunpack.c.l.s4 1934713408
        %v3232 = vunpack.c.0.s8 %v3231
        %v3233 = vlaneseq
        %v3234 = vshrl.u32 %v3233, 7
        %v3235 = vsub.s32 %v3232, %v3234
        %v3236 = vrot.slane %v3229, %v3235
        %v3237 = vcombine.low %v3228, %v3236
        %v3238 = vcombine.high %v3228, %v3236
        %v3239 = vcombine.low %v2381, %v2388
        %v3241 = vunpack.c.l.s4 1983009808
        %v3242 = vunpack.c.0.s8 %v3241
        %v3243 = vlaneseq
        %v3244 = vshrl.u32 %v3243, 7
        %v3245 = vsub.s32 %v3242, %v3244
        %v3246 = vrot.slane %v3239, %v3245
        %v3247 = vcombine.low %v2405, %v2406
        %v3249 = vunpack.c.l.s4 1983009808
        %v3250 = vunpack.c.0.s8 %v3249
        %v3251 = vlaneseq
        %v3252 = vshrl.u32 %v3251, 7
        %v3253 = vsub.s32 %v3250, %v3252
        %v3254 = vrot.slane %v3247, %v3253
        %v3255 = vcombine.low %v2397, %v2404
        %v3257 = vunpack.c.l.s4 1983009808
        %v3258 = vunpack.c.0.s8 %v3257
        %v3259 = vlaneseq
        %v3260 = vshrl.u32 %v3259, 7
        %v3261 = vsub.s32 %v3258, %v3260
        %v3262 = vrot.slane %v3255, %v3261
        %v3263 = vcombine.low %v2407, %v2408
        %v3265 = vunpack.c.l.s4 1983009808
        %v3266 = vunpack.c.0.s8 %v3265
        %v3267 = vlaneseq
        %v3268 = vshrl.u32 %v3267, 7
        %v3269 = vsub.s32 %v3266, %v3268
        %v3270 = vrot.slane %v3263, %v3269
        %v3271 = vcombine.low %v3246, %v3254
        %v3273 = vunpack.c.l.s4 1934713408
        %v3274 = vunpack.c.0.s8 %v3273
        %v3275 = vlaneseq
        %v3276 = vshrl.u32 %v3275, 7
        %v3277 = vsub.s32 %v3274, %v3276
        %v3278 = vrot.slane %v3271, %v3277
        %v3279 = vcombine.low %v3262, %v3270
        %v3281 = vunpack.c.l.s4 1934713408
        %v3282 = vunpack.c.0.s8 %v3281
        %v3283 = vlaneseq
        %v3284 = vshrl.u32 %v3283, 7
        %v3285 = vsub.s32 %v3282, %v3284
        %v3286 = vrot.slane %v3279, %v3285
        %v3287 = vcombine.low %v3278, %v3286
        %v3288 = vcombine.high %v3278, %v3286
        %v3289 = vcombine.low %v2447, %v2454
        %v3291 = vunpack.c.l.s4 1983009808
        %v3292 = vunpack.c.0.s8 %v3291
        %v3293 = vlaneseq
        %v3294 = vshrl.u32 %v3293, 7
        %v3295 = vsub.s32 %v3292, %v3294
        %v3296 = vrot.slane %v3289, %v3295
        %v3297 = vcombine.low %v2471, %v2472
        %v3299 = vunpack.c.l.s4 1983009808
        %v3300 = vunpack.c.0.s8 %v3299
        %v3301 = vlaneseq
        %v3302 = vshrl.u32 %v3301, 7
        %v3303 = vsub.s32 %v3300, %v3302
        %v3304 = vrot.slane %v3297, %v3303
        %v3305 = vcombine.low %v2463, %v2470
        %v3307 = vunpack.c.l.s4 1983009808
        %v3308 = vunpack.c.0.s8 %v3307
        %v3309 = vlaneseq
        %v3310 = vshrl.u32 %v3309, 7
        %v3311 = vsub.s32 %v3308, %v3310
        %v3312 = vrot.slane %v3305, %v3311
        %v3313 = vcombine.low %v2473, %v2474
        %v3315 = vunpack.c.l.s4 1983009808
        %v3316 = vunpack.c.0.s8 %v3315
        %v3317 = vlaneseq
        %v3318 = vshrl.u32 %v3317, 7
        %v3319 = vsub.s32 %v3316, %v3318
        %v3320 = vrot.slane %v3313, %v3319
        %v3321 = vcombine.low %v3296, %v3304
        %v3323 = vunpack.c.l.s4 1934713408
        %v3324 = vunpack.c.0.s8 %v3323
        %v3325 = vlaneseq
        %v3326 = vshrl.u32 %v3325, 7
        %v3327 = vsub.s32 %v3324, %v3326
        %v3328 = vrot.slane %v3321, %v3327
        %v3329 = vcombine.low %v3312, %v3320
        %v3331 = vunpack.c.l.s4 1934713408
        %v3332 = vunpack.c.0.s8 %v3331
        %v3333 = vlaneseq
        %v3334 = vshrl.u32 %v3333, 7
        %v3335 = vsub.s32 %v3332, %v3334
        %v3336 = vrot.slane %v3329, %v3335
        %v3337 = vcombine.low %v3328, %v3336
        %v3338 = vcombine.high %v3328, %v3336
        %v3339 = vcombine.low %v2513, %v2520
        %v3341 = vunpack.c.l.s4 1983009808
        %v3342 = vunpack.c.0.s8 %v3341
        %v3343 = vlaneseq
        %v3344 = vshrl.u32 %v3343, 7
        %v3345 = vsub.s32 %v3342, %v3344
        %v3346 = vrot.slane %v3339, %v3345
        %v3347 = vcombine.low %v2537, %v2538
        %v3349 = vunpack.c.l.s4 1983009808
        %v3350 = vunpack.c.0.s8 %v3349
        %v3351 = vlaneseq
        %v3352 = vshrl.u32 %v3351, 7
        %v3353 = vsub.s32 %v3350, %v3352
        %v3354 = vrot.slane %v3347, %v3353
        %v3355 = vcombine.low %v2529, %v2536
        %v3357 = vunpack.c.l.s4 1983009808
        %v3358 = vunpack.c.0.s8 %v3357
        %v3359 = vlaneseq
        %v3360 = vshrl.u32 %v3359, 7
        %v3361 = vsub.s32 %v3358, %v3360
        %v3362 = vrot.slane %v3355, %v3361
        %v3363 = vcombine.low %v2539, %v2540
        %v3365 = vunpack.c.l.s4 1983009808
        %v3366 = vunpack.c.0.s8 %v3365
        %v3367 = vlaneseq
        %v3368 = vshrl.u32 %v3367, 7
        %v3369 = vsub.s32 %v3366, %v3368
        %v3370 = vrot.slane %v3363, %v3369
        %v3371 = vcombine.low %v3346, %v3354
        %v3373 = vunpack.c.l.s4 1934713408
        %v3374 = vunpack.c.0.s8 %v3373
        %v3375 = vlaneseq
        %v3376 = vshrl.u32 %v3375, 7
        %v3377 = vsub.s32 %v3374, %v3376
        %v3378 = vrot.slane %v3371, %v3377
        %v3379 = vcombine.low %v3362, %v3370
        %v3381 = vunpack.c.l.s4 1934713408
        %v3382 = vunpack.c.0.s8 %v3381
        %v3383 = vlaneseq
        %v3384 = vshrl.u32 %v3383, 7
        %v3385 = vsub.s32 %v3382, %v3384
        %v3386 = vrot.slane %v3379, %v3385
        %v3387 = vcombine.low %v3378, %v3386
        %v3388 = vcombine.high %v3378, %v3386
        %v3389 = vcombine.low %v2579, %v2586
        %v3391 = vunpack.c.l.s4 1983009808
        %v3392 = vunpack.c.0.s8 %v3391
        %v3393 = vlaneseq
        %v3394 = vshrl.u32 %v3393, 7
        %v3395 = vsub.s32 %v3392, %v3394
        %v3396 = vrot.slane %v3389, %v3395
        %v3397 = vcombine.low %v2603, %v2604
        %v3399 = vunpack.c.l.s4 1983009808
        %v3400 = vunpack.c.0.s8 %v3399
        %v3401 = vlaneseq
        %v3402 = vshrl.u32 %v3401, 7
        %v3403 = vsub.s32 %v3400, %v3402
        %v3404 = vrot.slane %v3397, %v3403
        %v3405 = vcombine.low %v2595, %v2602
        %v3407 = vunpack.c.l.s4 1983009808
        %v3408 = vunpack.c.0.s8 %v3407
        %v3409 = vlaneseq
        %v3410 = vshrl.u32 %v3409, 7
        %v3411 = vsub.s32 %v3408, %v3410
        %v3412 = vrot.slane %v3405, %v3411
        %v3413 = vcombine.low %v2605, %v2606
        %v3415 = vunpack.c.l.s4 1983009808
        %v3416 = vunpack.c.0.s8 %v3415
        %v3417 = vlaneseq
        %v3418 = vshrl.u32 %v3417, 7
        %v3419 = vsub.s32 %v3416, %v3418
        %v3420 = vrot.slane %v3413, %v3419
        %v3421 = vcombine.low %v3396, %v3404
        %v3423 = vunpack.c.l.s4 1934713408
        %v3424 = vunpack.c.0.s8 %v3423
        %v3425 = vlaneseq
        %v3426 = vshrl.u32 %v3425, 7
        %v3427 = vsub.s32 %v3424, %v3426
        %v3428 = vrot.slane %v3421, %v3427
        %v3429 = vcombine.low %v3412, %v3420
        %v3431 = vunpack.c.l.s4 1934713408
        %v3432 = vunpack.c.0.s8 %v3431
        %v3433 = vlaneseq
        %v3434 = vshrl.u32 %v3433, 7
        %v3435 = vsub.s32 %v3432, %v3434
        %v3436 = vrot.slane %v3429, %v3435
        %v3437 = vcombine.low %v3428, %v3436
        %v3438 = vcombine.high %v3428, %v3436
        %v3439 = vcombine.low %v2645, %v2652
        %v3441 = vunpack.c.l.s4 1983009808
        %v3442 = vunpack.c.0.s8 %v3441
        %v3443 = vlaneseq
        %v3444 = vshrl.u32 %v3443, 7
        %v3445 = vsub.s32 %v3442, %v3444
        %v3446 = vrot.slane %v3439, %v3445
        %v3447 = vcombine.low %v2669, %v2670
        %v3449 = vunpack.c.l.s4 1983009808
        %v3450 = vunpack.c.0.s8 %v3449
        %v3451 = vlaneseq
        %v3452 = vshrl.u32 %v3451, 7
        %v3453 = vsub.s32 %v3450, %v3452
        %v3454 = vrot.slane %v3447, %v3453
        %v3455 = vcombine.low %v2661, %v2668
        %v3457 = vunpack.c.l.s4 1983009808
        %v3458 = vunpack.c.0.s8 %v3457
        %v3459 = vlaneseq
        %v3460 = vshrl.u32 %v3459, 7
        %v3461 = vsub.s32 %v3458, %v3460
        %v3462 = vrot.slane %v3455, %v3461
        %v3463 = vcombine.low %v2671, %v2672
        %v3465 = vunpack.c.l.s4 1983009808
        %v3466 = vunpack.c.0.s8 %v3465
        %v3467 = vlaneseq
        %v3468 = vshrl.u32 %v3467, 7
        %v3469 = vsub.s32 %v3466, %v3468
        %v3470 = vrot.slane %v3463, %v3469
        %v3471 = vcombine.low %v3446, %v3454
        %v3473 = vunpack.c.l.s4 1934713408
        %v3474 = vunpack.c.0.s8 %v3473
        %v3475 = vlaneseq
        %v3476 = vshrl.u32 %v3475, 7
        %v3477 = vsub.s32 %v3474, %v3476
        %v3478 = vrot.slane %v3471, %v3477
        %v3479 = vcombine.low %v3462, %v3470
        %v3481 = vunpack.c.l.s4 1934713408
        %v3482 = vunpack.c.0.s8 %v3481
        %v3483 = vlaneseq
        %v3484 = vshrl.u32 %v3483, 7
        %v3485 = vsub.s32 %v3482, %v3484
        %v3486 = vrot.slane %v3479, %v3485
        %v3487 = vcombine.low %v3478, %v3486
        %v3488 = vcombine.high %v3478, %v3486
        %v3489 = vcombine.low %v2711, %v2718
        %v3491 = vunpack.c.l.s4 1983009808
        %v3492 = vunpack.c.0.s8 %v3491
        %v3493 = vlaneseq
        %v3494 = vshrl.u32 %v3493, 7
        %v3495 = vsub.s32 %v3492, %v3494
        %v3496 = vrot.slane %v3489, %v3495
        %v3497 = vcombine.low %v2735, %v2736
        %v3499 = vunpack.c.l.s4 1983009808
        %v3500 = vunpack.c.0.s8 %v3499
        %v3501 = vlaneseq
        %v3502 = vshrl.u32 %v3501, 7
        %v3503 = vsub.s32 %v3500, %v3502
        %v3504 = vrot.slane %v3497, %v3503
        %v3505 = vcombine.low %v2727, %v2734
        %v3507 = vunpack.c.l.s4 1983009808
        %v3508 = vunpack.c.0.s8 %v3507
        %v3509 = vlaneseq
        %v3510 = vshrl.u32 %v3509, 7
        %v3511 = vsub.s32 %v3508, %v3510
        %v3512 = vrot.slane %v3505, %v3511
        %v3513 = vcombine.low %v2737, %v2738
        %v3515 = vunpack.c.l.s4 1983009808
        %v3516 = vunpack.c.0.s8 %v3515
        %v3517 = vlaneseq
        %v3518 = vshrl.u32 %v3517, 7
        %v3519 = vsub.s32 %v3516, %v3518
        %v3520 = vrot.slane %v3513, %v3519
        %v3521 = vcombine.low %v3496, %v3504
        %v3523 = vunpack.c.l.s4 1934713408
        %v3524 = vunpack.c.0.s8 %v3523
        %v3525 = vlaneseq
        %v3526 = vshrl.u32 %v3525, 7
        %v3527 = vsub.s32 %v3524, %v3526
        %v3528 = vrot.slane %v3521, %v3527
        %v3529 = vcombine.low %v3512, %v3520
        %v3531 = vunpack.c.l.s4 1934713408
        %v3532 = vunpack.c.0.s8 %v3531
        %v3533 = vlaneseq
        %v3534 = vshrl.u32 %v3533, 7
        %v3535 = vsub.s32 %v3532, %v3534
        %v3536 = vrot.slane %v3529, %v3535
        %v3537 = vcombine.low %v3528, %v3536
        %v3538 = vcombine.high %v3528, %v3536
        %v3539 = vcombine.high %v1428, 0.0
        %v3541 = vunpack.c.l.s4 1983009808
        %v3542 = vunpack.c.0.s8 %v3541
        %v3543 = vlaneseq
        %v3544 = vshrl.u32 %v3543, 7
        %v3545 = vsub.s32 %v3542, %v3544
        %v3546 = vrot.slane %v1428, %v3545
        %v3548 = vunpack.c.l.s4 1983009808
        %v3549 = vunpack.c.0.s8 %v3548
        %v3550 = vlaneseq
        %v3551 = vshrl.u32 %v3550, 7
        %v3552 = vsub.s32 %v3549, %v3551
        %v3553 = vrot.slane %v3539, %v3552
        %v3554 = vcombine.high %v1430, 0.0
        %v3556 = vunpack.c.l.s4 1983009808
        %v3557 = vunpack.c.0.s8 %v3556
        %v3558 = vlaneseq
        %v3559 = vshrl.u32 %v3558, 7
        %v3560 = vsub.s32 %v3557, %v3559
        %v3561 = vrot.slane %v1430, %v3560
        %v3563 = vunpack.c.l.s4 1983009808
        %v3564 = vunpack.c.0.s8 %v3563
        %v3565 = vlaneseq
        %v3566 = vshrl.u32 %v3565, 7
        %v3567 = vsub.s32 %v3564, %v3566
        %v3568 = vrot.slane %v3554, %v3567
        %v3569 = vcombine.low %v3546, %v3561
        %v3570 = vcombine.high %v3546, %v3561
        %v3572 = vunpack.c.l.s4 1934713408
        %v3573 = vunpack.c.0.s8 %v3572
        %v3574 = vlaneseq
        %v3575 = vshrl.u32 %v3574, 7
        %v3576 = vsub.s32 %v3573, %v3575
        %v3577 = vrot.slane %v3569, %v3576
        %v3579 = vunpack.c.l.s4 1934713408
        %v3580 = vunpack.c.0.s8 %v3579
        %v3581 = vlaneseq
        %v3582 = vshrl.u32 %v3581, 7
        %v3583 = vsub.s32 %v3580, %v3582
        %v3584 = vrot.slane %v3570, %v3583
        %v3585 = vcombine.low %v3553, %v3568
        %v3586 = vcombine.high %v3553, %v3568
        %v3588 = vunpack.c.l.s4 1934713408
        %v3589 = vunpack.c.0.s8 %v3588
        %v3590 = vlaneseq
        %v3591 = vshrl.u32 %v3590, 7
        %v3592 = vsub.s32 %v3589, %v3591
        %v3593 = vrot.slane %v3585, %v3592
        %v3595 = vunpack.c.l.s4 1934713408
        %v3596 = vunpack.c.0.s8 %v3595
        %v3597 = vlaneseq
        %v3598 = vshrl.u32 %v3597, 7
        %v3599 = vsub.s32 %v3596, %v3598
        %v3600 = vrot.slane %v3586, %v3599
        %v3601 = vcombine.high %v3577, 0.0
        %v3602 = vcombine.high %v3584, 0.0
        %v3603 = vcombine.high %v3593, 0.0
        %v3604 = vcombine.high %v3600, 0.0
        %v3605 = vcombine.high %v1434, 0.0
        %v3607 = vunpack.c.l.s4 1983009808
        %v3608 = vunpack.c.0.s8 %v3607
        %v3609 = vlaneseq
        %v3610 = vshrl.u32 %v3609, 7
        %v3611 = vsub.s32 %v3608, %v3610
        %v3612 = vrot.slane %v1434, %v3611
        %v3614 = vunpack.c.l.s4 1983009808
        %v3615 = vunpack.c.0.s8 %v3614
        %v3616 = vlaneseq
        %v3617 = vshrl.u32 %v3616, 7
        %v3618 = vsub.s32 %v3615, %v3617
        %v3619 = vrot.slane %v3605, %v3618
        %v3620 = vcombine.high %v1436, 0.0
        %v3622 = vunpack.c.l.s4 1983009808
        %v3623 = vunpack.c.0.s8 %v3622
        %v3624 = vlaneseq
        %v3625 = vshrl.u32 %v3624, 7
        %v3626 = vsub.s32 %v3623, %v3625
        %v3627 = vrot.slane %v1436, %v3626
        %v3629 = vunpack.c.l.s4 1983009808
        %v3630 = vunpack.c.0.s8 %v3629
        %v3631 = vlaneseq
        %v3632 = vshrl.u32 %v3631, 7
        %v3633 = vsub.s32 %v3630, %v3632
        %v3634 = vrot.slane %v3620, %v3633
        %v3635 = vcombine.low %v3612, %v3627
        %v3636 = vcombine.high %v3612, %v3627
        %v3638 = vunpack.c.l.s4 1934713408
        %v3639 = vunpack.c.0.s8 %v3638
        %v3640 = vlaneseq
        %v3641 = vshrl.u32 %v3640, 7
        %v3642 = vsub.s32 %v3639, %v3641
        %v3643 = vrot.slane %v3635, %v3642
        %v3645 = vunpack.c.l.s4 1934713408
        %v3646 = vunpack.c.0.s8 %v3645
        %v3647 = vlaneseq
        %v3648 = vshrl.u32 %v3647, 7
        %v3649 = vsub.s32 %v3646, %v3648
        %v3650 = vrot.slane %v3636, %v3649
        %v3651 = vcombine.low %v3619, %v3634
        %v3652 = vcombine.high %v3619, %v3634
        %v3654 = vunpack.c.l.s4 1934713408
        %v3655 = vunpack.c.0.s8 %v3654
        %v3656 = vlaneseq
        %v3657 = vshrl.u32 %v3656, 7
        %v3658 = vsub.s32 %v3655, %v3657
        %v3659 = vrot.slane %v3651, %v3658
        %v3661 = vunpack.c.l.s4 1934713408
        %v3662 = vunpack.c.0.s8 %v3661
        %v3663 = vlaneseq
        %v3664 = vshrl.u32 %v3663, 7
        %v3665 = vsub.s32 %v3662, %v3664
        %v3666 = vrot.slane %v3652, %v3665
        %v3667 = vcombine.high %v3643, 0.0
        %v3668 = vcombine.high %v3650, 0.0
        %v3669 = vcombine.high %v3659, 0.0
        %v3670 = vcombine.high %v3666, 0.0
        %v3671 = vcombine.high %v1440, 0.0
        %v3673 = vunpack.c.l.s4 1983009808
        %v3674 = vunpack.c.0.s8 %v3673
        %v3675 = vlaneseq
        %v3676 = vshrl.u32 %v3675, 7
        %v3677 = vsub.s32 %v3674, %v3676
        %v3678 = vrot.slane %v1440, %v3677
        %v3680 = vunpack.c.l.s4 1983009808
        %v3681 = vunpack.c.0.s8 %v3680
        %v3682 = vlaneseq
        %v3683 = vshrl.u32 %v3682, 7
        %v3684 = vsub.s32 %v3681, %v3683
        %v3685 = vrot.slane %v3671, %v3684
        %v3686 = vcombine.high %v1442, 0.0
        %v3688 = vunpack.c.l.s4 1983009808
        %v3689 = vunpack.c.0.s8 %v3688
        %v3690 = vlaneseq
        %v3691 = vshrl.u32 %v3690, 7
        %v3692 = vsub.s32 %v3689, %v3691
        %v3693 = vrot.slane %v1442, %v3692
        %v3695 = vunpack.c.l.s4 1983009808
        %v3696 = vunpack.c.0.s8 %v3695
        %v3697 = vlaneseq
        %v3698 = vshrl.u32 %v3697, 7
        %v3699 = vsub.s32 %v3696, %v3698
        %v3700 = vrot.slane %v3686, %v3699
        %v3701 = vcombine.low %v3678, %v3693
        %v3702 = vcombine.high %v3678, %v3693
        %v3704 = vunpack.c.l.s4 1934713408
        %v3705 = vunpack.c.0.s8 %v3704
        %v3706 = vlaneseq
        %v3707 = vshrl.u32 %v3706, 7
        %v3708 = vsub.s32 %v3705, %v3707
        %v3709 = vrot.slane %v3701, %v3708
        %v3711 = vunpack.c.l.s4 1934713408
        %v3712 = vunpack.c.0.s8 %v3711
        %v3713 = vlaneseq
        %v3714 = vshrl.u32 %v3713, 7
        %v3715 = vsub.s32 %v3712, %v3714
        %v3716 = vrot.slane %v3702, %v3715
        %v3717 = vcombine.low %v3685, %v3700
        %v3718 = vcombine.high %v3685, %v3700
        %v3720 = vunpack.c.l.s4 1934713408
        %v3721 = vunpack.c.0.s8 %v3720
        %v3722 = vlaneseq
        %v3723 = vshrl.u32 %v3722, 7
        %v3724 = vsub.s32 %v3721, %v3723
        %v3725 = vrot.slane %v3717, %v3724
        %v3727 = vunpack.c.l.s4 1934713408
        %v3728 = vunpack.c.0.s8 %v3727
        %v3729 = vlaneseq
        %v3730 = vshrl.u32 %v3729, 7
        %v3731 = vsub.s32 %v3728, %v3730
        %v3732 = vrot.slane %v3718, %v3731
        %v3733 = vcombine.high %v3709, 0.0
        %v3734 = vcombine.high %v3716, 0.0
        %v3735 = vcombine.high %v3725, 0.0
        %v3736 = vcombine.high %v3732, 0.0
        %v3737 = vcombine.high %v1446, 0.0
        %v3739 = vunpack.c.l.s4 1983009808
        %v3740 = vunpack.c.0.s8 %v3739
        %v3741 = vlaneseq
        %v3742 = vshrl.u32 %v3741, 7
        %v3743 = vsub.s32 %v3740, %v3742
        %v3744 = vrot.slane %v1446, %v3743
        %v3746 = vunpack.c.l.s4 1983009808
        %v3747 = vunpack.c.0.s8 %v3746
        %v3748 = vlaneseq
        %v3749 = vshrl.u32 %v3748, 7
        %v3750 = vsub.s32 %v3747, %v3749
        %v3751 = vrot.slane %v3737, %v3750
        %v3752 = vcombine.high %v1448, 0.0
        %v3754 = vunpack.c.l.s4 1983009808
        %v3755 = vunpack.c.0.s8 %v3754
        %v3756 = vlaneseq
        %v3757 = vshrl.u32 %v3756, 7
        %v3758 = vsub.s32 %v3755, %v3757
        %v3759 = vrot.slane %v1448, %v3758
        %v3761 = vunpack.c.l.s4 1983009808
        %v3762 = vunpack.c.0.s8 %v3761
        %v3763 = vlaneseq
        %v3764 = vshrl.u32 %v3763, 7
        %v3765 = vsub.s32 %v3762, %v3764
        %v3766 = vrot.slane %v3752, %v3765
        %v3767 = vcombine.low %v3744, %v3759
        %v3768 = vcombine.high %v3744, %v3759
        %v3770 = vunpack.c.l.s4 1934713408
        %v3771 = vunpack.c.0.s8 %v3770
        %v3772 = vlaneseq
        %v3773 = vshrl.u32 %v3772, 7
        %v3774 = vsub.s32 %v3771, %v3773
        %v3775 = vrot.slane %v3767, %v3774
        %v3777 = vunpack.c.l.s4 1934713408
        %v3778 = vunpack.c.0.s8 %v3777
        %v3779 = vlaneseq
        %v3780 = vshrl.u32 %v3779, 7
        %v3781 = vsub.s32 %v3778, %v3780
        %v3782 = vrot.slane %v3768, %v3781
        %v3783 = vcombine.low %v3751, %v3766
        %v3784 = vcombine.high %v3751, %v3766
        %v3786 = vunpack.c.l.s4 1934713408
        %v3787 = vunpack.c.0.s8 %v3786
        %v3788 = vlaneseq
        %v3789 = vshrl.u32 %v3788, 7
        %v3790 = vsub.s32 %v3787, %v3789
        %v3791 = vrot.slane %v3783, %v3790
        %v3793 = vunpack.c.l.s4 1934713408
        %v3794 = vunpack.c.0.s8 %v3793
        %v3795 = vlaneseq
        %v3796 = vshrl.u32 %v3795, 7
        %v3797 = vsub.s32 %v3794, %v3796
        %v3798 = vrot.slane %v3784, %v3797
        %v3799 = vcombine.high %v3775, 0.0
        %v3800 = vcombine.high %v3782, 0.0
        %v3801 = vcombine.high %v3791, 0.0
        %v3802 = vcombine.high %v3798, 0.0
        %v3803 = vcombine.high %v1452, 0.0
        %v3805 = vunpack.c.l.s4 1983009808
        %v3806 = vunpack.c.0.s8 %v3805
        %v3807 = vlaneseq
        %v3808 = vshrl.u32 %v3807, 7
        %v3809 = vsub.s32 %v3806, %v3808
        %v3810 = vrot.slane %v1452, %v3809
        %v3812 = vunpack.c.l.s4 1983009808
        %v3813 = vunpack.c.0.s8 %v3812
        %v3814 = vlaneseq
        %v3815 = vshrl.u32 %v3814, 7
        %v3816 = vsub.s32 %v3813, %v3815
        %v3817 = vrot.slane %v3803, %v3816
        %v3818 = vcombine.high %v1454, 0.0
        %v3820 = vunpack.c.l.s4 1983009808
        %v3821 = vunpack.c.0.s8 %v3820
        %v3822 = vlaneseq
        %v3823 = vshrl.u32 %v3822, 7
        %v3824 = vsub.s32 %v3821, %v3823
        %v3825 = vrot.slane %v1454, %v3824
        %v3827 = vunpack.c.l.s4 1983009808
        %v3828 = vunpack.c.0.s8 %v3827
        %v3829 = vlaneseq
        %v3830 = vshrl.u32 %v3829, 7
        %v3831 = vsub.s32 %v3828, %v3830
        %v3832 = vrot.slane %v3818, %v3831
        %v3833 = vcombine.low %v3810, %v3825
        %v3834 = vcombine.high %v3810, %v3825
        %v3836 = vunpack.c.l.s4 1934713408
        %v3837 = vunpack.c.0.s8 %v3836
        %v3838 = vlaneseq
        %v3839 = vshrl.u32 %v3838, 7
        %v3840 = vsub.s32 %v3837, %v3839
        %v3841 = vrot.slane %v3833, %v3840
        %v3843 = vunpack.c.l.s4 1934713408
        %v3844 = vunpack.c.0.s8 %v3843
        %v3845 = vlaneseq
        %v3846 = vshrl.u32 %v3845, 7
        %v3847 = vsub.s32 %v3844, %v3846
        %v3848 = vrot.slane %v3834, %v3847
        %v3849 = vcombine.low %v3817, %v3832
        %v3850 = vcombine.high %v3817, %v3832
        %v3852 = vunpack.c.l.s4 1934713408
        %v3853 = vunpack.c.0.s8 %v3852
        %v3854 = vlaneseq
        %v3855 = vshrl.u32 %v3854, 7
        %v3856 = vsub.s32 %v3853, %v3855
        %v3857 = vrot.slane %v3849, %v3856
        %v3859 = vunpack.c.l.s4 1934713408
        %v3860 = vunpack.c.0.s8 %v3859
        %v3861 = vlaneseq
        %v3862 = vshrl.u32 %v3861, 7
        %v3863 = vsub.s32 %v3860, %v3862
        %v3864 = vrot.slane %v3850, %v3863
        %v3865 = vcombine.high %v3841, 0.0
        %v3866 = vcombine.high %v3848, 0.0
        %v3867 = vcombine.high %v3857, 0.0
        %v3868 = vcombine.high %v3864, 0.0
        %v3869 = vcombine.high %v1458, 0.0
        %v3871 = vunpack.c.l.s4 1983009808
        %v3872 = vunpack.c.0.s8 %v3871
        %v3873 = vlaneseq
        %v3874 = vshrl.u32 %v3873, 7
        %v3875 = vsub.s32 %v3872, %v3874
        %v3876 = vrot.slane %v1458, %v3875
        %v3878 = vunpack.c.l.s4 1983009808
        %v3879 = vunpack.c.0.s8 %v3878
        %v3880 = vlaneseq
        %v3881 = vshrl.u32 %v3880, 7
        %v3882 = vsub.s32 %v3879, %v3881
        %v3883 = vrot.slane %v3869, %v3882
        %v3884 = vcombine.high %v1460, 0.0
        %v3886 = vunpack.c.l.s4 1983009808
        %v3887 = vunpack.c.0.s8 %v3886
        %v3888 = vlaneseq
        %v3889 = vshrl.u32 %v3888, 7
        %v3890 = vsub.s32 %v3887, %v3889
        %v3891 = vrot.slane %v1460, %v3890
        %v3893 = vunpack.c.l.s4 1983009808
        %v3894 = vunpack.c.0.s8 %v3893
        %v3895 = vlaneseq
        %v3896 = vshrl.u32 %v3895, 7
        %v3897 = vsub.s32 %v3894, %v3896
        %v3898 = vrot.slane %v3884, %v3897
        %v3899 = vcombine.low %v3876, %v3891
        %v3900 = vcombine.high %v3876, %v3891
        %v3902 = vunpack.c.l.s4 1934713408
        %v3903 = vunpack.c.0.s8 %v3902
        %v3904 = vlaneseq
        %v3905 = vshrl.u32 %v3904, 7
        %v3906 = vsub.s32 %v3903, %v3905
        %v3907 = vrot.slane %v3899, %v3906
        %v3909 = vunpack.c.l.s4 1934713408
        %v3910 = vunpack.c.0.s8 %v3909
        %v3911 = vlaneseq
        %v3912 = vshrl.u32 %v3911, 7
        %v3913 = vsub.s32 %v3910, %v3912
        %v3914 = vrot.slane %v3900, %v3913
        %v3915 = vcombine.low %v3883, %v3898
        %v3916 = vcombine.high %v3883, %v3898
        %v3918 = vunpack.c.l.s4 1934713408
        %v3919 = vunpack.c.0.s8 %v3918
        %v3920 = vlaneseq
        %v3921 = vshrl.u32 %v3920, 7
        %v3922 = vsub.s32 %v3919, %v3921
        %v3923 = vrot.slane %v3915, %v3922
        %v3925 = vunpack.c.l.s4 1934713408
        %v3926 = vunpack.c.0.s8 %v3925
        %v3927 = vlaneseq
        %v3928 = vshrl.u32 %v3927, 7
        %v3929 = vsub.s32 %v3926, %v3928
        %v3930 = vrot.slane %v3916, %v3929
        %v3931 = vcombine.high %v3907, 0.0
        %v3932 = vcombine.high %v3914, 0.0
        %v3933 = vcombine.high %v3923, 0.0
        %v3934 = vcombine.high %v3930, 0.0
        %v3935 = vcombine.high %v1464, 0.0
        %v3937 = vunpack.c.l.s4 1983009808
        %v3938 = vunpack.c.0.s8 %v3937
        %v3939 = vlaneseq
        %v3940 = vshrl.u32 %v3939, 7
        %v3941 = vsub.s32 %v3938, %v3940
        %v3942 = vrot.slane %v1464, %v3941
        %v3944 = vunpack.c.l.s4 1983009808
        %v3945 = vunpack.c.0.s8 %v3944
        %v3946 = vlaneseq
        %v3947 = vshrl.u32 %v3946, 7
        %v3948 = vsub.s32 %v3945, %v3947
        %v3949 = vrot.slane %v3935, %v3948
        %v3950 = vcombine.high %v1466, 0.0
        %v3952 = vunpack.c.l.s4 1983009808
        %v3953 = vunpack.c.0.s8 %v3952
        %v3954 = vlaneseq
        %v3955 = vshrl.u32 %v3954, 7
        %v3956 = vsub.s32 %v3953, %v3955
        %v3957 = vrot.slane %v1466, %v3956
        %v3959 = vunpack.c.l.s4 1983009808
        %v3960 = vunpack.c.0.s8 %v3959
        %v3961 = vlaneseq
        %v3962 = vshrl.u32 %v3961, 7
        %v3963 = vsub.s32 %v3960, %v3962
        %v3964 = vrot.slane %v3950, %v3963
        %v3965 = vcombine.low %v3942, %v3957
        %v3966 = vcombine.high %v3942, %v3957
        %v3968 = vunpack.c.l.s4 1934713408
        %v3969 = vunpack.c.0.s8 %v3968
        %v3970 = vlaneseq
        %v3971 = vshrl.u32 %v3970, 7
        %v3972 = vsub.s32 %v3969, %v3971
        %v3973 = vrot.slane %v3965, %v3972
        %v3975 = vunpack.c.l.s4 1934713408
        %v3976 = vunpack.c.0.s8 %v3975
        %v3977 = vlaneseq
        %v3978 = vshrl.u32 %v3977, 7
        %v3979 = vsub.s32 %v3976, %v3978
        %v3980 = vrot.slane %v3966, %v3979
        %v3981 = vcombine.low %v3949, %v3964
        %v3982 = vcombine.high %v3949, %v3964
        %v3984 = vunpack.c.l.s4 1934713408
        %v3985 = vunpack.c.0.s8 %v3984
        %v3986 = vlaneseq
        %v3987 = vshrl.u32 %v3986, 7
        %v3988 = vsub.s32 %v3985, %v3987
        %v3989 = vrot.slane %v3981, %v3988
        %v3991 = vunpack.c.l.s4 1934713408
        %v3992 = vunpack.c.0.s8 %v3991
        %v3993 = vlaneseq
        %v3994 = vshrl.u32 %v3993, 7
        %v3995 = vsub.s32 %v3992, %v3994
        %v3996 = vrot.slane %v3982, %v3995
        %v3997 = vcombine.high %v3973, 0.0
        %v3998 = vcombine.high %v3980, 0.0
        %v3999 = vcombine.high %v3989, 0.0
        %v4000 = vcombine.high %v3996, 0.0
        %v4001 = vcombine.high %v1470, 0.0
        %v4003 = vunpack.c.l.s4 1983009808
        %v4004 = vunpack.c.0.s8 %v4003
        %v4005 = vlaneseq
        %v4006 = vshrl.u32 %v4005, 7
        %v4007 = vsub.s32 %v4004, %v4006
        %v4008 = vrot.slane %v1470, %v4007
        %v4010 = vunpack.c.l.s4 1983009808
        %v4011 = vunpack.c.0.s8 %v4010
        %v4012 = vlaneseq
        %v4013 = vshrl.u32 %v4012, 7
        %v4014 = vsub.s32 %v4011, %v4013
        %v4015 = vrot.slane %v4001, %v4014
        %v4016 = vcombine.high %v1472, 0.0
        %v4018 = vunpack.c.l.s4 1983009808
        %v4019 = vunpack.c.0.s8 %v4018
        %v4020 = vlaneseq
        %v4021 = vshrl.u32 %v4020, 7
        %v4022 = vsub.s32 %v4019, %v4021
        %v4023 = vrot.slane %v1472, %v4022
        %v4025 = vunpack.c.l.s4 1983009808
        %v4026 = vunpack.c.0.s8 %v4025
        %v4027 = vlaneseq
        %v4028 = vshrl.u32 %v4027, 7
        %v4029 = vsub.s32 %v4026, %v4028
        %v4030 = vrot.slane %v4016, %v4029
        %v4031 = vcombine.low %v4008, %v4023
        %v4032 = vcombine.high %v4008, %v4023
        %v4034 = vunpack.c.l.s4 1934713408
        %v4035 = vunpack.c.0.s8 %v4034
        %v4036 = vlaneseq
        %v4037 = vshrl.u32 %v4036, 7
        %v4038 = vsub.s32 %v4035, %v4037
        %v4039 = vrot.slane %v4031, %v4038
        %v4041 = vunpack.c.l.s4 1934713408
        %v4042 = vunpack.c.0.s8 %v4041
        %v4043 = vlaneseq
        %v4044 = vshrl.u32 %v4043, 7
        %v4045 = vsub.s32 %v4042, %v4044
        %v4046 = vrot.slane %v4032, %v4045
        %v4047 = vcombine.low %v4015, %v4030
        %v4048 = vcombine.high %v4015, %v4030
        %v4050 = vunpack.c.l.s4 1934713408
        %v4051 = vunpack.c.0.s8 %v4050
        %v4052 = vlaneseq
        %v4053 = vshrl.u32 %v4052, 7
        %v4054 = vsub.s32 %v4051, %v4053
        %v4055 = vrot.slane %v4047, %v4054
        %v4057 = vunpack.c.l.s4 1934713408
        %v4058 = vunpack.c.0.s8 %v4057
        %v4059 = vlaneseq
        %v4060 = vshrl.u32 %v4059, 7
        %v4061 = vsub.s32 %v4058, %v4060
        %v4062 = vrot.slane %v4048, %v4061
        %v4063 = vcombine.high %v4039, 0.0
        %v4064 = vcombine.high %v4046, 0.0
        %v4065 = vcombine.high %v4055, 0.0
        %v4066 = vcombine.high %v4062, 0.0
        %v4067 = vcombine.high %v1476, 0.0
        %v4069 = vunpack.c.l.s4 1983009808
        %v4070 = vunpack.c.0.s8 %v4069
        %v4071 = vlaneseq
        %v4072 = vshrl.u32 %v4071, 7
        %v4073 = vsub.s32 %v4070, %v4072
        %v4074 = vrot.slane %v1476, %v4073
        %v4076 = vunpack.c.l.s4 1983009808
        %v4077 = vunpack.c.0.s8 %v4076
        %v4078 = vlaneseq
        %v4079 = vshrl.u32 %v4078, 7
        %v4080 = vsub.s32 %v4077, %v4079
        %v4081 = vrot.slane %v4067, %v4080
        %v4082 = vcombine.high %v1478, 0.0
        %v4084 = vunpack.c.l.s4 1983009808
        %v4085 = vunpack.c.0.s8 %v4084
        %v4086 = vlaneseq
        %v4087 = vshrl.u32 %v4086, 7
        %v4088 = vsub.s32 %v4085, %v4087
        %v4089 = vrot.slane %v1478, %v4088
        %v4091 = vunpack.c.l.s4 1983009808
        %v4092 = vunpack.c.0.s8 %v4091
        %v4093 = vlaneseq
        %v4094 = vshrl.u32 %v4093, 7
        %v4095 = vsub.s32 %v4092, %v4094
        %v4096 = vrot.slane %v4082, %v4095
        %v4097 = vcombine.low %v4074, %v4089
        %v4098 = vcombine.high %v4074, %v4089
        %v4100 = vunpack.c.l.s4 1934713408
        %v4101 = vunpack.c.0.s8 %v4100
        %v4102 = vlaneseq
        %v4103 = vshrl.u32 %v4102, 7
        %v4104 = vsub.s32 %v4101, %v4103
        %v4105 = vrot.slane %v4097, %v4104
        %v4107 = vunpack.c.l.s4 1934713408
        %v4108 = vunpack.c.0.s8 %v4107
        %v4109 = vlaneseq
        %v4110 = vshrl.u32 %v4109, 7
        %v4111 = vsub.s32 %v4108, %v4110
        %v4112 = vrot.slane %v4098, %v4111
        %v4113 = vcombine.low %v4081, %v4096
        %v4114 = vcombine.high %v4081, %v4096
        %v4116 = vunpack.c.l.s4 1934713408
        %v4117 = vunpack.c.0.s8 %v4116
        %v4118 = vlaneseq
        %v4119 = vshrl.u32 %v4118, 7
        %v4120 = vsub.s32 %v4117, %v4119
        %v4121 = vrot.slane %v4113, %v4120
        %v4123 = vunpack.c.l.s4 1934713408
        %v4124 = vunpack.c.0.s8 %v4123
        %v4125 = vlaneseq
        %v4126 = vshrl.u32 %v4125, 7
        %v4127 = vsub.s32 %v4124, %v4126
        %v4128 = vrot.slane %v4114, %v4127
        %v4129 = vcombine.high %v4105, 0.0
        %v4130 = vcombine.high %v4112, 0.0
        %v4131 = vcombine.high %v4121, 0.0
        %v4132 = vcombine.high %v4128, 0.0
        %v4133 = vcombine.high %v1482, 0.0
        %v4135 = vunpack.c.l.s4 1983009808
        %v4136 = vunpack.c.0.s8 %v4135
        %v4137 = vlaneseq
        %v4138 = vshrl.u32 %v4137, 7
        %v4139 = vsub.s32 %v4136, %v4138
        %v4140 = vrot.slane %v1482, %v4139
        %v4142 = vunpack.c.l.s4 1983009808
        %v4143 = vunpack.c.0.s8 %v4142
        %v4144 = vlaneseq
        %v4145 = vshrl.u32 %v4144, 7
        %v4146 = vsub.s32 %v4143, %v4145
        %v4147 = vrot.slane %v4133, %v4146
        %v4148 = vcombine.high %v1484, 0.0
        %v4150 = vunpack.c.l.s4 1983009808
        %v4151 = vunpack.c.0.s8 %v4150
        %v4152 = vlaneseq
        %v4153 = vshrl.u32 %v4152, 7
        %v4154 = vsub.s32 %v4151, %v4153
        %v4155 = vrot.slane %v1484, %v4154
        %v4157 = vunpack.c.l.s4 1983009808
        %v4158 = vunpack.c.0.s8 %v4157
        %v4159 = vlaneseq
        %v4160 = vshrl.u32 %v4159, 7
        %v4161 = vsub.s32 %v4158, %v4160
        %v4162 = vrot.slane %v4148, %v4161
        %v4163 = vcombine.low %v4140, %v4155
        %v4164 = vcombine.high %v4140, %v4155
        %v4166 = vunpack.c.l.s4 1934713408
        %v4167 = vunpack.c.0.s8 %v4166
        %v4168 = vlaneseq
        %v4169 = vshrl.u32 %v4168, 7
        %v4170 = vsub.s32 %v4167, %v4169
        %v4171 = vrot.slane %v4163, %v4170
        %v4173 = vunpack.c.l.s4 1934713408
        %v4174 = vunpack.c.0.s8 %v4173
        %v4175 = vlaneseq
        %v4176 = vshrl.u32 %v4175, 7
        %v4177 = vsub.s32 %v4174, %v4176
        %v4178 = vrot.slane %v4164, %v4177
        %v4179 = vcombine.low %v4147, %v4162
        %v4180 = vcombine.high %v4147, %v4162
        %v4182 = vunpack.c.l.s4 1934713408
        %v4183 = vunpack.c.0.s8 %v4182
        %v4184 = vlaneseq
        %v4185 = vshrl.u32 %v4184, 7
        %v4186 = vsub.s32 %v4183, %v4185
        %v4187 = vrot.slane %v4179, %v4186
        %v4189 = vunpack.c.l.s4 1934713408
        %v4190 = vunpack.c.0.s8 %v4189
        %v4191 = vlaneseq
        %v4192 = vshrl.u32 %v4191, 7
        %v4193 = vsub.s32 %v4190, %v4192
        %v4194 = vrot.slane %v4180, %v4193
        %v4195 = vcombine.high %v4171, 0.0
        %v4196 = vcombine.high %v4178, 0.0
        %v4197 = vcombine.high %v4187, 0.0
        %v4198 = vcombine.high %v4194, 0.0
        %v4199 = vcombine.high %v1488, 0.0
        %v4201 = vunpack.c.l.s4 1983009808
        %v4202 = vunpack.c.0.s8 %v4201
        %v4203 = vlaneseq
        %v4204 = vshrl.u32 %v4203, 7
        %v4205 = vsub.s32 %v4202, %v4204
        %v4206 = vrot.slane %v1488, %v4205
        %v4208 = vunpack.c.l.s4 1983009808
        %v4209 = vunpack.c.0.s8 %v4208
        %v4210 = vlaneseq
        %v4211 = vshrl.u32 %v4210, 7
        %v4212 = vsub.s32 %v4209, %v4211
        %v4213 = vrot.slane %v4199, %v4212
        %v4214 = vcombine.high %v1490, 0.0
        %v4216 = vunpack.c.l.s4 1983009808
        %v4217 = vunpack.c.0.s8 %v4216
        %v4218 = vlaneseq
        %v4219 = vshrl.u32 %v4218, 7
        %v4220 = vsub.s32 %v4217, %v4219
        %v4221 = vrot.slane %v1490, %v4220
        %v4223 = vunpack.c.l.s4 1983009808
        %v4224 = vunpack.c.0.s8 %v4223
        %v4225 = vlaneseq
        %v4226 = vshrl.u32 %v4225, 7
        %v4227 = vsub.s32 %v4224, %v4226
        %v4228 = vrot.slane %v4214, %v4227
        %v4229 = vcombine.low %v4206, %v4221
        %v4230 = vcombine.high %v4206, %v4221
        %v4232 = vunpack.c.l.s4 1934713408
        %v4233 = vunpack.c.0.s8 %v4232
        %v4234 = vlaneseq
        %v4235 = vshrl.u32 %v4234, 7
        %v4236 = vsub.s32 %v4233, %v4235
        %v4237 = vrot.slane %v4229, %v4236
        %v4239 = vunpack.c.l.s4 1934713408
        %v4240 = vunpack.c.0.s8 %v4239
        %v4241 = vlaneseq
        %v4242 = vshrl.u32 %v4241, 7
        %v4243 = vsub.s32 %v4240, %v4242
        %v4244 = vrot.slane %v4230, %v4243
        %v4245 = vcombine.low %v4213, %v4228
        %v4246 = vcombine.high %v4213, %v4228
        %v4248 = vunpack.c.l.s4 1934713408
        %v4249 = vunpack.c.0.s8 %v4248
        %v4250 = vlaneseq
        %v4251 = vshrl.u32 %v4250, 7
        %v4252 = vsub.s32 %v4249, %v4251
        %v4253 = vrot.slane %v4245, %v4252
        %v4255 = vunpack.c.l.s4 1934713408
        %v4256 = vunpack.c.0.s8 %v4255
        %v4257 = vlaneseq
        %v4258 = vshrl.u32 %v4257, 7
        %v4259 = vsub.s32 %v4256, %v4258
        %v4260 = vrot.slane %v4246, %v4259
        %v4261 = vcombine.high %v4237, 0.0
        %v4262 = vcombine.high %v4244, 0.0
        %v4263 = vcombine.high %v4253, 0.0
        %v4264 = vcombine.high %v4260, 0.0
        %v4265 = vcombine.high %v1494, 0.0
        %v4267 = vunpack.c.l.s4 1983009808
        %v4268 = vunpack.c.0.s8 %v4267
        %v4269 = vlaneseq
        %v4270 = vshrl.u32 %v4269, 7
        %v4271 = vsub.s32 %v4268, %v4270
        %v4272 = vrot.slane %v1494, %v4271
        %v4274 = vunpack.c.l.s4 1983009808
        %v4275 = vunpack.c.0.s8 %v4274
        %v4276 = vlaneseq
        %v4277 = vshrl.u32 %v4276, 7
        %v4278 = vsub.s32 %v4275, %v4277
        %v4279 = vrot.slane %v4265, %v4278
        %v4280 = vcombine.high %v1496, 0.0
        %v4282 = vunpack.c.l.s4 1983009808
        %v4283 = vunpack.c.0.s8 %v4282
        %v4284 = vlaneseq
        %v4285 = vshrl.u32 %v4284, 7
        %v4286 = vsub.s32 %v4283, %v4285
        %v4287 = vrot.slane %v1496, %v4286
        %v4289 = vunpack.c.l.s4 1983009808
        %v4290 = vunpack.c.0.s8 %v4289
        %v4291 = vlaneseq
        %v4292 = vshrl.u32 %v4291, 7
        %v4293 = vsub.s32 %v4290, %v4292
        %v4294 = vrot.slane %v4280, %v4293
        %v4295 = vcombine.low %v4272, %v4287
        %v4296 = vcombine.high %v4272, %v4287
        %v4298 = vunpack.c.l.s4 1934713408
        %v4299 = vunpack.c.0.s8 %v4298
        %v4300 = vlaneseq
        %v4301 = vshrl.u32 %v4300, 7
        %v4302 = vsub.s32 %v4299, %v4301
        %v4303 = vrot.slane %v4295, %v4302
        %v4305 = vunpack.c.l.s4 1934713408
        %v4306 = vunpack.c.0.s8 %v4305
        %v4307 = vlaneseq
        %v4308 = vshrl.u32 %v4307, 7
        %v4309 = vsub.s32 %v4306, %v4308
        %v4310 = vrot.slane %v4296, %v4309
        %v4311 = vcombine.low %v4279, %v4294
        %v4312 = vcombine.high %v4279, %v4294
        %v4314 = vunpack.c.l.s4 1934713408
        %v4315 = vunpack.c.0.s8 %v4314
        %v4316 = vlaneseq
        %v4317 = vshrl.u32 %v4316, 7
        %v4318 = vsub.s32 %v4315, %v4317
        %v4319 = vrot.slane %v4311, %v4318
        %v4321 = vunpack.c.l.s4 1934713408
        %v4322 = vunpack.c.0.s8 %v4321
        %v4323 = vlaneseq
        %v4324 = vshrl.u32 %v4323, 7
        %v4325 = vsub.s32 %v4322, %v4324
        %v4326 = vrot.slane %v4312, %v4325
        %v4327 = vcombine.high %v4303, 0.0
        %v4328 = vcombine.high %v4310, 0.0
        %v4329 = vcombine.high %v4319, 0.0
        %v4330 = vcombine.high %v4326, 0.0
        %v4331 = vcombine.high %v1500, 0.0
        %v4333 = vunpack.c.l.s4 1983009808
        %v4334 = vunpack.c.0.s8 %v4333
        %v4335 = vlaneseq
        %v4336 = vshrl.u32 %v4335, 7
        %v4337 = vsub.s32 %v4334, %v4336
        %v4338 = vrot.slane %v1500, %v4337
        %v4340 = vunpack.c.l.s4 1983009808
        %v4341 = vunpack.c.0.s8 %v4340
        %v4342 = vlaneseq
        %v4343 = vshrl.u32 %v4342, 7
        %v4344 = vsub.s32 %v4341, %v4343
        %v4345 = vrot.slane %v4331, %v4344
        %v4346 = vcombine.high %v1502, 0.0
        %v4348 = vunpack.c.l.s4 1983009808
        %v4349 = vunpack.c.0.s8 %v4348
        %v4350 = vlaneseq
        %v4351 = vshrl.u32 %v4350, 7
        %v4352 = vsub.s32 %v4349, %v4351
        %v4353 = vrot.slane %v1502, %v4352
        %v4355 = vunpack.c.l.s4 1983009808
        %v4356 = vunpack.c.0.s8 %v4355
        %v4357 = vlaneseq
        %v4358 = vshrl.u32 %v4357, 7
        %v4359 = vsub.s32 %v4356, %v4358
        %v4360 = vrot.slane %v4346, %v4359
        %v4361 = vcombine.low %v4338, %v4353
        %v4362 = vcombine.high %v4338, %v4353
        %v4364 = vunpack.c.l.s4 1934713408
        %v4365 = vunpack.c.0.s8 %v4364
        %v4366 = vlaneseq
        %v4367 = vshrl.u32 %v4366, 7
        %v4368 = vsub.s32 %v4365, %v4367
        %v4369 = vrot.slane %v4361, %v4368
        %v4371 = vunpack.c.l.s4 1934713408
        %v4372 = vunpack.c.0.s8 %v4371
        %v4373 = vlaneseq
        %v4374 = vshrl.u32 %v4373, 7
        %v4375 = vsub.s32 %v4372, %v4374
        %v4376 = vrot.slane %v4362, %v4375
        %v4377 = vcombine.low %v4345, %v4360
        %v4378 = vcombine.high %v4345, %v4360
        %v4380 = vunpack.c.l.s4 1934713408
        %v4381 = vunpack.c.0.s8 %v4380
        %v4382 = vlaneseq
        %v4383 = vshrl.u32 %v4382, 7
        %v4384 = vsub.s32 %v4381, %v4383
        %v4385 = vrot.slane %v4377, %v4384
        %v4387 = vunpack.c.l.s4 1934713408
        %v4388 = vunpack.c.0.s8 %v4387
        %v4389 = vlaneseq
        %v4390 = vshrl.u32 %v4389, 7
        %v4391 = vsub.s32 %v4388, %v4390
        %v4392 = vrot.slane %v4378, %v4391
        %v4393 = vcombine.high %v4369, 0.0
        %v4394 = vcombine.high %v4376, 0.0
        %v4395 = vcombine.high %v4385, 0.0
        %v4396 = vcombine.high %v4392, 0.0
        %v4397 = vcombine.high %v1506, 0.0
        %v4399 = vunpack.c.l.s4 1983009808
        %v4400 = vunpack.c.0.s8 %v4399
        %v4401 = vlaneseq
        %v4402 = vshrl.u32 %v4401, 7
        %v4403 = vsub.s32 %v4400, %v4402
        %v4404 = vrot.slane %v1506, %v4403
        %v4406 = vunpack.c.l.s4 1983009808
        %v4407 = vunpack.c.0.s8 %v4406
        %v4408 = vlaneseq
        %v4409 = vshrl.u32 %v4408, 7
        %v4410 = vsub.s32 %v4407, %v4409
        %v4411 = vrot.slane %v4397, %v4410
        %v4412 = vcombine.high %v1508, 0.0
        %v4414 = vunpack.c.l.s4 1983009808
        %v4415 = vunpack.c.0.s8 %v4414
        %v4416 = vlaneseq
        %v4417 = vshrl.u32 %v4416, 7
        %v4418 = vsub.s32 %v4415, %v4417
        %v4419 = vrot.slane %v1508, %v4418
        %v4421 = vunpack.c.l.s4 1983009808
        %v4422 = vunpack.c.0.s8 %v4421
        %v4423 = vlaneseq
        %v4424 = vshrl.u32 %v4423, 7
        %v4425 = vsub.s32 %v4422, %v4424
        %v4426 = vrot.slane %v4412, %v4425
        %v4427 = vcombine.low %v4404, %v4419
        %v4428 = vcombine.high %v4404, %v4419
        %v4430 = vunpack.c.l.s4 1934713408
        %v4431 = vunpack.c.0.s8 %v4430
        %v4432 = vlaneseq
        %v4433 = vshrl.u32 %v4432, 7
        %v4434 = vsub.s32 %v4431, %v4433
        %v4435 = vrot.slane %v4427, %v4434
        %v4437 = vunpack.c.l.s4 1934713408
        %v4438 = vunpack.c.0.s8 %v4437
        %v4439 = vlaneseq
        %v4440 = vshrl.u32 %v4439, 7
        %v4441 = vsub.s32 %v4438, %v4440
        %v4442 = vrot.slane %v4428, %v4441
        %v4443 = vcombine.low %v4411, %v4426
        %v4444 = vcombine.high %v4411, %v4426
        %v4446 = vunpack.c.l.s4 1934713408
        %v4447 = vunpack.c.0.s8 %v4446
        %v4448 = vlaneseq
        %v4449 = vshrl.u32 %v4448, 7
        %v4450 = vsub.s32 %v4447, %v4449
        %v4451 = vrot.slane %v4443, %v4450
        %v4453 = vunpack.c.l.s4 1934713408
        %v4454 = vunpack.c.0.s8 %v4453
        %v4455 = vlaneseq
        %v4456 = vshrl.u32 %v4455, 7
        %v4457 = vsub.s32 %v4454, %v4456
        %v4458 = vrot.slane %v4444, %v4457
        %v4459 = vcombine.high %v4435, 0.0
        %v4460 = vcombine.high %v4442, 0.0
        %v4461 = vcombine.high %v4451, 0.0
        %v4462 = vcombine.high %v4458, 0.0
        %v4463 = vcombine.high %v1512, 0.0
        %v4465 = vunpack.c.l.s4 1983009808
        %v4466 = vunpack.c.0.s8 %v4465
        %v4467 = vlaneseq
        %v4468 = vshrl.u32 %v4467, 7
        %v4469 = vsub.s32 %v4466, %v4468
        %v4470 = vrot.slane %v1512, %v4469
        %v4472 = vunpack.c.l.s4 1983009808
        %v4473 = vunpack.c.0.s8 %v4472
        %v4474 = vlaneseq
        %v4475 = vshrl.u32 %v4474, 7
        %v4476 = vsub.s32 %v4473, %v4475
        %v4477 = vrot.slane %v4463, %v4476
        %v4478 = vcombine.high %v1514, 0.0
        %v4480 = vunpack.c.l.s4 1983009808
        %v4481 = vunpack.c.0.s8 %v4480
        %v4482 = vlaneseq
        %v4483 = vshrl.u32 %v4482, 7
        %v4484 = vsub.s32 %v4481, %v4483
        %v4485 = vrot.slane %v1514, %v4484
        %v4487 = vunpack.c.l.s4 1983009808
        %v4488 = vunpack.c.0.s8 %v4487
        %v4489 = vlaneseq
        %v4490 = vshrl.u32 %v4489, 7
        %v4491 = vsub.s32 %v4488, %v4490
        %v4492 = vrot.slane %v4478, %v4491
        %v4493 = vcombine.low %v4470, %v4485
        %v4494 = vcombine.high %v4470, %v4485
        %v4496 = vunpack.c.l.s4 1934713408
        %v4497 = vunpack.c.0.s8 %v4496
        %v4498 = vlaneseq
        %v4499 = vshrl.u32 %v4498, 7
        %v4500 = vsub.s32 %v4497, %v4499
        %v4501 = vrot.slane %v4493, %v4500
        %v4503 = vunpack.c.l.s4 1934713408
        %v4504 = vunpack.c.0.s8 %v4503
        %v4505 = vlaneseq
        %v4506 = vshrl.u32 %v4505, 7
        %v4507 = vsub.s32 %v4504, %v4506
        %v4508 = vrot.slane %v4494, %v4507
        %v4509 = vcombine.low %v4477, %v4492
        %v4510 = vcombine.high %v4477, %v4492
        %v4512 = vunpack.c.l.s4 1934713408
        %v4513 = vunpack.c.0.s8 %v4512
        %v4514 = vlaneseq
        %v4515 = vshrl.u32 %v4514, 7
        %v4516 = vsub.s32 %v4513, %v4515
        %v4517 = vrot.slane %v4509, %v4516
        %v4519 = vunpack.c.l.s4 1934713408
        %v4520 = vunpack.c.0.s8 %v4519
        %v4521 = vlaneseq
        %v4522 = vshrl.u32 %v4521, 7
        %v4523 = vsub.s32 %v4520, %v4522
        %v4524 = vrot.slane %v4510, %v4523
        %v4525 = vcombine.high %v4501, 0.0
        %v4526 = vcombine.high %v4508, 0.0
        %v4527 = vcombine.high %v4517, 0.0
        %v4528 = vcombine.high %v4524, 0.0
        %v4529 = vcombine.high %v1518, 0.0
        %v4531 = vunpack.c.l.s4 1983009808
        %v4532 = vunpack.c.0.s8 %v4531
        %v4533 = vlaneseq
        %v4534 = vshrl.u32 %v4533, 7
        %v4535 = vsub.s32 %v4532, %v4534
        %v4536 = vrot.slane %v1518, %v4535
        %v4538 = vunpack.c.l.s4 1983009808
        %v4539 = vunpack.c.0.s8 %v4538
        %v4540 = vlaneseq
        %v4541 = vshrl.u32 %v4540, 7
        %v4542 = vsub.s32 %v4539, %v4541
        %v4543 = vrot.slane %v4529, %v4542
        %v4544 = vcombine.high %v1520, 0.0
        %v4546 = vunpack.c.l.s4 1983009808
        %v4547 = vunpack.c.0.s8 %v4546
        %v4548 = vlaneseq
        %v4549 = vshrl.u32 %v4548, 7
        %v4550 = vsub.s32 %v4547, %v4549
        %v4551 = vrot.slane %v1520, %v4550
        %v4553 = vunpack.c.l.s4 1983009808
        %v4554 = vunpack.c.0.s8 %v4553
        %v4555 = vlaneseq
        %v4556 = vshrl.u32 %v4555, 7
        %v4557 = vsub.s32 %v4554, %v4556
        %v4558 = vrot.slane %v4544, %v4557
        %v4559 = vcombine.low %v4536, %v4551
        %v4560 = vcombine.high %v4536, %v4551
        %v4562 = vunpack.c.l.s4 1934713408
        %v4563 = vunpack.c.0.s8 %v4562
        %v4564 = vlaneseq
        %v4565 = vshrl.u32 %v4564, 7
        %v4566 = vsub.s32 %v4563, %v4565
        %v4567 = vrot.slane %v4559, %v4566
        %v4569 = vunpack.c.l.s4 1934713408
        %v4570 = vunpack.c.0.s8 %v4569
        %v4571 = vlaneseq
        %v4572 = vshrl.u32 %v4571, 7
        %v4573 = vsub.s32 %v4570, %v4572
        %v4574 = vrot.slane %v4560, %v4573
        %v4575 = vcombine.low %v4543, %v4558
        %v4576 = vcombine.high %v4543, %v4558
        %v4578 = vunpack.c.l.s4 1934713408
        %v4579 = vunpack.c.0.s8 %v4578
        %v4580 = vlaneseq
        %v4581 = vshrl.u32 %v4580, 7
        %v4582 = vsub.s32 %v4579, %v4581
        %v4583 = vrot.slane %v4575, %v4582
        %v4585 = vunpack.c.l.s4 1934713408
        %v4586 = vunpack.c.0.s8 %v4585
        %v4587 = vlaneseq
        %v4588 = vshrl.u32 %v4587, 7
        %v4589 = vsub.s32 %v4586, %v4588
        %v4590 = vrot.slane %v4576, %v4589
        %v4591 = vcombine.high %v4567, 0.0
        %v4592 = vcombine.high %v4574, 0.0
        %v4593 = vcombine.high %v4583, 0.0
        %v4594 = vcombine.high %v4590, 0.0
        %v4595 = vcombine.low %v3577, %v3584
        %v4597 = vunpack.c.l.s4 1983009808
        %v4598 = vunpack.c.0.s8 %v4597
        %v4599 = vlaneseq
        %v4600 = vshrl.u32 %v4599, 7
        %v4601 = vsub.s32 %v4598, %v4600
        %v4602 = vrot.slane %v4595, %v4601
        %v4603 = vcombine.low %v3601, %v3602
        %v4605 = vunpack.c.l.s4 1983009808
        %v4606 = vunpack.c.0.s8 %v4605
        %v4607 = vlaneseq
        %v4608 = vshrl.u32 %v4607, 7
        %v4609 = vsub.s32 %v4606, %v4608
        %v4610 = vrot.slane %v4603, %v4609
        %v4611 = vcombine.low %v3593, %v3600
        %v4613 = vunpack.c.l.s4 1983009808
        %v4614 = vunpack.c.0.s8 %v4613
        %v4615 = vlaneseq
        %v4616 = vshrl.u32 %v4615, 7
        %v4617 = vsub.s32 %v4614, %v4616
        %v4618 = vrot.slane %v4611, %v4617
        %v4619 = vcombine.low %v3603, %v3604
        %v4621 = vunpack.c.l.s4 1983009808
        %v4622 = vunpack.c.0.s8 %v4621
        %v4623 = vlaneseq
        %v4624 = vshrl.u32 %v4623, 7
        %v4625 = vsub.s32 %v4622, %v4624
        %v4626 = vrot.slane %v4619, %v4625
        %v4627 = vcombine.low %v4602, %v4610
        %v4629 = vunpack.c.l.s4 1934713408
        %v4630 = vunpack.c.0.s8 %v4629
        %v4631 = vlaneseq
        %v4632 = vshrl.u32 %v4631, 7
        %v4633 = vsub.s32 %v4630, %v4632
        %v4634 = vrot.slane %v4627, %v4633
        %v4635 = vcombine.low %v4618, %v4626
        %v4637 = vunpack.c.l.s4 1934713408
        %v4638 = vunpack.c.0.s8 %v4637
        %v4639 = vlaneseq
        %v4640 = vshrl.u32 %v4639, 7
        %v4641 = vsub.s32 %v4638, %v4640
        %v4642 = vrot.slane %v4635, %v4641
        %v4643 = vcombine.low %v4634, %v4642
        %v4644 = vcombine.high %v4634, %v4642
        %v4645 = vcombine.low %v3643, %v3650
        %v4647 = vunpack.c.l.s4 1983009808
        %v4648 = vunpack.c.0.s8 %v4647
        %v4649 = vlaneseq
        %v4650 = vshrl.u32 %v4649, 7
        %v4651 = vsub.s32 %v4648, %v4650
        %v4652 = vrot.slane %v4645, %v4651
        %v4653 = vcombine.low %v3667, %v3668
        %v4655 = vunpack.c.l.s4 1983009808
        %v4656 = vunpack.c.0.s8 %v4655
        %v4657 = vlaneseq
        %v4658 = vshrl.u32 %v4657, 7
        %v4659 = vsub.s32 %v4656, %v4658
        %v4660 = vrot.slane %v4653, %v4659
        %v4661 = vcombine.low %v3659, %v3666
        %v4663 = vunpack.c.l.s4 1983009808
        %v4664 = vunpack.c.0.s8 %v4663
        %v4665 = vlaneseq
        %v4666 = vshrl.u32 %v4665, 7
        %v4667 = vsub.s32 %v4664, %v4666
        %v4668 = vrot.slane %v4661, %v4667
        %v4669 = vcombine.low %v3669, %v3670
        %v4671 = vunpack.c.l.s4 1983009808
        %v4672 = vunpack.c.0.s8 %v4671
        %v4673 = vlaneseq
        %v4674 = vshrl.u32 %v4673, 7
        %v4675 = vsub.s32 %v4672, %v4674
        %v4676 = vrot.slane %v4669, %v4675
        %v4677 = vcombine.low %v4652, %v4660
        %v4679 = vunpack.c.l.s4 1934713408
        %v4680 = vunpack.c.0.s8 %v4679
        %v4681 = vlaneseq
        %v4682 = vshrl.u32 %v4681, 7
        %v4683 = vsub.s32 %v4680, %v4682
        %v4684 = vrot.slane %v4677, %v4683
        %v4685 = vcombine.low %v4668, %v4676
        %v4687 = vunpack.c.l.s4 1934713408
        %v4688 = vunpack.c.0.s8 %v4687
        %v4689 = vlaneseq
        %v4690 = vshrl.u32 %v4689, 7
        %v4691 = vsub.s32 %v4688, %v4690
        %v4692 = vrot.slane %v4685, %v4691
        %v4693 = vcombine.low %v4684, %v4692
        %v4694 = vcombine.high %v4684, %v4692
        %v4695 = vcombine.low %v3709, %v3716
        %v4697 = vunpack.c.l.s4 1983009808
        %v4698 = vunpack.c.0.s8 %v4697
        %v4699 = vlaneseq
        %v4700 = vshrl.u32 %v4699, 7
        %v4701 = vsub.s32 %v4698, %v4700
        %v4702 = vrot.slane %v4695, %v4701
        %v4703 = vcombine.low %v3733, %v3734
        %v4705 = vunpack.c.l.s4 1983009808
        %v4706 = vunpack.c.0.s8 %v4705
        %v4707 = vlaneseq
        %v4708 = vshrl.u32 %v4707, 7
        %v4709 = vsub.s32 %v4706, %v4708
        %v4710 = vrot.slane %v4703, %v4709
        %v4711 = vcombine.low %v3725, %v3732
        %v4713 = vunpack.c.l.s4 1983009808
        %v4714 = vunpack.c.0.s8 %v4713
        %v4715 = vlaneseq
        %v4716 = vshrl.u32 %v4715, 7
        %v4717 = vsub.s32 %v4714, %v4716
        %v4718 = vrot.slane %v4711, %v4717
        %v4719 = vcombine.low %v3735, %v3736
        %v4721 = vunpack.c.l.s4 1983009808
        %v4722 = vunpack.c.0.s8 %v4721
        %v4723 = vlaneseq
        %v4724 = vshrl.u32 %v4723, 7
        %v4725 = vsub.s32 %v4722, %v4724
        %v4726 = vrot.slane %v4719, %v4725
        %v4727 = vcombine.low %v4702, %v4710
        %v4729 = vunpack.c.l.s4 1934713408
        %v4730 = vunpack.c.0.s8 %v4729
        %v4731 = vlaneseq
        %v4732 = vshrl.u32 %v4731, 7
        %v4733 = vsub.s32 %v4730, %v4732
        %v4734 = vrot.slane %v4727, %v4733
        %v4735 = vcombine.low %v4718, %v4726
        %v4737 = vunpack.c.l.s4 1934713408
        %v4738 = vunpack.c.0.s8 %v4737
        %v4739 = vlaneseq
        %v4740 = vshrl.u32 %v4739, 7
        %v4741 = vsub.s32 %v4738, %v4740
        %v4742 = vrot.slane %v4735, %v4741
        %v4743 = vcombine.low %v4734, %v4742
        %v4744 = vcombine.high %v4734, %v4742
        %v4745 = vcombine.low %v3775, %v3782
        %v4747 = vunpack.c.l.s4 1983009808
        %v4748 = vunpack.c.0.s8 %v4747
        %v4749 = vlaneseq
        %v4750 = vshrl.u32 %v4749, 7
        %v4751 = vsub.s32 %v4748, %v4750
        %v4752 = vrot.slane %v4745, %v4751
        %v4753 = vcombine.low %v3799, %v3800
        %v4755 = vunpack.c.l.s4 1983009808
        %v4756 = vunpack.c.0.s8 %v4755
        %v4757 = vlaneseq
        %v4758 = vshrl.u32 %v4757, 7
        %v4759 = vsub.s32 %v4756, %v4758
        %v4760 = vrot.slane %v4753, %v4759
        %v4761 = vcombine.low %v3791, %v3798
        %v4763 = vunpack.c.l.s4 1983009808
        %v4764 = vunpack.c.0.s8 %v4763
        %v4765 = vlaneseq
        %v4766 = vshrl.u32 %v4765, 7
        %v4767 = vsub.s32 %v4764, %v4766
        %v4768 = vrot.slane %v4761, %v4767
        %v4769 = vcombine.low %v3801, %v3802
        %v4771 = vunpack.c.l.s4 1983009808
        %v4772 = vunpack.c.0.s8 %v4771
        %v4773 = vlaneseq
        %v4774 = vshrl.u32 %v4773, 7
        %v4775 = vsub.s32 %v4772, %v4774
        %v4776 = vrot.slane %v4769, %v4775
        %v4777 = vcombine.low %v4752, %v4760
        %v4779 = vunpack.c.l.s4 1934713408
        %v4780 = vunpack.c.0.s8 %v4779
        %v4781 = vlaneseq
        %v4782 = vshrl.u32 %v4781, 7
        %v4783 = vsub.s32 %v4780, %v4782
        %v4784 = vrot.slane %v4777, %v4783
        %v4785 = vcombine.low %v4768, %v4776
        %v4787 = vunpack.c.l.s4 1934713408
        %v4788 = vunpack.c.0.s8 %v4787
        %v4789 = vlaneseq
        %v4790 = vshrl.u32 %v4789, 7
        %v4791 = vsub.s32 %v4788, %v4790
        %v4792 = vrot.slane %v4785, %v4791
        %v4793 = vcombine.low %v4784, %v4792
        %v4794 = vcombine.high %v4784, %v4792
        %v4795 = vcombine.low %v3841, %v3848
        %v4797 = vunpack.c.l.s4 1983009808
        %v4798 = vunpack.c.0.s8 %v4797
        %v4799 = vlaneseq
        %v4800 = vshrl.u32 %v4799, 7
        %v4801 = vsub.s32 %v4798, %v4800
        %v4802 = vrot.slane %v4795, %v4801
        %v4803 = vcombine.low %v3865, %v3866
        %v4805 = vunpack.c.l.s4 1983009808
        %v4806 = vunpack.c.0.s8 %v4805
        %v4807 = vlaneseq
        %v4808 = vshrl.u32 %v4807, 7
        %v4809 = vsub.s32 %v4806, %v4808
        %v4810 = vrot.slane %v4803, %v4809
        %v4811 = vcombine.low %v3857, %v3864
        %v4813 = vunpack.c.l.s4 1983009808
        %v4814 = vunpack.c.0.s8 %v4813
        %v4815 = vlaneseq
        %v4816 = vshrl.u32 %v4815, 7
        %v4817 = vsub.s32 %v4814, %v4816
        %v4818 = vrot.slane %v4811, %v4817
        %v4819 = vcombine.low %v3867, %v3868
        %v4821 = vunpack.c.l.s4 1983009808
        %v4822 = vunpack.c.0.s8 %v4821
        %v4823 = vlaneseq
        %v4824 = vshrl.u32 %v4823, 7
        %v4825 = vsub.s32 %v4822, %v4824
        %v4826 = vrot.slane %v4819, %v4825
        %v4827 = vcombine.low %v4802, %v4810
        %v4829 = vunpack.c.l.s4 1934713408
        %v4830 = vunpack.c.0.s8 %v4829
        %v4831 = vlaneseq
        %v4832 = vshrl.u32 %v4831, 7
        %v4833 = vsub.s32 %v4830, %v4832
        %v4834 = vrot.slane %v4827, %v4833
        %v4835 = vcombine.low %v4818, %v4826
        %v4837 = vunpack.c.l.s4 1934713408
        %v4838 = vunpack.c.0.s8 %v4837
        %v4839 = vlaneseq
        %v4840 = vshrl.u32 %v4839, 7
        %v4841 = vsub.s32 %v4838, %v4840
        %v4842 = vrot.slane %v4835, %v4841
        %v4843 = vcombine.low %v4834, %v4842
        %v4844 = vcombine.high %v4834, %v4842
        %v4845 = vcombine.low %v3907, %v3914
        %v4847 = vunpack.c.l.s4 1983009808
        %v4848 = vunpack.c.0.s8 %v4847
        %v4849 = vlaneseq
        %v4850 = vshrl.u32 %v4849, 7
        %v4851 = vsub.s32 %v4848, %v4850
        %v4852 = vrot.slane %v4845, %v4851
        %v4853 = vcombine.low %v3931, %v3932
        %v4855 = vunpack.c.l.s4 1983009808
        %v4856 = vunpack.c.0.s8 %v4855
        %v4857 = vlaneseq
        %v4858 = vshrl.u32 %v4857, 7
        %v4859 = vsub.s32 %v4856, %v4858
        %v4860 = vrot.slane %v4853, %v4859
        %v4861 = vcombine.low %v3923, %v3930
        %v4863 = vunpack.c.l.s4 1983009808
        %v4864 = vunpack.c.0.s8 %v4863
        %v4865 = vlaneseq
        %v4866 = vshrl.u32 %v4865, 7
        %v4867 = vsub.s32 %v4864, %v4866
        %v4868 = vrot.slane %v4861, %v4867
        %v4869 = vcombine.low %v3933, %v3934
        %v4871 = vunpack.c.l.s4 1983009808
        %v4872 = vunpack.c.0.s8 %v4871
        %v4873 = vlaneseq
        %v4874 = vshrl.u32 %v4873, 7
        %v4875 = vsub.s32 %v4872, %v4874
        %v4876 = vrot.slane %v4869, %v4875
        %v4877 = vcombine.low %v4852, %v4860
        %v4879 = vunpack.c.l.s4 1934713408
        %v4880 = vunpack.c.0.s8 %v4879
        %v4881 = vlaneseq
        %v4882 = vshrl.u32 %v4881, 7
        %v4883 = vsub.s32 %v4880, %v4882
        %v4884 = vrot.slane %v4877, %v4883
        %v4885 = vcombine.low %v4868, %v4876
        %v4887 = vunpack.c.l.s4 1934713408
        %v4888 = vunpack.c.0.s8 %v4887
        %v4889 = vlaneseq
        %v4890 = vshrl.u32 %v4889, 7
        %v4891 = vsub.s32 %v4888, %v4890
        %v4892 = vrot.slane %v4885, %v4891
        %v4893 = vcombine.low %v4884, %v4892
        %v4894 = vcombine.high %v4884, %v4892
        %v4895 = vcombine.low %v3973, %v3980
        %v4897 = vunpack.c.l.s4 1983009808
        %v4898 = vunpack.c.0.s8 %v4897
        %v4899 = vlaneseq
        %v4900 = vshrl.u32 %v4899, 7
        %v4901 = vsub.s32 %v4898, %v4900
        %v4902 = vrot.slane %v4895, %v4901
        %v4903 = vcombine.low %v3997, %v3998
        %v4905 = vunpack.c.l.s4 1983009808
        %v4906 = vunpack.c.0.s8 %v4905
        %v4907 = vlaneseq
        %v4908 = vshrl.u32 %v4907, 7
        %v4909 = vsub.s32 %v4906, %v4908
        %v4910 = vrot.slane %v4903, %v4909
        %v4911 = vcombine.low %v3989, %v3996
        %v4913 = vunpack.c.l.s4 1983009808
        %v4914 = vunpack.c.0.s8 %v4913
        %v4915 = vlaneseq
        %v4916 = vshrl.u32 %v4915, 7
        %v4917 = vsub.s32 %v4914, %v4916
        %v4918 = vrot.slane %v4911, %v4917
        %v4919 = vcombine.low %v3999, %v4000
        %v4921 = vunpack.c.l.s4 1983009808
        %v4922 = vunpack.c.0.s8 %v4921
        %v4923 = vlaneseq
        %v4924 = vshrl.u32 %v4923, 7
        %v4925 = vsub.s32 %v4922, %v4924
        %v4926 = vrot.slane %v4919, %v4925
        %v4927 = vcombine.low %v4902, %v4910
        %v4929 = vunpack.c.l.s4 1934713408
        %v4930 = vunpack.c.0.s8 %v4929
        %v4931 = vlaneseq
        %v4932 = vshrl.u32 %v4931, 7
        %v4933 = vsub.s32 %v4930, %v4932
        %v4934 = vrot.slane %v4927, %v4933
        %v4935 = vcombine.low %v4918, %v4926
        %v4937 = vunpack.c.l.s4 1934713408
        %v4938 = vunpack.c.0.s8 %v4937
        %v4939 = vlaneseq
        %v4940 = vshrl.u32 %v4939, 7
        %v4941 = vsub.s32 %v4938, %v4940
        %v4942 = vrot.slane %v4935, %v4941
        %v4943 = vcombine.low %v4934, %v4942
        %v4944 = vcombine.high %v4934, %v4942
        %v4945 = vcombine.low %v4039, %v4046
        %v4947 = vunpack.c.l.s4 1983009808
        %v4948 = vunpack.c.0.s8 %v4947
        %v4949 = vlaneseq
        %v4950 = vshrl.u32 %v4949, 7
        %v4951 = vsub.s32 %v4948, %v4950
        %v4952 = vrot.slane %v4945, %v4951
        %v4953 = vcombine.low %v4063, %v4064
        %v4955 = vunpack.c.l.s4 1983009808
        %v4956 = vunpack.c.0.s8 %v4955
        %v4957 = vlaneseq
        %v4958 = vshrl.u32 %v4957, 7
        %v4959 = vsub.s32 %v4956, %v4958
        %v4960 = vrot.slane %v4953, %v4959
        %v4961 = vcombine.low %v4055, %v4062
        %v4963 = vunpack.c.l.s4 1983009808
        %v4964 = vunpack.c.0.s8 %v4963
        %v4965 = vlaneseq
        %v4966 = vshrl.u32 %v4965, 7
        %v4967 = vsub.s32 %v4964, %v4966
        %v4968 = vrot.slane %v4961, %v4967
        %v4969 = vcombine.low %v4065, %v4066
        %v4971 = vunpack.c.l.s4 1983009808
        %v4972 = vunpack.c.0.s8 %v4971
        %v4973 = vlaneseq
        %v4974 = vshrl.u32 %v4973, 7
        %v4975 = vsub.s32 %v4972, %v4974
        %v4976 = vrot.slane %v4969, %v4975
        %v4977 = vcombine.low %v4952, %v4960
        %v4979 = vunpack.c.l.s4 1934713408
        %v4980 = vunpack.c.0.s8 %v4979
        %v4981 = vlaneseq
        %v4982 = vshrl.u32 %v4981, 7
        %v4983 = vsub.s32 %v4980, %v4982
        %v4984 = vrot.slane %v4977, %v4983
        %v4985 = vcombine.low %v4968, %v4976
        %v4987 = vunpack.c.l.s4 1934713408
        %v4988 = vunpack.c.0.s8 %v4987
        %v4989 = vlaneseq
        %v4990 = vshrl.u32 %v4989, 7
        %v4991 = vsub.s32 %v4988, %v4990
        %v4992 = vrot.slane %v4985, %v4991
        %v4993 = vcombine.low %v4984, %v4992
        %v4994 = vcombine.high %v4984, %v4992
        %v4995 = vcombine.low %v4105, %v4112
        %v4997 = vunpack.c.l.s4 1983009808
        %v4998 = vunpack.c.0.s8 %v4997
        %v4999 = vlaneseq
        %v5000 = vshrl.u32 %v4999, 7
        %v5001 = vsub.s32 %v4998, %v5000
        %v5002 = vrot.slane %v4995, %v5001
        %v5003 = vcombine.low %v4129, %v4130
        %v5005 = vunpack.c.l.s4 1983009808
        %v5006 = vunpack.c.0.s8 %v5005
        %v5007 = vlaneseq
        %v5008 = vshrl.u32 %v5007, 7
        %v5009 = vsub.s32 %v5006, %v5008
        %v5010 = vrot.slane %v5003, %v5009
        %v5011 = vcombine.low %v4121, %v4128
        %v5013 = vunpack.c.l.s4 1983009808
        %v5014 = vunpack.c.0.s8 %v5013
        %v5015 = vlaneseq
        %v5016 = vshrl.u32 %v5015, 7
        %v5017 = vsub.s32 %v5014, %v5016
        %v5018 = vrot.slane %v5011, %v5017
        %v5019 = vcombine.low %v4131, %v4132
        %v5021 = vunpack.c.l.s4 1983009808
        %v5022 = vunpack.c.0.s8 %v5021
        %v5023 = vlaneseq
        %v5024 = vshrl.u32 %v5023, 7
        %v5025 = vsub.s32 %v5022, %v5024
        %v5026 = vrot.slane %v5019, %v5025
        %v5027 = vcombine.low %v5002, %v5010
        %v5029 = vunpack.c.l.s4 1934713408
        %v5030 = vunpack.c.0.s8 %v5029
        %v5031 = vlaneseq
        %v5032 = vshrl.u32 %v5031, 7
        %v5033 = vsub.s32 %v5030, %v5032
        %v5034 = vrot.slane %v5027, %v5033
        %v5035 = vcombine.low %v5018, %v5026
        %v5037 = vunpack.c.l.s4 1934713408
        %v5038 = vunpack.c.0.s8 %v5037
        %v5039 = vlaneseq
        %v5040 = vshrl.u32 %v5039, 7
        %v5041 = vsub.s32 %v5038, %v5040
        %v5042 = vrot.slane %v5035, %v5041
        %v5043 = vcombine.low %v5034, %v5042
        %v5044 = vcombine.high %v5034, %v5042
        %v5045 = vcombine.low %v4171, %v4178
        %v5047 = vunpack.c.l.s4 1983009808
        %v5048 = vunpack.c.0.s8 %v5047
        %v5049 = vlaneseq
        %v5050 = vshrl.u32 %v5049, 7
        %v5051 = vsub.s32 %v5048, %v5050
        %v5052 = vrot.slane %v5045, %v5051
        %v5053 = vcombine.low %v4195, %v4196
        %v5055 = vunpack.c.l.s4 1983009808
        %v5056 = vunpack.c.0.s8 %v5055
        %v5057 = vlaneseq
        %v5058 = vshrl.u32 %v5057, 7
        %v5059 = vsub.s32 %v5056, %v5058
        %v5060 = vrot.slane %v5053, %v5059
        %v5061 = vcombine.low %v4187, %v4194
        %v5063 = vunpack.c.l.s4 1983009808
        %v5064 = vunpack.c.0.s8 %v5063
        %v5065 = vlaneseq
        %v5066 = vshrl.u32 %v5065, 7
        %v5067 = vsub.s32 %v5064, %v5066
        %v5068 = vrot.slane %v5061, %v5067
        %v5069 = vcombine.low %v4197, %v4198
        %v5071 = vunpack.c.l.s4 1983009808
        %v5072 = vunpack.c.0.s8 %v5071
        %v5073 = vlaneseq
        %v5074 = vshrl.u32 %v5073, 7
        %v5075 = vsub.s32 %v5072, %v5074
        %v5076 = vrot.slane %v5069, %v5075
        %v5077 = vcombine.low %v5052, %v5060
        %v5079 = vunpack.c.l.s4 1934713408
        %v5080 = vunpack.c.0.s8 %v5079
        %v5081 = vlaneseq
        %v5082 = vshrl.u32 %v5081, 7
        %v5083 = vsub.s32 %v5080, %v5082
        %v5084 = vrot.slane %v5077, %v5083
        %v5085 = vcombine.low %v5068, %v5076
        %v5087 = vunpack.c.l.s4 1934713408
        %v5088 = vunpack.c.0.s8 %v5087
        %v5089 = vlaneseq
        %v5090 = vshrl.u32 %v5089, 7
        %v5091 = vsub.s32 %v5088, %v5090
        %v5092 = vrot.slane %v5085, %v5091
        %v5093 = vcombine.low %v5084, %v5092
        %v5094 = vcombine.high %v5084, %v5092
        %v5095 = vcombine.low %v4237, %v4244
        %v5097 = vunpack.c.l.s4 1983009808
        %v5098 = vunpack.c.0.s8 %v5097
        %v5099 = vlaneseq
        %v5100 = vshrl.u32 %v5099, 7
        %v5101 = vsub.s32 %v5098, %v5100
        %v5102 = vrot.slane %v5095, %v5101
        %v5103 = vcombine.low %v4261, %v4262
        %v5105 = vunpack.c.l.s4 1983009808
        %v5106 = vunpack.c.0.s8 %v5105
        %v5107 = vlaneseq
        %v5108 = vshrl.u32 %v5107, 7
        %v5109 = vsub.s32 %v5106, %v5108
        %v5110 = vrot.slane %v5103, %v5109
        %v5111 = vcombine.low %v4253, %v4260
        %v5113 = vunpack.c.l.s4 1983009808
        %v5114 = vunpack.c.0.s8 %v5113
        %v5115 = vlaneseq
        %v5116 = vshrl.u32 %v5115, 7
        %v5117 = vsub.s32 %v5114, %v5116
        %v5118 = vrot.slane %v5111, %v5117
        %v5119 = vcombine.low %v4263, %v4264
        %v5121 = vunpack.c.l.s4 1983009808
        %v5122 = vunpack.c.0.s8 %v5121
        %v5123 = vlaneseq
        %v5124 = vshrl.u32 %v5123, 7
        %v5125 = vsub.s32 %v5122, %v5124
        %v5126 = vrot.slane %v5119, %v5125
        %v5127 = vcombine.low %v5102, %v5110
        %v5129 = vunpack.c.l.s4 1934713408
        %v5130 = vunpack.c.0.s8 %v5129
        %v5131 = vlaneseq
        %v5132 = vshrl.u32 %v5131, 7
        %v5133 = vsub.s32 %v5130, %v5132
        %v5134 = vrot.slane %v5127, %v5133
        %v5135 = vcombine.low %v5118, %v5126
        %v5137 = vunpack.c.l.s4 1934713408
        %v5138 = vunpack.c.0.s8 %v5137
        %v5139 = vlaneseq
        %v5140 = vshrl.u32 %v5139, 7
        %v5141 = vsub.s32 %v5138, %v5140
        %v5142 = vrot.slane %v5135, %v5141
        %v5143 = vcombine.low %v5134, %v5142
        %v5144 = vcombine.high %v5134, %v5142
        %v5145 = vcombine.low %v4303, %v4310
        %v5147 = vunpack.c.l.s4 1983009808
        %v5148 = vunpack.c.0.s8 %v5147
        %v5149 = vlaneseq
        %v5150 = vshrl.u32 %v5149, 7
        %v5151 = vsub.s32 %v5148, %v5150
        %v5152 = vrot.slane %v5145, %v5151
        %v5153 = vcombine.low %v4327, %v4328
        %v5155 = vunpack.c.l.s4 1983009808
        %v5156 = vunpack.c.0.s8 %v5155
        %v5157 = vlaneseq
        %v5158 = vshrl.u32 %v5157, 7
        %v5159 = vsub.s32 %v5156, %v5158
        %v5160 = vrot.slane %v5153, %v5159
        %v5161 = vcombine.low %v4319, %v4326
        %v5163 = vunpack.c.l.s4 1983009808
        %v5164 = vunpack.c.0.s8 %v5163
        %v5165 = vlaneseq
        %v5166 = vshrl.u32 %v5165, 7
        %v5167 = vsub.s32 %v5164, %v5166
        %v5168 = vrot.slane %v5161, %v5167
        %v5169 = vcombine.low %v4329, %v4330
        %v5171 = vunpack.c.l.s4 1983009808
        %v5172 = vunpack.c.0.s8 %v5171
        %v5173 = vlaneseq
        %v5174 = vshrl.u32 %v5173, 7
        %v5175 = vsub.s32 %v5172, %v5174
        %v5176 = vrot.slane %v5169, %v5175
        %v5177 = vcombine.low %v5152, %v5160
        %v5179 = vunpack.c.l.s4 1934713408
        %v5180 = vunpack.c.0.s8 %v5179
        %v5181 = vlaneseq
        %v5182 = vshrl.u32 %v5181, 7
        %v5183 = vsub.s32 %v5180, %v5182
        %v5184 = vrot.slane %v5177, %v5183
        %v5185 = vcombine.low %v5168, %v5176
        %v5187 = vunpack.c.l.s4 1934713408
        %v5188 = vunpack.c.0.s8 %v5187
        %v5189 = vlaneseq
        %v5190 = vshrl.u32 %v5189, 7
        %v5191 = vsub.s32 %v5188, %v5190
        %v5192 = vrot.slane %v5185, %v5191
        %v5193 = vcombine.low %v5184, %v5192
        %v5194 = vcombine.high %v5184, %v5192
        %v5195 = vcombine.low %v4369, %v4376
        %v5197 = vunpack.c.l.s4 1983009808
        %v5198 = vunpack.c.0.s8 %v5197
        %v5199 = vlaneseq
        %v5200 = vshrl.u32 %v5199, 7
        %v5201 = vsub.s32 %v5198, %v5200
        %v5202 = vrot.slane %v5195, %v5201
        %v5203 = vcombine.low %v4393, %v4394
        %v5205 = vunpack.c.l.s4 1983009808
        %v5206 = vunpack.c.0.s8 %v5205
        %v5207 = vlaneseq
        %v5208 = vshrl.u32 %v5207, 7
        %v5209 = vsub.s32 %v5206, %v5208
        %v5210 = vrot.slane %v5203, %v5209
        %v5211 = vcombine.low %v4385, %v4392
        %v5213 = vunpack.c.l.s4 1983009808
        %v5214 = vunpack.c.0.s8 %v5213
        %v5215 = vlaneseq
        %v5216 = vshrl.u32 %v5215, 7
        %v5217 = vsub.s32 %v5214, %v5216
        %v5218 = vrot.slane %v5211, %v5217
        %v5219 = vcombine.low %v4395, %v4396
        %v5221 = vunpack.c.l.s4 1983009808
        %v5222 = vunpack.c.0.s8 %v5221
        %v5223 = vlaneseq
        %v5224 = vshrl.u32 %v5223, 7
        %v5225 = vsub.s32 %v5222, %v5224
        %v5226 = vrot.slane %v5219, %v5225
        %v5227 = vcombine.low %v5202, %v5210
        %v5229 = vunpack.c.l.s4 1934713408
        %v5230 = vunpack.c.0.s8 %v5229
        %v5231 = vlaneseq
        %v5232 = vshrl.u32 %v5231, 7
        %v5233 = vsub.s32 %v5230, %v5232
        %v5234 = vrot.slane %v5227, %v5233
        %v5235 = vcombine.low %v5218, %v5226
        %v5237 = vunpack.c.l.s4 1934713408
        %v5238 = vunpack.c.0.s8 %v5237
        %v5239 = vlaneseq
        %v5240 = vshrl.u32 %v5239, 7
        %v5241 = vsub.s32 %v5238, %v5240
        %v5242 = vrot.slane %v5235, %v5241
        %v5243 = vcombine.low %v5234, %v5242
        %v5244 = vcombine.high %v5234, %v5242
        %v5245 = vcombine.low %v4435, %v4442
        %v5247 = vunpack.c.l.s4 1983009808
        %v5248 = vunpack.c.0.s8 %v5247
        %v5249 = vlaneseq
        %v5250 = vshrl.u32 %v5249, 7
        %v5251 = vsub.s32 %v5248, %v5250
        %v5252 = vrot.slane %v5245, %v5251
        %v5253 = vcombine.low %v4459, %v4460
        %v5255 = vunpack.c.l.s4 1983009808
        %v5256 = vunpack.c.0.s8 %v5255
        %v5257 = vlaneseq
        %v5258 = vshrl.u32 %v5257, 7
        %v5259 = vsub.s32 %v5256, %v5258
        %v5260 = vrot.slane %v5253, %v5259
        %v5261 = vcombine.low %v4451, %v4458
        %v5263 = vunpack.c.l.s4 1983009808
        %v5264 = vunpack.c.0.s8 %v5263
        %v5265 = vlaneseq
        %v5266 = vshrl.u32 %v5265, 7
        %v5267 = vsub.s32 %v5264, %v5266
        %v5268 = vrot.slane %v5261, %v5267
        %v5269 = vcombine.low %v4461, %v4462
        %v5271 = vunpack.c.l.s4 1983009808
        %v5272 = vunpack.c.0.s8 %v5271
        %v5273 = vlaneseq
        %v5274 = vshrl.u32 %v5273, 7
        %v5275 = vsub.s32 %v5272, %v5274
        %v5276 = vrot.slane %v5269, %v5275
        %v5277 = vcombine.low %v5252, %v5260
        %v5279 = vunpack.c.l.s4 1934713408
        %v5280 = vunpack.c.0.s8 %v5279
        %v5281 = vlaneseq
        %v5282 = vshrl.u32 %v5281, 7
        %v5283 = vsub.s32 %v5280, %v5282
        %v5284 = vrot.slane %v5277, %v5283
        %v5285 = vcombine.low %v5268, %v5276
        %v5287 = vunpack.c.l.s4 1934713408
        %v5288 = vunpack.c.0.s8 %v5287
        %v5289 = vlaneseq
        %v5290 = vshrl.u32 %v5289, 7
        %v5291 = vsub.s32 %v5288, %v5290
        %v5292 = vrot.slane %v5285, %v5291
        %v5293 = vcombine.low %v5284, %v5292
        %v5294 = vcombine.high %v5284, %v5292
        %v5295 = vcombine.low %v4501, %v4508
        %v5297 = vunpack.c.l.s4 1983009808
        %v5298 = vunpack.c.0.s8 %v5297
        %v5299 = vlaneseq
        %v5300 = vshrl.u32 %v5299, 7
        %v5301 = vsub.s32 %v5298, %v5300
        %v5302 = vrot.slane %v5295, %v5301
        %v5303 = vcombine.low %v4525, %v4526
        %v5305 = vunpack.c.l.s4 1983009808
        %v5306 = vunpack.c.0.s8 %v5305
        %v5307 = vlaneseq
        %v5308 = vshrl.u32 %v5307, 7
        %v5309 = vsub.s32 %v5306, %v5308
        %v5310 = vrot.slane %v5303, %v5309
        %v5311 = vcombine.low %v4517, %v4524
        %v5313 = vunpack.c.l.s4 1983009808
        %v5314 = vunpack.c.0.s8 %v5313
        %v5315 = vlaneseq
        %v5316 = vshrl.u32 %v5315, 7
        %v5317 = vsub.s32 %v5314, %v5316
        %v5318 = vrot.slane %v5311, %v5317
        %v5319 = vcombine.low %v4527, %v4528
        %v5321 = vunpack.c.l.s4 1983009808
        %v5322 = vunpack.c.0.s8 %v5321
        %v5323 = vlaneseq
        %v5324 = vshrl.u32 %v5323, 7
        %v5325 = vsub.s32 %v5322, %v5324
        %v5326 = vrot.slane %v5319, %v5325
        %v5327 = vcombine.low %v5302, %v5310
        %v5329 = vunpack.c.l.s4 1934713408
        %v5330 = vunpack.c.0.s8 %v5329
        %v5331 = vlaneseq
        %v5332 = vshrl.u32 %v5331, 7
        %v5333 = vsub.s32 %v5330, %v5332
        %v5334 = vrot.slane %v5327, %v5333
        %v5335 = vcombine.low %v5318, %v5326
        %v5337 = vunpack.c.l.s4 1934713408
        %v5338 = vunpack.c.0.s8 %v5337
        %v5339 = vlaneseq
        %v5340 = vshrl.u32 %v5339, 7
        %v5341 = vsub.s32 %v5338, %v5340
        %v5342 = vrot.slane %v5335, %v5341
        %v5343 = vcombine.low %v5334, %v5342
        %v5344 = vcombine.high %v5334, %v5342
        %v5345 = vcombine.low %v4567, %v4574
        %v5347 = vunpack.c.l.s4 1983009808
        %v5348 = vunpack.c.0.s8 %v5347
        %v5349 = vlaneseq
        %v5350 = vshrl.u32 %v5349, 7
        %v5351 = vsub.s32 %v5348, %v5350
        %v5352 = vrot.slane %v5345, %v5351
        %v5353 = vcombine.low %v4591, %v4592
        %v5355 = vunpack.c.l.s4 1983009808
        %v5356 = vunpack.c.0.s8 %v5355
        %v5357 = vlaneseq
        %v5358 = vshrl.u32 %v5357, 7
        %v5359 = vsub.s32 %v5356, %v5358
        %v5360 = vrot.slane %v5353, %v5359
        %v5361 = vcombine.low %v4583, %v4590
        %v5363 = vunpack.c.l.s4 1983009808
        %v5364 = vunpack.c.0.s8 %v5363
        %v5365 = vlaneseq
        %v5366 = vshrl.u32 %v5365, 7
        %v5367 = vsub.s32 %v5364, %v5366
        %v5368 = vrot.slane %v5361, %v5367
        %v5369 = vcombine.low %v4593, %v4594
        %v5371 = vunpack.c.l.s4 1983009808
        %v5372 = vunpack.c.0.s8 %v5371
        %v5373 = vlaneseq
        %v5374 = vshrl.u32 %v5373, 7
        %v5375 = vsub.s32 %v5372, %v5374
        %v5376 = vrot.slane %v5369, %v5375
        %v5377 = vcombine.low %v5352, %v5360
        %v5379 = vunpack.c.l.s4 1934713408
        %v5380 = vunpack.c.0.s8 %v5379
        %v5381 = vlaneseq
        %v5382 = vshrl.u32 %v5381, 7
        %v5383 = vsub.s32 %v5380, %v5382
        %v5384 = vrot.slane %v5377, %v5383
        %v5385 = vcombine.low %v5368, %v5376
        %v5387 = vunpack.c.l.s4 1934713408
        %v5388 = vunpack.c.0.s8 %v5387
        %v5389 = vlaneseq
        %v5390 = vshrl.u32 %v5389, 7
        %v5391 = vsub.s32 %v5388, %v5390
        %v5392 = vrot.slane %v5385, %v5391
        %v5393 = vcombine.low %v5384, %v5392
        %v5394 = vcombine.high %v5384, %v5392
        %v5395 = vcombine.high %v1589, 0.0
        %v5397 = vunpack.c.l.s4 1983009808
        %v5398 = vunpack.c.0.s8 %v5397
        %v5399 = vlaneseq
        %v5400 = vshrl.u32 %v5399, 7
        %v5401 = vsub.s32 %v5398, %v5400
        %v5402 = vrot.slane %v1589, %v5401
        %v5404 = vunpack.c.l.s4 1983009808
        %v5405 = vunpack.c.0.s8 %v5404
        %v5406 = vlaneseq
        %v5407 = vshrl.u32 %v5406, 7
        %v5408 = vsub.s32 %v5405, %v5407
        %v5409 = vrot.slane %v5395, %v5408
        %v5410 = vcombine.high %v1591, 0.0
        %v5412 = vunpack.c.l.s4 1983009808
        %v5413 = vunpack.c.0.s8 %v5412
        %v5414 = vlaneseq
        %v5415 = vshrl.u32 %v5414, 7
        %v5416 = vsub.s32 %v5413, %v5415
        %v5417 = vrot.slane %v1591, %v5416
        %v5419 = vunpack.c.l.s4 1983009808
        %v5420 = vunpack.c.0.s8 %v5419
        %v5421 = vlaneseq
        %v5422 = vshrl.u32 %v5421, 7
        %v5423 = vsub.s32 %v5420, %v5422
        %v5424 = vrot.slane %v5410, %v5423
        %v5425 = vcombine.low %v5402, %v5417
        %v5426 = vcombine.high %v5402, %v5417
        %v5428 = vunpack.c.l.s4 1934713408
        %v5429 = vunpack.c.0.s8 %v5428
        %v5430 = vlaneseq
        %v5431 = vshrl.u32 %v5430, 7
        %v5432 = vsub.s32 %v5429, %v5431
        %v5433 = vrot.slane %v5425, %v5432
        %v5435 = vunpack.c.l.s4 1934713408
        %v5436 = vunpack.c.0.s8 %v5435
        %v5437 = vlaneseq
        %v5438 = vshrl.u32 %v5437, 7
        %v5439 = vsub.s32 %v5436, %v5438
        %v5440 = vrot.slane %v5426, %v5439
        %v5441 = vcombine.low %v5409, %v5424
        %v5442 = vcombine.high %v5409, %v5424
        %v5444 = vunpack.c.l.s4 1934713408
        %v5445 = vunpack.c.0.s8 %v5444
        %v5446 = vlaneseq
        %v5447 = vshrl.u32 %v5446, 7
        %v5448 = vsub.s32 %v5445, %v5447
        %v5449 = vrot.slane %v5441, %v5448
        %v5451 = vunpack.c.l.s4 1934713408
        %v5452 = vunpack.c.0.s8 %v5451
        %v5453 = vlaneseq
        %v5454 = vshrl.u32 %v5453, 7
        %v5455 = vsub.s32 %v5452, %v5454
        %v5456 = vrot.slane %v5442, %v5455
        %v5457 = vcombine.high %v5433, 0.0
        %v5458 = vcombine.high %v5440, 0.0
        %v5459 = vcombine.high %v5449, 0.0
        %v5460 = vcombine.high %v5456, 0.0
        %v5461 = vcombine.high %v1595, 0.0
        %v5463 = vunpack.c.l.s4 1983009808
        %v5464 = vunpack.c.0.s8 %v5463
        %v5465 = vlaneseq
        %v5466 = vshrl.u32 %v5465, 7
        %v5467 = vsub.s32 %v5464, %v5466
        %v5468 = vrot.slane %v1595, %v5467
        %v5470 = vunpack.c.l.s4 1983009808
        %v5471 = vunpack.c.0.s8 %v5470
        %v5472 = vlaneseq
        %v5473 = vshrl.u32 %v5472, 7
        %v5474 = vsub.s32 %v5471, %v5473
        %v5475 = vrot.slane %v5461, %v5474
        %v5476 = vcombine.high %v1597, 0.0
        %v5478 = vunpack.c.l.s4 1983009808
        %v5479 = vunpack.c.0.s8 %v5478
        %v5480 = vlaneseq
        %v5481 = vshrl.u32 %v5480, 7
        %v5482 = vsub.s32 %v5479, %v5481
        %v5483 = vrot.slane %v1597, %v5482
        %v5485 = vunpack.c.l.s4 1983009808
        %v5486 = vunpack.c.0.s8 %v5485
        %v5487 = vlaneseq
        %v5488 = vshrl.u32 %v5487, 7
        %v5489 = vsub.s32 %v5486, %v5488
        %v5490 = vrot.slane %v5476, %v5489
        %v5491 = vcombine.low %v5468, %v5483
        %v5492 = vcombine.high %v5468, %v5483
        %v5494 = vunpack.c.l.s4 1934713408
        %v5495 = vunpack.c.0.s8 %v5494
        %v5496 = vlaneseq
        %v5497 = vshrl.u32 %v5496, 7
        %v5498 = vsub.s32 %v5495, %v5497
        %v5499 = vrot.slane %v5491, %v5498
        %v5501 = vunpack.c.l.s4 1934713408
        %v5502 = vunpack.c.0.s8 %v5501
        %v5503 = vlaneseq
        %v5504 = vshrl.u32 %v5503, 7
        %v5505 = vsub.s32 %v5502, %v5504
        %v5506 = vrot.slane %v5492, %v5505
        %v5507 = vcombine.low %v5475, %v5490
        %v5508 = vcombine.high %v5475, %v5490
        %v5510 = vunpack.c.l.s4 1934713408
        %v5511 = vunpack.c.0.s8 %v5510
        %v5512 = vlaneseq
        %v5513 = vshrl.u32 %v5512, 7
        %v5514 = vsub.s32 %v5511, %v5513
        %v5515 = vrot.slane %v5507, %v5514
        %v5517 = vunpack.c.l.s4 1934713408
        %v5518 = vunpack.c.0.s8 %v5517
        %v5519 = vlaneseq
        %v5520 = vshrl.u32 %v5519, 7
        %v5521 = vsub.s32 %v5518, %v5520
        %v5522 = vrot.slane %v5508, %v5521
        %v5523 = vcombine.high %v5499, 0.0
        %v5524 = vcombine.high %v5506, 0.0
        %v5525 = vcombine.high %v5515, 0.0
        %v5526 = vcombine.high %v5522, 0.0
        %v5527 = vcombine.high %v1601, 0.0
        %v5529 = vunpack.c.l.s4 1983009808
        %v5530 = vunpack.c.0.s8 %v5529
        %v5531 = vlaneseq
        %v5532 = vshrl.u32 %v5531, 7
        %v5533 = vsub.s32 %v5530, %v5532
        %v5534 = vrot.slane %v1601, %v5533
        %v5536 = vunpack.c.l.s4 1983009808
        %v5537 = vunpack.c.0.s8 %v5536
        %v5538 = vlaneseq
        %v5539 = vshrl.u32 %v5538, 7
        %v5540 = vsub.s32 %v5537, %v5539
        %v5541 = vrot.slane %v5527, %v5540
        %v5542 = vcombine.high %v1603, 0.0
        %v5544 = vunpack.c.l.s4 1983009808
        %v5545 = vunpack.c.0.s8 %v5544
        %v5546 = vlaneseq
        %v5547 = vshrl.u32 %v5546, 7
        %v5548 = vsub.s32 %v5545, %v5547
        %v5549 = vrot.slane %v1603, %v5548
        %v5551 = vunpack.c.l.s4 1983009808
        %v5552 = vunpack.c.0.s8 %v5551
        %v5553 = vlaneseq
        %v5554 = vshrl.u32 %v5553, 7
        %v5555 = vsub.s32 %v5552, %v5554
        %v5556 = vrot.slane %v5542, %v5555
        %v5557 = vcombine.low %v5534, %v5549
        %v5558 = vcombine.high %v5534, %v5549
        %v5560 = vunpack.c.l.s4 1934713408
        %v5561 = vunpack.c.0.s8 %v5560
        %v5562 = vlaneseq
        %v5563 = vshrl.u32 %v5562, 7
        %v5564 = vsub.s32 %v5561, %v5563
        %v5565 = vrot.slane %v5557, %v5564
        %v5567 = vunpack.c.l.s4 1934713408
        %v5568 = vunpack.c.0.s8 %v5567
        %v5569 = vlaneseq
        %v5570 = vshrl.u32 %v5569, 7
        %v5571 = vsub.s32 %v5568, %v5570
        %v5572 = vrot.slane %v5558, %v5571
        %v5573 = vcombine.low %v5541, %v5556
        %v5574 = vcombine.high %v5541, %v5556
        %v5576 = vunpack.c.l.s4 1934713408
        %v5577 = vunpack.c.0.s8 %v5576
        %v5578 = vlaneseq
        %v5579 = vshrl.u32 %v5578, 7
        %v5580 = vsub.s32 %v5577, %v5579
        %v5581 = vrot.slane %v5573, %v5580
        %v5583 = vunpack.c.l.s4 1934713408
        %v5584 = vunpack.c.0.s8 %v5583
        %v5585 = vlaneseq
        %v5586 = vshrl.u32 %v5585, 7
        %v5587 = vsub.s32 %v5584, %v5586
        %v5588 = vrot.slane %v5574, %v5587
        %v5589 = vcombine.high %v5565, 0.0
        %v5590 = vcombine.high %v5572, 0.0
        %v5591 = vcombine.high %v5581, 0.0
        %v5592 = vcombine.high %v5588, 0.0
        %v5593 = vcombine.high %v1607, 0.0
        %v5595 = vunpack.c.l.s4 1983009808
        %v5596 = vunpack.c.0.s8 %v5595
        %v5597 = vlaneseq
        %v5598 = vshrl.u32 %v5597, 7
        %v5599 = vsub.s32 %v5596, %v5598
        %v5600 = vrot.slane %v1607, %v5599
        %v5602 = vunpack.c.l.s4 1983009808
        %v5603 = vunpack.c.0.s8 %v5602
        %v5604 = vlaneseq
        %v5605 = vshrl.u32 %v5604, 7
        %v5606 = vsub.s32 %v5603, %v5605
        %v5607 = vrot.slane %v5593, %v5606
        %v5608 = vcombine.high %v1609, 0.0
        %v5610 = vunpack.c.l.s4 1983009808
        %v5611 = vunpack.c.0.s8 %v5610
        %v5612 = vlaneseq
        %v5613 = vshrl.u32 %v5612, 7
        %v5614 = vsub.s32 %v5611, %v5613
        %v5615 = vrot.slane %v1609, %v5614
        %v5617 = vunpack.c.l.s4 1983009808
        %v5618 = vunpack.c.0.s8 %v5617
        %v5619 = vlaneseq
        %v5620 = vshrl.u32 %v5619, 7
        %v5621 = vsub.s32 %v5618, %v5620
        %v5622 = vrot.slane %v5608, %v5621
        %v5623 = vcombine.low %v5600, %v5615
        %v5624 = vcombine.high %v5600, %v5615
        %v5626 = vunpack.c.l.s4 1934713408
        %v5627 = vunpack.c.0.s8 %v5626
        %v5628 = vlaneseq
        %v5629 = vshrl.u32 %v5628, 7
        %v5630 = vsub.s32 %v5627, %v5629
        %v5631 = vrot.slane %v5623, %v5630
        %v5633 = vunpack.c.l.s4 1934713408
        %v5634 = vunpack.c.0.s8 %v5633
        %v5635 = vlaneseq
        %v5636 = vshrl.u32 %v5635, 7
        %v5637 = vsub.s32 %v5634, %v5636
        %v5638 = vrot.slane %v5624, %v5637
        %v5639 = vcombine.low %v5607, %v5622
        %v5640 = vcombine.high %v5607, %v5622
        %v5642 = vunpack.c.l.s4 1934713408
        %v5643 = vunpack.c.0.s8 %v5642
        %v5644 = vlaneseq
        %v5645 = vshrl.u32 %v5644, 7
        %v5646 = vsub.s32 %v5643, %v5645
        %v5647 = vrot.slane %v5639, %v5646
        %v5649 = vunpack.c.l.s4 1934713408
        %v5650 = vunpack.c.0.s8 %v5649
        %v5651 = vlaneseq
        %v5652 = vshrl.u32 %v5651, 7
        %v5653 = vsub.s32 %v5650, %v5652
        %v5654 = vrot.slane %v5640, %v5653
        %v5655 = vcombine.high %v5631, 0.0
        %v5656 = vcombine.high %v5638, 0.0
        %v5657 = vcombine.high %v5647, 0.0
        %v5658 = vcombine.high %v5654, 0.0
        %v5659 = vcombine.high %v1613, 0.0
        %v5661 = vunpack.c.l.s4 1983009808
        %v5662 = vunpack.c.0.s8 %v5661
        %v5663 = vlaneseq
        %v5664 = vshrl.u32 %v5663, 7
        %v5665 = vsub.s32 %v5662, %v5664
        %v5666 = vrot.slane %v1613, %v5665
        %v5668 = vunpack.c.l.s4 1983009808
        %v5669 = vunpack.c.0.s8 %v5668
        %v5670 = vlaneseq
        %v5671 = vshrl.u32 %v5670, 7
        %v5672 = vsub.s32 %v5669, %v5671
        %v5673 = vrot.slane %v5659, %v5672
        %v5674 = vcombine.high %v1615, 0.0
        %v5676 = vunpack.c.l.s4 1983009808
        %v5677 = vunpack.c.0.s8 %v5676
        %v5678 = vlaneseq
        %v5679 = vshrl.u32 %v5678, 7
        %v5680 = vsub.s32 %v5677, %v5679
        %v5681 = vrot.slane %v1615, %v5680
        %v5683 = vunpack.c.l.s4 1983009808
        %v5684 = vunpack.c.0.s8 %v5683
        %v5685 = vlaneseq
        %v5686 = vshrl.u32 %v5685, 7
        %v5687 = vsub.s32 %v5684, %v5686
        %v5688 = vrot.slane %v5674, %v5687
        %v5689 = vcombine.low %v5666, %v5681
        %v5690 = vcombine.high %v5666, %v5681
        %v5692 = vunpack.c.l.s4 1934713408
        %v5693 = vunpack.c.0.s8 %v5692
        %v5694 = vlaneseq
        %v5695 = vshrl.u32 %v5694, 7
        %v5696 = vsub.s32 %v5693, %v5695
        %v5697 = vrot.slane %v5689, %v5696
        %v5699 = vunpack.c.l.s4 1934713408
        %v5700 = vunpack.c.0.s8 %v5699
        %v5701 = vlaneseq
        %v5702 = vshrl.u32 %v5701, 7
        %v5703 = vsub.s32 %v5700, %v5702
        %v5704 = vrot.slane %v5690, %v5703
        %v5705 = vcombine.low %v5673, %v5688
        %v5706 = vcombine.high %v5673, %v5688
        %v5708 = vunpack.c.l.s4 1934713408
        %v5709 = vunpack.c.0.s8 %v5708
        %v5710 = vlaneseq
        %v5711 = vshrl.u32 %v5710, 7
        %v5712 = vsub.s32 %v5709, %v5711
        %v5713 = vrot.slane %v5705, %v5712
        %v5715 = vunpack.c.l.s4 1934713408
        %v5716 = vunpack.c.0.s8 %v5715
        %v5717 = vlaneseq
        %v5718 = vshrl.u32 %v5717, 7
        %v5719 = vsub.s32 %v5716, %v5718
        %v5720 = vrot.slane %v5706, %v5719
        %v5721 = vcombine.high %v5697, 0.0
        %v5722 = vcombine.high %v5704, 0.0
        %v5723 = vcombine.high %v5713, 0.0
        %v5724 = vcombine.high %v5720, 0.0
        %v5725 = vcombine.high %v1619, 0.0
        %v5727 = vunpack.c.l.s4 1983009808
        %v5728 = vunpack.c.0.s8 %v5727
        %v5729 = vlaneseq
        %v5730 = vshrl.u32 %v5729, 7
        %v5731 = vsub.s32 %v5728, %v5730
        %v5732 = vrot.slane %v1619, %v5731
        %v5734 = vunpack.c.l.s4 1983009808
        %v5735 = vunpack.c.0.s8 %v5734
        %v5736 = vlaneseq
        %v5737 = vshrl.u32 %v5736, 7
        %v5738 = vsub.s32 %v5735, %v5737
        %v5739 = vrot.slane %v5725, %v5738
        %v5740 = vcombine.high %v1621, 0.0
        %v5742 = vunpack.c.l.s4 1983009808
        %v5743 = vunpack.c.0.s8 %v5742
        %v5744 = vlaneseq
        %v5745 = vshrl.u32 %v5744, 7
        %v5746 = vsub.s32 %v5743, %v5745
        %v5747 = vrot.slane %v1621, %v5746
        %v5749 = vunpack.c.l.s4 1983009808
        %v5750 = vunpack.c.0.s8 %v5749
        %v5751 = vlaneseq
        %v5752 = vshrl.u32 %v5751, 7
        %v5753 = vsub.s32 %v5750, %v5752
        %v5754 = vrot.slane %v5740, %v5753
        %v5755 = vcombine.low %v5732, %v5747
        %v5756 = vcombine.high %v5732, %v5747
        %v5758 = vunpack.c.l.s4 1934713408
        %v5759 = vunpack.c.0.s8 %v5758
        %v5760 = vlaneseq
        %v5761 = vshrl.u32 %v5760, 7
        %v5762 = vsub.s32 %v5759, %v5761
        %v5763 = vrot.slane %v5755, %v5762
        %v5765 = vunpack.c.l.s4 1934713408
        %v5766 = vunpack.c.0.s8 %v5765
        %v5767 = vlaneseq
        %v5768 = vshrl.u32 %v5767, 7
        %v5769 = vsub.s32 %v5766, %v5768
        %v5770 = vrot.slane %v5756, %v5769
        %v5771 = vcombine.low %v5739, %v5754
        %v5772 = vcombine.high %v5739, %v5754
        %v5774 = vunpack.c.l.s4 1934713408
        %v5775 = vunpack.c.0.s8 %v5774
        %v5776 = vlaneseq
        %v5777 = vshrl.u32 %v5776, 7
        %v5778 = vsub.s32 %v5775, %v5777
        %v5779 = vrot.slane %v5771, %v5778
        %v5781 = vunpack.c.l.s4 1934713408
        %v5782 = vunpack.c.0.s8 %v5781
        %v5783 = vlaneseq
        %v5784 = vshrl.u32 %v5783, 7
        %v5785 = vsub.s32 %v5782, %v5784
        %v5786 = vrot.slane %v5772, %v5785
        %v5787 = vcombine.high %v5763, 0.0
        %v5788 = vcombine.high %v5770, 0.0
        %v5789 = vcombine.high %v5779, 0.0
        %v5790 = vcombine.high %v5786, 0.0
        %v5791 = vcombine.high %v1625, 0.0
        %v5793 = vunpack.c.l.s4 1983009808
        %v5794 = vunpack.c.0.s8 %v5793
        %v5795 = vlaneseq
        %v5796 = vshrl.u32 %v5795, 7
        %v5797 = vsub.s32 %v5794, %v5796
        %v5798 = vrot.slane %v1625, %v5797
        %v5800 = vunpack.c.l.s4 1983009808
        %v5801 = vunpack.c.0.s8 %v5800
        %v5802 = vlaneseq
        %v5803 = vshrl.u32 %v5802, 7
        %v5804 = vsub.s32 %v5801, %v5803
        %v5805 = vrot.slane %v5791, %v5804
        %v5806 = vcombine.high %v1627, 0.0
        %v5808 = vunpack.c.l.s4 1983009808
        %v5809 = vunpack.c.0.s8 %v5808
        %v5810 = vlaneseq
        %v5811 = vshrl.u32 %v5810, 7
        %v5812 = vsub.s32 %v5809, %v5811
        %v5813 = vrot.slane %v1627, %v5812
        %v5815 = vunpack.c.l.s4 1983009808
        %v5816 = vunpack.c.0.s8 %v5815
        %v5817 = vlaneseq
        %v5818 = vshrl.u32 %v5817, 7
        %v5819 = vsub.s32 %v5816, %v5818
        %v5820 = vrot.slane %v5806, %v5819
        %v5821 = vcombine.low %v5798, %v5813
        %v5822 = vcombine.high %v5798, %v5813
        %v5824 = vunpack.c.l.s4 1934713408
        %v5825 = vunpack.c.0.s8 %v5824
        %v5826 = vlaneseq
        %v5827 = vshrl.u32 %v5826, 7
        %v5828 = vsub.s32 %v5825, %v5827
        %v5829 = vrot.slane %v5821, %v5828
        %v5831 = vunpack.c.l.s4 1934713408
        %v5832 = vunpack.c.0.s8 %v5831
        %v5833 = vlaneseq
        %v5834 = vshrl.u32 %v5833, 7
        %v5835 = vsub.s32 %v5832, %v5834
        %v5836 = vrot.slane %v5822, %v5835
        %v5837 = vcombine.low %v5805, %v5820
        %v5838 = vcombine.high %v5805, %v5820
        %v5840 = vunpack.c.l.s4 1934713408
        %v5841 = vunpack.c.0.s8 %v5840
        %v5842 = vlaneseq
        %v5843 = vshrl.u32 %v5842, 7
        %v5844 = vsub.s32 %v5841, %v5843
        %v5845 = vrot.slane %v5837, %v5844
        %v5847 = vunpack.c.l.s4 1934713408
        %v5848 = vunpack.c.0.s8 %v5847
        %v5849 = vlaneseq
        %v5850 = vshrl.u32 %v5849, 7
        %v5851 = vsub.s32 %v5848, %v5850
        %v5852 = vrot.slane %v5838, %v5851
        %v5853 = vcombine.high %v5829, 0.0
        %v5854 = vcombine.high %v5836, 0.0
        %v5855 = vcombine.high %v5845, 0.0
        %v5856 = vcombine.high %v5852, 0.0
        %v5857 = vcombine.high %v1631, 0.0
        %v5859 = vunpack.c.l.s4 1983009808
        %v5860 = vunpack.c.0.s8 %v5859
        %v5861 = vlaneseq
        %v5862 = vshrl.u32 %v5861, 7
        %v5863 = vsub.s32 %v5860, %v5862
        %v5864 = vrot.slane %v1631, %v5863
        %v5866 = vunpack.c.l.s4 1983009808
        %v5867 = vunpack.c.0.s8 %v5866
        %v5868 = vlaneseq
        %v5869 = vshrl.u32 %v5868, 7
        %v5870 = vsub.s32 %v5867, %v5869
        %v5871 = vrot.slane %v5857, %v5870
        %v5872 = vcombine.high %v1633, 0.0
        %v5874 = vunpack.c.l.s4 1983009808
        %v5875 = vunpack.c.0.s8 %v5874
        %v5876 = vlaneseq
        %v5877 = vshrl.u32 %v5876, 7
        %v5878 = vsub.s32 %v5875, %v5877
        %v5879 = vrot.slane %v1633, %v5878
        %v5881 = vunpack.c.l.s4 1983009808
        %v5882 = vunpack.c.0.s8 %v5881
        %v5883 = vlaneseq
        %v5884 = vshrl.u32 %v5883, 7
        %v5885 = vsub.s32 %v5882, %v5884
        %v5886 = vrot.slane %v5872, %v5885
        %v5887 = vcombine.low %v5864, %v5879
        %v5888 = vcombine.high %v5864, %v5879
        %v5890 = vunpack.c.l.s4 1934713408
        %v5891 = vunpack.c.0.s8 %v5890
        %v5892 = vlaneseq
        %v5893 = vshrl.u32 %v5892, 7
        %v5894 = vsub.s32 %v5891, %v5893
        %v5895 = vrot.slane %v5887, %v5894
        %v5897 = vunpack.c.l.s4 1934713408
        %v5898 = vunpack.c.0.s8 %v5897
        %v5899 = vlaneseq
        %v5900 = vshrl.u32 %v5899, 7
        %v5901 = vsub.s32 %v5898, %v5900
        %v5902 = vrot.slane %v5888, %v5901
        %v5903 = vcombine.low %v5871, %v5886
        %v5904 = vcombine.high %v5871, %v5886
        %v5906 = vunpack.c.l.s4 1934713408
        %v5907 = vunpack.c.0.s8 %v5906
        %v5908 = vlaneseq
        %v5909 = vshrl.u32 %v5908, 7
        %v5910 = vsub.s32 %v5907, %v5909
        %v5911 = vrot.slane %v5903, %v5910
        %v5913 = vunpack.c.l.s4 1934713408
        %v5914 = vunpack.c.0.s8 %v5913
        %v5915 = vlaneseq
        %v5916 = vshrl.u32 %v5915, 7
        %v5917 = vsub.s32 %v5914, %v5916
        %v5918 = vrot.slane %v5904, %v5917
        %v5919 = vcombine.high %v5895, 0.0
        %v5920 = vcombine.high %v5902, 0.0
        %v5921 = vcombine.high %v5911, 0.0
        %v5922 = vcombine.high %v5918, 0.0
        %v5923 = vcombine.high %v1637, 0.0
        %v5925 = vunpack.c.l.s4 1983009808
        %v5926 = vunpack.c.0.s8 %v5925
        %v5927 = vlaneseq
        %v5928 = vshrl.u32 %v5927, 7
        %v5929 = vsub.s32 %v5926, %v5928
        %v5930 = vrot.slane %v1637, %v5929
        %v5932 = vunpack.c.l.s4 1983009808
        %v5933 = vunpack.c.0.s8 %v5932
        %v5934 = vlaneseq
        %v5935 = vshrl.u32 %v5934, 7
        %v5936 = vsub.s32 %v5933, %v5935
        %v5937 = vrot.slane %v5923, %v5936
        %v5938 = vcombine.high %v1639, 0.0
        %v5940 = vunpack.c.l.s4 1983009808
        %v5941 = vunpack.c.0.s8 %v5940
        %v5942 = vlaneseq
        %v5943 = vshrl.u32 %v5942, 7
        %v5944 = vsub.s32 %v5941, %v5943
        %v5945 = vrot.slane %v1639, %v5944
        %v5947 = vunpack.c.l.s4 1983009808
        %v5948 = vunpack.c.0.s8 %v5947
        %v5949 = vlaneseq
        %v5950 = vshrl.u32 %v5949, 7
        %v5951 = vsub.s32 %v5948, %v5950
        %v5952 = vrot.slane %v5938, %v5951
        %v5953 = vcombine.low %v5930, %v5945
        %v5954 = vcombine.high %v5930, %v5945
        %v5956 = vunpack.c.l.s4 1934713408
        %v5957 = vunpack.c.0.s8 %v5956
        %v5958 = vlaneseq
        %v5959 = vshrl.u32 %v5958, 7
        %v5960 = vsub.s32 %v5957, %v5959
        %v5961 = vrot.slane %v5953, %v5960
        %v5963 = vunpack.c.l.s4 1934713408
        %v5964 = vunpack.c.0.s8 %v5963
        %v5965 = vlaneseq
        %v5966 = vshrl.u32 %v5965, 7
        %v5967 = vsub.s32 %v5964, %v5966
        %v5968 = vrot.slane %v5954, %v5967
        %v5969 = vcombine.low %v5937, %v5952
        %v5970 = vcombine.high %v5937, %v5952
        %v5972 = vunpack.c.l.s4 1934713408
        %v5973 = vunpack.c.0.s8 %v5972
        %v5974 = vlaneseq
        %v5975 = vshrl.u32 %v5974, 7
        %v5976 = vsub.s32 %v5973, %v5975
        %v5977 = vrot.slane %v5969, %v5976
        %v5979 = vunpack.c.l.s4 1934713408
        %v5980 = vunpack.c.0.s8 %v5979
        %v5981 = vlaneseq
        %v5982 = vshrl.u32 %v5981, 7
        %v5983 = vsub.s32 %v5980, %v5982
        %v5984 = vrot.slane %v5970, %v5983
        %v5985 = vcombine.high %v5961, 0.0
        %v5986 = vcombine.high %v5968, 0.0
        %v5987 = vcombine.high %v5977, 0.0
        %v5988 = vcombine.high %v5984, 0.0
        %v5989 = vcombine.high %v1643, 0.0
        %v5991 = vunpack.c.l.s4 1983009808
        %v5992 = vunpack.c.0.s8 %v5991
        %v5993 = vlaneseq
        %v5994 = vshrl.u32 %v5993, 7
        %v5995 = vsub.s32 %v5992, %v5994
        %v5996 = vrot.slane %v1643, %v5995
        %v5998 = vunpack.c.l.s4 1983009808
        %v5999 = vunpack.c.0.s8 %v5998
        %v6000 = vlaneseq
        %v6001 = vshrl.u32 %v6000, 7
        %v6002 = vsub.s32 %v5999, %v6001
        %v6003 = vrot.slane %v5989, %v6002
        %v6004 = vcombine.high %v1645, 0.0
        %v6006 = vunpack.c.l.s4 1983009808
        %v6007 = vunpack.c.0.s8 %v6006
        %v6008 = vlaneseq
        %v6009 = vshrl.u32 %v6008, 7
        %v6010 = vsub.s32 %v6007, %v6009
        %v6011 = vrot.slane %v1645, %v6010
        %v6013 = vunpack.c.l.s4 1983009808
        %v6014 = vunpack.c.0.s8 %v6013
        %v6015 = vlaneseq
        %v6016 = vshrl.u32 %v6015, 7
        %v6017 = vsub.s32 %v6014, %v6016
        %v6018 = vrot.slane %v6004, %v6017
        %v6019 = vcombine.low %v5996, %v6011
        %v6020 = vcombine.high %v5996, %v6011
        %v6022 = vunpack.c.l.s4 1934713408
        %v6023 = vunpack.c.0.s8 %v6022
        %v6024 = vlaneseq
        %v6025 = vshrl.u32 %v6024, 7
        %v6026 = vsub.s32 %v6023, %v6025
        %v6027 = vrot.slane %v6019, %v6026
        %v6029 = vunpack.c.l.s4 1934713408
        %v6030 = vunpack.c.0.s8 %v6029
        %v6031 = vlaneseq
        %v6032 = vshrl.u32 %v6031, 7
        %v6033 = vsub.s32 %v6030, %v6032
        %v6034 = vrot.slane %v6020, %v6033
        %v6035 = vcombine.low %v6003, %v6018
        %v6036 = vcombine.high %v6003, %v6018
        %v6038 = vunpack.c.l.s4 1934713408
        %v6039 = vunpack.c.0.s8 %v6038
        %v6040 = vlaneseq
        %v6041 = vshrl.u32 %v6040, 7
        %v6042 = vsub.s32 %v6039, %v6041
        %v6043 = vrot.slane %v6035, %v6042
        %v6045 = vunpack.c.l.s4 1934713408
        %v6046 = vunpack.c.0.s8 %v6045
        %v6047 = vlaneseq
        %v6048 = vshrl.u32 %v6047, 7
        %v6049 = vsub.s32 %v6046, %v6048
        %v6050 = vrot.slane %v6036, %v6049
        %v6051 = vcombine.high %v6027, 0.0
        %v6052 = vcombine.high %v6034, 0.0
        %v6053 = vcombine.high %v6043, 0.0
        %v6054 = vcombine.high %v6050, 0.0
        %v6055 = vcombine.high %v1649, 0.0
        %v6057 = vunpack.c.l.s4 1983009808
        %v6058 = vunpack.c.0.s8 %v6057
        %v6059 = vlaneseq
        %v6060 = vshrl.u32 %v6059, 7
        %v6061 = vsub.s32 %v6058, %v6060
        %v6062 = vrot.slane %v1649, %v6061
        %v6064 = vunpack.c.l.s4 1983009808
        %v6065 = vunpack.c.0.s8 %v6064
        %v6066 = vlaneseq
        %v6067 = vshrl.u32 %v6066, 7
        %v6068 = vsub.s32 %v6065, %v6067
        %v6069 = vrot.slane %v6055, %v6068
        %v6070 = vcombine.high %v1651, 0.0
        %v6072 = vunpack.c.l.s4 1983009808
        %v6073 = vunpack.c.0.s8 %v6072
        %v6074 = vlaneseq
        %v6075 = vshrl.u32 %v6074, 7
        %v6076 = vsub.s32 %v6073, %v6075
        %v6077 = vrot.slane %v1651, %v6076
        %v6079 = vunpack.c.l.s4 1983009808
        %v6080 = vunpack.c.0.s8 %v6079
        %v6081 = vlaneseq
        %v6082 = vshrl.u32 %v6081, 7
        %v6083 = vsub.s32 %v6080, %v6082
        %v6084 = vrot.slane %v6070, %v6083
        %v6085 = vcombine.low %v6062, %v6077
        %v6086 = vcombine.high %v6062, %v6077
        %v6088 = vunpack.c.l.s4 1934713408
        %v6089 = vunpack.c.0.s8 %v6088
        %v6090 = vlaneseq
        %v6091 = vshrl.u32 %v6090, 7
        %v6092 = vsub.s32 %v6089, %v6091
        %v6093 = vrot.slane %v6085, %v6092
        %v6095 = vunpack.c.l.s4 1934713408
        %v6096 = vunpack.c.0.s8 %v6095
        %v6097 = vlaneseq
        %v6098 = vshrl.u32 %v6097, 7
        %v6099 = vsub.s32 %v6096, %v6098
        %v6100 = vrot.slane %v6086, %v6099
        %v6101 = vcombine.low %v6069, %v6084
        %v6102 = vcombine.high %v6069, %v6084
        %v6104 = vunpack.c.l.s4 1934713408
        %v6105 = vunpack.c.0.s8 %v6104
        %v6106 = vlaneseq
        %v6107 = vshrl.u32 %v6106, 7
        %v6108 = vsub.s32 %v6105, %v6107
        %v6109 = vrot.slane %v6101, %v6108
        %v6111 = vunpack.c.l.s4 1934713408
        %v6112 = vunpack.c.0.s8 %v6111
        %v6113 = vlaneseq
        %v6114 = vshrl.u32 %v6113, 7
        %v6115 = vsub.s32 %v6112, %v6114
        %v6116 = vrot.slane %v6102, %v6115
        %v6117 = vcombine.high %v6093, 0.0
        %v6118 = vcombine.high %v6100, 0.0
        %v6119 = vcombine.high %v6109, 0.0
        %v6120 = vcombine.high %v6116, 0.0
        %v6121 = vcombine.high %v1655, 0.0
        %v6123 = vunpack.c.l.s4 1983009808
        %v6124 = vunpack.c.0.s8 %v6123
        %v6125 = vlaneseq
        %v6126 = vshrl.u32 %v6125, 7
        %v6127 = vsub.s32 %v6124, %v6126
        %v6128 = vrot.slane %v1655, %v6127
        %v6130 = vunpack.c.l.s4 1983009808
        %v6131 = vunpack.c.0.s8 %v6130
        %v6132 = vlaneseq
        %v6133 = vshrl.u32 %v6132, 7
        %v6134 = vsub.s32 %v6131, %v6133
        %v6135 = vrot.slane %v6121, %v6134
        %v6136 = vcombine.high %v1657, 0.0
        %v6138 = vunpack.c.l.s4 1983009808
        %v6139 = vunpack.c.0.s8 %v6138
        %v6140 = vlaneseq
        %v6141 = vshrl.u32 %v6140, 7
        %v6142 = vsub.s32 %v6139, %v6141
        %v6143 = vrot.slane %v1657, %v6142
        %v6145 = vunpack.c.l.s4 1983009808
        %v6146 = vunpack.c.0.s8 %v6145
        %v6147 = vlaneseq
        %v6148 = vshrl.u32 %v6147, 7
        %v6149 = vsub.s32 %v6146, %v6148
        %v6150 = vrot.slane %v6136, %v6149
        %v6151 = vcombine.low %v6128, %v6143
        %v6152 = vcombine.high %v6128, %v6143
        %v6154 = vunpack.c.l.s4 1934713408
        %v6155 = vunpack.c.0.s8 %v6154
        %v6156 = vlaneseq
        %v6157 = vshrl.u32 %v6156, 7
        %v6158 = vsub.s32 %v6155, %v6157
        %v6159 = vrot.slane %v6151, %v6158
        %v6161 = vunpack.c.l.s4 1934713408
        %v6162 = vunpack.c.0.s8 %v6161
        %v6163 = vlaneseq
        %v6164 = vshrl.u32 %v6163, 7
        %v6165 = vsub.s32 %v6162, %v6164
        %v6166 = vrot.slane %v6152, %v6165
        %v6167 = vcombine.low %v6135, %v6150
        %v6168 = vcombine.high %v6135, %v6150
        %v6170 = vunpack.c.l.s4 1934713408
        %v6171 = vunpack.c.0.s8 %v6170
        %v6172 = vlaneseq
        %v6173 = vshrl.u32 %v6172, 7
        %v6174 = vsub.s32 %v6171, %v6173
        %v6175 = vrot.slane %v6167, %v6174
        %v6177 = vunpack.c.l.s4 1934713408
        %v6178 = vunpack.c.0.s8 %v6177
        %v6179 = vlaneseq
        %v6180 = vshrl.u32 %v6179, 7
        %v6181 = vsub.s32 %v6178, %v6180
        %v6182 = vrot.slane %v6168, %v6181
        %v6183 = vcombine.high %v6159, 0.0
        %v6184 = vcombine.high %v6166, 0.0
        %v6185 = vcombine.high %v6175, 0.0
        %v6186 = vcombine.high %v6182, 0.0
        %v6187 = vcombine.high %v1661, 0.0
        %v6189 = vunpack.c.l.s4 1983009808
        %v6190 = vunpack.c.0.s8 %v6189
        %v6191 = vlaneseq
        %v6192 = vshrl.u32 %v6191, 7
        %v6193 = vsub.s32 %v6190, %v6192
        %v6194 = vrot.slane %v1661, %v6193
        %v6196 = vunpack.c.l.s4 1983009808
        %v6197 = vunpack.c.0.s8 %v6196
        %v6198 = vlaneseq
        %v6199 = vshrl.u32 %v6198, 7
        %v6200 = vsub.s32 %v6197, %v6199
        %v6201 = vrot.slane %v6187, %v6200
        %v6202 = vcombine.high %v1663, 0.0
        %v6204 = vunpack.c.l.s4 1983009808
        %v6205 = vunpack.c.0.s8 %v6204
        %v6206 = vlaneseq
        %v6207 = vshrl.u32 %v6206, 7
        %v6208 = vsub.s32 %v6205, %v6207
        %v6209 = vrot.slane %v1663, %v6208
        %v6211 = vunpack.c.l.s4 1983009808
        %v6212 = vunpack.c.0.s8 %v6211
        %v6213 = vlaneseq
        %v6214 = vshrl.u32 %v6213, 7
        %v6215 = vsub.s32 %v6212, %v6214
        %v6216 = vrot.slane %v6202, %v6215
        %v6217 = vcombine.low %v6194, %v6209
        %v6218 = vcombine.high %v6194, %v6209
        %v6220 = vunpack.c.l.s4 1934713408
        %v6221 = vunpack.c.0.s8 %v6220
        %v6222 = vlaneseq
        %v6223 = vshrl.u32 %v6222, 7
        %v6224 = vsub.s32 %v6221, %v6223
        %v6225 = vrot.slane %v6217, %v6224
        %v6227 = vunpack.c.l.s4 1934713408
        %v6228 = vunpack.c.0.s8 %v6227
        %v6229 = vlaneseq
        %v6230 = vshrl.u32 %v6229, 7
        %v6231 = vsub.s32 %v6228, %v6230
        %v6232 = vrot.slane %v6218, %v6231
        %v6233 = vcombine.low %v6201, %v6216
        %v6234 = vcombine.high %v6201, %v6216
        %v6236 = vunpack.c.l.s4 1934713408
        %v6237 = vunpack.c.0.s8 %v6236
        %v6238 = vlaneseq
        %v6239 = vshrl.u32 %v6238, 7
        %v6240 = vsub.s32 %v6237, %v6239
        %v6241 = vrot.slane %v6233, %v6240
        %v6243 = vunpack.c.l.s4 1934713408
        %v6244 = vunpack.c.0.s8 %v6243
        %v6245 = vlaneseq
        %v6246 = vshrl.u32 %v6245, 7
        %v6247 = vsub.s32 %v6244, %v6246
        %v6248 = vrot.slane %v6234, %v6247
        %v6249 = vcombine.high %v6225, 0.0
        %v6250 = vcombine.high %v6232, 0.0
        %v6251 = vcombine.high %v6241, 0.0
        %v6252 = vcombine.high %v6248, 0.0
        %v6253 = vcombine.high %v1667, 0.0
        %v6255 = vunpack.c.l.s4 1983009808
        %v6256 = vunpack.c.0.s8 %v6255
        %v6257 = vlaneseq
        %v6258 = vshrl.u32 %v6257, 7
        %v6259 = vsub.s32 %v6256, %v6258
        %v6260 = vrot.slane %v1667, %v6259
        %v6262 = vunpack.c.l.s4 1983009808
        %v6263 = vunpack.c.0.s8 %v6262
        %v6264 = vlaneseq
        %v6265 = vshrl.u32 %v6264, 7
        %v6266 = vsub.s32 %v6263, %v6265
        %v6267 = vrot.slane %v6253, %v6266
        %v6268 = vcombine.high %v1669, 0.0
        %v6270 = vunpack.c.l.s4 1983009808
        %v6271 = vunpack.c.0.s8 %v6270
        %v6272 = vlaneseq
        %v6273 = vshrl.u32 %v6272, 7
        %v6274 = vsub.s32 %v6271, %v6273
        %v6275 = vrot.slane %v1669, %v6274
        %v6277 = vunpack.c.l.s4 1983009808
        %v6278 = vunpack.c.0.s8 %v6277
        %v6279 = vlaneseq
        %v6280 = vshrl.u32 %v6279, 7
        %v6281 = vsub.s32 %v6278, %v6280
        %v6282 = vrot.slane %v6268, %v6281
        %v6283 = vcombine.low %v6260, %v6275
        %v6284 = vcombine.high %v6260, %v6275
        %v6286 = vunpack.c.l.s4 1934713408
        %v6287 = vunpack.c.0.s8 %v6286
        %v6288 = vlaneseq
        %v6289 = vshrl.u32 %v6288, 7
        %v6290 = vsub.s32 %v6287, %v6289
        %v6291 = vrot.slane %v6283, %v6290
        %v6293 = vunpack.c.l.s4 1934713408
        %v6294 = vunpack.c.0.s8 %v6293
        %v6295 = vlaneseq
        %v6296 = vshrl.u32 %v6295, 7
        %v6297 = vsub.s32 %v6294, %v6296
        %v6298 = vrot.slane %v6284, %v6297
        %v6299 = vcombine.low %v6267, %v6282
        %v6300 = vcombine.high %v6267, %v6282
        %v6302 = vunpack.c.l.s4 1934713408
        %v6303 = vunpack.c.0.s8 %v6302
        %v6304 = vlaneseq
        %v6305 = vshrl.u32 %v6304, 7
        %v6306 = vsub.s32 %v6303, %v6305
        %v6307 = vrot.slane %v6299, %v6306
        %v6309 = vunpack.c.l.s4 1934713408
        %v6310 = vunpack.c.0.s8 %v6309
        %v6311 = vlaneseq
        %v6312 = vshrl.u32 %v6311, 7
        %v6313 = vsub.s32 %v6310, %v6312
        %v6314 = vrot.slane %v6300, %v6313
        %v6315 = vcombine.high %v6291, 0.0
        %v6316 = vcombine.high %v6298, 0.0
        %v6317 = vcombine.high %v6307, 0.0
        %v6318 = vcombine.high %v6314, 0.0
        %v6319 = vcombine.high %v1673, 0.0
        %v6321 = vunpack.c.l.s4 1983009808
        %v6322 = vunpack.c.0.s8 %v6321
        %v6323 = vlaneseq
        %v6324 = vshrl.u32 %v6323, 7
        %v6325 = vsub.s32 %v6322, %v6324
        %v6326 = vrot.slane %v1673, %v6325
        %v6328 = vunpack.c.l.s4 1983009808
        %v6329 = vunpack.c.0.s8 %v6328
        %v6330 = vlaneseq
        %v6331 = vshrl.u32 %v6330, 7
        %v6332 = vsub.s32 %v6329, %v6331
        %v6333 = vrot.slane %v6319, %v6332
        %v6334 = vcombine.high %v1675, 0.0
        %v6336 = vunpack.c.l.s4 1983009808
        %v6337 = vunpack.c.0.s8 %v6336
        %v6338 = vlaneseq
        %v6339 = vshrl.u32 %v6338, 7
        %v6340 = vsub.s32 %v6337, %v6339
        %v6341 = vrot.slane %v1675, %v6340
        %v6343 = vunpack.c.l.s4 1983009808
        %v6344 = vunpack.c.0.s8 %v6343
        %v6345 = vlaneseq
        %v6346 = vshrl.u32 %v6345, 7
        %v6347 = vsub.s32 %v6344, %v6346
        %v6348 = vrot.slane %v6334, %v6347
        %v6349 = vcombine.low %v6326, %v6341
        %v6350 = vcombine.high %v6326, %v6341
        %v6352 = vunpack.c.l.s4 1934713408
        %v6353 = vunpack.c.0.s8 %v6352
        %v6354 = vlaneseq
        %v6355 = vshrl.u32 %v6354, 7
        %v6356 = vsub.s32 %v6353, %v6355
        %v6357 = vrot.slane %v6349, %v6356
        %v6359 = vunpack.c.l.s4 1934713408
        %v6360 = vunpack.c.0.s8 %v6359
        %v6361 = vlaneseq
        %v6362 = vshrl.u32 %v6361, 7
        %v6363 = vsub.s32 %v6360, %v6362
        %v6364 = vrot.slane %v6350, %v6363
        %v6365 = vcombine.low %v6333, %v6348
        %v6366 = vcombine.high %v6333, %v6348
        %v6368 = vunpack.c.l.s4 1934713408
        %v6369 = vunpack.c.0.s8 %v6368
        %v6370 = vlaneseq
        %v6371 = vshrl.u32 %v6370, 7
        %v6372 = vsub.s32 %v6369, %v6371
        %v6373 = vrot.slane %v6365, %v6372
        %v6375 = vunpack.c.l.s4 1934713408
        %v6376 = vunpack.c.0.s8 %v6375
        %v6377 = vlaneseq
        %v6378 = vshrl.u32 %v6377, 7
        %v6379 = vsub.s32 %v6376, %v6378
        %v6380 = vrot.slane %v6366, %v6379
        %v6381 = vcombine.high %v6357, 0.0
        %v6382 = vcombine.high %v6364, 0.0
        %v6383 = vcombine.high %v6373, 0.0
        %v6384 = vcombine.high %v6380, 0.0
        %v6385 = vcombine.high %v1679, 0.0
        %v6387 = vunpack.c.l.s4 1983009808
        %v6388 = vunpack.c.0.s8 %v6387
        %v6389 = vlaneseq
        %v6390 = vshrl.u32 %v6389, 7
        %v6391 = vsub.s32 %v6388, %v6390
        %v6392 = vrot.slane %v1679, %v6391
        %v6394 = vunpack.c.l.s4 1983009808
        %v6395 = vunpack.c.0.s8 %v6394
        %v6396 = vlaneseq
        %v6397 = vshrl.u32 %v6396, 7
        %v6398 = vsub.s32 %v6395, %v6397
        %v6399 = vrot.slane %v6385, %v6398
        %v6400 = vcombine.high %v1681, 0.0
        %v6402 = vunpack.c.l.s4 1983009808
        %v6403 = vunpack.c.0.s8 %v6402
        %v6404 = vlaneseq
        %v6405 = vshrl.u32 %v6404, 7
        %v6406 = vsub.s32 %v6403, %v6405
        %v6407 = vrot.slane %v1681, %v6406
        %v6409 = vunpack.c.l.s4 1983009808
        %v6410 = vunpack.c.0.s8 %v6409
        %v6411 = vlaneseq
        %v6412 = vshrl.u32 %v6411, 7
        %v6413 = vsub.s32 %v6410, %v6412
        %v6414 = vrot.slane %v6400, %v6413
        %v6415 = vcombine.low %v6392, %v6407
        %v6416 = vcombine.high %v6392, %v6407
        %v6418 = vunpack.c.l.s4 1934713408
        %v6419 = vunpack.c.0.s8 %v6418
        %v6420 = vlaneseq
        %v6421 = vshrl.u32 %v6420, 7
        %v6422 = vsub.s32 %v6419, %v6421
        %v6423 = vrot.slane %v6415, %v6422
        %v6425 = vunpack.c.l.s4 1934713408
        %v6426 = vunpack.c.0.s8 %v6425
        %v6427 = vlaneseq
        %v6428 = vshrl.u32 %v6427, 7
        %v6429 = vsub.s32 %v6426, %v6428
        %v6430 = vrot.slane %v6416, %v6429
        %v6431 = vcombine.low %v6399, %v6414
        %v6432 = vcombine.high %v6399, %v6414
        %v6434 = vunpack.c.l.s4 1934713408
        %v6435 = vunpack.c.0.s8 %v6434
        %v6436 = vlaneseq
        %v6437 = vshrl.u32 %v6436, 7
        %v6438 = vsub.s32 %v6435, %v6437
        %v6439 = vrot.slane %v6431, %v6438
        %v6441 = vunpack.c.l.s4 1934713408
        %v6442 = vunpack.c.0.s8 %v6441
        %v6443 = vlaneseq
        %v6444 = vshrl.u32 %v6443, 7
        %v6445 = vsub.s32 %v6442, %v6444
        %v6446 = vrot.slane %v6432, %v6445
        %v6447 = vcombine.high %v6423, 0.0
        %v6448 = vcombine.high %v6430, 0.0
        %v6449 = vcombine.high %v6439, 0.0
        %v6450 = vcombine.high %v6446, 0.0
        %v6451 = vcombine.low %v5433, %v5440
        %v6453 = vunpack.c.l.s4 1983009808
        %v6454 = vunpack.c.0.s8 %v6453
        %v6455 = vlaneseq
        %v6456 = vshrl.u32 %v6455, 7
        %v6457 = vsub.s32 %v6454, %v6456
        %v6458 = vrot.slane %v6451, %v6457
        %v6459 = vcombine.low %v5457, %v5458
        %v6461 = vunpack.c.l.s4 1983009808
        %v6462 = vunpack.c.0.s8 %v6461
        %v6463 = vlaneseq
        %v6464 = vshrl.u32 %v6463, 7
        %v6465 = vsub.s32 %v6462, %v6464
        %v6466 = vrot.slane %v6459, %v6465
        %v6467 = vcombine.low %v5449, %v5456
        %v6469 = vunpack.c.l.s4 1983009808
        %v6470 = vunpack.c.0.s8 %v6469
        %v6471 = vlaneseq
        %v6472 = vshrl.u32 %v6471, 7
        %v6473 = vsub.s32 %v6470, %v6472
        %v6474 = vrot.slane %v6467, %v6473
        %v6475 = vcombine.low %v5459, %v5460
        %v6477 = vunpack.c.l.s4 1983009808
        %v6478 = vunpack.c.0.s8 %v6477
        %v6479 = vlaneseq
        %v6480 = vshrl.u32 %v6479, 7
        %v6481 = vsub.s32 %v6478, %v6480
        %v6482 = vrot.slane %v6475, %v6481
        %v6483 = vcombine.low %v6458, %v6466
        %v6485 = vunpack.c.l.s4 1934713408
        %v6486 = vunpack.c.0.s8 %v6485
        %v6487 = vlaneseq
        %v6488 = vshrl.u32 %v6487, 7
        %v6489 = vsub.s32 %v6486, %v6488
        %v6490 = vrot.slane %v6483, %v6489
        %v6491 = vcombine.low %v6474, %v6482
        %v6493 = vunpack.c.l.s4 1934713408
        %v6494 = vunpack.c.0.s8 %v6493
        %v6495 = vlaneseq
        %v6496 = vshrl.u32 %v6495, 7
        %v6497 = vsub.s32 %v6494, %v6496
        %v6498 = vrot.slane %v6491, %v6497
        %v6499 = vcombine.low %v6490, %v6498
        %v6500 = vcombine.high %v6490, %v6498
        %v6501 = vcombine.low %v5499, %v5506
        %v6503 = vunpack.c.l.s4 1983009808
        %v6504 = vunpack.c.0.s8 %v6503
        %v6505 = vlaneseq
        %v6506 = vshrl.u32 %v6505, 7
        %v6507 = vsub.s32 %v6504, %v6506
        %v6508 = vrot.slane %v6501, %v6507
        %v6509 = vcombine.low %v5523, %v5524
        %v6511 = vunpack.c.l.s4 1983009808
        %v6512 = vunpack.c.0.s8 %v6511
        %v6513 = vlaneseq
        %v6514 = vshrl.u32 %v6513, 7
        %v6515 = vsub.s32 %v6512, %v6514
        %v6516 = vrot.slane %v6509, %v6515
        %v6517 = vcombine.low %v5515, %v5522
        %v6519 = vunpack.c.l.s4 1983009808
        %v6520 = vunpack.c.0.s8 %v6519
        %v6521 = vlaneseq
        %v6522 = vshrl.u32 %v6521, 7
        %v6523 = vsub.s32 %v6520, %v6522
        %v6524 = vrot.slane %v6517, %v6523
        %v6525 = vcombine.low %v5525, %v5526
        %v6527 = vunpack.c.l.s4 1983009808
        %v6528 = vunpack.c.0.s8 %v6527
        %v6529 = vlaneseq
        %v6530 = vshrl.u32 %v6529, 7
        %v6531 = vsub.s32 %v6528, %v6530
        %v6532 = vrot.slane %v6525, %v6531
        %v6533 = vcombine.low %v6508, %v6516
        %v6535 = vunpack.c.l.s4 1934713408
        %v6536 = vunpack.c.0.s8 %v6535
        %v6537 = vlaneseq
        %v6538 = vshrl.u32 %v6537, 7
        %v6539 = vsub.s32 %v6536, %v6538
        %v6540 = vrot.slane %v6533, %v6539
        %v6541 = vcombine.low %v6524, %v6532
        %v6543 = vunpack.c.l.s4 1934713408
        %v6544 = vunpack.c.0.s8 %v6543
        %v6545 = vlaneseq
        %v6546 = vshrl.u32 %v6545, 7
        %v6547 = vsub.s32 %v6544, %v6546
        %v6548 = vrot.slane %v6541, %v6547
        %v6549 = vcombine.low %v6540, %v6548
        %v6550 = vcombine.high %v6540, %v6548
        %v6551 = vcombine.low %v5565, %v5572
        %v6553 = vunpack.c.l.s4 1983009808
        %v6554 = vunpack.c.0.s8 %v6553
        %v6555 = vlaneseq
        %v6556 = vshrl.u32 %v6555, 7
        %v6557 = vsub.s32 %v6554, %v6556
        %v6558 = vrot.slane %v6551, %v6557
        %v6559 = vcombine.low %v5589, %v5590
        %v6561 = vunpack.c.l.s4 1983009808
        %v6562 = vunpack.c.0.s8 %v6561
        %v6563 = vlaneseq
        %v6564 = vshrl.u32 %v6563, 7
        %v6565 = vsub.s32 %v6562, %v6564
        %v6566 = vrot.slane %v6559, %v6565
        %v6567 = vcombine.low %v5581, %v5588
        %v6569 = vunpack.c.l.s4 1983009808
        %v6570 = vunpack.c.0.s8 %v6569
        %v6571 = vlaneseq
        %v6572 = vshrl.u32 %v6571, 7
        %v6573 = vsub.s32 %v6570, %v6572
        %v6574 = vrot.slane %v6567, %v6573
        %v6575 = vcombine.low %v5591, %v5592
        %v6577 = vunpack.c.l.s4 1983009808
        %v6578 = vunpack.c.0.s8 %v6577
        %v6579 = vlaneseq
        %v6580 = vshrl.u32 %v6579, 7
        %v6581 = vsub.s32 %v6578, %v6580
        %v6582 = vrot.slane %v6575, %v6581
        %v6583 = vcombine.low %v6558, %v6566
        %v6585 = vunpack.c.l.s4 1934713408
        %v6586 = vunpack.c.0.s8 %v6585
        %v6587 = vlaneseq
        %v6588 = vshrl.u32 %v6587, 7
        %v6589 = vsub.s32 %v6586, %v6588
        %v6590 = vrot.slane %v6583, %v6589
        %v6591 = vcombine.low %v6574, %v6582
        %v6593 = vunpack.c.l.s4 1934713408
        %v6594 = vunpack.c.0.s8 %v6593
        %v6595 = vlaneseq
        %v6596 = vshrl.u32 %v6595, 7
        %v6597 = vsub.s32 %v6594, %v6596
        %v6598 = vrot.slane %v6591, %v6597
        %v6599 = vcombine.low %v6590, %v6598
        %v6600 = vcombine.high %v6590, %v6598
        %v6601 = vcombine.low %v5631, %v5638
        %v6603 = vunpack.c.l.s4 1983009808
        %v6604 = vunpack.c.0.s8 %v6603
        %v6605 = vlaneseq
        %v6606 = vshrl.u32 %v6605, 7
        %v6607 = vsub.s32 %v6604, %v6606
        %v6608 = vrot.slane %v6601, %v6607
        %v6609 = vcombine.low %v5655, %v5656
        %v6611 = vunpack.c.l.s4 1983009808
        %v6612 = vunpack.c.0.s8 %v6611
        %v6613 = vlaneseq
        %v6614 = vshrl.u32 %v6613, 7
        %v6615 = vsub.s32 %v6612, %v6614
        %v6616 = vrot.slane %v6609, %v6615
        %v6617 = vcombine.low %v5647, %v5654
        %v6619 = vunpack.c.l.s4 1983009808
        %v6620 = vunpack.c.0.s8 %v6619
        %v6621 = vlaneseq
        %v6622 = vshrl.u32 %v6621, 7
        %v6623 = vsub.s32 %v6620, %v6622
        %v6624 = vrot.slane %v6617, %v6623
        %v6625 = vcombine.low %v5657, %v5658
        %v6627 = vunpack.c.l.s4 1983009808
        %v6628 = vunpack.c.0.s8 %v6627
        %v6629 = vlaneseq
        %v6630 = vshrl.u32 %v6629, 7
        %v6631 = vsub.s32 %v6628, %v6630
        %v6632 = vrot.slane %v6625, %v6631
        %v6633 = vcombine.low %v6608, %v6616
        %v6635 = vunpack.c.l.s4 1934713408
        %v6636 = vunpack.c.0.s8 %v6635
        %v6637 = vlaneseq
        %v6638 = vshrl.u32 %v6637, 7
        %v6639 = vsub.s32 %v6636, %v6638
        %v6640 = vrot.slane %v6633, %v6639
        %v6641 = vcombine.low %v6624, %v6632
        %v6643 = vunpack.c.l.s4 1934713408
        %v6644 = vunpack.c.0.s8 %v6643
        %v6645 = vlaneseq
        %v6646 = vshrl.u32 %v6645, 7
        %v6647 = vsub.s32 %v6644, %v6646
        %v6648 = vrot.slane %v6641, %v6647
        %v6649 = vcombine.low %v6640, %v6648
        %v6650 = vcombine.high %v6640, %v6648
        %v6651 = vcombine.low %v5697, %v5704
        %v6653 = vunpack.c.l.s4 1983009808
        %v6654 = vunpack.c.0.s8 %v6653
        %v6655 = vlaneseq
        %v6656 = vshrl.u32 %v6655, 7
        %v6657 = vsub.s32 %v6654, %v6656
        %v6658 = vrot.slane %v6651, %v6657
        %v6659 = vcombine.low %v5721, %v5722
        %v6661 = vunpack.c.l.s4 1983009808
        %v6662 = vunpack.c.0.s8 %v6661
        %v6663 = vlaneseq
        %v6664 = vshrl.u32 %v6663, 7
        %v6665 = vsub.s32 %v6662, %v6664
        %v6666 = vrot.slane %v6659, %v6665
        %v6667 = vcombine.low %v5713, %v5720
        %v6669 = vunpack.c.l.s4 1983009808
        %v6670 = vunpack.c.0.s8 %v6669
        %v6671 = vlaneseq
        %v6672 = vshrl.u32 %v6671, 7
        %v6673 = vsub.s32 %v6670, %v6672
        %v6674 = vrot.slane %v6667, %v6673
        %v6675 = vcombine.low %v5723, %v5724
        %v6677 = vunpack.c.l.s4 1983009808
        %v6678 = vunpack.c.0.s8 %v6677
        %v6679 = vlaneseq
        %v6680 = vshrl.u32 %v6679, 7
        %v6681 = vsub.s32 %v6678, %v6680
        %v6682 = vrot.slane %v6675, %v6681
        %v6683 = vcombine.low %v6658, %v6666
        %v6685 = vunpack.c.l.s4 1934713408
        %v6686 = vunpack.c.0.s8 %v6685
        %v6687 = vlaneseq
        %v6688 = vshrl.u32 %v6687, 7
        %v6689 = vsub.s32 %v6686, %v6688
        %v6690 = vrot.slane %v6683, %v6689
        %v6691 = vcombine.low %v6674, %v6682
        %v6693 = vunpack.c.l.s4 1934713408
        %v6694 = vunpack.c.0.s8 %v6693
        %v6695 = vlaneseq
        %v6696 = vshrl.u32 %v6695, 7
        %v6697 = vsub.s32 %v6694, %v6696
        %v6698 = vrot.slane %v6691, %v6697
        %v6699 = vcombine.low %v6690, %v6698
        %v6700 = vcombine.high %v6690, %v6698
        %v6701 = vcombine.low %v5763, %v5770
        %v6703 = vunpack.c.l.s4 1983009808
        %v6704 = vunpack.c.0.s8 %v6703
        %v6705 = vlaneseq
        %v6706 = vshrl.u32 %v6705, 7
        %v6707 = vsub.s32 %v6704, %v6706
        %v6708 = vrot.slane %v6701, %v6707
        %v6709 = vcombine.low %v5787, %v5788
        %v6711 = vunpack.c.l.s4 1983009808
        %v6712 = vunpack.c.0.s8 %v6711
        %v6713 = vlaneseq
        %v6714 = vshrl.u32 %v6713, 7
        %v6715 = vsub.s32 %v6712, %v6714
        %v6716 = vrot.slane %v6709, %v6715
        %v6717 = vcombine.low %v5779, %v5786
        %v6719 = vunpack.c.l.s4 1983009808
        %v6720 = vunpack.c.0.s8 %v6719
        %v6721 = vlaneseq
        %v6722 = vshrl.u32 %v6721, 7
        %v6723 = vsub.s32 %v6720, %v6722
        %v6724 = vrot.slane %v6717, %v6723
        %v6725 = vcombine.low %v5789, %v5790
        %v6727 = vunpack.c.l.s4 1983009808
        %v6728 = vunpack.c.0.s8 %v6727
        %v6729 = vlaneseq
        %v6730 = vshrl.u32 %v6729, 7
        %v6731 = vsub.s32 %v6728, %v6730
        %v6732 = vrot.slane %v6725, %v6731
        %v6733 = vcombine.low %v6708, %v6716
        %v6735 = vunpack.c.l.s4 1934713408
        %v6736 = vunpack.c.0.s8 %v6735
        %v6737 = vlaneseq
        %v6738 = vshrl.u32 %v6737, 7
        %v6739 = vsub.s32 %v6736, %v6738
        %v6740 = vrot.slane %v6733, %v6739
        %v6741 = vcombine.low %v6724, %v6732
        %v6743 = vunpack.c.l.s4 1934713408
        %v6744 = vunpack.c.0.s8 %v6743
        %v6745 = vlaneseq
        %v6746 = vshrl.u32 %v6745, 7
        %v6747 = vsub.s32 %v6744, %v6746
        %v6748 = vrot.slane %v6741, %v6747
        %v6749 = vcombine.low %v6740, %v6748
        %v6750 = vcombine.high %v6740, %v6748
        %v6751 = vcombine.low %v5829, %v5836
        %v6753 = vunpack.c.l.s4 1983009808
        %v6754 = vunpack.c.0.s8 %v6753
        %v6755 = vlaneseq
        %v6756 = vshrl.u32 %v6755, 7
        %v6757 = vsub.s32 %v6754, %v6756
        %v6758 = vrot.slane %v6751, %v6757
        %v6759 = vcombine.low %v5853, %v5854
        %v6761 = vunpack.c.l.s4 1983009808
        %v6762 = vunpack.c.0.s8 %v6761
        %v6763 = vlaneseq
        %v6764 = vshrl.u32 %v6763, 7
        %v6765 = vsub.s32 %v6762, %v6764
        %v6766 = vrot.slane %v6759, %v6765
        %v6767 = vcombine.low %v5845, %v5852
        %v6769 = vunpack.c.l.s4 1983009808
        %v6770 = vunpack.c.0.s8 %v6769
        %v6771 = vlaneseq
        %v6772 = vshrl.u32 %v6771, 7
        %v6773 = vsub.s32 %v6770, %v6772
        %v6774 = vrot.slane %v6767, %v6773
        %v6775 = vcombine.low %v5855, %v5856
        %v6777 = vunpack.c.l.s4 1983009808
        %v6778 = vunpack.c.0.s8 %v6777
        %v6779 = vlaneseq
        %v6780 = vshrl.u32 %v6779, 7
        %v6781 = vsub.s32 %v6778, %v6780
        %v6782 = vrot.slane %v6775, %v6781
        %v6783 = vcombine.low %v6758, %v6766
        %v6785 = vunpack.c.l.s4 1934713408
        %v6786 = vunpack.c.0.s8 %v6785
        %v6787 = vlaneseq
        %v6788 = vshrl.u32 %v6787, 7
        %v6789 = vsub.s32 %v6786, %v6788
        %v6790 = vrot.slane %v6783, %v6789
        %v6791 = vcombine.low %v6774, %v6782
        %v6793 = vunpack.c.l.s4 1934713408
        %v6794 = vunpack.c.0.s8 %v6793
        %v6795 = vlaneseq
        %v6796 = vshrl.u32 %v6795, 7
        %v6797 = vsub.s32 %v6794, %v6796
        %v6798 = vrot.slane %v6791, %v6797
        %v6799 = vcombine.low %v6790, %v6798
        %v6800 = vcombine.high %v6790, %v6798
        %v6801 = vcombine.low %v5895, %v5902
        %v6803 = vunpack.c.l.s4 1983009808
        %v6804 = vunpack.c.0.s8 %v6803
        %v6805 = vlaneseq
        %v6806 = vshrl.u32 %v6805, 7
        %v6807 = vsub.s32 %v6804, %v6806
        %v6808 = vrot.slane %v6801, %v6807
        %v6809 = vcombine.low %v5919, %v5920
        %v6811 = vunpack.c.l.s4 1983009808
        %v6812 = vunpack.c.0.s8 %v6811
        %v6813 = vlaneseq
        %v6814 = vshrl.u32 %v6813, 7
        %v6815 = vsub.s32 %v6812, %v6814
        %v6816 = vrot.slane %v6809, %v6815
        %v6817 = vcombine.low %v5911, %v5918
        %v6819 = vunpack.c.l.s4 1983009808
        %v6820 = vunpack.c.0.s8 %v6819
        %v6821 = vlaneseq
        %v6822 = vshrl.u32 %v6821, 7
        %v6823 = vsub.s32 %v6820, %v6822
        %v6824 = vrot.slane %v6817, %v6823
        %v6825 = vcombine.low %v5921, %v5922
        %v6827 = vunpack.c.l.s4 1983009808
        %v6828 = vunpack.c.0.s8 %v6827
        %v6829 = vlaneseq
        %v6830 = vshrl.u32 %v6829, 7
        %v6831 = vsub.s32 %v6828, %v6830
        %v6832 = vrot.slane %v6825, %v6831
        %v6833 = vcombine.low %v6808, %v6816
        %v6835 = vunpack.c.l.s4 1934713408
        %v6836 = vunpack.c.0.s8 %v6835
        %v6837 = vlaneseq
        %v6838 = vshrl.u32 %v6837, 7
        %v6839 = vsub.s32 %v6836, %v6838
        %v6840 = vrot.slane %v6833, %v6839
        %v6841 = vcombine.low %v6824, %v6832
        %v6843 = vunpack.c.l.s4 1934713408
        %v6844 = vunpack.c.0.s8 %v6843
        %v6845 = vlaneseq
        %v6846 = vshrl.u32 %v6845, 7
        %v6847 = vsub.s32 %v6844, %v6846
        %v6848 = vrot.slane %v6841, %v6847
        %v6849 = vcombine.low %v6840, %v6848
        %v6850 = vcombine.high %v6840, %v6848
        %v6851 = vcombine.low %v5961, %v5968
        %v6853 = vunpack.c.l.s4 1983009808
        %v6854 = vunpack.c.0.s8 %v6853
        %v6855 = vlaneseq
        %v6856 = vshrl.u32 %v6855, 7
        %v6857 = vsub.s32 %v6854, %v6856
        %v6858 = vrot.slane %v6851, %v6857
        %v6859 = vcombine.low %v5985, %v5986
        %v6861 = vunpack.c.l.s4 1983009808
        %v6862 = vunpack.c.0.s8 %v6861
        %v6863 = vlaneseq
        %v6864 = vshrl.u32 %v6863, 7
        %v6865 = vsub.s32 %v6862, %v6864
        %v6866 = vrot.slane %v6859, %v6865
        %v6867 = vcombine.low %v5977, %v5984
        %v6869 = vunpack.c.l.s4 1983009808
        %v6870 = vunpack.c.0.s8 %v6869
        %v6871 = vlaneseq
        %v6872 = vshrl.u32 %v6871, 7
        %v6873 = vsub.s32 %v6870, %v6872
        %v6874 = vrot.slane %v6867, %v6873
        %v6875 = vcombine.low %v5987, %v5988
        %v6877 = vunpack.c.l.s4 1983009808
        %v6878 = vunpack.c.0.s8 %v6877
        %v6879 = vlaneseq
        %v6880 = vshrl.u32 %v6879, 7
        %v6881 = vsub.s32 %v6878, %v6880
        %v6882 = vrot.slane %v6875, %v6881
        %v6883 = vcombine.low %v6858, %v6866
        %v6885 = vunpack.c.l.s4 1934713408
        %v6886 = vunpack.c.0.s8 %v6885
        %v6887 = vlaneseq
        %v6888 = vshrl.u32 %v6887, 7
        %v6889 = vsub.s32 %v6886, %v6888
        %v6890 = vrot.slane %v6883, %v6889
        %v6891 = vcombine.low %v6874, %v6882
        %v6893 = vunpack.c.l.s4 1934713408
        %v6894 = vunpack.c.0.s8 %v6893
        %v6895 = vlaneseq
        %v6896 = vshrl.u32 %v6895, 7
        %v6897 = vsub.s32 %v6894, %v6896
        %v6898 = vrot.slane %v6891, %v6897
        %v6899 = vcombine.low %v6890, %v6898
        %v6900 = vcombine.high %v6890, %v6898
        %v6901 = vcombine.low %v6027, %v6034
        %v6903 = vunpack.c.l.s4 1983009808
        %v6904 = vunpack.c.0.s8 %v6903
        %v6905 = vlaneseq
        %v6906 = vshrl.u32 %v6905, 7
        %v6907 = vsub.s32 %v6904, %v6906
        %v6908 = vrot.slane %v6901, %v6907
        %v6909 = vcombine.low %v6051, %v6052
        %v6911 = vunpack.c.l.s4 1983009808
        %v6912 = vunpack.c.0.s8 %v6911
        %v6913 = vlaneseq
        %v6914 = vshrl.u32 %v6913, 7
        %v6915 = vsub.s32 %v6912, %v6914
        %v6916 = vrot.slane %v6909, %v6915
        %v6917 = vcombine.low %v6043, %v6050
        %v6919 = vunpack.c.l.s4 1983009808
        %v6920 = vunpack.c.0.s8 %v6919
        %v6921 = vlaneseq
        %v6922 = vshrl.u32 %v6921, 7
        %v6923 = vsub.s32 %v6920, %v6922
        %v6924 = vrot.slane %v6917, %v6923
        %v6925 = vcombine.low %v6053, %v6054
        %v6927 = vunpack.c.l.s4 1983009808
        %v6928 = vunpack.c.0.s8 %v6927
        %v6929 = vlaneseq
        %v6930 = vshrl.u32 %v6929, 7
        %v6931 = vsub.s32 %v6928, %v6930
        %v6932 = vrot.slane %v6925, %v6931
        %v6933 = vcombine.low %v6908, %v6916
        %v6935 = vunpack.c.l.s4 1934713408
        %v6936 = vunpack.c.0.s8 %v6935
        %v6937 = vlaneseq
        %v6938 = vshrl.u32 %v6937, 7
        %v6939 = vsub.s32 %v6936, %v6938
        %v6940 = vrot.slane %v6933, %v6939
        %v6941 = vcombine.low %v6924, %v6932
        %v6943 = vunpack.c.l.s4 1934713408
        %v6944 = vunpack.c.0.s8 %v6943
        %v6945 = vlaneseq
        %v6946 = vshrl.u32 %v6945, 7
        %v6947 = vsub.s32 %v6944, %v6946
        %v6948 = vrot.slane %v6941, %v6947
        %v6949 = vcombine.low %v6940, %v6948
        %v6950 = vcombine.high %v6940, %v6948
        %v6951 = vcombine.low %v6093, %v6100
        %v6953 = vunpack.c.l.s4 1983009808
        %v6954 = vunpack.c.0.s8 %v6953
        %v6955 = vlaneseq
        %v6956 = vshrl.u32 %v6955, 7
        %v6957 = vsub.s32 %v6954, %v6956
        %v6958 = vrot.slane %v6951, %v6957
        %v6959 = vcombine.low %v6117, %v6118
        %v6961 = vunpack.c.l.s4 1983009808
        %v6962 = vunpack.c.0.s8 %v6961
        %v6963 = vlaneseq
        %v6964 = vshrl.u32 %v6963, 7
        %v6965 = vsub.s32 %v6962, %v6964
        %v6966 = vrot.slane %v6959, %v6965
        %v6967 = vcombine.low %v6109, %v6116
        %v6969 = vunpack.c.l.s4 1983009808
        %v6970 = vunpack.c.0.s8 %v6969
        %v6971 = vlaneseq
        %v6972 = vshrl.u32 %v6971, 7
        %v6973 = vsub.s32 %v6970, %v6972
        %v6974 = vrot.slane %v6967, %v6973
        %v6975 = vcombine.low %v6119, %v6120
        %v6977 = vunpack.c.l.s4 1983009808
        %v6978 = vunpack.c.0.s8 %v6977
        %v6979 = vlaneseq
        %v6980 = vshrl.u32 %v6979, 7
        %v6981 = vsub.s32 %v6978, %v6980
        %v6982 = vrot.slane %v6975, %v6981
        %v6983 = vcombine.low %v6958, %v6966
        %v6985 = vunpack.c.l.s4 1934713408
        %v6986 = vunpack.c.0.s8 %v6985
        %v6987 = vlaneseq
        %v6988 = vshrl.u32 %v6987, 7
        %v6989 = vsub.s32 %v6986, %v6988
        %v6990 = vrot.slane %v6983, %v6989
        %v6991 = vcombine.low %v6974, %v6982
        %v6993 = vunpack.c.l.s4 1934713408
        %v6994 = vunpack.c.0.s8 %v6993
        %v6995 = vlaneseq
        %v6996 = vshrl.u32 %v6995, 7
        %v6997 = vsub.s32 %v6994, %v6996
        %v6998 = vrot.slane %v6991, %v6997
        %v6999 = vcombine.low %v6990, %v6998
        %v7000 = vcombine.high %v6990, %v6998
        %v7001 = vcombine.low %v6159, %v6166
        %v7003 = vunpack.c.l.s4 1983009808
        %v7004 = vunpack.c.0.s8 %v7003
        %v7005 = vlaneseq
        %v7006 = vshrl.u32 %v7005, 7
        %v7007 = vsub.s32 %v7004, %v7006
        %v7008 = vrot.slane %v7001, %v7007
        %v7009 = vcombine.low %v6183, %v6184
        %v7011 = vunpack.c.l.s4 1983009808
        %v7012 = vunpack.c.0.s8 %v7011
        %v7013 = vlaneseq
        %v7014 = vshrl.u32 %v7013, 7
        %v7015 = vsub.s32 %v7012, %v7014
        %v7016 = vrot.slane %v7009, %v7015
        %v7017 = vcombine.low %v6175, %v6182
        %v7019 = vunpack.c.l.s4 1983009808
        %v7020 = vunpack.c.0.s8 %v7019
        %v7021 = vlaneseq
        %v7022 = vshrl.u32 %v7021, 7
        %v7023 = vsub.s32 %v7020, %v7022
        %v7024 = vrot.slane %v7017, %v7023
        %v7025 = vcombine.low %v6185, %v6186
        %v7027 = vunpack.c.l.s4 1983009808
        %v7028 = vunpack.c.0.s8 %v7027
        %v7029 = vlaneseq
        %v7030 = vshrl.u32 %v7029, 7
        %v7031 = vsub.s32 %v7028, %v7030
        %v7032 = vrot.slane %v7025, %v7031
        %v7033 = vcombine.low %v7008, %v7016
        %v7035 = vunpack.c.l.s4 1934713408
        %v7036 = vunpack.c.0.s8 %v7035
        %v7037 = vlaneseq
        %v7038 = vshrl.u32 %v7037, 7
        %v7039 = vsub.s32 %v7036, %v7038
        %v7040 = vrot.slane %v7033, %v7039
        %v7041 = vcombine.low %v7024, %v7032
        %v7043 = vunpack.c.l.s4 1934713408
        %v7044 = vunpack.c.0.s8 %v7043
        %v7045 = vlaneseq
        %v7046 = vshrl.u32 %v7045, 7
        %v7047 = vsub.s32 %v7044, %v7046
        %v7048 = vrot.slane %v7041, %v7047
        %v7049 = vcombine.low %v7040, %v7048
        %v7050 = vcombine.high %v7040, %v7048
        %v7051 = vcombine.low %v6225, %v6232
        %v7053 = vunpack.c.l.s4 1983009808
        %v7054 = vunpack.c.0.s8 %v7053
        %v7055 = vlaneseq
        %v7056 = vshrl.u32 %v7055, 7
        %v7057 = vsub.s32 %v7054, %v7056
        %v7058 = vrot.slane %v7051, %v7057
        %v7059 = vcombine.low %v6249, %v6250
        %v7061 = vunpack.c.l.s4 1983009808
        %v7062 = vunpack.c.0.s8 %v7061
        %v7063 = vlaneseq
        %v7064 = vshrl.u32 %v7063, 7
        %v7065 = vsub.s32 %v7062, %v7064
        %v7066 = vrot.slane %v7059, %v7065
        %v7067 = vcombine.low %v6241, %v6248
        %v7069 = vunpack.c.l.s4 1983009808
        %v7070 = vunpack.c.0.s8 %v7069
        %v7071 = vlaneseq
        %v7072 = vshrl.u32 %v7071, 7
        %v7073 = vsub.s32 %v7070, %v7072
        %v7074 = vrot.slane %v7067, %v7073
        %v7075 = vcombine.low %v6251, %v6252
        %v7077 = vunpack.c.l.s4 1983009808
        %v7078 = vunpack.c.0.s8 %v7077
        %v7079 = vlaneseq
        %v7080 = vshrl.u32 %v7079, 7
        %v7081 = vsub.s32 %v7078, %v7080
        %v7082 = vrot.slane %v7075, %v7081
        %v7083 = vcombine.low %v7058, %v7066
        %v7085 = vunpack.c.l.s4 1934713408
        %v7086 = vunpack.c.0.s8 %v7085
        %v7087 = vlaneseq
        %v7088 = vshrl.u32 %v7087, 7
        %v7089 = vsub.s32 %v7086, %v7088
        %v7090 = vrot.slane %v7083, %v7089
        %v7091 = vcombine.low %v7074, %v7082
        %v7093 = vunpack.c.l.s4 1934713408
        %v7094 = vunpack.c.0.s8 %v7093
        %v7095 = vlaneseq
        %v7096 = vshrl.u32 %v7095, 7
        %v7097 = vsub.s32 %v7094, %v7096
        %v7098 = vrot.slane %v7091, %v7097
        %v7099 = vcombine.low %v7090, %v7098
        %v7100 = vcombine.high %v7090, %v7098
        %v7101 = vcombine.low %v6291, %v6298
        %v7103 = vunpack.c.l.s4 1983009808
        %v7104 = vunpack.c.0.s8 %v7103
        %v7105 = vlaneseq
        %v7106 = vshrl.u32 %v7105, 7
        %v7107 = vsub.s32 %v7104, %v7106
        %v7108 = vrot.slane %v7101, %v7107
        %v7109 = vcombine.low %v6315, %v6316
        %v7111 = vunpack.c.l.s4 1983009808
        %v7112 = vunpack.c.0.s8 %v7111
        %v7113 = vlaneseq
        %v7114 = vshrl.u32 %v7113, 7
        %v7115 = vsub.s32 %v7112, %v7114
        %v7116 = vrot.slane %v7109, %v7115
        %v7117 = vcombine.low %v6307, %v6314
        %v7119 = vunpack.c.l.s4 1983009808
        %v7120 = vunpack.c.0.s8 %v7119
        %v7121 = vlaneseq
        %v7122 = vshrl.u32 %v7121, 7
        %v7123 = vsub.s32 %v7120, %v7122
        %v7124 = vrot.slane %v7117, %v7123
        %v7125 = vcombine.low %v6317, %v6318
        %v7127 = vunpack.c.l.s4 1983009808
        %v7128 = vunpack.c.0.s8 %v7127
        %v7129 = vlaneseq
        %v7130 = vshrl.u32 %v7129, 7
        %v7131 = vsub.s32 %v7128, %v7130
        %v7132 = vrot.slane %v7125, %v7131
        %v7133 = vcombine.low %v7108, %v7116
        %v7135 = vunpack.c.l.s4 1934713408
        %v7136 = vunpack.c.0.s8 %v7135
        %v7137 = vlaneseq
        %v7138 = vshrl.u32 %v7137, 7
        %v7139 = vsub.s32 %v7136, %v7138
        %v7140 = vrot.slane %v7133, %v7139
        %v7141 = vcombine.low %v7124, %v7132
        %v7143 = vunpack.c.l.s4 1934713408
        %v7144 = vunpack.c.0.s8 %v7143
        %v7145 = vlaneseq
        %v7146 = vshrl.u32 %v7145, 7
        %v7147 = vsub.s32 %v7144, %v7146
        %v7148 = vrot.slane %v7141, %v7147
        %v7149 = vcombine.low %v7140, %v7148
        %v7150 = vcombine.high %v7140, %v7148
        %v7151 = vcombine.low %v6357, %v6364
        %v7153 = vunpack.c.l.s4 1983009808
        %v7154 = vunpack.c.0.s8 %v7153
        %v7155 = vlaneseq
        %v7156 = vshrl.u32 %v7155, 7
        %v7157 = vsub.s32 %v7154, %v7156
        %v7158 = vrot.slane %v7151, %v7157
        %v7159 = vcombine.low %v6381, %v6382
        %v7161 = vunpack.c.l.s4 1983009808
        %v7162 = vunpack.c.0.s8 %v7161
        %v7163 = vlaneseq
        %v7164 = vshrl.u32 %v7163, 7
        %v7165 = vsub.s32 %v7162, %v7164
        %v7166 = vrot.slane %v7159, %v7165
        %v7167 = vcombine.low %v6373, %v6380
        %v7169 = vunpack.c.l.s4 1983009808
        %v7170 = vunpack.c.0.s8 %v7169
        %v7171 = vlaneseq
        %v7172 = vshrl.u32 %v7171, 7
        %v7173 = vsub.s32 %v7170, %v7172
        %v7174 = vrot.slane %v7167, %v7173
        %v7175 = vcombine.low %v6383, %v6384
        %v7177 = vunpack.c.l.s4 1983009808
        %v7178 = vunpack.c.0.s8 %v7177
        %v7179 = vlaneseq
        %v7180 = vshrl.u32 %v7179, 7
        %v7181 = vsub.s32 %v7178, %v7180
        %v7182 = vrot.slane %v7175, %v7181
        %v7183 = vcombine.low %v7158, %v7166
        %v7185 = vunpack.c.l.s4 1934713408
        %v7186 = vunpack.c.0.s8 %v7185
        %v7187 = vlaneseq
        %v7188 = vshrl.u32 %v7187, 7
        %v7189 = vsub.s32 %v7186, %v7188
        %v7190 = vrot.slane %v7183, %v7189
        %v7191 = vcombine.low %v7174, %v7182
        %v7193 = vunpack.c.l.s4 1934713408
        %v7194 = vunpack.c.0.s8 %v7193
        %v7195 = vlaneseq
        %v7196 = vshrl.u32 %v7195, 7
        %v7197 = vsub.s32 %v7194, %v7196
        %v7198 = vrot.slane %v7191, %v7197
        %v7199 = vcombine.low %v7190, %v7198
        %v7200 = vcombine.high %v7190, %v7198
        %v7201 = vcombine.low %v6423, %v6430
        %v7203 = vunpack.c.l.s4 1983009808
        %v7204 = vunpack.c.0.s8 %v7203
        %v7205 = vlaneseq
        %v7206 = vshrl.u32 %v7205, 7
        %v7207 = vsub.s32 %v7204, %v7206
        %v7208 = vrot.slane %v7201, %v7207
        %v7209 = vcombine.low %v6447, %v6448
        %v7211 = vunpack.c.l.s4 1983009808
        %v7212 = vunpack.c.0.s8 %v7211
        %v7213 = vlaneseq
        %v7214 = vshrl.u32 %v7213, 7
        %v7215 = vsub.s32 %v7212, %v7214
        %v7216 = vrot.slane %v7209, %v7215
        %v7217 = vcombine.low %v6439, %v6446
        %v7219 = vunpack.c.l.s4 1983009808
        %v7220 = vunpack.c.0.s8 %v7219
        %v7221 = vlaneseq
        %v7222 = vshrl.u32 %v7221, 7
        %v7223 = vsub.s32 %v7220, %v7222
        %v7224 = vrot.slane %v7217, %v7223
        %v7225 = vcombine.low %v6449, %v6450
        %v7227 = vunpack.c.l.s4 1983009808
        %v7228 = vunpack.c.0.s8 %v7227
        %v7229 = vlaneseq
        %v7230 = vshrl.u32 %v7229, 7
        %v7231 = vsub.s32 %v7228, %v7230
        %v7232 = vrot.slane %v7225, %v7231
        %v7233 = vcombine.low %v7208, %v7216
        %v7235 = vunpack.c.l.s4 1934713408
        %v7236 = vunpack.c.0.s8 %v7235
        %v7237 = vlaneseq
        %v7238 = vshrl.u32 %v7237, 7
        %v7239 = vsub.s32 %v7236, %v7238
        %v7240 = vrot.slane %v7233, %v7239
        %v7241 = vcombine.low %v7224, %v7232
        %v7243 = vunpack.c.l.s4 1934713408
        %v7244 = vunpack.c.0.s8 %v7243
        %v7245 = vlaneseq
        %v7246 = vshrl.u32 %v7245, 7
        %v7247 = vsub.s32 %v7244, %v7246
        %v7248 = vrot.slane %v7241, %v7247
        %v7249 = vcombine.low %v7240, %v7248
        %v7250 = vcombine.high %v7240, %v7248
        %7251 = vmatprep.subr.mxu0 0.0
        %7252 = vmatpush1.xpose.msra.mxu0 %v4643
        %7253 = vmatprep.subr.mxu0 0.0
        %7254 = vmatpush1.xpose.msra.mxu0 %v4693
        %7255 = vmatprep.subr.mxu0 0.0
        %7256 = vmatpush1.xpose.msra.mxu0 %v4743
        %7257 = vmatprep.subr.mxu0 0.0
        %7258 = vmatpush1.xpose.msra.mxu0 %v4793
        %7259 = vmatprep.subr.mxu0 0.0
        %7260 = vmatpush1.xpose.msra.mxu0 %v4843
        %7261 = vmatprep.subr.mxu0 0.0
        %7262 = vmatpush1.xpose.msra.mxu0 %v4893
        %7263 = vmatprep.subr.mxu0 0.0
        %7264 = vmatpush1.xpose.msra.mxu0 %v4943
        %7265 = vmatprep.subr.mxu0 0.0
        %7266 = vmatpush1.xpose.msra.mxu0 %v4993
        %7267 = vmatprep.subr.mxu0 0.0
        %7268 = vmatpush1.xpose.msra.mxu0 %v5043
        %7269 = vmatprep.subr.mxu0 0.0
        %7270 = vmatpush1.xpose.msra.mxu0 %v5093
        %7271 = vmatprep.subr.mxu0 0.0
        %7272 = vmatpush1.xpose.msra.mxu0 %v5143
        %7273 = vmatprep.subr.mxu0 0.0
        %7274 = vmatpush1.xpose.msra.mxu0 %v5193
        %7275 = vmatprep.subr.mxu0 0.0
        %7276 = vmatpush1.xpose.msra.mxu0 %v5243
        %7277 = vmatprep.subr.mxu0 0.0
        %7278 = vmatpush1.xpose.msra.mxu0 %v5293
        %7279 = vmatprep.subr.mxu0 0.0
        %7280 = vmatpush1.xpose.msra.mxu0 %v5343
        %7281 = vmatprep.subr.mxu0 0.0
        %7282 = vmatpush1.xpose.msra.mxu0 %v5393
        %7283 = vmatprep.subr.mxu0 0.0
        %7284 = vmatpush1.xpose.msra.mxu0 0.0
        %7285 = vmatprep.subr.mxu0 0.0
        %7286 = vmatpush1.xpose.msra.mxu0 0.0
        %7287 = vmatprep.subr.mxu0 0.0
        %7288 = vmatpush1.xpose.msra.mxu0 0.0
        %7289 = vmatprep.subr.mxu0 0.0
        %7290 = vmatpush1.xpose.msra.mxu0 0.0
        %7291 = vmatprep.subr.mxu0 0.0
        %7292 = vmatpush1.xpose.msra.mxu0 0.0
        %7293 = vmatprep.subr.mxu0 0.0
        %7294 = vmatpush1.xpose.msra.mxu0 0.0
        %7295 = vmatprep.subr.mxu0 0.0
        %7296 = vmatpush1.xpose.msra.mxu0 0.0
        %7297 = vmatprep.subr.mxu0 0.0
        %7298 = vmatpush1.xpose.msra.mxu0 0.0
        %7299 = vmatprep.subr.mxu0 0.0
        %7300 = vmatpush1.xpose.msra.mxu0 0.0
        %7301 = vmatprep.subr.mxu0 0.0
        %7302 = vmatpush1.xpose.msra.mxu0 0.0
        %7303 = vmatprep.subr.mxu0 0.0
        %7304 = vmatpush1.xpose.msra.mxu0 0.0
        %7305 = vmatprep.subr.mxu0 0.0
        %7306 = vmatpush1.xpose.msra.mxu0 0.0
        %7307 = vmatprep.subr.mxu0 0.0
        %7308 = vmatpush1.xpose.msra.mxu0 0.0
        %7309 = vmatprep.subr.mxu0 0.0
        %7310 = vmatpush1.xpose.msra.mxu0 0.0
        %7311 = vmatprep.subr.mxu0 0.0
        %7312 = vmatpush1.xpose.msra.mxu0 0.0
        %7313 = vmatprep.subr.mxu0 0.0
        %7314 = vmatpush1.xpose.msra.mxu0 0.0
        %7315 = vmatprep.mubr.f32.mxu0 0.0
        %7316 = vmatmul.mubr.f32.gmra.mrb[0].mxu0 %v2787
        %v7317 = vpop.f32.mrb[0].mxu0
        %v7318 = vadd.f32 0.0, %v7317
        %v7319 = vpop.f32.mrb[0].mxu0
        %7320 = vmatprep.mubr.f32.mxu0 0.0
        %7321 = vmatmul.mubr.f32.gmra.mrb[0].mxu0 %v2837
        %v7322 = vpop.f32.mrb[0].mxu0
        %v7323 = vadd.f32 0.0, %v7322
        %v7324 = vpop.f32.mrb[0].mxu0
        %7325 = vmatprep.mubr.f32.mxu0 0.0
        %7326 = vmatmul.mubr.f32.gmra.mrb[0].mxu0 %v2887
        %v7327 = vpop.f32.mrb[0].mxu0
        %v7328 = vadd.f32 0.0, %v7327
        %v7329 = vpop.f32.mrb[0].mxu0
        %7330 = vmatprep.mubr.f32.mxu0 0.0
        %7331 = vmatmul.mubr.f32.gmra.mrb[0].mxu0 %v2937
        %v7332 = vpop.f32.mrb[0].mxu0
        %v7333 = vadd.f32 0.0, %v7332
        %v7334 = vpop.f32.mrb[0].mxu0
        %7335 = vmatprep.mubr.f32.mxu0 0.0
        %7336 = vmatmul.mubr.f32.gmra.mrb[0].mxu0 %v2987
        %v7337 = vpop.f32.mrb[0].mxu0
        %v7338 = vadd.f32 0.0, %v7337
        %v7339 = vpop.f32.mrb[0].mxu0
        %7340 = vmatprep.mubr.f32.mxu0 0.0
        %7341 = vmatmul.mubr.f32.gmra.mrb[0].mxu0 %v3037
        %v7342 = vpop.f32.mrb[0].mxu0
        %v7343 = vadd.f32 0.0, %v7342
        %v7344 = vpop.f32.mrb[0].mxu0
        %7345 = vmatprep.mubr.f32.mxu0 0.0
        %7346 = vmatmul.mubr.f32.gmra.mrb[0].mxu0 %v3087
        %v7347 = vpop.f32.mrb[0].mxu0
        %v7348 = vadd.f32 0.0, %v7347
        %v7349 = vpop.f32.mrb[0].mxu0
        %7350 = vmatprep.mubr.f32.mxu0 0.0
        %7351 = vmatmul.mubr.f32.gmra.mrb[0].mxu0 %v3137
        %v7352 = vpop.f32.mrb[0].mxu0
        %v7353 = vadd.f32 0.0, %v7352
        %v7354 = vpop.f32.mrb[0].mxu0
        %7355 = vmatprep.mubr.f32.mxu0 0.0
        %7356 = vmatmul.mubr.f32.gmra.mrb[0].mxu0 %v3187
        %v7357 = vpop.f32.mrb[0].mxu0
        %v7358 = vadd.f32 0.0, %v7357
        %v7359 = vpop.f32.mrb[0].mxu0
        %7360 = vmatprep.mubr.f32.mxu0 0.0
        %7361 = vmatmul.mubr.f32.gmra.mrb[0].mxu0 %v3237
        %v7362 = vpop.f32.mrb[0].mxu0
        %v7363 = vadd.f32 0.0, %v7362
        %v7364 = vpop.f32.mrb[0].mxu0
        %7365 = vmatprep.mubr.f32.mxu0 0.0
        %7366 = vmatmul.mubr.f32.gmra.mrb[0].mxu0 %v3287
        %v7367 = vpop.f32.mrb[0].mxu0
        %v7368 = vadd.f32 0.0, %v7367
        %v7369 = vpop.f32.mrb[0].mxu0
        %7370 = vmatprep.mubr.f32.mxu0 0.0
        %7371 = vmatmul.mubr.f32.gmra.mrb[0].mxu0 %v3337
        %v7372 = vpop.f32.mrb[0].mxu0
        %v7373 = vadd.f32 0.0, %v7372
        %v7374 = vpop.f32.mrb[0].mxu0
        %7375 = vmatprep.mubr.f32.mxu0 0.0
        %7376 = vmatmul.mubr.f32.gmra.mrb[0].mxu0 %v3387
        %v7377 = vpop.f32.mrb[0].mxu0
        %v7378 = vadd.f32 0.0, %v7377
        %v7379 = vpop.f32.mrb[0].mxu0
        %7380 = vmatprep.mubr.f32.mxu0 0.0
        %7381 = vmatmul.mubr.f32.gmra.mrb[0].mxu0 %v3437
        %v7382 = vpop.f32.mrb[0].mxu0
        %v7383 = vadd.f32 0.0, %v7382
        %v7384 = vpop.f32.mrb[0].mxu0
        %7385 = vmatprep.mubr.f32.mxu0 0.0
        %7386 = vmatmul.mubr.f32.gmra.mrb[0].mxu0 %v3487
        %v7387 = vpop.f32.mrb[0].mxu0
        %v7388 = vadd.f32 0.0, %v7387
        %v7389 = vpop.f32.mrb[0].mxu0
        %7390 = vmatprep.mubr.f32.mxu0 0.0
        %7391 = vmatmul.mubr.f32.gmra.mrb[0].mxu0 %v3537
        %v7392 = vpop.f32.mrb[0].mxu0
        %v7393 = vadd.f32 0.0, %v7392
        %v7394 = vpop.f32.mrb[0].mxu0
        %7395 = vdwg.mxu0
        %7396 = vmatprep.subr.mxu0 0.0
        %7397 = vmatpush1.xpose.msra.mxu0 %v4644
        %7398 = vmatprep.subr.mxu0 0.0
        %7399 = vmatpush1.xpose.msra.mxu0 %v4694
        %7400 = vmatprep.subr.mxu0 0.0
        %7401 = vmatpush1.xpose.msra.mxu0 %v4744
        %7402 = vmatprep.subr.mxu0 0.0
        %7403 = vmatpush1.xpose.msra.mxu0 %v4794
        %7404 = vmatprep.subr.mxu0 0.0
        %7405 = vmatpush1.xpose.msra.mxu0 %v4844
        %7406 = vmatprep.subr.mxu0 0.0
        %7407 = vmatpush1.xpose.msra.mxu0 %v4894
        %7408 = vmatprep.subr.mxu0 0.0
        %7409 = vmatpush1.xpose.msra.mxu0 %v4944
        %7410 = vmatprep.subr.mxu0 0.0
        %7411 = vmatpush1.xpose.msra.mxu0 %v4994
        %7412 = vmatprep.subr.mxu0 0.0
        %7413 = vmatpush1.xpose.msra.mxu0 %v5044
        %7414 = vmatprep.subr.mxu0 0.0
        %7415 = vmatpush1.xpose.msra.mxu0 %v5094
        %7416 = vmatprep.subr.mxu0 0.0
        %7417 = vmatpush1.xpose.msra.mxu0 %v5144
        %7418 = vmatprep.subr.mxu0 0.0
        %7419 = vmatpush1.xpose.msra.mxu0 %v5194
        %7420 = vmatprep.subr.mxu0 0.0
        %7421 = vmatpush1.xpose.msra.mxu0 %v5244
        %7422 = vmatprep.subr.mxu0 0.0
        %7423 = vmatpush1.xpose.msra.mxu0 %v5294
        %7424 = vmatprep.subr.mxu0 0.0
        %7425 = vmatpush1.xpose.msra.mxu0 %v5344
        %7426 = vmatprep.subr.mxu0 0.0
        %7427 = vmatpush1.xpose.msra.mxu0 %v5394
        %7428 = vmatprep.subr.mxu0 0.0
        %7429 = vmatpush1.xpose.msra.mxu0 0.0
        %7430 = vmatprep.subr.mxu0 0.0
        %7431 = vmatpush1.xpose.msra.mxu0 0.0
        %7432 = vmatprep.subr.mxu0 0.0
        %7433 = vmatpush1.xpose.msra.mxu0 0.0
        %7434 = vmatprep.subr.mxu0 0.0
        %7435 = vmatpush1.xpose.msra.mxu0 0.0
        %7436 = vmatprep.subr.mxu0 0.0
        %7437 = vmatpush1.xpose.msra.mxu0 0.0
        %7438 = vmatprep.subr.mxu0 0.0
        %7439 = vmatpush1.xpose.msra.mxu0 0.0
        %7440 = vmatprep.subr.mxu0 0.0
        %7441 = vmatpush1.xpose.msra.mxu0 0.0
        %7442 = vmatprep.subr.mxu0 0.0
        %7443 = vmatpush1.xpose.msra.mxu0 0.0
        %7444 = vmatprep.subr.mxu0 0.0
        %7445 = vmatpush1.xpose.msra.mxu0 0.0
        %7446 = vmatprep.subr.mxu0 0.0
        %7447 = vmatpush1.xpose.msra.mxu0 0.0
        %7448 = vmatprep.subr.mxu0 0.0
        %7449 = vmatpush1.xpose.msra.mxu0 0.0
        %7450 = vmatprep.subr.mxu0 0.0
        %7451 = vmatpush1.xpose.msra.mxu0 0.0
        %7452 = vmatprep.subr.mxu0 0.0
        %7453 = vmatpush1.xpose.msra.mxu0 0.0
        %7454 = vmatprep.subr.mxu0 0.0
        %7455 = vmatpush1.xpose.msra.mxu0 0.0
        %7456 = vmatprep.subr.mxu0 0.0
        %7457 = vmatpush1.xpose.msra.mxu0 0.0
        %7458 = vmatprep.subr.mxu0 0.0
        %7459 = vmatpush1.xpose.msra.mxu0 0.0
        %7460 = vmatprep.mubr.f32.mxu0 0.0
        %7461 = vmatmul.mubr.f32.gmra.mrb[0].mxu0 %v2788
        %v7462 = vpop.f32.mrb[0].mxu0
        %v7463 = vadd.f32 0.0, %v7462
        %v7464 = vpop.f32.mrb[0].mxu0
        %7465 = vmatprep.mubr.f32.mxu0 0.0
        %7466 = vmatmul.mubr.f32.gmra.mrb[0].mxu0 %v2838
        %v7467 = vpop.f32.mrb[0].mxu0
        %v7468 = vadd.f32 0.0, %v7467
        %v7469 = vpop.f32.mrb[0].mxu0
        %7470 = vmatprep.mubr.f32.mxu0 0.0
        %7471 = vmatmul.mubr.f32.gmra.mrb[0].mxu0 %v2888
        %v7472 = vpop.f32.mrb[0].mxu0
        %v7473 = vadd.f32 0.0, %v7472
        %v7474 = vpop.f32.mrb[0].mxu0
        %7475 = vmatprep.mubr.f32.mxu0 0.0
        %7476 = vmatmul.mubr.f32.gmra.mrb[0].mxu0 %v2938
        %v7477 = vpop.f32.mrb[0].mxu0
        %v7478 = vadd.f32 0.0, %v7477
        %v7479 = vpop.f32.mrb[0].mxu0
        %7480 = vmatprep.mubr.f32.mxu0 0.0
        %7481 = vmatmul.mubr.f32.gmra.mrb[0].mxu0 %v2988
        %v7482 = vpop.f32.mrb[0].mxu0
        %v7483 = vadd.f32 0.0, %v7482
        %v7484 = vpop.f32.mrb[0].mxu0
        %7485 = vmatprep.mubr.f32.mxu0 0.0
        %7486 = vmatmul.mubr.f32.gmra.mrb[0].mxu0 %v3038
        %v7487 = vpop.f32.mrb[0].mxu0
        %v7488 = vadd.f32 0.0, %v7487
        %v7489 = vpop.f32.mrb[0].mxu0
        %7490 = vmatprep.mubr.f32.mxu0 0.0
        %7491 = vmatmul.mubr.f32.gmra.mrb[0].mxu0 %v3088
        %v7492 = vpop.f32.mrb[0].mxu0
        %v7493 = vadd.f32 0.0, %v7492
        %v7494 = vpop.f32.mrb[0].mxu0
        %7495 = vmatprep.mubr.f32.mxu0 0.0
        %7496 = vmatmul.mubr.f32.gmra.mrb[0].mxu0 %v3138
        %v7497 = vpop.f32.mrb[0].mxu0
        %v7498 = vadd.f32 0.0, %v7497
        %v7499 = vpop.f32.mrb[0].mxu0
        %7500 = vmatprep.mubr.f32.mxu0 0.0
        %7501 = vmatmul.mubr.f32.gmra.mrb[0].mxu0 %v3188
        %v7502 = vpop.f32.mrb[0].mxu0
        %v7503 = vadd.f32 0.0, %v7502
        %v7504 = vpop.f32.mrb[0].mxu0
        %7505 = vmatprep.mubr.f32.mxu0 0.0
        %7506 = vmatmul.mubr.f32.gmra.mrb[0].mxu0 %v3238
        %v7507 = vpop.f32.mrb[0].mxu0
        %v7508 = vadd.f32 0.0, %v7507
        %v7509 = vpop.f32.mrb[0].mxu0
        %7510 = vmatprep.mubr.f32.mxu0 0.0
        %7511 = vmatmul.mubr.f32.gmra.mrb[0].mxu0 %v3288
        %v7512 = vpop.f32.mrb[0].mxu0
        %v7513 = vadd.f32 0.0, %v7512
        %v7514 = vpop.f32.mrb[0].mxu0
        %7515 = vmatprep.mubr.f32.mxu0 0.0
        %7516 = vmatmul.mubr.f32.gmra.mrb[0].mxu0 %v3338
        %v7517 = vpop.f32.mrb[0].mxu0
        %v7518 = vadd.f32 0.0, %v7517
        %v7519 = vpop.f32.mrb[0].mxu0
        %7520 = vmatprep.mubr.f32.mxu0 0.0
        %7521 = vmatmul.mubr.f32.gmra.mrb[0].mxu0 %v3388
        %v7522 = vpop.f32.mrb[0].mxu0
        %v7523 = vadd.f32 0.0, %v7522
        %v7524 = vpop.f32.mrb[0].mxu0
        %7525 = vmatprep.mubr.f32.mxu0 0.0
        %7526 = vmatmul.mubr.f32.gmra.mrb[0].mxu0 %v3438
        %v7527 = vpop.f32.mrb[0].mxu0
        %v7528 = vadd.f32 0.0, %v7527
        %v7529 = vpop.f32.mrb[0].mxu0
        %7530 = vmatprep.mubr.f32.mxu0 0.0
        %7531 = vmatmul.mubr.f32.gmra.mrb[0].mxu0 %v3488
        %v7532 = vpop.f32.mrb[0].mxu0
        %v7533 = vadd.f32 0.0, %v7532
        %v7534 = vpop.f32.mrb[0].mxu0
        %7535 = vmatprep.mubr.f32.mxu0 0.0
        %7536 = vmatmul.mubr.f32.gmra.mrb[0].mxu0 %v3538
        %v7537 = vpop.f32.mrb[0].mxu0
        %v7538 = vadd.f32 0.0, %v7537
        %v7539 = vpop.f32.mrb[0].mxu0
        %7540 = vdwg.mxu0
        %v7541 = vmul.f32 %v7318, 0.088388346
        %v7542 = vmul.f32 %v7323, 0.088388346
        %v7543 = vmul.f32 %v7328, 0.088388346
        %v7544 = vmul.f32 %v7333, 0.088388346
        %v7545 = vmul.f32 %v7338, 0.088388346
        %v7546 = vmul.f32 %v7343, 0.088388346
        %v7547 = vmul.f32 %v7348, 0.088388346
        %v7548 = vmul.f32 %v7353, 0.088388346
        %v7549 = vmul.f32 %v7358, 0.088388346
        %v7550 = vmul.f32 %v7363, 0.088388346
        %v7551 = vmul.f32 %v7368, 0.088388346
        %v7552 = vmul.f32 %v7373, 0.088388346
        %v7553 = vmul.f32 %v7378, 0.088388346
        %v7554 = vmul.f32 %v7383, 0.088388346
        %v7555 = vmul.f32 %v7388, 0.088388346
        %v7556 = vmul.f32 %v7393, 0.088388346
        %v7557 = vmul.f32 %v7463, 0.088388346
        %v7558 = vmul.f32 %v7468, 0.088388346
        %v7559 = vmul.f32 %v7473, 0.088388346
        %v7560 = vmul.f32 %v7478, 0.088388346
        %v7561 = vmul.f32 %v7483, 0.088388346
        %v7562 = vmul.f32 %v7488, 0.088388346
        %v7563 = vmul.f32 %v7493, 0.088388346
        %v7564 = vmul.f32 %v7498, 0.088388346
        %v7565 = vmul.f32 %v7503, 0.088388346
        %v7566 = vmul.f32 %v7508, 0.088388346
        %v7567 = vmul.f32 %v7513, 0.088388346
        %v7568 = vmul.f32 %v7518, 0.088388346
        %v7569 = vmul.f32 %v7523, 0.088388346
        %v7570 = vmul.f32 %v7528, 0.088388346
        %v7571 = vmul.f32 %v7533, 0.088388346
        %v7572 = vmul.f32 %v7538, 0.088388346
        %v7574 = vlaneseq
        %v7575 = vshrl.u32 %v7574, 7
        %v7576 = vsub.s32 0, %v7575
        %v7577 = vrot.slane %v549, %v7576
        %v7579 = vadd.f32 %v7541, %v7577
        %v7580 = vadd.f32 %v7542, %v7577
        %v7581 = vadd.f32 %v7543, %v7577
        %v7582 = vadd.f32 %v7544, %v7577
        %v7583 = vadd.f32 %v7545, %v7577
        %v7584 = vadd.f32 %v7546, %v7577
        %v7585 = vadd.f32 %v7547, %v7577
        %v7586 = vadd.f32 %v7548, %v7577
        %v7587 = vadd.f32 %v7549, %v7577
        %v7588 = vadd.f32 %v7550, %v7577
        %v7589 = vadd.f32 %v7551, %v7577
        %v7590 = vadd.f32 %v7552, %v7577
        %v7591 = vadd.f32 %v7553, %v7577
        %v7592 = vadd.f32 %v7554, %v7577
        %v7593 = vadd.f32 %v7555, %v7577
        %v7594 = vadd.f32 %v7556, %v7577
        %v7595 = vadd.f32 %v7557, %v7577
        %v7596 = vadd.f32 %v7558, %v7577
        %v7597 = vadd.f32 %v7559, %v7577
        %v7598 = vadd.f32 %v7560, %v7577
        %v7599 = vadd.f32 %v7561, %v7577
        %v7600 = vadd.f32 %v7562, %v7577
        %v7601 = vadd.f32 %v7563, %v7577
        %v7602 = vadd.f32 %v7564, %v7577
        %v7603 = vadd.f32 %v7565, %v7577
        %v7604 = vadd.f32 %v7566, %v7577
        %v7605 = vadd.f32 %v7567, %v7577
        %v7606 = vadd.f32 %v7568, %v7577
        %v7607 = vadd.f32 %v7569, %v7577
        %v7608 = vadd.f32 %v7570, %v7577
        %v7609 = vadd.f32 %v7571, %v7577
        %v7610 = vadd.f32 %v7572, %v7577
        %7611 = vmax.xlane.f32.xlu0 %v7579
        %v7612 = vpop.xlane.xlu0 %7611
        %7613 = vmax.xlane.f32.xlu0 %v7580
        %v7614 = vpop.xlane.xlu0 %7613
        %7615 = vmax.xlane.f32.xlu0 %v7581
        %v7616 = vpop.xlane.xlu0 %7615
        %7617 = vmax.xlane.f32.xlu0 %v7582
        %v7618 = vpop.xlane.xlu0 %7617
        %7619 = vmax.xlane.f32.xlu0 %v7583
        %v7620 = vpop.xlane.xlu0 %7619
        %7621 = vmax.xlane.f32.xlu0 %v7584
        %v7622 = vpop.xlane.xlu0 %7621
        %7623 = vmax.xlane.f32.xlu0 %v7585
        %v7624 = vpop.xlane.xlu0 %7623
        %7625 = vmax.xlane.f32.xlu0 %v7586
        %v7626 = vpop.xlane.xlu0 %7625
        %7627 = vmax.xlane.f32.xlu0 %v7587
        %v7628 = vpop.xlane.xlu0 %7627
        %7629 = vmax.xlane.f32.xlu0 %v7588
        %v7630 = vpop.xlane.xlu0 %7629
        %7631 = vmax.xlane.f32.xlu0 %v7589
        %v7632 = vpop.xlane.xlu0 %7631
        %7633 = vmax.xlane.f32.xlu0 %v7590
        %v7634 = vpop.xlane.xlu0 %7633
        %7635 = vmax.xlane.f32.xlu0 %v7591
        %v7636 = vpop.xlane.xlu0 %7635
        %7637 = vmax.xlane.f32.xlu0 %v7592
        %v7638 = vpop.xlane.xlu0 %7637
        %7639 = vmax.xlane.f32.xlu0 %v7593
        %v7640 = vpop.xlane.xlu0 %7639
        %7641 = vmax.xlane.f32.xlu0 %v7594
        %v7642 = vpop.xlane.xlu0 %7641
        %7643 = vmax.xlane.f32.xlu0 %v7595
        %v7644 = vpop.xlane.xlu0 %7643
        %7645 = vmax.xlane.f32.xlu0 %v7596
        %v7646 = vpop.xlane.xlu0 %7645
        %7647 = vmax.xlane.f32.xlu0 %v7597
        %v7648 = vpop.xlane.xlu0 %7647
        %7649 = vmax.xlane.f32.xlu0 %v7598
        %v7650 = vpop.xlane.xlu0 %7649
        %7651 = vmax.xlane.f32.xlu0 %v7599
        %v7652 = vpop.xlane.xlu0 %7651
        %7653 = vmax.xlane.f32.xlu0 %v7600
        %v7654 = vpop.xlane.xlu0 %7653
        %7655 = vmax.xlane.f32.xlu0 %v7601
        %v7656 = vpop.xlane.xlu0 %7655
        %7657 = vmax.xlane.f32.xlu0 %v7602
        %v7658 = vpop.xlane.xlu0 %7657
        %7659 = vmax.xlane.f32.xlu0 %v7603
        %v7660 = vpop.xlane.xlu0 %7659
        %7661 = vmax.xlane.f32.xlu0 %v7604
        %v7662 = vpop.xlane.xlu0 %7661
        %7663 = vmax.xlane.f32.xlu0 %v7605
        %v7664 = vpop.xlane.xlu0 %7663
        %7665 = vmax.xlane.f32.xlu0 %v7606
        %v7666 = vpop.xlane.xlu0 %7665
        %7667 = vmax.xlane.f32.xlu0 %v7607
        %v7668 = vpop.xlane.xlu0 %7667
        %7669 = vmax.xlane.f32.xlu0 %v7608
        %v7670 = vpop.xlane.xlu0 %7669
        %7671 = vmax.xlane.f32.xlu0 %v7609
        %v7672 = vpop.xlane.xlu0 %7671
        %7673 = vmax.xlane.f32.xlu0 %v7610
        %v7674 = vpop.xlane.xlu0 %7673
        %v7675 = vsub.f32 %v7579, %v7612
        %v7676 = vsub.f32 %v7580, %v7614
        %v7677 = vsub.f32 %v7581, %v7616
        %v7678 = vsub.f32 %v7582, %v7618
        %v7679 = vsub.f32 %v7583, %v7620
        %v7680 = vsub.f32 %v7584, %v7622
        %v7681 = vsub.f32 %v7585, %v7624
        %v7682 = vsub.f32 %v7586, %v7626
        %v7683 = vsub.f32 %v7587, %v7628
        %v7684 = vsub.f32 %v7588, %v7630
        %v7685 = vsub.f32 %v7589, %v7632
        %v7686 = vsub.f32 %v7590, %v7634
        %v7687 = vsub.f32 %v7591, %v7636
        %v7688 = vsub.f32 %v7592, %v7638
        %v7689 = vsub.f32 %v7593, %v7640
        %v7690 = vsub.f32 %v7594, %v7642
        %v7691 = vsub.f32 %v7595, %v7644
        %v7692 = vsub.f32 %v7596, %v7646
        %v7693 = vsub.f32 %v7597, %v7648
        %v7694 = vsub.f32 %v7598, %v7650
        %v7695 = vsub.f32 %v7599, %v7652
        %v7696 = vsub.f32 %v7600, %v7654
        %v7697 = vsub.f32 %v7601, %v7656
        %v7698 = vsub.f32 %v7602, %v7658
        %v7699 = vsub.f32 %v7603, %v7660
        %v7700 = vsub.f32 %v7604, %v7662
        %v7701 = vsub.f32 %v7605, %v7664
        %v7702 = vsub.f32 %v7606, %v7666
        %v7703 = vsub.f32 %v7607, %v7668
        %v7704 = vsub.f32 %v7608, %v7670
        %v7705 = vsub.f32 %v7609, %v7672
        %v7706 = vsub.f32 %v7610, %v7674
        %v7707 = vmul.f32 %v7675, 1.442695
        %v7708 = vpow.pop %v7707
        %v7709 = vmul.f32 %v7676, 1.442695
        %v7710 = vpow.pop %v7709
        %v7711 = vmul.f32 %v7677, 1.442695
        %v7712 = vpow.pop %v7711
        %v7713 = vmul.f32 %v7678, 1.442695
        %v7714 = vpow.pop %v7713
        %v7715 = vmul.f32 %v7679, 1.442695
        %v7716 = vpow.pop %v7715
        %v7717 = vmul.f32 %v7680, 1.442695
        %v7718 = vpow.pop %v7717
        %v7719 = vmul.f32 %v7681, 1.442695
        %v7720 = vpow.pop %v7719
        %v7721 = vmul.f32 %v7682, 1.442695
        %v7722 = vpow.pop %v7721
        %v7723 = vmul.f32 %v7683, 1.442695
        %v7724 = vpow.pop %v7723
        %v7725 = vmul.f32 %v7684, 1.442695
        %v7726 = vpow.pop %v7725
        %v7727 = vmul.f32 %v7685, 1.442695
        %v7728 = vpow.pop %v7727
        %v7729 = vmul.f32 %v7686, 1.442695
        %v7730 = vpow.pop %v7729
        %v7731 = vmul.f32 %v7687, 1.442695
        %v7732 = vpow.pop %v7731
        %v7733 = vmul.f32 %v7688, 1.442695
        %v7734 = vpow.pop %v7733
        %v7735 = vmul.f32 %v7689, 1.442695
        %v7736 = vpow.pop %v7735
        %v7737 = vmul.f32 %v7690, 1.442695
        %v7738 = vpow.pop %v7737
        %v7739 = vmul.f32 %v7691, 1.442695
        %v7740 = vpow.pop %v7739
        %v7741 = vmul.f32 %v7692, 1.442695
        %v7742 = vpow.pop %v7741
        %v7743 = vmul.f32 %v7693, 1.442695
        %v7744 = vpow.pop %v7743
        %v7745 = vmul.f32 %v7694, 1.442695
        %v7746 = vpow.pop %v7745
        %v7747 = vmul.f32 %v7695, 1.442695
        %v7748 = vpow.pop %v7747
        %v7749 = vmul.f32 %v7696, 1.442695
        %v7750 = vpow.pop %v7749
        %v7751 = vmul.f32 %v7697, 1.442695
        %v7752 = vpow.pop %v7751
        %v7753 = vmul.f32 %v7698, 1.442695
        %v7754 = vpow.pop %v7753
        %v7755 = vmul.f32 %v7699, 1.442695
        %v7756 = vpow.pop %v7755
        %v7757 = vmul.f32 %v7700, 1.442695
        %v7758 = vpow.pop %v7757
        %v7759 = vmul.f32 %v7701, 1.442695
        %v7760 = vpow.pop %v7759
        %v7761 = vmul.f32 %v7702, 1.442695
        %v7762 = vpow.pop %v7761
        %v7763 = vmul.f32 %v7703, 1.442695
        %v7764 = vpow.pop %v7763
        %v7765 = vmul.f32 %v7704, 1.442695
        %v7766 = vpow.pop %v7765
        %v7767 = vmul.f32 %v7705, 1.442695
        %v7768 = vpow.pop %v7767
        %v7769 = vmul.f32 %v7706, 1.442695
        %v7770 = vpow.pop %v7769
        %7771 = vadd.xlane.f32.xlu0 %v7708
        %v7772 = vpop.xlane.xlu0 %7771
        %7773 = vadd.xlane.f32.xlu0 %v7710
        %v7774 = vpop.xlane.xlu0 %7773
        %7775 = vadd.xlane.f32.xlu0 %v7712
        %v7776 = vpop.xlane.xlu0 %7775
        %7777 = vadd.xlane.f32.xlu0 %v7714
        %v7778 = vpop.xlane.xlu0 %7777
        %7779 = vadd.xlane.f32.xlu0 %v7716
        %v7780 = vpop.xlane.xlu0 %7779
        %7781 = vadd.xlane.f32.xlu0 %v7718
        %v7782 = vpop.xlane.xlu0 %7781
        %7783 = vadd.xlane.f32.xlu0 %v7720
        %v7784 = vpop.xlane.xlu0 %7783
        %7785 = vadd.xlane.f32.xlu0 %v7722
        %v7786 = vpop.xlane.xlu0 %7785
        %7787 = vadd.xlane.f32.xlu0 %v7724
        %v7788 = vpop.xlane.xlu0 %7787
        %7789 = vadd.xlane.f32.xlu0 %v7726
        %v7790 = vpop.xlane.xlu0 %7789
        %7791 = vadd.xlane.f32.xlu0 %v7728
        %v7792 = vpop.xlane.xlu0 %7791
        %7793 = vadd.xlane.f32.xlu0 %v7730
        %v7794 = vpop.xlane.xlu0 %7793
        %7795 = vadd.xlane.f32.xlu0 %v7732
        %v7796 = vpop.xlane.xlu0 %7795
        %7797 = vadd.xlane.f32.xlu0 %v7734
        %v7798 = vpop.xlane.xlu0 %7797
        %7799 = vadd.xlane.f32.xlu0 %v7736
        %v7800 = vpop.xlane.xlu0 %7799
        %7801 = vadd.xlane.f32.xlu0 %v7738
        %v7802 = vpop.xlane.xlu0 %7801
        %7803 = vadd.xlane.f32.xlu0 %v7740
        %v7804 = vpop.xlane.xlu0 %7803
        %7805 = vadd.xlane.f32.xlu0 %v7742
        %v7806 = vpop.xlane.xlu0 %7805
        %7807 = vadd.xlane.f32.xlu0 %v7744
        %v7808 = vpop.xlane.xlu0 %7807
        %7809 = vadd.xlane.f32.xlu0 %v7746
        %v7810 = vpop.xlane.xlu0 %7809
        %7811 = vadd.xlane.f32.xlu0 %v7748
        %v7812 = vpop.xlane.xlu0 %7811
        %7813 = vadd.xlane.f32.xlu0 %v7750
        %v7814 = vpop.xlane.xlu0 %7813
        %7815 = vadd.xlane.f32.xlu0 %v7752
        %v7816 = vpop.xlane.xlu0 %7815
        %7817 = vadd.xlane.f32.xlu0 %v7754
        %v7818 = vpop.xlane.xlu0 %7817
        %7819 = vadd.xlane.f32.xlu0 %v7756
        %v7820 = vpop.xlane.xlu0 %7819
        %7821 = vadd.xlane.f32.xlu0 %v7758
        %v7822 = vpop.xlane.xlu0 %7821
        %7823 = vadd.xlane.f32.xlu0 %v7760
        %v7824 = vpop.xlane.xlu0 %7823
        %7825 = vadd.xlane.f32.xlu0 %v7762
        %v7826 = vpop.xlane.xlu0 %7825
        %7827 = vadd.xlane.f32.xlu0 %v7764
        %v7828 = vpop.xlane.xlu0 %7827
        %7829 = vadd.xlane.f32.xlu0 %v7766
        %v7830 = vpop.xlane.xlu0 %7829
        %7831 = vadd.xlane.f32.xlu0 %v7768
        %v7832 = vpop.xlane.xlu0 %7831
        %7833 = vadd.xlane.f32.xlu0 %v7770
        %v7834 = vpop.xlane.xlu0 %7833
        %v7835 = vrcp.pop %v7772
        %v7836 = vrcp.pop %v7774
        %v7837 = vrcp.pop %v7776
        %v7838 = vrcp.pop %v7778
        %v7839 = vrcp.pop %v7780
        %v7840 = vrcp.pop %v7782
        %v7841 = vrcp.pop %v7784
        %v7842 = vrcp.pop %v7786
        %v7843 = vrcp.pop %v7788
        %v7844 = vrcp.pop %v7790
        %v7845 = vrcp.pop %v7792
        %v7846 = vrcp.pop %v7794
        %v7847 = vrcp.pop %v7796
        %v7848 = vrcp.pop %v7798
        %v7849 = vrcp.pop %v7800
        %v7850 = vrcp.pop %v7802
        %v7851 = vrcp.pop %v7804
        %v7852 = vrcp.pop %v7806
        %v7853 = vrcp.pop %v7808
        %v7854 = vrcp.pop %v7810
        %v7855 = vrcp.pop %v7812
        %v7856 = vrcp.pop %v7814
        %v7857 = vrcp.pop %v7816
        %v7858 = vrcp.pop %v7818
        %v7859 = vrcp.pop %v7820
        %v7860 = vrcp.pop %v7822
        %v7861 = vrcp.pop %v7824
        %v7862 = vrcp.pop %v7826
        %v7863 = vrcp.pop %v7828
        %v7864 = vrcp.pop %v7830
        %v7865 = vrcp.pop %v7832
        %v7866 = vrcp.pop %v7834
        %v7867 = vmul.f32 %v7708, %v7835
        %v7868 = vmul.f32 %v7710, %v7836
        %v7869 = vmul.f32 %v7712, %v7837
        %v7870 = vmul.f32 %v7714, %v7838
        %v7871 = vmul.f32 %v7716, %v7839
        %v7872 = vmul.f32 %v7718, %v7840
        %v7873 = vmul.f32 %v7720, %v7841
        %v7874 = vmul.f32 %v7722, %v7842
        %v7875 = vmul.f32 %v7724, %v7843
        %v7876 = vmul.f32 %v7726, %v7844
        %v7877 = vmul.f32 %v7728, %v7845
        %v7878 = vmul.f32 %v7730, %v7846
        %v7879 = vmul.f32 %v7732, %v7847
        %v7880 = vmul.f32 %v7734, %v7848
        %v7881 = vmul.f32 %v7736, %v7849
        %v7882 = vmul.f32 %v7738, %v7850
        %v7883 = vmul.f32 %v7740, %v7851
        %v7884 = vmul.f32 %v7742, %v7852
        %v7885 = vmul.f32 %v7744, %v7853
        %v7886 = vmul.f32 %v7746, %v7854
        %v7887 = vmul.f32 %v7748, %v7855
        %v7888 = vmul.f32 %v7750, %v7856
        %v7889 = vmul.f32 %v7752, %v7857
        %v7890 = vmul.f32 %v7754, %v7858
        %v7891 = vmul.f32 %v7756, %v7859
        %v7892 = vmul.f32 %v7758, %v7860
        %v7893 = vmul.f32 %v7760, %v7861
        %v7894 = vmul.f32 %v7762, %v7862
        %v7895 = vmul.f32 %v7764, %v7863
        %v7896 = vmul.f32 %v7766, %v7864
        %v7897 = vmul.f32 %v7768, %v7865
        %v7898 = vmul.f32 %v7770, %v7866
        %7899 = vmatprep.subr.mxu0 0.0
        %7900 = vmatpush1.msra.mxu0 %v6499
        %7901 = vmatprep.subr.mxu0 0.0
        %7902 = vmatpush1.msra.mxu0 %v6549
        %7903 = vmatprep.subr.mxu0 0.0
        %7904 = vmatpush1.msra.mxu0 %v6599
        %7905 = vmatprep.subr.mxu0 0.0
        %7906 = vmatpush1.msra.mxu0 %v6649
        %7907 = vmatprep.subr.mxu0 0.0
        %7908 = vmatpush1.msra.mxu0 %v6699
        %7909 = vmatprep.subr.mxu0 0.0
        %7910 = vmatpush1.msra.mxu0 %v6749
        %7911 = vmatprep.subr.mxu0 0.0
        %7912 = vmatpush1.msra.mxu0 %v6799
        %7913 = vmatprep.subr.mxu0 0.0
        %7914 = vmatpush1.msra.mxu0 %v6849
        %7915 = vmatprep.subr.mxu0 0.0
        %7916 = vmatpush1.msra.mxu0 %v6899
        %7917 = vmatprep.subr.mxu0 0.0
        %7918 = vmatpush1.msra.mxu0 %v6949
        %7919 = vmatprep.subr.mxu0 0.0
        %7920 = vmatpush1.msra.mxu0 %v6999
        %7921 = vmatprep.subr.mxu0 0.0
        %7922 = vmatpush1.msra.mxu0 %v7049
        %7923 = vmatprep.subr.mxu0 0.0
        %7924 = vmatpush1.msra.mxu0 %v7099
        %7925 = vmatprep.subr.mxu0 0.0
        %7926 = vmatpush1.msra.mxu0 %v7149
        %7927 = vmatprep.subr.mxu0 0.0
        %7928 = vmatpush1.msra.mxu0 %v7199
        %7929 = vmatprep.subr.mxu0 0.0
        %7930 = vmatpush1.msra.mxu0 %v7249
        %7931 = vmatprep.subr.mxu0 0.0
        %7932 = vmatpush1.msra.mxu0 0.0
        %7933 = vmatprep.subr.mxu0 0.0
        %7934 = vmatpush1.msra.mxu0 0.0
        %7935 = vmatprep.subr.mxu0 0.0
        %7936 = vmatpush1.msra.mxu0 0.0
        %7937 = vmatprep.subr.mxu0 0.0
        %7938 = vmatpush1.msra.mxu0 0.0
        %7939 = vmatprep.subr.mxu0 0.0
        %7940 = vmatpush1.msra.mxu0 0.0
        %7941 = vmatprep.subr.mxu0 0.0
        %7942 = vmatpush1.msra.mxu0 0.0
        %7943 = vmatprep.subr.mxu0 0.0
        %7944 = vmatpush1.msra.mxu0 0.0
        %7945 = vmatprep.subr.mxu0 0.0
        %7946 = vmatpush1.msra.mxu0 0.0
        %7947 = vmatprep.subr.mxu0 0.0
        %7948 = vmatpush1.msra.mxu0 0.0
        %7949 = vmatprep.subr.mxu0 0.0
        %7950 = vmatpush1.msra.mxu0 0.0
        %7951 = vmatprep.subr.mxu0 0.0
        %7952 = vmatpush1.msra.mxu0 0.0
        %7953 = vmatprep.subr.mxu0 0.0
        %7954 = vmatpush1.msra.mxu0 0.0
        %7955 = vmatprep.subr.mxu0 0.0
        %7956 = vmatpush1.msra.mxu0 0.0
        %7957 = vmatprep.subr.mxu0 0.0
        %7958 = vmatpush1.msra.mxu0 0.0
        %7959 = vmatprep.subr.mxu0 0.0
        %7960 = vmatpush1.msra.mxu0 0.0
        %7961 = vmatprep.subr.mxu0 0.0
        %7962 = vmatpush1.msra.mxu0 0.0
        %7963 = vmatprep.mubr.f32.mxu0 0.0
        %7964 = vmatmul.mubr.f32.gmra.mrb[0].mxu0 %v7867
        %v7965 = vpop.f32.mrb[0].mxu0
        %v7966 = vadd.f32 0.0, %v7965
        %v7967 = vpop.f32.mrb[0].mxu0
        %7968 = vmatprep.mubr.f32.mxu0 0.0
        %7969 = vmatmul.mubr.f32.gmra.mrb[0].mxu0 %v7868
        %v7970 = vpop.f32.mrb[0].mxu0
        %v7971 = vadd.f32 0.0, %v7970
        %v7972 = vpop.f32.mrb[0].mxu0
        %7973 = vmatprep.mubr.f32.mxu0 0.0
        %7974 = vmatmul.mubr.f32.gmra.mrb[0].mxu0 %v7869
        %v7975 = vpop.f32.mrb[0].mxu0
        %v7976 = vadd.f32 0.0, %v7975
        %v7977 = vpop.f32.mrb[0].mxu0
        %7978 = vmatprep.mubr.f32.mxu0 0.0
        %7979 = vmatmul.mubr.f32.gmra.mrb[0].mxu0 %v7870
        %v7980 = vpop.f32.mrb[0].mxu0
        %v7981 = vadd.f32 0.0, %v7980
        %v7982 = vpop.f32.mrb[0].mxu0
        %7983 = vmatprep.mubr.f32.mxu0 0.0
        %7984 = vmatmul.mubr.f32.gmra.mrb[0].mxu0 %v7871
        %v7985 = vpop.f32.mrb[0].mxu0
        %v7986 = vadd.f32 0.0, %v7985
        %v7987 = vpop.f32.mrb[0].mxu0
        %7988 = vmatprep.mubr.f32.mxu0 0.0
        %7989 = vmatmul.mubr.f32.gmra.mrb[0].mxu0 %v7872
        %v7990 = vpop.f32.mrb[0].mxu0
        %v7991 = vadd.f32 0.0, %v7990
        %v7992 = vpop.f32.mrb[0].mxu0
        %7993 = vmatprep.mubr.f32.mxu0 0.0
        %7994 = vmatmul.mubr.f32.gmra.mrb[0].mxu0 %v7873
        %v7995 = vpop.f32.mrb[0].mxu0
        %v7996 = vadd.f32 0.0, %v7995
        %v7997 = vpop.f32.mrb[0].mxu0
        %7998 = vmatprep.mubr.f32.mxu0 0.0
        %7999 = vmatmul.mubr.f32.gmra.mrb[0].mxu0 %v7874
        %v8000 = vpop.f32.mrb[0].mxu0
        %v8001 = vadd.f32 0.0, %v8000
        %v8002 = vpop.f32.mrb[0].mxu0
        %8003 = vmatprep.mubr.f32.mxu0 0.0
        %8004 = vmatmul.mubr.f32.gmra.mrb[0].mxu0 %v7875
        %v8005 = vpop.f32.mrb[0].mxu0
        %v8006 = vadd.f32 0.0, %v8005
        %v8007 = vpop.f32.mrb[0].mxu0
        %8008 = vmatprep.mubr.f32.mxu0 0.0
        %8009 = vmatmul.mubr.f32.gmra.mrb[0].mxu0 %v7876
        %v8010 = vpop.f32.mrb[0].mxu0
        %v8011 = vadd.f32 0.0, %v8010
        %v8012 = vpop.f32.mrb[0].mxu0
        %8013 = vmatprep.mubr.f32.mxu0 0.0
        %8014 = vmatmul.mubr.f32.gmra.mrb[0].mxu0 %v7877
        %v8015 = vpop.f32.mrb[0].mxu0
        %v8016 = vadd.f32 0.0, %v8015
        %v8017 = vpop.f32.mrb[0].mxu0
        %8018 = vmatprep.mubr.f32.mxu0 0.0
        %8019 = vmatmul.mubr.f32.gmra.mrb[0].mxu0 %v7878
        %v8020 = vpop.f32.mrb[0].mxu0
        %v8021 = vadd.f32 0.0, %v8020
        %v8022 = vpop.f32.mrb[0].mxu0
        %8023 = vmatprep.mubr.f32.mxu0 0.0
        %8024 = vmatmul.mubr.f32.gmra.mrb[0].mxu0 %v7879
        %v8025 = vpop.f32.mrb[0].mxu0
        %v8026 = vadd.f32 0.0, %v8025
        %v8027 = vpop.f32.mrb[0].mxu0
        %8028 = vmatprep.mubr.f32.mxu0 0.0
        %8029 = vmatmul.mubr.f32.gmra.mrb[0].mxu0 %v7880
        %v8030 = vpop.f32.mrb[0].mxu0
        %v8031 = vadd.f32 0.0, %v8030
        %v8032 = vpop.f32.mrb[0].mxu0
        %8033 = vmatprep.mubr.f32.mxu0 0.0
        %8034 = vmatmul.mubr.f32.gmra.mrb[0].mxu0 %v7881
        %v8035 = vpop.f32.mrb[0].mxu0
        %v8036 = vadd.f32 0.0, %v8035
        %v8037 = vpop.f32.mrb[0].mxu0
        %8038 = vmatprep.mubr.f32.mxu0 0.0
        %8039 = vmatmul.mubr.f32.gmra.mrb[0].mxu0 %v7882
        %v8040 = vpop.f32.mrb[0].mxu0
        %v8041 = vadd.f32 0.0, %v8040
        %v8042 = vpop.f32.mrb[0].mxu0
        %8043 = vdwg.mxu0
        %8044 = vmatprep.subr.mxu0 0.0
        %8045 = vmatpush1.msra.mxu0 %v6500
        %8046 = vmatprep.subr.mxu0 0.0
        %8047 = vmatpush1.msra.mxu0 %v6550
        %8048 = vmatprep.subr.mxu0 0.0
        %8049 = vmatpush1.msra.mxu0 %v6600
        %8050 = vmatprep.subr.mxu0 0.0
        %8051 = vmatpush1.msra.mxu0 %v6650
        %8052 = vmatprep.subr.mxu0 0.0
        %8053 = vmatpush1.msra.mxu0 %v6700
        %8054 = vmatprep.subr.mxu0 0.0
        %8055 = vmatpush1.msra.mxu0 %v6750
        %8056 = vmatprep.subr.mxu0 0.0
        %8057 = vmatpush1.msra.mxu0 %v6800
        %8058 = vmatprep.subr.mxu0 0.0
        %8059 = vmatpush1.msra.mxu0 %v6850
        %8060 = vmatprep.subr.mxu0 0.0
        %8061 = vmatpush1.msra.mxu0 %v6900
        %8062 = vmatprep.subr.mxu0 0.0
        %8063 = vmatpush1.msra.mxu0 %v6950
        %8064 = vmatprep.subr.mxu0 0.0
        %8065 = vmatpush1.msra.mxu0 %v7000
        %8066 = vmatprep.subr.mxu0 0.0
        %8067 = vmatpush1.msra.mxu0 %v7050
        %8068 = vmatprep.subr.mxu0 0.0
        %8069 = vmatpush1.msra.mxu0 %v7100
        %8070 = vmatprep.subr.mxu0 0.0
        %8071 = vmatpush1.msra.mxu0 %v7150
        %8072 = vmatprep.subr.mxu0 0.0
        %8073 = vmatpush1.msra.mxu0 %v7200
        %8074 = vmatprep.subr.mxu0 0.0
        %8075 = vmatpush1.msra.mxu0 %v7250
        %8076 = vmatprep.subr.mxu0 0.0
        %8077 = vmatpush1.msra.mxu0 0.0
        %8078 = vmatprep.subr.mxu0 0.0
        %8079 = vmatpush1.msra.mxu0 0.0
        %8080 = vmatprep.subr.mxu0 0.0
        %8081 = vmatpush1.msra.mxu0 0.0
        %8082 = vmatprep.subr.mxu0 0.0
        %8083 = vmatpush1.msra.mxu0 0.0
        %8084 = vmatprep.subr.mxu0 0.0
        %8085 = vmatpush1.msra.mxu0 0.0
        %8086 = vmatprep.subr.mxu0 0.0
        %8087 = vmatpush1.msra.mxu0 0.0
        %8088 = vmatprep.subr.mxu0 0.0
        %8089 = vmatpush1.msra.mxu0 0.0
        %8090 = vmatprep.subr.mxu0 0.0
        %8091 = vmatpush1.msra.mxu0 0.0
        %8092 = vmatprep.subr.mxu0 0.0
        %8093 = vmatpush1.msra.mxu0 0.0
        %8094 = vmatprep.subr.mxu0 0.0
        %8095 = vmatpush1.msra.mxu0 0.0
        %8096 = vmatprep.subr.mxu0 0.0
        %8097 = vmatpush1.msra.mxu0 0.0
        %8098 = vmatprep.subr.mxu0 0.0
        %8099 = vmatpush1.msra.mxu0 0.0
        %8100 = vmatprep.subr.mxu0 0.0
        %8101 = vmatpush1.msra.mxu0 0.0
        %8102 = vmatprep.subr.mxu0 0.0
        %8103 = vmatpush1.msra.mxu0 0.0
        %8104 = vmatprep.subr.mxu0 0.0
        %8105 = vmatpush1.msra.mxu0 0.0
        %8106 = vmatprep.subr.mxu0 0.0
        %8107 = vmatpush1.msra.mxu0 0.0
        %8108 = vmatprep.mubr.f32.mxu0 0.0
        %8109 = vmatmul.mubr.f32.gmra.mrb[0].mxu0 %v7883
        %v8110 = vpop.f32.mrb[0].mxu0
        %v8111 = vadd.f32 0.0, %v8110
        %v8112 = vpop.f32.mrb[0].mxu0
        %8113 = vmatprep.mubr.f32.mxu0 0.0
        %8114 = vmatmul.mubr.f32.gmra.mrb[0].mxu0 %v7884
        %v8115 = vpop.f32.mrb[0].mxu0
        %v8116 = vadd.f32 0.0, %v8115
        %v8117 = vpop.f32.mrb[0].mxu0
        %8118 = vmatprep.mubr.f32.mxu0 0.0
        %8119 = vmatmul.mubr.f32.gmra.mrb[0].mxu0 %v7885
        %v8120 = vpop.f32.mrb[0].mxu0
        %v8121 = vadd.f32 0.0, %v8120
        %v8122 = vpop.f32.mrb[0].mxu0
        %8123 = vmatprep.mubr.f32.mxu0 0.0
        %8124 = vmatmul.mubr.f32.gmra.mrb[0].mxu0 %v7886
        %v8125 = vpop.f32.mrb[0].mxu0
        %v8126 = vadd.f32 0.0, %v8125
        %v8127 = vpop.f32.mrb[0].mxu0
        %8128 = vmatprep.mubr.f32.mxu0 0.0
        %8129 = vmatmul.mubr.f32.gmra.mrb[0].mxu0 %v7887
        %v8130 = vpop.f32.mrb[0].mxu0
        %v8131 = vadd.f32 0.0, %v8130
        %v8132 = vpop.f32.mrb[0].mxu0
        %8133 = vmatprep.mubr.f32.mxu0 0.0
        %8134 = vmatmul.mubr.f32.gmra.mrb[0].mxu0 %v7888
        %v8135 = vpop.f32.mrb[0].mxu0
        %v8136 = vadd.f32 0.0, %v8135
        %v8137 = vpop.f32.mrb[0].mxu0
        %8138 = vmatprep.mubr.f32.mxu0 0.0
        %8139 = vmatmul.mubr.f32.gmra.mrb[0].mxu0 %v7889
        %v8140 = vpop.f32.mrb[0].mxu0
        %v8141 = vadd.f32 0.0, %v8140
        %v8142 = vpop.f32.mrb[0].mxu0
        %8143 = vmatprep.mubr.f32.mxu0 0.0
        %8144 = vmatmul.mubr.f32.gmra.mrb[0].mxu0 %v7890
        %v8145 = vpop.f32.mrb[0].mxu0
        %v8146 = vadd.f32 0.0, %v8145
        %v8147 = vpop.f32.mrb[0].mxu0
        %8148 = vmatprep.mubr.f32.mxu0 0.0
        %8149 = vmatmul.mubr.f32.gmra.mrb[0].mxu0 %v7891
        %v8150 = vpop.f32.mrb[0].mxu0
        %v8151 = vadd.f32 0.0, %v8150
        %v8152 = vpop.f32.mrb[0].mxu0
        %8153 = vmatprep.mubr.f32.mxu0 0.0
        %8154 = vmatmul.mubr.f32.gmra.mrb[0].mxu0 %v7892
        %v8155 = vpop.f32.mrb[0].mxu0
        %v8156 = vadd.f32 0.0, %v8155
        %v8157 = vpop.f32.mrb[0].mxu0
        %8158 = vmatprep.mubr.f32.mxu0 0.0
        %8159 = vmatmul.mubr.f32.gmra.mrb[0].mxu0 %v7893
        %v8160 = vpop.f32.mrb[0].mxu0
        %v8161 = vadd.f32 0.0, %v8160
        %v8162 = vpop.f32.mrb[0].mxu0
        %8163 = vmatprep.mubr.f32.mxu0 0.0
        %8164 = vmatmul.mubr.f32.gmra.mrb[0].mxu0 %v7894
        %v8165 = vpop.f32.mrb[0].mxu0
        %v8166 = vadd.f32 0.0, %v8165
        %v8167 = vpop.f32.mrb[0].mxu0
        %8168 = vmatprep.mubr.f32.mxu0 0.0
        %8169 = vmatmul.mubr.f32.gmra.mrb[0].mxu0 %v7895
        %v8170 = vpop.f32.mrb[0].mxu0
        %v8171 = vadd.f32 0.0, %v8170
        %v8172 = vpop.f32.mrb[0].mxu0
        %8173 = vmatprep.mubr.f32.mxu0 0.0
        %8174 = vmatmul.mubr.f32.gmra.mrb[0].mxu0 %v7896
        %v8175 = vpop.f32.mrb[0].mxu0
        %v8176 = vadd.f32 0.0, %v8175
        %v8177 = vpop.f32.mrb[0].mxu0
        %8178 = vmatprep.mubr.f32.mxu0 0.0
        %8179 = vmatmul.mubr.f32.gmra.mrb[0].mxu0 %v7897
        %v8180 = vpop.f32.mrb[0].mxu0
        %v8181 = vadd.f32 0.0, %v8180
        %v8182 = vpop.f32.mrb[0].mxu0
        %8183 = vmatprep.mubr.f32.mxu0 0.0
        %8184 = vmatmul.mubr.f32.gmra.mrb[0].mxu0 %v7898
        %v8185 = vpop.f32.mrb[0].mxu0
        %v8186 = vadd.f32 0.0, %v8185
        %v8187 = vpop.f32.mrb[0].mxu0
        %8188 = vdwg.mxu0
        %v8189 = vcombine.high %v7966, 0.0
        %v8191 = vunpack.c.l.s4 1983009808
        %v8192 = vunpack.c.0.s8 %v8191
        %v8193 = vlaneseq
        %v8194 = vshrl.u32 %v8193, 7
        %v8195 = vsub.s32 %v8192, %v8194
        %v8196 = vrot.slane %v7966, %v8195
        %v8198 = vunpack.c.l.s4 1983009808
        %v8199 = vunpack.c.0.s8 %v8198
        %v8200 = vlaneseq
        %v8201 = vshrl.u32 %v8200, 7
        %v8202 = vsub.s32 %v8199, %v8201
        %v8203 = vrot.slane %v8189, %v8202
        %v8204 = vcombine.high %v8111, 0.0
        %v8206 = vunpack.c.l.s4 1983009808
        %v8207 = vunpack.c.0.s8 %v8206
        %v8208 = vlaneseq
        %v8209 = vshrl.u32 %v8208, 7
        %v8210 = vsub.s32 %v8207, %v8209
        %v8211 = vrot.slane %v8111, %v8210
        %v8213 = vunpack.c.l.s4 1983009808
        %v8214 = vunpack.c.0.s8 %v8213
        %v8215 = vlaneseq
        %v8216 = vshrl.u32 %v8215, 7
        %v8217 = vsub.s32 %v8214, %v8216
        %v8218 = vrot.slane %v8204, %v8217
        %v8219 = vcombine.low %v8196, %v8211
        %v8220 = vcombine.high %v8196, %v8211
        %v8222 = vunpack.c.l.s4 1934713408
        %v8223 = vunpack.c.0.s8 %v8222
        %v8224 = vlaneseq
        %v8225 = vshrl.u32 %v8224, 7
        %v8226 = vsub.s32 %v8223, %v8225
        %v8227 = vrot.slane %v8219, %v8226
        %v8229 = vunpack.c.l.s4 1934713408
        %v8230 = vunpack.c.0.s8 %v8229
        %v8231 = vlaneseq
        %v8232 = vshrl.u32 %v8231, 7
        %v8233 = vsub.s32 %v8230, %v8232
        %v8234 = vrot.slane %v8220, %v8233
        %v8235 = vcombine.low %v8203, %v8218
        %v8236 = vcombine.high %v8203, %v8218
        %v8238 = vunpack.c.l.s4 1934713408
        %v8239 = vunpack.c.0.s8 %v8238
        %v8240 = vlaneseq
        %v8241 = vshrl.u32 %v8240, 7
        %v8242 = vsub.s32 %v8239, %v8241
        %v8243 = vrot.slane %v8235, %v8242
        %v8245 = vunpack.c.l.s4 1934713408
        %v8246 = vunpack.c.0.s8 %v8245
        %v8247 = vlaneseq
        %v8248 = vshrl.u32 %v8247, 7
        %v8249 = vsub.s32 %v8246, %v8248
        %v8250 = vrot.slane %v8236, %v8249
        %v8251 = vcombine.high %v8227, 0.0
        %v8252 = vcombine.high %v8234, 0.0
        %v8253 = vcombine.high %v8243, 0.0
        %v8254 = vcombine.high %v8250, 0.0
        %v8255 = vcombine.high %v7971, 0.0
        %v8257 = vunpack.c.l.s4 1983009808
        %v8258 = vunpack.c.0.s8 %v8257
        %v8259 = vlaneseq
        %v8260 = vshrl.u32 %v8259, 7
        %v8261 = vsub.s32 %v8258, %v8260
        %v8262 = vrot.slane %v7971, %v8261
        %v8264 = vunpack.c.l.s4 1983009808
        %v8265 = vunpack.c.0.s8 %v8264
        %v8266 = vlaneseq
        %v8267 = vshrl.u32 %v8266, 7
        %v8268 = vsub.s32 %v8265, %v8267
        %v8269 = vrot.slane %v8255, %v8268
        %v8270 = vcombine.high %v8116, 0.0
        %v8272 = vunpack.c.l.s4 1983009808
        %v8273 = vunpack.c.0.s8 %v8272
        %v8274 = vlaneseq
        %v8275 = vshrl.u32 %v8274, 7
        %v8276 = vsub.s32 %v8273, %v8275
        %v8277 = vrot.slane %v8116, %v8276
        %v8279 = vunpack.c.l.s4 1983009808
        %v8280 = vunpack.c.0.s8 %v8279
        %v8281 = vlaneseq
        %v8282 = vshrl.u32 %v8281, 7
        %v8283 = vsub.s32 %v8280, %v8282
        %v8284 = vrot.slane %v8270, %v8283
        %v8285 = vcombine.low %v8262, %v8277
        %v8286 = vcombine.high %v8262, %v8277
        %v8288 = vunpack.c.l.s4 1934713408
        %v8289 = vunpack.c.0.s8 %v8288
        %v8290 = vlaneseq
        %v8291 = vshrl.u32 %v8290, 7
        %v8292 = vsub.s32 %v8289, %v8291
        %v8293 = vrot.slane %v8285, %v8292
        %v8295 = vunpack.c.l.s4 1934713408
        %v8296 = vunpack.c.0.s8 %v8295
        %v8297 = vlaneseq
        %v8298 = vshrl.u32 %v8297, 7
        %v8299 = vsub.s32 %v8296, %v8298
        %v8300 = vrot.slane %v8286, %v8299
        %v8301 = vcombine.low %v8269, %v8284
        %v8302 = vcombine.high %v8269, %v8284
        %v8304 = vunpack.c.l.s4 1934713408
        %v8305 = vunpack.c.0.s8 %v8304
        %v8306 = vlaneseq
        %v8307 = vshrl.u32 %v8306, 7
        %v8308 = vsub.s32 %v8305, %v8307
        %v8309 = vrot.slane %v8301, %v8308
        %v8311 = vunpack.c.l.s4 1934713408
        %v8312 = vunpack.c.0.s8 %v8311
        %v8313 = vlaneseq
        %v8314 = vshrl.u32 %v8313, 7
        %v8315 = vsub.s32 %v8312, %v8314
        %v8316 = vrot.slane %v8302, %v8315
        %v8317 = vcombine.high %v8293, 0.0
        %v8318 = vcombine.high %v8300, 0.0
        %v8319 = vcombine.high %v8309, 0.0
        %v8320 = vcombine.high %v8316, 0.0
        %v8321 = vcombine.high %v7976, 0.0
        %v8323 = vunpack.c.l.s4 1983009808
        %v8324 = vunpack.c.0.s8 %v8323
        %v8325 = vlaneseq
        %v8326 = vshrl.u32 %v8325, 7
        %v8327 = vsub.s32 %v8324, %v8326
        %v8328 = vrot.slane %v7976, %v8327
        %v8330 = vunpack.c.l.s4 1983009808
        %v8331 = vunpack.c.0.s8 %v8330
        %v8332 = vlaneseq
        %v8333 = vshrl.u32 %v8332, 7
        %v8334 = vsub.s32 %v8331, %v8333
        %v8335 = vrot.slane %v8321, %v8334
        %v8336 = vcombine.high %v8121, 0.0
        %v8338 = vunpack.c.l.s4 1983009808
        %v8339 = vunpack.c.0.s8 %v8338
        %v8340 = vlaneseq
        %v8341 = vshrl.u32 %v8340, 7
        %v8342 = vsub.s32 %v8339, %v8341
        %v8343 = vrot.slane %v8121, %v8342
        %v8345 = vunpack.c.l.s4 1983009808
        %v8346 = vunpack.c.0.s8 %v8345
        %v8347 = vlaneseq
        %v8348 = vshrl.u32 %v8347, 7
        %v8349 = vsub.s32 %v8346, %v8348
        %v8350 = vrot.slane %v8336, %v8349
        %v8351 = vcombine.low %v8328, %v8343
        %v8352 = vcombine.high %v8328, %v8343
        %v8354 = vunpack.c.l.s4 1934713408
        %v8355 = vunpack.c.0.s8 %v8354
        %v8356 = vlaneseq
        %v8357 = vshrl.u32 %v8356, 7
        %v8358 = vsub.s32 %v8355, %v8357
        %v8359 = vrot.slane %v8351, %v8358
        %v8361 = vunpack.c.l.s4 1934713408
        %v8362 = vunpack.c.0.s8 %v8361
        %v8363 = vlaneseq
        %v8364 = vshrl.u32 %v8363, 7
        %v8365 = vsub.s32 %v8362, %v8364
        %v8366 = vrot.slane %v8352, %v8365
        %v8367 = vcombine.low %v8335, %v8350
        %v8368 = vcombine.high %v8335, %v8350
        %v8370 = vunpack.c.l.s4 1934713408
        %v8371 = vunpack.c.0.s8 %v8370
        %v8372 = vlaneseq
        %v8373 = vshrl.u32 %v8372, 7
        %v8374 = vsub.s32 %v8371, %v8373
        %v8375 = vrot.slane %v8367, %v8374
        %v8377 = vunpack.c.l.s4 1934713408
        %v8378 = vunpack.c.0.s8 %v8377
        %v8379 = vlaneseq
        %v8380 = vshrl.u32 %v8379, 7
        %v8381 = vsub.s32 %v8378, %v8380
        %v8382 = vrot.slane %v8368, %v8381
        %v8383 = vcombine.high %v8359, 0.0
        %v8384 = vcombine.high %v8366, 0.0
        %v8385 = vcombine.high %v8375, 0.0
        %v8386 = vcombine.high %v8382, 0.0
        %v8387 = vcombine.high %v7981, 0.0
        %v8389 = vunpack.c.l.s4 1983009808
        %v8390 = vunpack.c.0.s8 %v8389
        %v8391 = vlaneseq
        %v8392 = vshrl.u32 %v8391, 7
        %v8393 = vsub.s32 %v8390, %v8392
        %v8394 = vrot.slane %v7981, %v8393
        %v8396 = vunpack.c.l.s4 1983009808
        %v8397 = vunpack.c.0.s8 %v8396
        %v8398 = vlaneseq
        %v8399 = vshrl.u32 %v8398, 7
        %v8400 = vsub.s32 %v8397, %v8399
        %v8401 = vrot.slane %v8387, %v8400
        %v8402 = vcombine.high %v8126, 0.0
        %v8404 = vunpack.c.l.s4 1983009808
        %v8405 = vunpack.c.0.s8 %v8404
        %v8406 = vlaneseq
        %v8407 = vshrl.u32 %v8406, 7
        %v8408 = vsub.s32 %v8405, %v8407
        %v8409 = vrot.slane %v8126, %v8408
        %v8411 = vunpack.c.l.s4 1983009808
        %v8412 = vunpack.c.0.s8 %v8411
        %v8413 = vlaneseq
        %v8414 = vshrl.u32 %v8413, 7
        %v8415 = vsub.s32 %v8412, %v8414
        %v8416 = vrot.slane %v8402, %v8415
        %v8417 = vcombine.low %v8394, %v8409
        %v8418 = vcombine.high %v8394, %v8409
        %v8420 = vunpack.c.l.s4 1934713408
        %v8421 = vunpack.c.0.s8 %v8420
        %v8422 = vlaneseq
        %v8423 = vshrl.u32 %v8422, 7
        %v8424 = vsub.s32 %v8421, %v8423
        %v8425 = vrot.slane %v8417, %v8424
        %v8427 = vunpack.c.l.s4 1934713408
        %v8428 = vunpack.c.0.s8 %v8427
        %v8429 = vlaneseq
        %v8430 = vshrl.u32 %v8429, 7
        %v8431 = vsub.s32 %v8428, %v8430
        %v8432 = vrot.slane %v8418, %v8431
        %v8433 = vcombine.low %v8401, %v8416
        %v8434 = vcombine.high %v8401, %v8416
        %v8436 = vunpack.c.l.s4 1934713408
        %v8437 = vunpack.c.0.s8 %v8436
        %v8438 = vlaneseq
        %v8439 = vshrl.u32 %v8438, 7
        %v8440 = vsub.s32 %v8437, %v8439
        %v8441 = vrot.slane %v8433, %v8440
        %v8443 = vunpack.c.l.s4 1934713408
        %v8444 = vunpack.c.0.s8 %v8443
        %v8445 = vlaneseq
        %v8446 = vshrl.u32 %v8445, 7
        %v8447 = vsub.s32 %v8444, %v8446
        %v8448 = vrot.slane %v8434, %v8447
        %v8449 = vcombine.high %v8425, 0.0
        %v8450 = vcombine.high %v8432, 0.0
        %v8451 = vcombine.high %v8441, 0.0
        %v8452 = vcombine.high %v8448, 0.0
        %v8453 = vcombine.high %v7986, 0.0
        %v8455 = vunpack.c.l.s4 1983009808
        %v8456 = vunpack.c.0.s8 %v8455
        %v8457 = vlaneseq
        %v8458 = vshrl.u32 %v8457, 7
        %v8459 = vsub.s32 %v8456, %v8458
        %v8460 = vrot.slane %v7986, %v8459
        %v8462 = vunpack.c.l.s4 1983009808
        %v8463 = vunpack.c.0.s8 %v8462
        %v8464 = vlaneseq
        %v8465 = vshrl.u32 %v8464, 7
        %v8466 = vsub.s32 %v8463, %v8465
        %v8467 = vrot.slane %v8453, %v8466
        %v8468 = vcombine.high %v8131, 0.0
        %v8470 = vunpack.c.l.s4 1983009808
        %v8471 = vunpack.c.0.s8 %v8470
        %v8472 = vlaneseq
        %v8473 = vshrl.u32 %v8472, 7
        %v8474 = vsub.s32 %v8471, %v8473
        %v8475 = vrot.slane %v8131, %v8474
        %v8477 = vunpack.c.l.s4 1983009808
        %v8478 = vunpack.c.0.s8 %v8477
        %v8479 = vlaneseq
        %v8480 = vshrl.u32 %v8479, 7
        %v8481 = vsub.s32 %v8478, %v8480
        %v8482 = vrot.slane %v8468, %v8481
        %v8483 = vcombine.low %v8460, %v8475
        %v8484 = vcombine.high %v8460, %v8475
        %v8486 = vunpack.c.l.s4 1934713408
        %v8487 = vunpack.c.0.s8 %v8486
        %v8488 = vlaneseq
        %v8489 = vshrl.u32 %v8488, 7
        %v8490 = vsub.s32 %v8487, %v8489
        %v8491 = vrot.slane %v8483, %v8490
        %v8493 = vunpack.c.l.s4 1934713408
        %v8494 = vunpack.c.0.s8 %v8493
        %v8495 = vlaneseq
        %v8496 = vshrl.u32 %v8495, 7
        %v8497 = vsub.s32 %v8494, %v8496
        %v8498 = vrot.slane %v8484, %v8497
        %v8499 = vcombine.low %v8467, %v8482
        %v8500 = vcombine.high %v8467, %v8482
        %v8502 = vunpack.c.l.s4 1934713408
        %v8503 = vunpack.c.0.s8 %v8502
        %v8504 = vlaneseq
        %v8505 = vshrl.u32 %v8504, 7
        %v8506 = vsub.s32 %v8503, %v8505
        %v8507 = vrot.slane %v8499, %v8506
        %v8509 = vunpack.c.l.s4 1934713408
        %v8510 = vunpack.c.0.s8 %v8509
        %v8511 = vlaneseq
        %v8512 = vshrl.u32 %v8511, 7
        %v8513 = vsub.s32 %v8510, %v8512
        %v8514 = vrot.slane %v8500, %v8513
        %v8515 = vcombine.high %v8491, 0.0
        %v8516 = vcombine.high %v8498, 0.0
        %v8517 = vcombine.high %v8507, 0.0
        %v8518 = vcombine.high %v8514, 0.0
        %v8519 = vcombine.high %v7991, 0.0
        %v8521 = vunpack.c.l.s4 1983009808
        %v8522 = vunpack.c.0.s8 %v8521
        %v8523 = vlaneseq
        %v8524 = vshrl.u32 %v8523, 7
        %v8525 = vsub.s32 %v8522, %v8524
        %v8526 = vrot.slane %v7991, %v8525
        %v8528 = vunpack.c.l.s4 1983009808
        %v8529 = vunpack.c.0.s8 %v8528
        %v8530 = vlaneseq
        %v8531 = vshrl.u32 %v8530, 7
        %v8532 = vsub.s32 %v8529, %v8531
        %v8533 = vrot.slane %v8519, %v8532
        %v8534 = vcombine.high %v8136, 0.0
        %v8536 = vunpack.c.l.s4 1983009808
        %v8537 = vunpack.c.0.s8 %v8536
        %v8538 = vlaneseq
        %v8539 = vshrl.u32 %v8538, 7
        %v8540 = vsub.s32 %v8537, %v8539
        %v8541 = vrot.slane %v8136, %v8540
        %v8543 = vunpack.c.l.s4 1983009808
        %v8544 = vunpack.c.0.s8 %v8543
        %v8545 = vlaneseq
        %v8546 = vshrl.u32 %v8545, 7
        %v8547 = vsub.s32 %v8544, %v8546
        %v8548 = vrot.slane %v8534, %v8547
        %v8549 = vcombine.low %v8526, %v8541
        %v8550 = vcombine.high %v8526, %v8541
        %v8552 = vunpack.c.l.s4 1934713408
        %v8553 = vunpack.c.0.s8 %v8552
        %v8554 = vlaneseq
        %v8555 = vshrl.u32 %v8554, 7
        %v8556 = vsub.s32 %v8553, %v8555
        %v8557 = vrot.slane %v8549, %v8556
        %v8559 = vunpack.c.l.s4 1934713408
        %v8560 = vunpack.c.0.s8 %v8559
        %v8561 = vlaneseq
        %v8562 = vshrl.u32 %v8561, 7
        %v8563 = vsub.s32 %v8560, %v8562
        %v8564 = vrot.slane %v8550, %v8563
        %v8565 = vcombine.low %v8533, %v8548
        %v8566 = vcombine.high %v8533, %v8548
        %v8568 = vunpack.c.l.s4 1934713408
        %v8569 = vunpack.c.0.s8 %v8568
        %v8570 = vlaneseq
        %v8571 = vshrl.u32 %v8570, 7
        %v8572 = vsub.s32 %v8569, %v8571
        %v8573 = vrot.slane %v8565, %v8572
        %v8575 = vunpack.c.l.s4 1934713408
        %v8576 = vunpack.c.0.s8 %v8575
        %v8577 = vlaneseq
        %v8578 = vshrl.u32 %v8577, 7
        %v8579 = vsub.s32 %v8576, %v8578
        %v8580 = vrot.slane %v8566, %v8579
        %v8581 = vcombine.high %v8557, 0.0
        %v8582 = vcombine.high %v8564, 0.0
        %v8583 = vcombine.high %v8573, 0.0
        %v8584 = vcombine.high %v8580, 0.0
        %v8585 = vcombine.high %v7996, 0.0
        %v8587 = vunpack.c.l.s4 1983009808
        %v8588 = vunpack.c.0.s8 %v8587
        %v8589 = vlaneseq
        %v8590 = vshrl.u32 %v8589, 7
        %v8591 = vsub.s32 %v8588, %v8590
        %v8592 = vrot.slane %v7996, %v8591
        %v8594 = vunpack.c.l.s4 1983009808
        %v8595 = vunpack.c.0.s8 %v8594
        %v8596 = vlaneseq
        %v8597 = vshrl.u32 %v8596, 7
        %v8598 = vsub.s32 %v8595, %v8597
        %v8599 = vrot.slane %v8585, %v8598
        %v8600 = vcombine.high %v8141, 0.0
        %v8602 = vunpack.c.l.s4 1983009808
        %v8603 = vunpack.c.0.s8 %v8602
        %v8604 = vlaneseq
        %v8605 = vshrl.u32 %v8604, 7
        %v8606 = vsub.s32 %v8603, %v8605
        %v8607 = vrot.slane %v8141, %v8606
        %v8609 = vunpack.c.l.s4 1983009808
        %v8610 = vunpack.c.0.s8 %v8609
        %v8611 = vlaneseq
        %v8612 = vshrl.u32 %v8611, 7
        %v8613 = vsub.s32 %v8610, %v8612
        %v8614 = vrot.slane %v8600, %v8613
        %v8615 = vcombine.low %v8592, %v8607
        %v8616 = vcombine.high %v8592, %v8607
        %v8618 = vunpack.c.l.s4 1934713408
        %v8619 = vunpack.c.0.s8 %v8618
        %v8620 = vlaneseq
        %v8621 = vshrl.u32 %v8620, 7
        %v8622 = vsub.s32 %v8619, %v8621
        %v8623 = vrot.slane %v8615, %v8622
        %v8625 = vunpack.c.l.s4 1934713408
        %v8626 = vunpack.c.0.s8 %v8625
        %v8627 = vlaneseq
        %v8628 = vshrl.u32 %v8627, 7
        %v8629 = vsub.s32 %v8626, %v8628
        %v8630 = vrot.slane %v8616, %v8629
        %v8631 = vcombine.low %v8599, %v8614
        %v8632 = vcombine.high %v8599, %v8614
        %v8634 = vunpack.c.l.s4 1934713408
        %v8635 = vunpack.c.0.s8 %v8634
        %v8636 = vlaneseq
        %v8637 = vshrl.u32 %v8636, 7
        %v8638 = vsub.s32 %v8635, %v8637
        %v8639 = vrot.slane %v8631, %v8638
        %v8641 = vunpack.c.l.s4 1934713408
        %v8642 = vunpack.c.0.s8 %v8641
        %v8643 = vlaneseq
        %v8644 = vshrl.u32 %v8643, 7
        %v8645 = vsub.s32 %v8642, %v8644
        %v8646 = vrot.slane %v8632, %v8645
        %v8647 = vcombine.high %v8623, 0.0
        %v8648 = vcombine.high %v8630, 0.0
        %v8649 = vcombine.high %v8639, 0.0
        %v8650 = vcombine.high %v8646, 0.0
        %v8651 = vcombine.high %v8001, 0.0
        %v8653 = vunpack.c.l.s4 1983009808
        %v8654 = vunpack.c.0.s8 %v8653
        %v8655 = vlaneseq
        %v8656 = vshrl.u32 %v8655, 7
        %v8657 = vsub.s32 %v8654, %v8656
        %v8658 = vrot.slane %v8001, %v8657
        %v8660 = vunpack.c.l.s4 1983009808
        %v8661 = vunpack.c.0.s8 %v8660
        %v8662 = vlaneseq
        %v8663 = vshrl.u32 %v8662, 7
        %v8664 = vsub.s32 %v8661, %v8663
        %v8665 = vrot.slane %v8651, %v8664
        %v8666 = vcombine.high %v8146, 0.0
        %v8668 = vunpack.c.l.s4 1983009808
        %v8669 = vunpack.c.0.s8 %v8668
        %v8670 = vlaneseq
        %v8671 = vshrl.u32 %v8670, 7
        %v8672 = vsub.s32 %v8669, %v8671
        %v8673 = vrot.slane %v8146, %v8672
        %v8675 = vunpack.c.l.s4 1983009808
        %v8676 = vunpack.c.0.s8 %v8675
        %v8677 = vlaneseq
        %v8678 = vshrl.u32 %v8677, 7
        %v8679 = vsub.s32 %v8676, %v8678
        %v8680 = vrot.slane %v8666, %v8679
        %v8681 = vcombine.low %v8658, %v8673
        %v8682 = vcombine.high %v8658, %v8673
        %v8684 = vunpack.c.l.s4 1934713408
        %v8685 = vunpack.c.0.s8 %v8684
        %v8686 = vlaneseq
        %v8687 = vshrl.u32 %v8686, 7
        %v8688 = vsub.s32 %v8685, %v8687
        %v8689 = vrot.slane %v8681, %v8688
        %v8691 = vunpack.c.l.s4 1934713408
        %v8692 = vunpack.c.0.s8 %v8691
        %v8693 = vlaneseq
        %v8694 = vshrl.u32 %v8693, 7
        %v8695 = vsub.s32 %v8692, %v8694
        %v8696 = vrot.slane %v8682, %v8695
        %v8697 = vcombine.low %v8665, %v8680
        %v8698 = vcombine.high %v8665, %v8680
        %v8700 = vunpack.c.l.s4 1934713408
        %v8701 = vunpack.c.0.s8 %v8700
        %v8702 = vlaneseq
        %v8703 = vshrl.u32 %v8702, 7
        %v8704 = vsub.s32 %v8701, %v8703
        %v8705 = vrot.slane %v8697, %v8704
        %v8707 = vunpack.c.l.s4 1934713408
        %v8708 = vunpack.c.0.s8 %v8707
        %v8709 = vlaneseq
        %v8710 = vshrl.u32 %v8709, 7
        %v8711 = vsub.s32 %v8708, %v8710
        %v8712 = vrot.slane %v8698, %v8711
        %v8713 = vcombine.high %v8689, 0.0
        %v8714 = vcombine.high %v8696, 0.0
        %v8715 = vcombine.high %v8705, 0.0
        %v8716 = vcombine.high %v8712, 0.0
        %v8717 = vcombine.high %v8006, 0.0
        %v8719 = vunpack.c.l.s4 1983009808
        %v8720 = vunpack.c.0.s8 %v8719
        %v8721 = vlaneseq
        %v8722 = vshrl.u32 %v8721, 7
        %v8723 = vsub.s32 %v8720, %v8722
        %v8724 = vrot.slane %v8006, %v8723
        %v8726 = vunpack.c.l.s4 1983009808
        %v8727 = vunpack.c.0.s8 %v8726
        %v8728 = vlaneseq
        %v8729 = vshrl.u32 %v8728, 7
        %v8730 = vsub.s32 %v8727, %v8729
        %v8731 = vrot.slane %v8717, %v8730
        %v8732 = vcombine.high %v8151, 0.0
        %v8734 = vunpack.c.l.s4 1983009808
        %v8735 = vunpack.c.0.s8 %v8734
        %v8736 = vlaneseq
        %v8737 = vshrl.u32 %v8736, 7
        %v8738 = vsub.s32 %v8735, %v8737
        %v8739 = vrot.slane %v8151, %v8738
        %v8741 = vunpack.c.l.s4 1983009808
        %v8742 = vunpack.c.0.s8 %v8741
        %v8743 = vlaneseq
        %v8744 = vshrl.u32 %v8743, 7
        %v8745 = vsub.s32 %v8742, %v8744
        %v8746 = vrot.slane %v8732, %v8745
        %v8747 = vcombine.low %v8724, %v8739
        %v8748 = vcombine.high %v8724, %v8739
        %v8750 = vunpack.c.l.s4 1934713408
        %v8751 = vunpack.c.0.s8 %v8750
        %v8752 = vlaneseq
        %v8753 = vshrl.u32 %v8752, 7
        %v8754 = vsub.s32 %v8751, %v8753
        %v8755 = vrot.slane %v8747, %v8754
        %v8757 = vunpack.c.l.s4 1934713408
        %v8758 = vunpack.c.0.s8 %v8757
        %v8759 = vlaneseq
        %v8760 = vshrl.u32 %v8759, 7
        %v8761 = vsub.s32 %v8758, %v8760
        %v8762 = vrot.slane %v8748, %v8761
        %v8763 = vcombine.low %v8731, %v8746
        %v8764 = vcombine.high %v8731, %v8746
        %v8766 = vunpack.c.l.s4 1934713408
        %v8767 = vunpack.c.0.s8 %v8766
        %v8768 = vlaneseq
        %v8769 = vshrl.u32 %v8768, 7
        %v8770 = vsub.s32 %v8767, %v8769
        %v8771 = vrot.slane %v8763, %v8770
        %v8773 = vunpack.c.l.s4 1934713408
        %v8774 = vunpack.c.0.s8 %v8773
        %v8775 = vlaneseq
        %v8776 = vshrl.u32 %v8775, 7
        %v8777 = vsub.s32 %v8774, %v8776
        %v8778 = vrot.slane %v8764, %v8777
        %v8779 = vcombine.high %v8755, 0.0
        %v8780 = vcombine.high %v8762, 0.0
        %v8781 = vcombine.high %v8771, 0.0
        %v8782 = vcombine.high %v8778, 0.0
        %v8783 = vcombine.high %v8011, 0.0
        %v8785 = vunpack.c.l.s4 1983009808
        %v8786 = vunpack.c.0.s8 %v8785
        %v8787 = vlaneseq
        %v8788 = vshrl.u32 %v8787, 7
        %v8789 = vsub.s32 %v8786, %v8788
        %v8790 = vrot.slane %v8011, %v8789
        %v8792 = vunpack.c.l.s4 1983009808
        %v8793 = vunpack.c.0.s8 %v8792
        %v8794 = vlaneseq
        %v8795 = vshrl.u32 %v8794, 7
        %v8796 = vsub.s32 %v8793, %v8795
        %v8797 = vrot.slane %v8783, %v8796
        %v8798 = vcombine.high %v8156, 0.0
        %v8800 = vunpack.c.l.s4 1983009808
        %v8801 = vunpack.c.0.s8 %v8800
        %v8802 = vlaneseq
        %v8803 = vshrl.u32 %v8802, 7
        %v8804 = vsub.s32 %v8801, %v8803
        %v8805 = vrot.slane %v8156, %v8804
        %v8807 = vunpack.c.l.s4 1983009808
        %v8808 = vunpack.c.0.s8 %v8807
        %v8809 = vlaneseq
        %v8810 = vshrl.u32 %v8809, 7
        %v8811 = vsub.s32 %v8808, %v8810
        %v8812 = vrot.slane %v8798, %v8811
        %v8813 = vcombine.low %v8790, %v8805
        %v8814 = vcombine.high %v8790, %v8805
        %v8816 = vunpack.c.l.s4 1934713408
        %v8817 = vunpack.c.0.s8 %v8816
        %v8818 = vlaneseq
        %v8819 = vshrl.u32 %v8818, 7
        %v8820 = vsub.s32 %v8817, %v8819
        %v8821 = vrot.slane %v8813, %v8820
        %v8823 = vunpack.c.l.s4 1934713408
        %v8824 = vunpack.c.0.s8 %v8823
        %v8825 = vlaneseq
        %v8826 = vshrl.u32 %v8825, 7
        %v8827 = vsub.s32 %v8824, %v8826
        %v8828 = vrot.slane %v8814, %v8827
        %v8829 = vcombine.low %v8797, %v8812
        %v8830 = vcombine.high %v8797, %v8812
        %v8832 = vunpack.c.l.s4 1934713408
        %v8833 = vunpack.c.0.s8 %v8832
        %v8834 = vlaneseq
        %v8835 = vshrl.u32 %v8834, 7
        %v8836 = vsub.s32 %v8833, %v8835
        %v8837 = vrot.slane %v8829, %v8836
        %v8839 = vunpack.c.l.s4 1934713408
        %v8840 = vunpack.c.0.s8 %v8839
        %v8841 = vlaneseq
        %v8842 = vshrl.u32 %v8841, 7
        %v8843 = vsub.s32 %v8840, %v8842
        %v8844 = vrot.slane %v8830, %v8843
        %v8845 = vcombine.high %v8821, 0.0
        %v8846 = vcombine.high %v8828, 0.0
        %v8847 = vcombine.high %v8837, 0.0
        %v8848 = vcombine.high %v8844, 0.0
        %v8849 = vcombine.high %v8016, 0.0
        %v8851 = vunpack.c.l.s4 1983009808
        %v8852 = vunpack.c.0.s8 %v8851
        %v8853 = vlaneseq
        %v8854 = vshrl.u32 %v8853, 7
        %v8855 = vsub.s32 %v8852, %v8854
        %v8856 = vrot.slane %v8016, %v8855
        %v8858 = vunpack.c.l.s4 1983009808
        %v8859 = vunpack.c.0.s8 %v8858
        %v8860 = vlaneseq
        %v8861 = vshrl.u32 %v8860, 7
        %v8862 = vsub.s32 %v8859, %v8861
        %v8863 = vrot.slane %v8849, %v8862
        %v8864 = vcombine.high %v8161, 0.0
        %v8866 = vunpack.c.l.s4 1983009808
        %v8867 = vunpack.c.0.s8 %v8866
        %v8868 = vlaneseq
        %v8869 = vshrl.u32 %v8868, 7
        %v8870 = vsub.s32 %v8867, %v8869
        %v8871 = vrot.slane %v8161, %v8870
        %v8873 = vunpack.c.l.s4 1983009808
        %v8874 = vunpack.c.0.s8 %v8873
        %v8875 = vlaneseq
        %v8876 = vshrl.u32 %v8875, 7
        %v8877 = vsub.s32 %v8874, %v8876
        %v8878 = vrot.slane %v8864, %v8877
        %v8879 = vcombine.low %v8856, %v8871
        %v8880 = vcombine.high %v8856, %v8871
        %v8882 = vunpack.c.l.s4 1934713408
        %v8883 = vunpack.c.0.s8 %v8882
        %v8884 = vlaneseq
        %v8885 = vshrl.u32 %v8884, 7
        %v8886 = vsub.s32 %v8883, %v8885
        %v8887 = vrot.slane %v8879, %v8886
        %v8889 = vunpack.c.l.s4 1934713408
        %v8890 = vunpack.c.0.s8 %v8889
        %v8891 = vlaneseq
        %v8892 = vshrl.u32 %v8891, 7
        %v8893 = vsub.s32 %v8890, %v8892
        %v8894 = vrot.slane %v8880, %v8893
        %v8895 = vcombine.low %v8863, %v8878
        %v8896 = vcombine.high %v8863, %v8878
        %v8898 = vunpack.c.l.s4 1934713408
        %v8899 = vunpack.c.0.s8 %v8898
        %v8900 = vlaneseq
        %v8901 = vshrl.u32 %v8900, 7
        %v8902 = vsub.s32 %v8899, %v8901
        %v8903 = vrot.slane %v8895, %v8902
        %v8905 = vunpack.c.l.s4 1934713408
        %v8906 = vunpack.c.0.s8 %v8905
        %v8907 = vlaneseq
        %v8908 = vshrl.u32 %v8907, 7
        %v8909 = vsub.s32 %v8906, %v8908
        %v8910 = vrot.slane %v8896, %v8909
        %v8911 = vcombine.high %v8887, 0.0
        %v8912 = vcombine.high %v8894, 0.0
        %v8913 = vcombine.high %v8903, 0.0
        %v8914 = vcombine.high %v8910, 0.0
        %v8915 = vcombine.high %v8021, 0.0
        %v8917 = vunpack.c.l.s4 1983009808
        %v8918 = vunpack.c.0.s8 %v8917
        %v8919 = vlaneseq
        %v8920 = vshrl.u32 %v8919, 7
        %v8921 = vsub.s32 %v8918, %v8920
        %v8922 = vrot.slane %v8021, %v8921
        %v8924 = vunpack.c.l.s4 1983009808
        %v8925 = vunpack.c.0.s8 %v8924
        %v8926 = vlaneseq
        %v8927 = vshrl.u32 %v8926, 7
        %v8928 = vsub.s32 %v8925, %v8927
        %v8929 = vrot.slane %v8915, %v8928
        %v8930 = vcombine.high %v8166, 0.0
        %v8932 = vunpack.c.l.s4 1983009808
        %v8933 = vunpack.c.0.s8 %v8932
        %v8934 = vlaneseq
        %v8935 = vshrl.u32 %v8934, 7
        %v8936 = vsub.s32 %v8933, %v8935
        %v8937 = vrot.slane %v8166, %v8936
        %v8939 = vunpack.c.l.s4 1983009808
        %v8940 = vunpack.c.0.s8 %v8939
        %v8941 = vlaneseq
        %v8942 = vshrl.u32 %v8941, 7
        %v8943 = vsub.s32 %v8940, %v8942
        %v8944 = vrot.slane %v8930, %v8943
        %v8945 = vcombine.low %v8922, %v8937
        %v8946 = vcombine.high %v8922, %v8937
        %v8948 = vunpack.c.l.s4 1934713408
        %v8949 = vunpack.c.0.s8 %v8948
        %v8950 = vlaneseq
        %v8951 = vshrl.u32 %v8950, 7
        %v8952 = vsub.s32 %v8949, %v8951
        %v8953 = vrot.slane %v8945, %v8952
        %v8955 = vunpack.c.l.s4 1934713408
        %v8956 = vunpack.c.0.s8 %v8955
        %v8957 = vlaneseq
        %v8958 = vshrl.u32 %v8957, 7
        %v8959 = vsub.s32 %v8956, %v8958
        %v8960 = vrot.slane %v8946, %v8959
        %v8961 = vcombine.low %v8929, %v8944
        %v8962 = vcombine.high %v8929, %v8944
        %v8964 = vunpack.c.l.s4 1934713408
        %v8965 = vunpack.c.0.s8 %v8964
        %v8966 = vlaneseq
        %v8967 = vshrl.u32 %v8966, 7
        %v8968 = vsub.s32 %v8965, %v8967
        %v8969 = vrot.slane %v8961, %v8968
        %v8971 = vunpack.c.l.s4 1934713408
        %v8972 = vunpack.c.0.s8 %v8971
        %v8973 = vlaneseq
        %v8974 = vshrl.u32 %v8973, 7
        %v8975 = vsub.s32 %v8972, %v8974
        %v8976 = vrot.slane %v8962, %v8975
        %v8977 = vcombine.high %v8953, 0.0
        %v8978 = vcombine.high %v8960, 0.0
        %v8979 = vcombine.high %v8969, 0.0
        %v8980 = vcombine.high %v8976, 0.0
        %v8981 = vcombine.high %v8026, 0.0
        %v8983 = vunpack.c.l.s4 1983009808
        %v8984 = vunpack.c.0.s8 %v8983
        %v8985 = vlaneseq
        %v8986 = vshrl.u32 %v8985, 7
        %v8987 = vsub.s32 %v8984, %v8986
        %v8988 = vrot.slane %v8026, %v8987
        %v8990 = vunpack.c.l.s4 1983009808
        %v8991 = vunpack.c.0.s8 %v8990
        %v8992 = vlaneseq
        %v8993 = vshrl.u32 %v8992, 7
        %v8994 = vsub.s32 %v8991, %v8993
        %v8995 = vrot.slane %v8981, %v8994
        %v8996 = vcombine.high %v8171, 0.0
        %v8998 = vunpack.c.l.s4 1983009808
        %v8999 = vunpack.c.0.s8 %v8998
        %v9000 = vlaneseq
        %v9001 = vshrl.u32 %v9000, 7
        %v9002 = vsub.s32 %v8999, %v9001
        %v9003 = vrot.slane %v8171, %v9002
        %v9005 = vunpack.c.l.s4 1983009808
        %v9006 = vunpack.c.0.s8 %v9005
        %v9007 = vlaneseq
        %v9008 = vshrl.u32 %v9007, 7
        %v9009 = vsub.s32 %v9006, %v9008
        %v9010 = vrot.slane %v8996, %v9009
        %v9011 = vcombine.low %v8988, %v9003
        %v9012 = vcombine.high %v8988, %v9003
        %v9014 = vunpack.c.l.s4 1934713408
        %v9015 = vunpack.c.0.s8 %v9014
        %v9016 = vlaneseq
        %v9017 = vshrl.u32 %v9016, 7
        %v9018 = vsub.s32 %v9015, %v9017
        %v9019 = vrot.slane %v9011, %v9018
        %v9021 = vunpack.c.l.s4 1934713408
        %v9022 = vunpack.c.0.s8 %v9021
        %v9023 = vlaneseq
        %v9024 = vshrl.u32 %v9023, 7
        %v9025 = vsub.s32 %v9022, %v9024
        %v9026 = vrot.slane %v9012, %v9025
        %v9027 = vcombine.low %v8995, %v9010
        %v9028 = vcombine.high %v8995, %v9010
        %v9030 = vunpack.c.l.s4 1934713408
        %v9031 = vunpack.c.0.s8 %v9030
        %v9032 = vlaneseq
        %v9033 = vshrl.u32 %v9032, 7
        %v9034 = vsub.s32 %v9031, %v9033
        %v9035 = vrot.slane %v9027, %v9034
        %v9037 = vunpack.c.l.s4 1934713408
        %v9038 = vunpack.c.0.s8 %v9037
        %v9039 = vlaneseq
        %v9040 = vshrl.u32 %v9039, 7
        %v9041 = vsub.s32 %v9038, %v9040
        %v9042 = vrot.slane %v9028, %v9041
        %v9043 = vcombine.high %v9019, 0.0
        %v9044 = vcombine.high %v9026, 0.0
        %v9045 = vcombine.high %v9035, 0.0
        %v9046 = vcombine.high %v9042, 0.0
        %v9047 = vcombine.high %v8031, 0.0
        %v9049 = vunpack.c.l.s4 1983009808
        %v9050 = vunpack.c.0.s8 %v9049
        %v9051 = vlaneseq
        %v9052 = vshrl.u32 %v9051, 7
        %v9053 = vsub.s32 %v9050, %v9052
        %v9054 = vrot.slane %v8031, %v9053
        %v9056 = vunpack.c.l.s4 1983009808
        %v9057 = vunpack.c.0.s8 %v9056
        %v9058 = vlaneseq
        %v9059 = vshrl.u32 %v9058, 7
        %v9060 = vsub.s32 %v9057, %v9059
        %v9061 = vrot.slane %v9047, %v9060
        %v9062 = vcombine.high %v8176, 0.0
        %v9064 = vunpack.c.l.s4 1983009808
        %v9065 = vunpack.c.0.s8 %v9064
        %v9066 = vlaneseq
        %v9067 = vshrl.u32 %v9066, 7
        %v9068 = vsub.s32 %v9065, %v9067
        %v9069 = vrot.slane %v8176, %v9068
        %v9071 = vunpack.c.l.s4 1983009808
        %v9072 = vunpack.c.0.s8 %v9071
        %v9073 = vlaneseq
        %v9074 = vshrl.u32 %v9073, 7
        %v9075 = vsub.s32 %v9072, %v9074
        %v9076 = vrot.slane %v9062, %v9075
        %v9077 = vcombine.low %v9054, %v9069
        %v9078 = vcombine.high %v9054, %v9069
        %v9080 = vunpack.c.l.s4 1934713408
        %v9081 = vunpack.c.0.s8 %v9080
        %v9082 = vlaneseq
        %v9083 = vshrl.u32 %v9082, 7
        %v9084 = vsub.s32 %v9081, %v9083
        %v9085 = vrot.slane %v9077, %v9084
        %v9087 = vunpack.c.l.s4 1934713408
        %v9088 = vunpack.c.0.s8 %v9087
        %v9089 = vlaneseq
        %v9090 = vshrl.u32 %v9089, 7
        %v9091 = vsub.s32 %v9088, %v9090
        %v9092 = vrot.slane %v9078, %v9091
        %v9093 = vcombine.low %v9061, %v9076
        %v9094 = vcombine.high %v9061, %v9076
        %v9096 = vunpack.c.l.s4 1934713408
        %v9097 = vunpack.c.0.s8 %v9096
        %v9098 = vlaneseq
        %v9099 = vshrl.u32 %v9098, 7
        %v9100 = vsub.s32 %v9097, %v9099
        %v9101 = vrot.slane %v9093, %v9100
        %v9103 = vunpack.c.l.s4 1934713408
        %v9104 = vunpack.c.0.s8 %v9103
        %v9105 = vlaneseq
        %v9106 = vshrl.u32 %v9105, 7
        %v9107 = vsub.s32 %v9104, %v9106
        %v9108 = vrot.slane %v9094, %v9107
        %v9109 = vcombine.high %v9085, 0.0
        %v9110 = vcombine.high %v9092, 0.0
        %v9111 = vcombine.high %v9101, 0.0
        %v9112 = vcombine.high %v9108, 0.0
        %v9113 = vcombine.high %v8036, 0.0
        %v9115 = vunpack.c.l.s4 1983009808
        %v9116 = vunpack.c.0.s8 %v9115
        %v9117 = vlaneseq
        %v9118 = vshrl.u32 %v9117, 7
        %v9119 = vsub.s32 %v9116, %v9118
        %v9120 = vrot.slane %v8036, %v9119
        %v9122 = vunpack.c.l.s4 1983009808
        %v9123 = vunpack.c.0.s8 %v9122
        %v9124 = vlaneseq
        %v9125 = vshrl.u32 %v9124, 7
        %v9126 = vsub.s32 %v9123, %v9125
        %v9127 = vrot.slane %v9113, %v9126
        %v9128 = vcombine.high %v8181, 0.0
        %v9130 = vunpack.c.l.s4 1983009808
        %v9131 = vunpack.c.0.s8 %v9130
        %v9132 = vlaneseq
        %v9133 = vshrl.u32 %v9132, 7
        %v9134 = vsub.s32 %v9131, %v9133
        %v9135 = vrot.slane %v8181, %v9134
        %v9137 = vunpack.c.l.s4 1983009808
        %v9138 = vunpack.c.0.s8 %v9137
        %v9139 = vlaneseq
        %v9140 = vshrl.u32 %v9139, 7
        %v9141 = vsub.s32 %v9138, %v9140
        %v9142 = vrot.slane %v9128, %v9141
        %v9143 = vcombine.low %v9120, %v9135
        %v9144 = vcombine.high %v9120, %v9135
        %v9146 = vunpack.c.l.s4 1934713408
        %v9147 = vunpack.c.0.s8 %v9146
        %v9148 = vlaneseq
        %v9149 = vshrl.u32 %v9148, 7
        %v9150 = vsub.s32 %v9147, %v9149
        %v9151 = vrot.slane %v9143, %v9150
        %v9153 = vunpack.c.l.s4 1934713408
        %v9154 = vunpack.c.0.s8 %v9153
        %v9155 = vlaneseq
        %v9156 = vshrl.u32 %v9155, 7
        %v9157 = vsub.s32 %v9154, %v9156
        %v9158 = vrot.slane %v9144, %v9157
        %v9159 = vcombine.low %v9127, %v9142
        %v9160 = vcombine.high %v9127, %v9142
        %v9162 = vunpack.c.l.s4 1934713408
        %v9163 = vunpack.c.0.s8 %v9162
        %v9164 = vlaneseq
        %v9165 = vshrl.u32 %v9164, 7
        %v9166 = vsub.s32 %v9163, %v9165
        %v9167 = vrot.slane %v9159, %v9166
        %v9169 = vunpack.c.l.s4 1934713408
        %v9170 = vunpack.c.0.s8 %v9169
        %v9171 = vlaneseq
        %v9172 = vshrl.u32 %v9171, 7
        %v9173 = vsub.s32 %v9170, %v9172
        %v9174 = vrot.slane %v9160, %v9173
        %v9175 = vcombine.high %v9151, 0.0
        %v9176 = vcombine.high %v9158, 0.0
        %v9177 = vcombine.high %v9167, 0.0
        %v9178 = vcombine.high %v9174, 0.0
        %v9179 = vcombine.high %v8041, 0.0
        %v9181 = vunpack.c.l.s4 1983009808
        %v9182 = vunpack.c.0.s8 %v9181
        %v9183 = vlaneseq
        %v9184 = vshrl.u32 %v9183, 7
        %v9185 = vsub.s32 %v9182, %v9184
        %v9186 = vrot.slane %v8041, %v9185
        %v9188 = vunpack.c.l.s4 1983009808
        %v9189 = vunpack.c.0.s8 %v9188
        %v9190 = vlaneseq
        %v9191 = vshrl.u32 %v9190, 7
        %v9192 = vsub.s32 %v9189, %v9191
        %v9193 = vrot.slane %v9179, %v9192
        %v9194 = vcombine.high %v8186, 0.0
        %v9196 = vunpack.c.l.s4 1983009808
        %v9197 = vunpack.c.0.s8 %v9196
        %v9198 = vlaneseq
        %v9199 = vshrl.u32 %v9198, 7
        %v9200 = vsub.s32 %v9197, %v9199
        %v9201 = vrot.slane %v8186, %v9200
        %v9203 = vunpack.c.l.s4 1983009808
        %v9204 = vunpack.c.0.s8 %v9203
        %v9205 = vlaneseq
        %v9206 = vshrl.u32 %v9205, 7
        %v9207 = vsub.s32 %v9204, %v9206
        %v9208 = vrot.slane %v9194, %v9207
        %v9209 = vcombine.low %v9186, %v9201
        %v9210 = vcombine.high %v9186, %v9201
        %v9212 = vunpack.c.l.s4 1934713408
        %v9213 = vunpack.c.0.s8 %v9212
        %v9214 = vlaneseq
        %v9215 = vshrl.u32 %v9214, 7
        %v9216 = vsub.s32 %v9213, %v9215
        %v9217 = vrot.slane %v9209, %v9216
        %v9219 = vunpack.c.l.s4 1934713408
        %v9220 = vunpack.c.0.s8 %v9219
        %v9221 = vlaneseq
        %v9222 = vshrl.u32 %v9221, 7
        %v9223 = vsub.s32 %v9220, %v9222
        %v9224 = vrot.slane %v9210, %v9223
        %v9225 = vcombine.low %v9193, %v9208
        %v9226 = vcombine.high %v9193, %v9208
        %v9228 = vunpack.c.l.s4 1934713408
        %v9229 = vunpack.c.0.s8 %v9228
        %v9230 = vlaneseq
        %v9231 = vshrl.u32 %v9230, 7
        %v9232 = vsub.s32 %v9229, %v9231
        %v9233 = vrot.slane %v9225, %v9232
        %v9235 = vunpack.c.l.s4 1934713408
        %v9236 = vunpack.c.0.s8 %v9235
        %v9237 = vlaneseq
        %v9238 = vshrl.u32 %v9237, 7
        %v9239 = vsub.s32 %v9236, %v9238
        %v9240 = vrot.slane %v9226, %v9239
        %v9241 = vcombine.high %v9217, 0.0
        %v9242 = vcombine.high %v9224, 0.0
        %v9243 = vcombine.high %v9233, 0.0
        %v9244 = vcombine.high %v9240, 0.0
        %v9245 = vcombine.low %v8227, %v8234
        %v9247 = vunpack.c.l.s4 1983009808
        %v9248 = vunpack.c.0.s8 %v9247
        %v9249 = vlaneseq
        %v9250 = vshrl.u32 %v9249, 7
        %v9251 = vsub.s32 %v9248, %v9250
        %v9252 = vrot.slane %v9245, %v9251
        %v9253 = vcombine.low %v8251, %v8252
        %v9255 = vunpack.c.l.s4 1983009808
        %v9256 = vunpack.c.0.s8 %v9255
        %v9257 = vlaneseq
        %v9258 = vshrl.u32 %v9257, 7
        %v9259 = vsub.s32 %v9256, %v9258
        %v9260 = vrot.slane %v9253, %v9259
        %v9261 = vcombine.low %v8243, %v8250
        %v9263 = vunpack.c.l.s4 1983009808
        %v9264 = vunpack.c.0.s8 %v9263
        %v9265 = vlaneseq
        %v9266 = vshrl.u32 %v9265, 7
        %v9267 = vsub.s32 %v9264, %v9266
        %v9268 = vrot.slane %v9261, %v9267
        %v9269 = vcombine.low %v8253, %v8254
        %v9271 = vunpack.c.l.s4 1983009808
        %v9272 = vunpack.c.0.s8 %v9271
        %v9273 = vlaneseq
        %v9274 = vshrl.u32 %v9273, 7
        %v9275 = vsub.s32 %v9272, %v9274
        %v9276 = vrot.slane %v9269, %v9275
        %v9277 = vcombine.low %v9252, %v9260
        %v9279 = vunpack.c.l.s4 1934713408
        %v9280 = vunpack.c.0.s8 %v9279
        %v9281 = vlaneseq
        %v9282 = vshrl.u32 %v9281, 7
        %v9283 = vsub.s32 %v9280, %v9282
        %v9284 = vrot.slane %v9277, %v9283
        %v9285 = vcombine.low %v9268, %v9276
        %v9287 = vunpack.c.l.s4 1934713408
        %v9288 = vunpack.c.0.s8 %v9287
        %v9289 = vlaneseq
        %v9290 = vshrl.u32 %v9289, 7
        %v9291 = vsub.s32 %v9288, %v9290
        %v9292 = vrot.slane %v9285, %v9291
        %v9293 = vcombine.low %v9284, %v9292
        %v9294 = vcombine.high %v9284, %v9292
        %v9295 = vcombine.low %v8293, %v8300
        %v9297 = vunpack.c.l.s4 1983009808
        %v9298 = vunpack.c.0.s8 %v9297
        %v9299 = vlaneseq
        %v9300 = vshrl.u32 %v9299, 7
        %v9301 = vsub.s32 %v9298, %v9300
        %v9302 = vrot.slane %v9295, %v9301
        %v9303 = vcombine.low %v8317, %v8318
        %v9305 = vunpack.c.l.s4 1983009808
        %v9306 = vunpack.c.0.s8 %v9305
        %v9307 = vlaneseq
        %v9308 = vshrl.u32 %v9307, 7
        %v9309 = vsub.s32 %v9306, %v9308
        %v9310 = vrot.slane %v9303, %v9309
        %v9311 = vcombine.low %v8309, %v8316
        %v9313 = vunpack.c.l.s4 1983009808
        %v9314 = vunpack.c.0.s8 %v9313
        %v9315 = vlaneseq
        %v9316 = vshrl.u32 %v9315, 7
        %v9317 = vsub.s32 %v9314, %v9316
        %v9318 = vrot.slane %v9311, %v9317
        %v9319 = vcombine.low %v8319, %v8320
        %v9321 = vunpack.c.l.s4 1983009808
        %v9322 = vunpack.c.0.s8 %v9321
        %v9323 = vlaneseq
        %v9324 = vshrl.u32 %v9323, 7
        %v9325 = vsub.s32 %v9322, %v9324
        %v9326 = vrot.slane %v9319, %v9325
        %v9327 = vcombine.low %v9302, %v9310
        %v9329 = vunpack.c.l.s4 1934713408
        %v9330 = vunpack.c.0.s8 %v9329
        %v9331 = vlaneseq
        %v9332 = vshrl.u32 %v9331, 7
        %v9333 = vsub.s32 %v9330, %v9332
        %v9334 = vrot.slane %v9327, %v9333
        %v9335 = vcombine.low %v9318, %v9326
        %v9337 = vunpack.c.l.s4 1934713408
        %v9338 = vunpack.c.0.s8 %v9337
        %v9339 = vlaneseq
        %v9340 = vshrl.u32 %v9339, 7
        %v9341 = vsub.s32 %v9338, %v9340
        %v9342 = vrot.slane %v9335, %v9341
        %v9343 = vcombine.low %v9334, %v9342
        %v9344 = vcombine.high %v9334, %v9342
        %v9345 = vcombine.low %v8359, %v8366
        %v9347 = vunpack.c.l.s4 1983009808
        %v9348 = vunpack.c.0.s8 %v9347
        %v9349 = vlaneseq
        %v9350 = vshrl.u32 %v9349, 7
        %v9351 = vsub.s32 %v9348, %v9350
        %v9352 = vrot.slane %v9345, %v9351
        %v9353 = vcombine.low %v8383, %v8384
        %v9355 = vunpack.c.l.s4 1983009808
        %v9356 = vunpack.c.0.s8 %v9355
        %v9357 = vlaneseq
        %v9358 = vshrl.u32 %v9357, 7
        %v9359 = vsub.s32 %v9356, %v9358
        %v9360 = vrot.slane %v9353, %v9359
        %v9361 = vcombine.low %v8375, %v8382
        %v9363 = vunpack.c.l.s4 1983009808
        %v9364 = vunpack.c.0.s8 %v9363
        %v9365 = vlaneseq
        %v9366 = vshrl.u32 %v9365, 7
        %v9367 = vsub.s32 %v9364, %v9366
        %v9368 = vrot.slane %v9361, %v9367
        %v9369 = vcombine.low %v8385, %v8386
        %v9371 = vunpack.c.l.s4 1983009808
        %v9372 = vunpack.c.0.s8 %v9371
        %v9373 = vlaneseq
        %v9374 = vshrl.u32 %v9373, 7
        %v9375 = vsub.s32 %v9372, %v9374
        %v9376 = vrot.slane %v9369, %v9375
        %v9377 = vcombine.low %v9352, %v9360
        %v9379 = vunpack.c.l.s4 1934713408
        %v9380 = vunpack.c.0.s8 %v9379
        %v9381 = vlaneseq
        %v9382 = vshrl.u32 %v9381, 7
        %v9383 = vsub.s32 %v9380, %v9382
        %v9384 = vrot.slane %v9377, %v9383
        %v9385 = vcombine.low %v9368, %v9376
        %v9387 = vunpack.c.l.s4 1934713408
        %v9388 = vunpack.c.0.s8 %v9387
        %v9389 = vlaneseq
        %v9390 = vshrl.u32 %v9389, 7
        %v9391 = vsub.s32 %v9388, %v9390
        %v9392 = vrot.slane %v9385, %v9391
        %v9393 = vcombine.low %v9384, %v9392
        %v9394 = vcombine.high %v9384, %v9392
        %v9395 = vcombine.low %v8425, %v8432
        %v9397 = vunpack.c.l.s4 1983009808
        %v9398 = vunpack.c.0.s8 %v9397
        %v9399 = vlaneseq
        %v9400 = vshrl.u32 %v9399, 7
        %v9401 = vsub.s32 %v9398, %v9400
        %v9402 = vrot.slane %v9395, %v9401
        %v9403 = vcombine.low %v8449, %v8450
        %v9405 = vunpack.c.l.s4 1983009808
        %v9406 = vunpack.c.0.s8 %v9405
        %v9407 = vlaneseq
        %v9408 = vshrl.u32 %v9407, 7
        %v9409 = vsub.s32 %v9406, %v9408
        %v9410 = vrot.slane %v9403, %v9409
        %v9411 = vcombine.low %v8441, %v8448
        %v9413 = vunpack.c.l.s4 1983009808
        %v9414 = vunpack.c.0.s8 %v9413
        %v9415 = vlaneseq
        %v9416 = vshrl.u32 %v9415, 7
        %v9417 = vsub.s32 %v9414, %v9416
        %v9418 = vrot.slane %v9411, %v9417
        %v9419 = vcombine.low %v8451, %v8452
        %v9421 = vunpack.c.l.s4 1983009808
        %v9422 = vunpack.c.0.s8 %v9421
        %v9423 = vlaneseq
        %v9424 = vshrl.u32 %v9423, 7
        %v9425 = vsub.s32 %v9422, %v9424
        %v9426 = vrot.slane %v9419, %v9425
        %v9427 = vcombine.low %v9402, %v9410
        %v9429 = vunpack.c.l.s4 1934713408
        %v9430 = vunpack.c.0.s8 %v9429
        %v9431 = vlaneseq
        %v9432 = vshrl.u32 %v9431, 7
        %v9433 = vsub.s32 %v9430, %v9432
        %v9434 = vrot.slane %v9427, %v9433
        %v9435 = vcombine.low %v9418, %v9426
        %v9437 = vunpack.c.l.s4 1934713408
        %v9438 = vunpack.c.0.s8 %v9437
        %v9439 = vlaneseq
        %v9440 = vshrl.u32 %v9439, 7
        %v9441 = vsub.s32 %v9438, %v9440
        %v9442 = vrot.slane %v9435, %v9441
        %v9443 = vcombine.low %v9434, %v9442
        %v9444 = vcombine.high %v9434, %v9442
        %v9445 = vcombine.low %v8491, %v8498
        %v9447 = vunpack.c.l.s4 1983009808
        %v9448 = vunpack.c.0.s8 %v9447
        %v9449 = vlaneseq
        %v9450 = vshrl.u32 %v9449, 7
        %v9451 = vsub.s32 %v9448, %v9450
        %v9452 = vrot.slane %v9445, %v9451
        %v9453 = vcombine.low %v8515, %v8516
        %v9455 = vunpack.c.l.s4 1983009808
        %v9456 = vunpack.c.0.s8 %v9455
        %v9457 = vlaneseq
        %v9458 = vshrl.u32 %v9457, 7
        %v9459 = vsub.s32 %v9456, %v9458
        %v9460 = vrot.slane %v9453, %v9459
        %v9461 = vcombine.low %v8507, %v8514
        %v9463 = vunpack.c.l.s4 1983009808
        %v9464 = vunpack.c.0.s8 %v9463
        %v9465 = vlaneseq
        %v9466 = vshrl.u32 %v9465, 7
        %v9467 = vsub.s32 %v9464, %v9466
        %v9468 = vrot.slane %v9461, %v9467
        %v9469 = vcombine.low %v8517, %v8518
        %v9471 = vunpack.c.l.s4 1983009808
        %v9472 = vunpack.c.0.s8 %v9471
        %v9473 = vlaneseq
        %v9474 = vshrl.u32 %v9473, 7
        %v9475 = vsub.s32 %v9472, %v9474
        %v9476 = vrot.slane %v9469, %v9475
        %v9477 = vcombine.low %v9452, %v9460
        %v9479 = vunpack.c.l.s4 1934713408
        %v9480 = vunpack.c.0.s8 %v9479
        %v9481 = vlaneseq
        %v9482 = vshrl.u32 %v9481, 7
        %v9483 = vsub.s32 %v9480, %v9482
        %v9484 = vrot.slane %v9477, %v9483
        %v9485 = vcombine.low %v9468, %v9476
        %v9487 = vunpack.c.l.s4 1934713408
        %v9488 = vunpack.c.0.s8 %v9487
        %v9489 = vlaneseq
        %v9490 = vshrl.u32 %v9489, 7
        %v9491 = vsub.s32 %v9488, %v9490
        %v9492 = vrot.slane %v9485, %v9491
        %v9493 = vcombine.low %v9484, %v9492
        %v9494 = vcombine.high %v9484, %v9492
        %v9495 = vcombine.low %v8557, %v8564
        %v9497 = vunpack.c.l.s4 1983009808
        %v9498 = vunpack.c.0.s8 %v9497
        %v9499 = vlaneseq
        %v9500 = vshrl.u32 %v9499, 7
        %v9501 = vsub.s32 %v9498, %v9500
        %v9502 = vrot.slane %v9495, %v9501
        %v9503 = vcombine.low %v8581, %v8582
        %v9505 = vunpack.c.l.s4 1983009808
        %v9506 = vunpack.c.0.s8 %v9505
        %v9507 = vlaneseq
        %v9508 = vshrl.u32 %v9507, 7
        %v9509 = vsub.s32 %v9506, %v9508
        %v9510 = vrot.slane %v9503, %v9509
        %v9511 = vcombine.low %v8573, %v8580
        %v9513 = vunpack.c.l.s4 1983009808
        %v9514 = vunpack.c.0.s8 %v9513
        %v9515 = vlaneseq
        %v9516 = vshrl.u32 %v9515, 7
        %v9517 = vsub.s32 %v9514, %v9516
        %v9518 = vrot.slane %v9511, %v9517
        %v9519 = vcombine.low %v8583, %v8584
        %v9521 = vunpack.c.l.s4 1983009808
        %v9522 = vunpack.c.0.s8 %v9521
        %v9523 = vlaneseq
        %v9524 = vshrl.u32 %v9523, 7
        %v9525 = vsub.s32 %v9522, %v9524
        %v9526 = vrot.slane %v9519, %v9525
        %v9527 = vcombine.low %v9502, %v9510
        %v9529 = vunpack.c.l.s4 1934713408
        %v9530 = vunpack.c.0.s8 %v9529
        %v9531 = vlaneseq
        %v9532 = vshrl.u32 %v9531, 7
        %v9533 = vsub.s32 %v9530, %v9532
        %v9534 = vrot.slane %v9527, %v9533
        %v9535 = vcombine.low %v9518, %v9526
        %v9537 = vunpack.c.l.s4 1934713408
        %v9538 = vunpack.c.0.s8 %v9537
        %v9539 = vlaneseq
        %v9540 = vshrl.u32 %v9539, 7
        %v9541 = vsub.s32 %v9538, %v9540
        %v9542 = vrot.slane %v9535, %v9541
        %v9543 = vcombine.low %v9534, %v9542
        %v9544 = vcombine.high %v9534, %v9542
        %v9545 = vcombine.low %v8623, %v8630
        %v9547 = vunpack.c.l.s4 1983009808
        %v9548 = vunpack.c.0.s8 %v9547
        %v9549 = vlaneseq
        %v9550 = vshrl.u32 %v9549, 7
        %v9551 = vsub.s32 %v9548, %v9550
        %v9552 = vrot.slane %v9545, %v9551
        %v9553 = vcombine.low %v8647, %v8648
        %v9555 = vunpack.c.l.s4 1983009808
        %v9556 = vunpack.c.0.s8 %v9555
        %v9557 = vlaneseq
        %v9558 = vshrl.u32 %v9557, 7
        %v9559 = vsub.s32 %v9556, %v9558
        %v9560 = vrot.slane %v9553, %v9559
        %v9561 = vcombine.low %v8639, %v8646
        %v9563 = vunpack.c.l.s4 1983009808
        %v9564 = vunpack.c.0.s8 %v9563
        %v9565 = vlaneseq
        %v9566 = vshrl.u32 %v9565, 7
        %v9567 = vsub.s32 %v9564, %v9566
        %v9568 = vrot.slane %v9561, %v9567
        %v9569 = vcombine.low %v8649, %v8650
        %v9571 = vunpack.c.l.s4 1983009808
        %v9572 = vunpack.c.0.s8 %v9571
        %v9573 = vlaneseq
        %v9574 = vshrl.u32 %v9573, 7
        %v9575 = vsub.s32 %v9572, %v9574
        %v9576 = vrot.slane %v9569, %v9575
        %v9577 = vcombine.low %v9552, %v9560
        %v9579 = vunpack.c.l.s4 1934713408
        %v9580 = vunpack.c.0.s8 %v9579
        %v9581 = vlaneseq
        %v9582 = vshrl.u32 %v9581, 7
        %v9583 = vsub.s32 %v9580, %v9582
        %v9584 = vrot.slane %v9577, %v9583
        %v9585 = vcombine.low %v9568, %v9576
        %v9587 = vunpack.c.l.s4 1934713408
        %v9588 = vunpack.c.0.s8 %v9587
        %v9589 = vlaneseq
        %v9590 = vshrl.u32 %v9589, 7
        %v9591 = vsub.s32 %v9588, %v9590
        %v9592 = vrot.slane %v9585, %v9591
        %v9593 = vcombine.low %v9584, %v9592
        %v9594 = vcombine.high %v9584, %v9592
        %v9595 = vcombine.low %v8689, %v8696
        %v9597 = vunpack.c.l.s4 1983009808
        %v9598 = vunpack.c.0.s8 %v9597
        %v9599 = vlaneseq
        %v9600 = vshrl.u32 %v9599, 7
        %v9601 = vsub.s32 %v9598, %v9600
        %v9602 = vrot.slane %v9595, %v9601
        %v9603 = vcombine.low %v8713, %v8714
        %v9605 = vunpack.c.l.s4 1983009808
        %v9606 = vunpack.c.0.s8 %v9605
        %v9607 = vlaneseq
        %v9608 = vshrl.u32 %v9607, 7
        %v9609 = vsub.s32 %v9606, %v9608
        %v9610 = vrot.slane %v9603, %v9609
        %v9611 = vcombine.low %v8705, %v8712
        %v9613 = vunpack.c.l.s4 1983009808
        %v9614 = vunpack.c.0.s8 %v9613
        %v9615 = vlaneseq
        %v9616 = vshrl.u32 %v9615, 7
        %v9617 = vsub.s32 %v9614, %v9616
        %v9618 = vrot.slane %v9611, %v9617
        %v9619 = vcombine.low %v8715, %v8716
        %v9621 = vunpack.c.l.s4 1983009808
        %v9622 = vunpack.c.0.s8 %v9621
        %v9623 = vlaneseq
        %v9624 = vshrl.u32 %v9623, 7
        %v9625 = vsub.s32 %v9622, %v9624
        %v9626 = vrot.slane %v9619, %v9625
        %v9627 = vcombine.low %v9602, %v9610
        %v9629 = vunpack.c.l.s4 1934713408
        %v9630 = vunpack.c.0.s8 %v9629
        %v9631 = vlaneseq
        %v9632 = vshrl.u32 %v9631, 7
        %v9633 = vsub.s32 %v9630, %v9632
        %v9634 = vrot.slane %v9627, %v9633
        %v9635 = vcombine.low %v9618, %v9626
        %v9637 = vunpack.c.l.s4 1934713408
        %v9638 = vunpack.c.0.s8 %v9637
        %v9639 = vlaneseq
        %v9640 = vshrl.u32 %v9639, 7
        %v9641 = vsub.s32 %v9638, %v9640
        %v9642 = vrot.slane %v9635, %v9641
        %v9643 = vcombine.low %v9634, %v9642
        %v9644 = vcombine.high %v9634, %v9642
        %v9645 = vcombine.low %v8755, %v8762
        %v9647 = vunpack.c.l.s4 1983009808
        %v9648 = vunpack.c.0.s8 %v9647
        %v9649 = vlaneseq
        %v9650 = vshrl.u32 %v9649, 7
        %v9651 = vsub.s32 %v9648, %v9650
        %v9652 = vrot.slane %v9645, %v9651
        %v9653 = vcombine.low %v8779, %v8780
        %v9655 = vunpack.c.l.s4 1983009808
        %v9656 = vunpack.c.0.s8 %v9655
        %v9657 = vlaneseq
        %v9658 = vshrl.u32 %v9657, 7
        %v9659 = vsub.s32 %v9656, %v9658
        %v9660 = vrot.slane %v9653, %v9659
        %v9661 = vcombine.low %v8771, %v8778
        %v9663 = vunpack.c.l.s4 1983009808
        %v9664 = vunpack.c.0.s8 %v9663
        %v9665 = vlaneseq
        %v9666 = vshrl.u32 %v9665, 7
        %v9667 = vsub.s32 %v9664, %v9666
        %v9668 = vrot.slane %v9661, %v9667
        %v9669 = vcombine.low %v8781, %v8782
        %v9671 = vunpack.c.l.s4 1983009808
        %v9672 = vunpack.c.0.s8 %v9671
        %v9673 = vlaneseq
        %v9674 = vshrl.u32 %v9673, 7
        %v9675 = vsub.s32 %v9672, %v9674
        %v9676 = vrot.slane %v9669, %v9675
        %v9677 = vcombine.low %v9652, %v9660
        %v9679 = vunpack.c.l.s4 1934713408
        %v9680 = vunpack.c.0.s8 %v9679
        %v9681 = vlaneseq
        %v9682 = vshrl.u32 %v9681, 7
        %v9683 = vsub.s32 %v9680, %v9682
        %v9684 = vrot.slane %v9677, %v9683
        %v9685 = vcombine.low %v9668, %v9676
        %v9687 = vunpack.c.l.s4 1934713408
        %v9688 = vunpack.c.0.s8 %v9687
        %v9689 = vlaneseq
        %v9690 = vshrl.u32 %v9689, 7
        %v9691 = vsub.s32 %v9688, %v9690
        %v9692 = vrot.slane %v9685, %v9691
        %v9693 = vcombine.low %v9684, %v9692
        %v9694 = vcombine.high %v9684, %v9692
        %v9695 = vcombine.low %v8821, %v8828
        %v9697 = vunpack.c.l.s4 1983009808
        %v9698 = vunpack.c.0.s8 %v9697
        %v9699 = vlaneseq
        %v9700 = vshrl.u32 %v9699, 7
        %v9701 = vsub.s32 %v9698, %v9700
        %v9702 = vrot.slane %v9695, %v9701
        %v9703 = vcombine.low %v8845, %v8846
        %v9705 = vunpack.c.l.s4 1983009808
        %v9706 = vunpack.c.0.s8 %v9705
        %v9707 = vlaneseq
        %v9708 = vshrl.u32 %v9707, 7
        %v9709 = vsub.s32 %v9706, %v9708
        %v9710 = vrot.slane %v9703, %v9709
        %v9711 = vcombine.low %v8837, %v8844
        %v9713 = vunpack.c.l.s4 1983009808
        %v9714 = vunpack.c.0.s8 %v9713
        %v9715 = vlaneseq
        %v9716 = vshrl.u32 %v9715, 7
        %v9717 = vsub.s32 %v9714, %v9716
        %v9718 = vrot.slane %v9711, %v9717
        %v9719 = vcombine.low %v8847, %v8848
        %v9721 = vunpack.c.l.s4 1983009808
        %v9722 = vunpack.c.0.s8 %v9721
        %v9723 = vlaneseq
        %v9724 = vshrl.u32 %v9723, 7
        %v9725 = vsub.s32 %v9722, %v9724
        %v9726 = vrot.slane %v9719, %v9725
        %v9727 = vcombine.low %v9702, %v9710
        %v9729 = vunpack.c.l.s4 1934713408
        %v9730 = vunpack.c.0.s8 %v9729
        %v9731 = vlaneseq
        %v9732 = vshrl.u32 %v9731, 7
        %v9733 = vsub.s32 %v9730, %v9732
        %v9734 = vrot.slane %v9727, %v9733
        %v9735 = vcombine.low %v9718, %v9726
        %v9737 = vunpack.c.l.s4 1934713408
        %v9738 = vunpack.c.0.s8 %v9737
        %v9739 = vlaneseq
        %v9740 = vshrl.u32 %v9739, 7
        %v9741 = vsub.s32 %v9738, %v9740
        %v9742 = vrot.slane %v9735, %v9741
        %v9743 = vcombine.low %v9734, %v9742
        %v9744 = vcombine.high %v9734, %v9742
        %v9745 = vcombine.low %v8887, %v8894
        %v9747 = vunpack.c.l.s4 1983009808
        %v9748 = vunpack.c.0.s8 %v9747
        %v9749 = vlaneseq
        %v9750 = vshrl.u32 %v9749, 7
        %v9751 = vsub.s32 %v9748, %v9750
        %v9752 = vrot.slane %v9745, %v9751
        %v9753 = vcombine.low %v8911, %v8912
        %v9755 = vunpack.c.l.s4 1983009808
        %v9756 = vunpack.c.0.s8 %v9755
        %v9757 = vlaneseq
        %v9758 = vshrl.u32 %v9757, 7
        %v9759 = vsub.s32 %v9756, %v9758
        %v9760 = vrot.slane %v9753, %v9759
        %v9761 = vcombine.low %v8903, %v8910
        %v9763 = vunpack.c.l.s4 1983009808
        %v9764 = vunpack.c.0.s8 %v9763
        %v9765 = vlaneseq
        %v9766 = vshrl.u32 %v9765, 7
        %v9767 = vsub.s32 %v9764, %v9766
        %v9768 = vrot.slane %v9761, %v9767
        %v9769 = vcombine.low %v8913, %v8914
        %v9771 = vunpack.c.l.s4 1983009808
        %v9772 = vunpack.c.0.s8 %v9771
        %v9773 = vlaneseq
        %v9774 = vshrl.u32 %v9773, 7
        %v9775 = vsub.s32 %v9772, %v9774
        %v9776 = vrot.slane %v9769, %v9775
        %v9777 = vcombine.low %v9752, %v9760
        %v9779 = vunpack.c.l.s4 1934713408
        %v9780 = vunpack.c.0.s8 %v9779
        %v9781 = vlaneseq
        %v9782 = vshrl.u32 %v9781, 7
        %v9783 = vsub.s32 %v9780, %v9782
        %v9784 = vrot.slane %v9777, %v9783
        %v9785 = vcombine.low %v9768, %v9776
        %v9787 = vunpack.c.l.s4 1934713408
        %v9788 = vunpack.c.0.s8 %v9787
        %v9789 = vlaneseq
        %v9790 = vshrl.u32 %v9789, 7
        %v9791 = vsub.s32 %v9788, %v9790
        %v9792 = vrot.slane %v9785, %v9791
        %v9793 = vcombine.low %v9784, %v9792
        %v9794 = vcombine.high %v9784, %v9792
        %v9795 = vcombine.low %v8953, %v8960
        %v9797 = vunpack.c.l.s4 1983009808
        %v9798 = vunpack.c.0.s8 %v9797
        %v9799 = vlaneseq
        %v9800 = vshrl.u32 %v9799, 7
        %v9801 = vsub.s32 %v9798, %v9800
        %v9802 = vrot.slane %v9795, %v9801
        %v9803 = vcombine.low %v8977, %v8978
        %v9805 = vunpack.c.l.s4 1983009808
        %v9806 = vunpack.c.0.s8 %v9805
        %v9807 = vlaneseq
        %v9808 = vshrl.u32 %v9807, 7
        %v9809 = vsub.s32 %v9806, %v9808
        %v9810 = vrot.slane %v9803, %v9809
        %v9811 = vcombine.low %v8969, %v8976
        %v9813 = vunpack.c.l.s4 1983009808
        %v9814 = vunpack.c.0.s8 %v9813
        %v9815 = vlaneseq
        %v9816 = vshrl.u32 %v9815, 7
        %v9817 = vsub.s32 %v9814, %v9816
        %v9818 = vrot.slane %v9811, %v9817
        %v9819 = vcombine.low %v8979, %v8980
        %v9821 = vunpack.c.l.s4 1983009808
        %v9822 = vunpack.c.0.s8 %v9821
        %v9823 = vlaneseq
        %v9824 = vshrl.u32 %v9823, 7
        %v9825 = vsub.s32 %v9822, %v9824
        %v9826 = vrot.slane %v9819, %v9825
        %v9827 = vcombine.low %v9802, %v9810
        %v9829 = vunpack.c.l.s4 1934713408
        %v9830 = vunpack.c.0.s8 %v9829
        %v9831 = vlaneseq
        %v9832 = vshrl.u32 %v9831, 7
        %v9833 = vsub.s32 %v9830, %v9832
        %v9834 = vrot.slane %v9827, %v9833
        %v9835 = vcombine.low %v9818, %v9826
        %v9837 = vunpack.c.l.s4 1934713408
        %v9838 = vunpack.c.0.s8 %v9837
        %v9839 = vlaneseq
        %v9840 = vshrl.u32 %v9839, 7
        %v9841 = vsub.s32 %v9838, %v9840
        %v9842 = vrot.slane %v9835, %v9841
        %v9843 = vcombine.low %v9834, %v9842
        %v9844 = vcombine.high %v9834, %v9842
        %v9845 = vcombine.low %v9019, %v9026
        %v9847 = vunpack.c.l.s4 1983009808
        %v9848 = vunpack.c.0.s8 %v9847
        %v9849 = vlaneseq
        %v9850 = vshrl.u32 %v9849, 7
        %v9851 = vsub.s32 %v9848, %v9850
        %v9852 = vrot.slane %v9845, %v9851
        %v9853 = vcombine.low %v9043, %v9044
        %v9855 = vunpack.c.l.s4 1983009808
        %v9856 = vunpack.c.0.s8 %v9855
        %v9857 = vlaneseq
        %v9858 = vshrl.u32 %v9857, 7
        %v9859 = vsub.s32 %v9856, %v9858
        %v9860 = vrot.slane %v9853, %v9859
        %v9861 = vcombine.low %v9035, %v9042
        %v9863 = vunpack.c.l.s4 1983009808
        %v9864 = vunpack.c.0.s8 %v9863
        %v9865 = vlaneseq
        %v9866 = vshrl.u32 %v9865, 7
        %v9867 = vsub.s32 %v9864, %v9866
        %v9868 = vrot.slane %v9861, %v9867
        %v9869 = vcombine.low %v9045, %v9046
        %v9871 = vunpack.c.l.s4 1983009808
        %v9872 = vunpack.c.0.s8 %v9871
        %v9873 = vlaneseq
        %v9874 = vshrl.u32 %v9873, 7
        %v9875 = vsub.s32 %v9872, %v9874
        %v9876 = vrot.slane %v9869, %v9875
        %v9877 = vcombine.low %v9852, %v9860
        %v9879 = vunpack.c.l.s4 1934713408
        %v9880 = vunpack.c.0.s8 %v9879
        %v9881 = vlaneseq
        %v9882 = vshrl.u32 %v9881, 7
        %v9883 = vsub.s32 %v9880, %v9882
        %v9884 = vrot.slane %v9877, %v9883
        %v9885 = vcombine.low %v9868, %v9876
        %v9887 = vunpack.c.l.s4 1934713408
        %v9888 = vunpack.c.0.s8 %v9887
        %v9889 = vlaneseq
        %v9890 = vshrl.u32 %v9889, 7
        %v9891 = vsub.s32 %v9888, %v9890
        %v9892 = vrot.slane %v9885, %v9891
        %v9893 = vcombine.low %v9884, %v9892
        %v9894 = vcombine.high %v9884, %v9892
        %v9895 = vcombine.low %v9085, %v9092
        %v9897 = vunpack.c.l.s4 1983009808
        %v9898 = vunpack.c.0.s8 %v9897
        %v9899 = vlaneseq
        %v9900 = vshrl.u32 %v9899, 7
        %v9901 = vsub.s32 %v9898, %v9900
        %v9902 = vrot.slane %v9895, %v9901
        %v9903 = vcombine.low %v9109, %v9110
        %v9905 = vunpack.c.l.s4 1983009808
        %v9906 = vunpack.c.0.s8 %v9905
        %v9907 = vlaneseq
        %v9908 = vshrl.u32 %v9907, 7
        %v9909 = vsub.s32 %v9906, %v9908
        %v9910 = vrot.slane %v9903, %v9909
        %v9911 = vcombine.low %v9101, %v9108
        %v9913 = vunpack.c.l.s4 1983009808
        %v9914 = vunpack.c.0.s8 %v9913
        %v9915 = vlaneseq
        %v9916 = vshrl.u32 %v9915, 7
        %v9917 = vsub.s32 %v9914, %v9916
        %v9918 = vrot.slane %v9911, %v9917
        %v9919 = vcombine.low %v9111, %v9112
        %v9921 = vunpack.c.l.s4 1983009808
        %v9922 = vunpack.c.0.s8 %v9921
        %v9923 = vlaneseq
        %v9924 = vshrl.u32 %v9923, 7
        %v9925 = vsub.s32 %v9922, %v9924
        %v9926 = vrot.slane %v9919, %v9925
        %v9927 = vcombine.low %v9902, %v9910
        %v9929 = vunpack.c.l.s4 1934713408
        %v9930 = vunpack.c.0.s8 %v9929
        %v9931 = vlaneseq
        %v9932 = vshrl.u32 %v9931, 7
        %v9933 = vsub.s32 %v9930, %v9932
        %v9934 = vrot.slane %v9927, %v9933
        %v9935 = vcombine.low %v9918, %v9926
        %v9937 = vunpack.c.l.s4 1934713408
        %v9938 = vunpack.c.0.s8 %v9937
        %v9939 = vlaneseq
        %v9940 = vshrl.u32 %v9939, 7
        %v9941 = vsub.s32 %v9938, %v9940
        %v9942 = vrot.slane %v9935, %v9941
        %v9943 = vcombine.low %v9934, %v9942
        %v9944 = vcombine.high %v9934, %v9942
        %v9945 = vcombine.low %v9151, %v9158
        %v9947 = vunpack.c.l.s4 1983009808
        %v9948 = vunpack.c.0.s8 %v9947
        %v9949 = vlaneseq
        %v9950 = vshrl.u32 %v9949, 7
        %v9951 = vsub.s32 %v9948, %v9950
        %v9952 = vrot.slane %v9945, %v9951
        %v9953 = vcombine.low %v9175, %v9176
        %v9955 = vunpack.c.l.s4 1983009808
        %v9956 = vunpack.c.0.s8 %v9955
        %v9957 = vlaneseq
        %v9958 = vshrl.u32 %v9957, 7
        %v9959 = vsub.s32 %v9956, %v9958
        %v9960 = vrot.slane %v9953, %v9959
        %v9961 = vcombine.low %v9167, %v9174
        %v9963 = vunpack.c.l.s4 1983009808
        %v9964 = vunpack.c.0.s8 %v9963
        %v9965 = vlaneseq
        %v9966 = vshrl.u32 %v9965, 7
        %v9967 = vsub.s32 %v9964, %v9966
        %v9968 = vrot.slane %v9961, %v9967
        %v9969 = vcombine.low %v9177, %v9178
        %v9971 = vunpack.c.l.s4 1983009808
        %v9972 = vunpack.c.0.s8 %v9971
        %v9973 = vlaneseq
        %v9974 = vshrl.u32 %v9973, 7
        %v9975 = vsub.s32 %v9972, %v9974
        %v9976 = vrot.slane %v9969, %v9975
        %v9977 = vcombine.low %v9952, %v9960
        %v9979 = vunpack.c.l.s4 1934713408
        %v9980 = vunpack.c.0.s8 %v9979
        %v9981 = vlaneseq
        %v9982 = vshrl.u32 %v9981, 7
        %v9983 = vsub.s32 %v9980, %v9982
        %v9984 = vrot.slane %v9977, %v9983
        %v9985 = vcombine.low %v9968, %v9976
        %v9987 = vunpack.c.l.s4 1934713408
        %v9988 = vunpack.c.0.s8 %v9987
        %v9989 = vlaneseq
        %v9990 = vshrl.u32 %v9989, 7
        %v9991 = vsub.s32 %v9988, %v9990
        %v9992 = vrot.slane %v9985, %v9991
        %v9993 = vcombine.low %v9984, %v9992
        %v9994 = vcombine.high %v9984, %v9992
        %v9995 = vcombine.low %v9217, %v9224
        %v9997 = vunpack.c.l.s4 1983009808
        %v9998 = vunpack.c.0.s8 %v9997
        %v9999 = vlaneseq
        %v10000 = vshrl.u32 %v9999, 7
        %v10001 = vsub.s32 %v9998, %v10000
        %v10002 = vrot.slane %v9995, %v10001
        %v10003 = vcombine.low %v9241, %v9242
        %v10005 = vunpack.c.l.s4 1983009808
        %v10006 = vunpack.c.0.s8 %v10005
        %v10007 = vlaneseq
        %v10008 = vshrl.u32 %v10007, 7
        %v10009 = vsub.s32 %v10006, %v10008
        %v10010 = vrot.slane %v10003, %v10009
        %v10011 = vcombine.low %v9233, %v9240
        %v10013 = vunpack.c.l.s4 1983009808
        %v10014 = vunpack.c.0.s8 %v10013
        %v10015 = vlaneseq
        %v10016 = vshrl.u32 %v10015, 7
        %v10017 = vsub.s32 %v10014, %v10016
        %v10018 = vrot.slane %v10011, %v10017
        %v10019 = vcombine.low %v9243, %v9244
        %v10021 = vunpack.c.l.s4 1983009808
        %v10022 = vunpack.c.0.s8 %v10021
        %v10023 = vlaneseq
        %v10024 = vshrl.u32 %v10023, 7
        %v10025 = vsub.s32 %v10022, %v10024
        %v10026 = vrot.slane %v10019, %v10025
        %v10027 = vcombine.low %v10002, %v10010
        %v10029 = vunpack.c.l.s4 1934713408
        %v10030 = vunpack.c.0.s8 %v10029
        %v10031 = vlaneseq
        %v10032 = vshrl.u32 %v10031, 7
        %v10033 = vsub.s32 %v10030, %v10032
        %v10034 = vrot.slane %v10027, %v10033
        %v10035 = vcombine.low %v10018, %v10026
        %v10037 = vunpack.c.l.s4 1934713408
        %v10038 = vunpack.c.0.s8 %v10037
        %v10039 = vlaneseq
        %v10040 = vshrl.u32 %v10039, 7
        %v10041 = vsub.s32 %v10038, %v10040
        %v10042 = vrot.slane %v10035, %v10041
        %v10043 = vcombine.low %v10034, %v10042
        %v10044 = vcombine.high %v10034, %v10042
        %v10045 = vld [vmem:[#allocation8] sm:$0xff]
        %v10046 = vld [vmem:[#allocation8 + $0x8] sm:$0xff]
        %v10047 = vld [vmem:[#allocation8 + $0x10] sm:$0xff]
        %v10048 = vld [vmem:[#allocation8 + $0x18] sm:$0xff]
        %v10049 = vld [vmem:[#allocation8 + $0x20] sm:$0xff]
        %v10050 = vld [vmem:[#allocation8 + $0x28] sm:$0xff]
        %v10051 = vld [vmem:[#allocation8 + $0x30] sm:$0xff]
        %v10052 = vld [vmem:[#allocation8 + $0x38] sm:$0xff]
        %v10053 = vld [vmem:[#allocation8 + $0x40] sm:$0xff]
        %v10054 = vld [vmem:[#allocation8 + $0x48] sm:$0xff]
        %v10055 = vld [vmem:[#allocation8 + $0x50] sm:$0xff]
        %v10056 = vld [vmem:[#allocation8 + $0x58] sm:$0xff]
        %v10057 = vld [vmem:[#allocation8 + $0x60] sm:$0xff]
        %v10058 = vld [vmem:[#allocation8 + $0x68] sm:$0xff]
        %v10059 = vld [vmem:[#allocation8 + $0x70] sm:$0xff]
        %v10060 = vld [vmem:[#allocation8 + $0x78] sm:$0xff]
        %v10061 = vld [vmem:[#allocation8 + $0x80] sm:$0xff]
        %v10062 = vld [vmem:[#allocation8 + $0x88] sm:$0xff]
        %v10063 = vld [vmem:[#allocation8 + $0x90] sm:$0xff]
        %v10064 = vld [vmem:[#allocation8 + $0x98] sm:$0xff]
        %v10065 = vld [vmem:[#allocation8 + $0xa0] sm:$0xff]
        %v10066 = vld [vmem:[#allocation8 + $0xa8] sm:$0xff]
        %v10067 = vld [vmem:[#allocation8 + $0xb0] sm:$0xff]
        %v10068 = vld [vmem:[#allocation8 + $0xb8] sm:$0xff]
        %v10069 = vld [vmem:[#allocation8 + $0xc0] sm:$0xff]
        %v10070 = vld [vmem:[#allocation8 + $0xc8] sm:$0xff]
        %v10071 = vld [vmem:[#allocation8 + $0xd0] sm:$0xff]
        %v10072 = vld [vmem:[#allocation8 + $0xd8] sm:$0xff]
        %v10073 = vld [vmem:[#allocation8 + $0xe0] sm:$0xff]
        %v10074 = vld [vmem:[#allocation8 + $0xe8] sm:$0xff]
        %v10075 = vld [vmem:[#allocation8 + $0xf0] sm:$0xff]
        %v10076 = vld [vmem:[#allocation8 + $0xf8] sm:$0xff]
        %v10077 = vld [vmem:[#allocation8 + $0x100] sm:$0xff]
        %v10078 = vld [vmem:[#allocation8 + $0x108] sm:$0xff]
        %v10079 = vld [vmem:[#allocation8 + $0x110] sm:$0xff]
        %v10080 = vld [vmem:[#allocation8 + $0x118] sm:$0xff]
        %v10081 = vld [vmem:[#allocation8 + $0x120] sm:$0xff]
        %v10082 = vld [vmem:[#allocation8 + $0x128] sm:$0xff]
        %v10083 = vld [vmem:[#allocation8 + $0x130] sm:$0xff]
        %v10084 = vld [vmem:[#allocation8 + $0x138] sm:$0xff]
        %v10085 = vld [vmem:[#allocation8 + $0x140] sm:$0xff]
        %v10086 = vld [vmem:[#allocation8 + $0x148] sm:$0xff]
        %v10087 = vld [vmem:[#allocation8 + $0x150] sm:$0xff]
        %v10088 = vld [vmem:[#allocation8 + $0x158] sm:$0xff]
        %v10089 = vld [vmem:[#allocation8 + $0x160] sm:$0xff]
        %v10090 = vld [vmem:[#allocation8 + $0x168] sm:$0xff]
        %v10091 = vld [vmem:[#allocation8 + $0x170] sm:$0xff]
        %v10092 = vld [vmem:[#allocation8 + $0x178] sm:$0xff]
        %v10093 = vld [vmem:[#allocation8 + $0x180] sm:$0xff]
        %v10094 = vld [vmem:[#allocation8 + $0x188] sm:$0xff]
        %v10095 = vld [vmem:[#allocation8 + $0x190] sm:$0xff]
        %v10096 = vld [vmem:[#allocation8 + $0x198] sm:$0xff]
        %v10097 = vld [vmem:[#allocation8 + $0x1a0] sm:$0xff]
        %v10098 = vld [vmem:[#allocation8 + $0x1a8] sm:$0xff]
        %v10099 = vld [vmem:[#allocation8 + $0x1b0] sm:$0xff]
        %v10100 = vld [vmem:[#allocation8 + $0x1b8] sm:$0xff]
        %v10101 = vld [vmem:[#allocation8 + $0x1c0] sm:$0xff]
        %v10102 = vld [vmem:[#allocation8 + $0x1c8] sm:$0xff]
        %v10103 = vld [vmem:[#allocation8 + $0x1d0] sm:$0xff]
        %v10104 = vld [vmem:[#allocation8 + $0x1d8] sm:$0xff]
        %v10105 = vld [vmem:[#allocation8 + $0x1e0] sm:$0xff]
        %v10106 = vld [vmem:[#allocation8 + $0x1e8] sm:$0xff]
        %v10107 = vld [vmem:[#allocation8 + $0x1f0] sm:$0xff]
        %v10108 = vld [vmem:[#allocation8 + $0x1f8] sm:$0xff]
        %10109 = vmatprep.subr.mxu0 %v10046
        %10110 = vmatpush1.msra.mxu0 %v10045
        %10111 = vmatprep.subr.mxu0 %v10048
        %10112 = vmatpush1.msra.mxu0 %v10047
        %10113 = vmatprep.subr.mxu0 %v10050
        %10114 = vmatpush1.msra.mxu0 %v10049
        %10115 = vmatprep.subr.mxu0 %v10052
        %10116 = vmatpush1.msra.mxu0 %v10051
        %10117 = vmatprep.subr.mxu0 %v10054
        %10118 = vmatpush1.msra.mxu0 %v10053
        %10119 = vmatprep.subr.mxu0 %v10056
        %10120 = vmatpush1.msra.mxu0 %v10055
        %10121 = vmatprep.subr.mxu0 %v10058
        %10122 = vmatpush1.msra.mxu0 %v10057
        %10123 = vmatprep.subr.mxu0 %v10060
        %10124 = vmatpush1.msra.mxu0 %v10059
        %10125 = vmatprep.subr.mxu0 %v10062
        %10126 = vmatpush1.msra.mxu0 %v10061
        %10127 = vmatprep.subr.mxu0 %v10064
        %10128 = vmatpush1.msra.mxu0 %v10063
        %10129 = vmatprep.subr.mxu0 %v10066
        %10130 = vmatpush1.msra.mxu0 %v10065
        %10131 = vmatprep.subr.mxu0 %v10068
        %10132 = vmatpush1.msra.mxu0 %v10067
        %10133 = vmatprep.subr.mxu0 %v10070
        %10134 = vmatpush1.msra.mxu0 %v10069
        %10135 = vmatprep.subr.mxu0 %v10072
        %10136 = vmatpush1.msra.mxu0 %v10071
        %10137 = vmatprep.subr.mxu0 %v10074
        %10138 = vmatpush1.msra.mxu0 %v10073
        %10139 = vmatprep.subr.mxu0 %v10076
        %10140 = vmatpush1.msra.mxu0 %v10075
        %10141 = vmatprep.subr.mxu0 %v10078
        %10142 = vmatpush1.msra.mxu0 %v10077
        %10143 = vmatprep.subr.mxu0 %v10080
        %10144 = vmatpush1.msra.mxu0 %v10079
        %10145 = vmatprep.subr.mxu0 %v10082
        %10146 = vmatpush1.msra.mxu0 %v10081
        %10147 = vmatprep.subr.mxu0 %v10084
        %10148 = vmatpush1.msra.mxu0 %v10083
        %10149 = vmatprep.subr.mxu0 %v10086
        %10150 = vmatpush1.msra.mxu0 %v10085
        %10151 = vmatprep.subr.mxu0 %v10088
        %10152 = vmatpush1.msra.mxu0 %v10087
        %10153 = vmatprep.subr.mxu0 %v10090
        %10154 = vmatpush1.msra.mxu0 %v10089
        %10155 = vmatprep.subr.mxu0 %v10092
        %10156 = vmatpush1.msra.mxu0 %v10091
        %10157 = vmatprep.subr.mxu0 %v10094
        %10158 = vmatpush1.msra.mxu0 %v10093
        %10159 = vmatprep.subr.mxu0 %v10096
        %10160 = vmatpush1.msra.mxu0 %v10095
        %10161 = vmatprep.subr.mxu0 %v10098
        %10162 = vmatpush1.msra.mxu0 %v10097
        %10163 = vmatprep.subr.mxu0 %v10100
        %10164 = vmatpush1.msra.mxu0 %v10099
        %10165 = vmatprep.subr.mxu0 %v10102
        %10166 = vmatpush1.msra.mxu0 %v10101
        %10167 = vmatprep.subr.mxu0 %v10104
        %10168 = vmatpush1.msra.mxu0 %v10103
        %10169 = vmatprep.subr.mxu0 %v10106
        %10170 = vmatpush1.msra.mxu0 %v10105
        %10171 = vmatprep.subr.mxu0 %v10108
        %10172 = vmatpush1.msra.mxu0 %v10107
        %10173 = vmatprep.mubr.f32.mxu0 %v9294
        %10174 = vmatmul.mubr.f32.gmra.mrb[0].mxu0 %v9293
        %v10175 = vpop.f32.mrb[0].mxu0
        %v10176 = vadd.f32 0.0, %v10175
        %v10177 = vpop.f32.mrb[0].mxu0
        %v10178 = vadd.f32 0.0, %v10177
        %10179 = vmatprep.mubr.f32.mxu0 %v9344
        %10180 = vmatmul.mubr.f32.gmra.mrb[0].mxu0 %v9343
        %v10181 = vpop.f32.mrb[0].mxu0
        %v10182 = vadd.f32 0.0, %v10181
        %v10183 = vpop.f32.mrb[0].mxu0
        %v10184 = vadd.f32 0.0, %v10183
        %10185 = vmatprep.mubr.f32.mxu0 %v9394
        %10186 = vmatmul.mubr.f32.gmra.mrb[0].mxu0 %v9393
        %v10187 = vpop.f32.mrb[0].mxu0
        %v10188 = vadd.f32 0.0, %v10187
        %v10189 = vpop.f32.mrb[0].mxu0
        %v10190 = vadd.f32 0.0, %v10189
        %10191 = vmatprep.mubr.f32.mxu0 %v9444
        %10192 = vmatmul.mubr.f32.gmra.mrb[0].mxu0 %v9443
        %v10193 = vpop.f32.mrb[0].mxu0
        %v10194 = vadd.f32 0.0, %v10193
        %v10195 = vpop.f32.mrb[0].mxu0
        %v10196 = vadd.f32 0.0, %v10195
        %10197 = vmatprep.mubr.f32.mxu0 %v9494
        %10198 = vmatmul.mubr.f32.gmra.mrb[0].mxu0 %v9493
        %v10199 = vpop.f32.mrb[0].mxu0
        %v10200 = vadd.f32 0.0, %v10199
        %v10201 = vpop.f32.mrb[0].mxu0
        %v10202 = vadd.f32 0.0, %v10201
        %10203 = vmatprep.mubr.f32.mxu0 %v9544
        %10204 = vmatmul.mubr.f32.gmra.mrb[0].mxu0 %v9543
        %v10205 = vpop.f32.mrb[0].mxu0
        %v10206 = vadd.f32 0.0, %v10205
        %v10207 = vpop.f32.mrb[0].mxu0
        %v10208 = vadd.f32 0.0, %v10207
        %10209 = vmatprep.mubr.f32.mxu0 %v9594
        %10210 = vmatmul.mubr.f32.gmra.mrb[0].mxu0 %v9593
        %v10211 = vpop.f32.mrb[0].mxu0
        %v10212 = vadd.f32 0.0, %v10211
        %v10213 = vpop.f32.mrb[0].mxu0
        %v10214 = vadd.f32 0.0, %v10213
        %10215 = vmatprep.mubr.f32.mxu0 %v9644
        %10216 = vmatmul.mubr.f32.gmra.mrb[0].mxu0 %v9643
        %v10217 = vpop.f32.mrb[0].mxu0
        %v10218 = vadd.f32 0.0, %v10217
        %v10219 = vpop.f32.mrb[0].mxu0
        %v10220 = vadd.f32 0.0, %v10219
        %10221 = vmatprep.mubr.f32.mxu0 %v9694
        %10222 = vmatmul.mubr.f32.gmra.mrb[0].mxu0 %v9693
        %v10223 = vpop.f32.mrb[0].mxu0
        %v10224 = vadd.f32 0.0, %v10223
        %v10225 = vpop.f32.mrb[0].mxu0
        %v10226 = vadd.f32 0.0, %v10225
        %10227 = vmatprep.mubr.f32.mxu0 %v9744
        %10228 = vmatmul.mubr.f32.gmra.mrb[0].mxu0 %v9743
        %v10229 = vpop.f32.mrb[0].mxu0
        %v10230 = vadd.f32 0.0, %v10229
        %v10231 = vpop.f32.mrb[0].mxu0
        %v10232 = vadd.f32 0.0, %v10231
        %10233 = vmatprep.mubr.f32.mxu0 %v9794
        %10234 = vmatmul.mubr.f32.gmra.mrb[0].mxu0 %v9793
        %v10235 = vpop.f32.mrb[0].mxu0
        %v10236 = vadd.f32 0.0, %v10235
        %v10237 = vpop.f32.mrb[0].mxu0
        %v10238 = vadd.f32 0.0, %v10237
        %10239 = vmatprep.mubr.f32.mxu0 %v9844
        %10240 = vmatmul.mubr.f32.gmra.mrb[0].mxu0 %v9843
        %v10241 = vpop.f32.mrb[0].mxu0
        %v10242 = vadd.f32 0.0, %v10241
        %v10243 = vpop.f32.mrb[0].mxu0
        %v10244 = vadd.f32 0.0, %v10243
        %10245 = vmatprep.mubr.f32.mxu0 %v9894
        %10246 = vmatmul.mubr.f32.gmra.mrb[0].mxu0 %v9893
        %v10247 = vpop.f32.mrb[0].mxu0
        %v10248 = vadd.f32 0.0, %v10247
        %v10249 = vpop.f32.mrb[0].mxu0
        %v10250 = vadd.f32 0.0, %v10249
        %10251 = vmatprep.mubr.f32.mxu0 %v9944
        %10252 = vmatmul.mubr.f32.gmra.mrb[0].mxu0 %v9943
        %v10253 = vpop.f32.mrb[0].mxu0
        %v10254 = vadd.f32 0.0, %v10253
        %v10255 = vpop.f32.mrb[0].mxu0
        %v10256 = vadd.f32 0.0, %v10255
        %10257 = vmatprep.mubr.f32.mxu0 %v9994
        %10258 = vmatmul.mubr.f32.gmra.mrb[0].mxu0 %v9993
        %v10259 = vpop.f32.mrb[0].mxu0
        %v10260 = vadd.f32 0.0, %v10259
        %v10261 = vpop.f32.mrb[0].mxu0
        %v10262 = vadd.f32 0.0, %v10261
        %10263 = vmatprep.mubr.f32.mxu0 %v10044
        %10264 = vmatmul.mubr.f32.gmra.mrb[0].mxu0 %v10043
        %v10265 = vpop.f32.mrb[0].mxu0
        %v10266 = vadd.f32 0.0, %v10265
        %v10267 = vpop.f32.mrb[0].mxu0
        %v10268 = vadd.f32 0.0, %v10267
        %10269 = vdwg.mxu0
        %v10270 = vadd.f32 %v517, %v10176
        %v10271 = vadd.f32 %v518, %v10178
        %v10272 = vadd.f32 %v519, %v10182
        %v10273 = vadd.f32 %v520, %v10184
        %v10274 = vadd.f32 %v521, %v10188
        %v10275 = vadd.f32 %v522, %v10190
        %v10276 = vadd.f32 %v523, %v10194
        %v10277 = vadd.f32 %v524, %v10196
        %v10278 = vadd.f32 %v525, %v10200
        %v10279 = vadd.f32 %v526, %v10202
        %v10280 = vadd.f32 %v527, %v10206
        %v10281 = vadd.f32 %v528, %v10208
        %v10282 = vadd.f32 %v529, %v10212
        %v10283 = vadd.f32 %v530, %v10214
        %v10284 = vadd.f32 %v531, %v10218
        %v10285 = vadd.f32 %v532, %v10220
        %v10286 = vadd.f32 %v533, %v10224
        %v10287 = vadd.f32 %v534, %v10226
        %v10288 = vadd.f32 %v535, %v10230
        %v10289 = vadd.f32 %v536, %v10232
        %v10290 = vadd.f32 %v537, %v10236
        %v10291 = vadd.f32 %v538, %v10238
        %v10292 = vadd.f32 %v539, %v10242
        %v10293 = vadd.f32 %v540, %v10244
        %v10294 = vadd.f32 %v541, %v10248
        %v10295 = vadd.f32 %v542, %v10250
        %v10296 = vadd.f32 %v543, %v10254
        %v10297 = vadd.f32 %v544, %v10256
        %v10298 = vadd.f32 %v545, %v10260
        %v10299 = vadd.f32 %v546, %v10262
        %v10300 = vadd.f32 %v547, %v10266
        %v10301 = vadd.f32 %v548, %v10268
        %v10302 = vld [vmem:[%s6] sm:$0x3]
        %v10303 = vld [vmem:[%s7] sm:$0x3]
        %v10304 = vadd.f32 %v10270, %v10271
        %10305 = vadd.xlane.f32.xlu0 %v10304
        %v10306 = vpop.xlane.xlu0 %10305
        %v10307 = vadd.f32 %v10272, %v10273
        %10308 = vadd.xlane.f32.xlu0 %v10307
        %v10309 = vpop.xlane.xlu0 %10308
        %v10310 = vadd.f32 %v10274, %v10275
        %10311 = vadd.xlane.f32.xlu0 %v10310
        %v10312 = vpop.xlane.xlu0 %10311
        %v10313 = vadd.f32 %v10276, %v10277
        %10314 = vadd.xlane.f32.xlu0 %v10313
        %v10315 = vpop.xlane.xlu0 %10314
        %v10316 = vadd.f32 %v10278, %v10279
        %10317 = vadd.xlane.f32.xlu0 %v10316
        %v10318 = vpop.xlane.xlu0 %10317
        %v10319 = vadd.f32 %v10280, %v10281
        %10320 = vadd.xlane.f32.xlu0 %v10319
        %v10321 = vpop.xlane.xlu0 %10320
        %v10322 = vadd.f32 %v10282, %v10283
        %10323 = vadd.xlane.f32.xlu0 %v10322
        %v10324 = vpop.xlane.xlu0 %10323
        %v10325 = vadd.f32 %v10284, %v10285
        %10326 = vadd.xlane.f32.xlu0 %v10325
        %v10327 = vpop.xlane.xlu0 %10326
        %v10328 = vadd.f32 %v10286, %v10287
        %10329 = vadd.xlane.f32.xlu0 %v10328
        %v10330 = vpop.xlane.xlu0 %10329
        %v10331 = vadd.f32 %v10288, %v10289
        %10332 = vadd.xlane.f32.xlu0 %v10331
        %v10333 = vpop.xlane.xlu0 %10332
        %v10334 = vadd.f32 %v10290, %v10291
        %10335 = vadd.xlane.f32.xlu0 %v10334
        %v10336 = vpop.xlane.xlu0 %10335
        %v10337 = vadd.f32 %v10292, %v10293
        %10338 = vadd.xlane.f32.xlu0 %v10337
        %v10339 = vpop.xlane.xlu0 %10338
        %v10340 = vadd.f32 %v10294, %v10295
        %10341 = vadd.xlane.f32.xlu0 %v10340
        %v10342 = vpop.xlane.xlu0 %10341
        %v10343 = vadd.f32 %v10296, %v10297
        %10344 = vadd.xlane.f32.xlu0 %v10343
        %v10345 = vpop.xlane.xlu0 %10344
        %v10346 = vadd.f32 %v10298, %v10299
        %10347 = vadd.xlane.f32.xlu0 %v10346
        %v10348 = vpop.xlane.xlu0 %10347
        %v10349 = vadd.f32 %v10300, %v10301
        %10350 = vadd.xlane.f32.xlu0 %v10349
        %v10351 = vpop.xlane.xlu0 %10350
        %v10352 = vmul.f32 %v10306, %v600
        %v10353 = vmul.f32 %v10309, %v600
        %v10354 = vmul.f32 %v10312, %v600
        %v10355 = vmul.f32 %v10315, %v600
        %v10356 = vmul.f32 %v10318, %v600
        %v10357 = vmul.f32 %v10321, %v600
        %v10358 = vmul.f32 %v10324, %v600
        %v10359 = vmul.f32 %v10327, %v600
        %v10360 = vmul.f32 %v10330, %v600
        %v10361 = vmul.f32 %v10333, %v600
        %v10362 = vmul.f32 %v10336, %v600
        %v10363 = vmul.f32 %v10339, %v600
        %v10364 = vmul.f32 %v10342, %v600
        %v10365 = vmul.f32 %v10345, %v600
        %v10366 = vmul.f32 %v10348, %v600
        %v10367 = vmul.f32 %v10351, %v600
        %v10368 = vsub.f32 %v10270, %v10352
        %v10369 = vsub.f32 %v10271, %v10352
        %v10370 = vsub.f32 %v10272, %v10353
        %v10371 = vsub.f32 %v10273, %v10353
        %v10372 = vsub.f32 %v10274, %v10354
        %v10373 = vsub.f32 %v10275, %v10354
        %v10374 = vsub.f32 %v10276, %v10355
        %v10375 = vsub.f32 %v10277, %v10355
        %v10376 = vsub.f32 %v10278, %v10356
        %v10377 = vsub.f32 %v10279, %v10356
        %v10378 = vsub.f32 %v10280, %v10357
        %v10379 = vsub.f32 %v10281, %v10357
        %v10380 = vsub.f32 %v10282, %v10358
        %v10381 = vsub.f32 %v10283, %v10358
        %v10382 = vsub.f32 %v10284, %v10359
        %v10383 = vsub.f32 %v10285, %v10359
        %v10384 = vsub.f32 %v10286, %v10360
        %v10385 = vsub.f32 %v10287, %v10360
        %v10386 = vsub.f32 %v10288, %v10361
        %v10387 = vsub.f32 %v10289, %v10361
        %v10388 = vsub.f32 %v10290, %v10362
        %v10389 = vsub.f32 %v10291, %v10362
        %v10390 = vsub.f32 %v10292, %v10363
        %v10391 = vsub.f32 %v10293, %v10363
        %v10392 = vsub.f32 %v10294, %v10364
        %v10393 = vsub.f32 %v10295, %v10364
        %v10394 = vsub.f32 %v10296, %v10365
        %v10395 = vsub.f32 %v10297, %v10365
        %v10396 = vsub.f32 %v10298, %v10366
        %v10397 = vsub.f32 %v10299, %v10366
        %v10398 = vsub.f32 %v10300, %v10367
        %v10399 = vsub.f32 %v10301, %v10367
        %v10400 = vmul.f32 %v10368, %v10368
        %v10401 = vmul.f32 %v10369, %v10369
        %v10402 = vmul.f32 %v10370, %v10370
        %v10403 = vmul.f32 %v10371, %v10371
        %v10404 = vmul.f32 %v10372, %v10372
        %v10405 = vmul.f32 %v10373, %v10373
        %v10406 = vmul.f32 %v10374, %v10374
        %v10407 = vmul.f32 %v10375, %v10375
        %v10408 = vmul.f32 %v10376, %v10376
        %v10409 = vmul.f32 %v10377, %v10377
        %v10410 = vmul.f32 %v10378, %v10378
        %v10411 = vmul.f32 %v10379, %v10379
        %v10412 = vmul.f32 %v10380, %v10380
        %v10413 = vmul.f32 %v10381, %v10381
        %v10414 = vmul.f32 %v10382, %v10382
        %v10415 = vmul.f32 %v10383, %v10383
        %v10416 = vmul.f32 %v10384, %v10384
        %v10417 = vmul.f32 %v10385, %v10385
        %v10418 = vmul.f32 %v10386, %v10386
        %v10419 = vmul.f32 %v10387, %v10387
        %v10420 = vmul.f32 %v10388, %v10388
        %v10421 = vmul.f32 %v10389, %v10389
        %v10422 = vmul.f32 %v10390, %v10390
        %v10423 = vmul.f32 %v10391, %v10391
        %v10424 = vmul.f32 %v10392, %v10392
        %v10425 = vmul.f32 %v10393, %v10393
        %v10426 = vmul.f32 %v10394, %v10394
        %v10427 = vmul.f32 %v10395, %v10395
        %v10428 = vmul.f32 %v10396, %v10396
        %v10429 = vmul.f32 %v10397, %v10397
        %v10430 = vmul.f32 %v10398, %v10398
        %v10431 = vmul.f32 %v10399, %v10399
        %v10432 = vadd.f32 %v10400, %v10401
        %10433 = vadd.xlane.f32.xlu0 %v10432
        %v10434 = vpop.xlane.xlu0 %10433
        %v10435 = vadd.f32 %v10402, %v10403
        %10436 = vadd.xlane.f32.xlu0 %v10435
        %v10437 = vpop.xlane.xlu0 %10436
        %v10438 = vadd.f32 %v10404, %v10405
        %10439 = vadd.xlane.f32.xlu0 %v10438
        %v10440 = vpop.xlane.xlu0 %10439
        %v10441 = vadd.f32 %v10406, %v10407
        %10442 = vadd.xlane.f32.xlu0 %v10441
        %v10443 = vpop.xlane.xlu0 %10442
        %v10444 = vadd.f32 %v10408, %v10409
        %10445 = vadd.xlane.f32.xlu0 %v10444
        %v10446 = vpop.xlane.xlu0 %10445
        %v10447 = vadd.f32 %v10410, %v10411
        %10448 = vadd.xlane.f32.xlu0 %v10447
        %v10449 = vpop.xlane.xlu0 %10448
        %v10450 = vadd.f32 %v10412, %v10413
        %10451 = vadd.xlane.f32.xlu0 %v10450
        %v10452 = vpop.xlane.xlu0 %10451
        %v10453 = vadd.f32 %v10414, %v10415
        %10454 = vadd.xlane.f32.xlu0 %v10453
        %v10455 = vpop.xlane.xlu0 %10454
        %v10456 = vadd.f32 %v10416, %v10417
        %10457 = vadd.xlane.f32.xlu0 %v10456
        %v10458 = vpop.xlane.xlu0 %10457
        %v10459 = vadd.f32 %v10418, %v10419
        %10460 = vadd.xlane.f32.xlu0 %v10459
        %v10461 = vpop.xlane.xlu0 %10460
        %v10462 = vadd.f32 %v10420, %v10421
        %10463 = vadd.xlane.f32.xlu0 %v10462
        %v10464 = vpop.xlane.xlu0 %10463
        %v10465 = vadd.f32 %v10422, %v10423
        %10466 = vadd.xlane.f32.xlu0 %v10465
        %v10467 = vpop.xlane.xlu0 %10466
        %v10468 = vadd.f32 %v10424, %v10425
        %10469 = vadd.xlane.f32.xlu0 %v10468
        %v10470 = vpop.xlane.xlu0 %10469
        %v10471 = vadd.f32 %v10426, %v10427
        %10472 = vadd.xlane.f32.xlu0 %v10471
        %v10473 = vpop.xlane.xlu0 %10472
        %v10474 = vadd.f32 %v10428, %v10429
        %10475 = vadd.xlane.f32.xlu0 %v10474
        %v10476 = vpop.xlane.xlu0 %10475
        %v10477 = vadd.f32 %v10430, %v10431
        %10478 = vadd.xlane.f32.xlu0 %v10477
        %v10479 = vpop.xlane.xlu0 %10478
        %v10480 = vmul.f32 %v10434, %v729
        %v10481 = vmul.f32 %v10437, %v729
        %v10482 = vmul.f32 %v10440, %v729
        %v10483 = vmul.f32 %v10443, %v729
        %v10484 = vmul.f32 %v10446, %v729
        %v10485 = vmul.f32 %v10449, %v729
        %v10486 = vmul.f32 %v10452, %v729
        %v10487 = vmul.f32 %v10455, %v729
        %v10488 = vmul.f32 %v10458, %v729
        %v10489 = vmul.f32 %v10461, %v729
        %v10490 = vmul.f32 %v10464, %v729
        %v10491 = vmul.f32 %v10467, %v729
        %v10492 = vmul.f32 %v10470, %v729
        %v10493 = vmul.f32 %v10473, %v729
        %v10494 = vmul.f32 %v10476, %v729
        %v10495 = vmul.f32 %v10479, %v729
        %v10496 = vrsqrt.pop %v10480
        %v10497 = vmul.f32 %v10480, %v10496
        %vm10498 = vcmp.eq.f32.partialorder %v10480, inf
        %v10499 = vsel %vm10498, %v10480, %v10497
        %vm10500 = vcmp.eq.f32.partialorder %v10480, 0.0
        %v10501 = vand.u32 %v10480, 2147483648
        %v10502 = vsel %vm10500, %v10501, %v10499
        %v10503 = vrsqrt.pop %v10481
        %v10504 = vmul.f32 %v10481, %v10503
        %vm10505 = vcmp.eq.f32.partialorder %v10481, inf
        %v10506 = vsel %vm10505, %v10481, %v10504
        %vm10507 = vcmp.eq.f32.partialorder %v10481, 0.0
        %v10508 = vand.u32 %v10481, 2147483648
        %v10509 = vsel %vm10507, %v10508, %v10506
        %v10510 = vrsqrt.pop %v10482
        %v10511 = vmul.f32 %v10482, %v10510
        %vm10512 = vcmp.eq.f32.partialorder %v10482, inf
        %v10513 = vsel %vm10512, %v10482, %v10511
        %vm10514 = vcmp.eq.f32.partialorder %v10482, 0.0
        %v10515 = vand.u32 %v10482, 2147483648
        %v10516 = vsel %vm10514, %v10515, %v10513
        %v10517 = vrsqrt.pop %v10483
        %v10518 = vmul.f32 %v10483, %v10517
        %vm10519 = vcmp.eq.f32.partialorder %v10483, inf
        %v10520 = vsel %vm10519, %v10483, %v10518
        %vm10521 = vcmp.eq.f32.partialorder %v10483, 0.0
        %v10522 = vand.u32 %v10483, 2147483648
        %v10523 = vsel %vm10521, %v10522, %v10520
        %v10524 = vrsqrt.pop %v10484
        %v10525 = vmul.f32 %v10484, %v10524
        %vm10526 = vcmp.eq.f32.partialorder %v10484, inf
        %v10527 = vsel %vm10526, %v10484, %v10525
        %vm10528 = vcmp.eq.f32.partialorder %v10484, 0.0
        %v10529 = vand.u32 %v10484, 2147483648
        %v10530 = vsel %vm10528, %v10529, %v10527
        %v10531 = vrsqrt.pop %v10485
        %v10532 = vmul.f32 %v10485, %v10531
        %vm10533 = vcmp.eq.f32.partialorder %v10485, inf
        %v10534 = vsel %vm10533, %v10485, %v10532
        %vm10535 = vcmp.eq.f32.partialorder %v10485, 0.0
        %v10536 = vand.u32 %v10485, 2147483648
        %v10537 = vsel %vm10535, %v10536, %v10534
        %v10538 = vrsqrt.pop %v10486
        %v10539 = vmul.f32 %v10486, %v10538
        %vm10540 = vcmp.eq.f32.partialorder %v10486, inf
        %v10541 = vsel %vm10540, %v10486, %v10539
        %vm10542 = vcmp.eq.f32.partialorder %v10486, 0.0
        %v10543 = vand.u32 %v10486, 2147483648
        %v10544 = vsel %vm10542, %v10543, %v10541
        %v10545 = vrsqrt.pop %v10487
        %v10546 = vmul.f32 %v10487, %v10545
        %vm10547 = vcmp.eq.f32.partialorder %v10487, inf
        %v10548 = vsel %vm10547, %v10487, %v10546
        %vm10549 = vcmp.eq.f32.partialorder %v10487, 0.0
        %v10550 = vand.u32 %v10487, 2147483648
        %v10551 = vsel %vm10549, %v10550, %v10548
        %v10552 = vrsqrt.pop %v10488
        %v10553 = vmul.f32 %v10488, %v10552
        %vm10554 = vcmp.eq.f32.partialorder %v10488, inf
        %v10555 = vsel %vm10554, %v10488, %v10553
        %vm10556 = vcmp.eq.f32.partialorder %v10488, 0.0
        %v10557 = vand.u32 %v10488, 2147483648
        %v10558 = vsel %vm10556, %v10557, %v10555
        %v10559 = vrsqrt.pop %v10489
        %v10560 = vmul.f32 %v10489, %v10559
        %vm10561 = vcmp.eq.f32.partialorder %v10489, inf
        %v10562 = vsel %vm10561, %v10489, %v10560
        %vm10563 = vcmp.eq.f32.partialorder %v10489, 0.0
        %v10564 = vand.u32 %v10489, 2147483648
        %v10565 = vsel %vm10563, %v10564, %v10562
        %v10566 = vrsqrt.pop %v10490
        %v10567 = vmul.f32 %v10490, %v10566
        %vm10568 = vcmp.eq.f32.partialorder %v10490, inf
        %v10569 = vsel %vm10568, %v10490, %v10567
        %vm10570 = vcmp.eq.f32.partialorder %v10490, 0.0
        %v10571 = vand.u32 %v10490, 2147483648
        %v10572 = vsel %vm10570, %v10571, %v10569
        %v10573 = vrsqrt.pop %v10491
        %v10574 = vmul.f32 %v10491, %v10573
        %vm10575 = vcmp.eq.f32.partialorder %v10491, inf
        %v10576 = vsel %vm10575, %v10491, %v10574
        %vm10577 = vcmp.eq.f32.partialorder %v10491, 0.0
        %v10578 = vand.u32 %v10491, 2147483648
        %v10579 = vsel %vm10577, %v10578, %v10576
        %v10580 = vrsqrt.pop %v10492
        %v10581 = vmul.f32 %v10492, %v10580
        %vm10582 = vcmp.eq.f32.partialorder %v10492, inf
        %v10583 = vsel %vm10582, %v10492, %v10581
        %vm10584 = vcmp.eq.f32.partialorder %v10492, 0.0
        %v10585 = vand.u32 %v10492, 2147483648
        %v10586 = vsel %vm10584, %v10585, %v10583
        %v10587 = vrsqrt.pop %v10493
        %v10588 = vmul.f32 %v10493, %v10587
        %vm10589 = vcmp.eq.f32.partialorder %v10493, inf
        %v10590 = vsel %vm10589, %v10493, %v10588
        %vm10591 = vcmp.eq.f32.partialorder %v10493, 0.0
        %v10592 = vand.u32 %v10493, 2147483648
        %v10593 = vsel %vm10591, %v10592, %v10590
        %v10594 = vrsqrt.pop %v10494
        %v10595 = vmul.f32 %v10494, %v10594
        %vm10596 = vcmp.eq.f32.partialorder %v10494, inf
        %v10597 = vsel %vm10596, %v10494, %v10595
        %vm10598 = vcmp.eq.f32.partialorder %v10494, 0.0
        %v10599 = vand.u32 %v10494, 2147483648
        %v10600 = vsel %vm10598, %v10599, %v10597
        %v10601 = vrsqrt.pop %v10495
        %v10602 = vmul.f32 %v10495, %v10601
        %vm10603 = vcmp.eq.f32.partialorder %v10495, inf
        %v10604 = vsel %vm10603, %v10495, %v10602
        %vm10605 = vcmp.eq.f32.partialorder %v10495, 0.0
        %v10606 = vand.u32 %v10495, 2147483648
        %v10607 = vsel %vm10605, %v10606, %v10604
        %v10609 = vlaneseq
        %v10610 = vshrl.u32 %v10609, 7
        %v10611 = vsub.s32 0, %v10610
        %v10612 = vrot.slane %v10302, %v10611
        %v10613 = vlaneseq
        %v10614 = vshrl.u32 %v10613, 7
        %v10615 = vsub.s32 1, %v10614
        %v10616 = vrot.slane %v10302, %v10615
        %v10619 = vmul.f32 %v10612, %v10368
        %v10620 = vmul.f32 %v10616, %v10369
        %v10621 = vmul.f32 %v10612, %v10370
        %v10622 = vmul.f32 %v10616, %v10371
        %v10623 = vmul.f32 %v10612, %v10372
        %v10624 = vmul.f32 %v10616, %v10373
        %v10625 = vmul.f32 %v10612, %v10374
        %v10626 = vmul.f32 %v10616, %v10375
        %v10627 = vmul.f32 %v10612, %v10376
        %v10628 = vmul.f32 %v10616, %v10377
        %v10629 = vmul.f32 %v10612, %v10378
        %v10630 = vmul.f32 %v10616, %v10379
        %v10631 = vmul.f32 %v10612, %v10380
        %v10632 = vmul.f32 %v10616, %v10381
        %v10633 = vmul.f32 %v10612, %v10382
        %v10634 = vmul.f32 %v10616, %v10383
        %v10635 = vmul.f32 %v10612, %v10384
        %v10636 = vmul.f32 %v10616, %v10385
        %v10637 = vmul.f32 %v10612, %v10386
        %v10638 = vmul.f32 %v10616, %v10387
        %v10639 = vmul.f32 %v10612, %v10388
        %v10640 = vmul.f32 %v10616, %v10389
        %v10641 = vmul.f32 %v10612, %v10390
        %v10642 = vmul.f32 %v10616, %v10391
        %v10643 = vmul.f32 %v10612, %v10392
        %v10644 = vmul.f32 %v10616, %v10393
        %v10645 = vmul.f32 %v10612, %v10394
        %v10646 = vmul.f32 %v10616, %v10395
        %v10647 = vmul.f32 %v10612, %v10396
        %v10648 = vmul.f32 %v10616, %v10397
        %v10649 = vmul.f32 %v10612, %v10398
        %v10650 = vmul.f32 %v10616, %v10399
        %v10651 = vadd.f32 %v10502, 1e-06
        %v10652 = vadd.f32 %v10509, 1e-06
        %v10653 = vadd.f32 %v10516, 1e-06
        %v10654 = vadd.f32 %v10523, 1e-06
        %v10655 = vadd.f32 %v10530, 1e-06
        %v10656 = vadd.f32 %v10537, 1e-06
        %v10657 = vadd.f32 %v10544, 1e-06
        %v10658 = vadd.f32 %v10551, 1e-06
        %v10659 = vadd.f32 %v10558, 1e-06
        %v10660 = vadd.f32 %v10565, 1e-06
        %v10661 = vadd.f32 %v10572, 1e-06
        %v10662 = vadd.f32 %v10579, 1e-06
        %v10663 = vadd.f32 %v10586, 1e-06
        %v10664 = vadd.f32 %v10593, 1e-06
        %v10665 = vadd.f32 %v10600, 1e-06
        %v10666 = vadd.f32 %v10607, 1e-06
        %v10667 = vrcp.pop %v10651
        %v10668 = vmul.f32 %v10619, %v10667
        %v10669 = vmul.f32 %v10620, %v10667
        %v10670 = vrcp.pop %v10652
        %v10671 = vmul.f32 %v10621, %v10670
        %v10672 = vmul.f32 %v10622, %v10670
        %v10673 = vrcp.pop %v10653
        %v10674 = vmul.f32 %v10623, %v10673
        %v10675 = vmul.f32 %v10624, %v10673
        %v10676 = vrcp.pop %v10654
        %v10677 = vmul.f32 %v10625, %v10676
        %v10678 = vmul.f32 %v10626, %v10676
        %v10679 = vrcp.pop %v10655
        %v10680 = vmul.f32 %v10627, %v10679
        %v10681 = vmul.f32 %v10628, %v10679
        %v10682 = vrcp.pop %v10656
        %v10683 = vmul.f32 %v10629, %v10682
        %v10684 = vmul.f32 %v10630, %v10682
        %v10685 = vrcp.pop %v10657
        %v10686 = vmul.f32 %v10631, %v10685
        %v10687 = vmul.f32 %v10632, %v10685
        %v10688 = vrcp.pop %v10658
        %v10689 = vmul.f32 %v10633, %v10688
        %v10690 = vmul.f32 %v10634, %v10688
        %v10691 = vrcp.pop %v10659
        %v10692 = vmul.f32 %v10635, %v10691
        %v10693 = vmul.f32 %v10636, %v10691
        %v10694 = vrcp.pop %v10660
        %v10695 = vmul.f32 %v10637, %v10694
        %v10696 = vmul.f32 %v10638, %v10694
        %v10697 = vrcp.pop %v10661
        %v10698 = vmul.f32 %v10639, %v10697
        %v10699 = vmul.f32 %v10640, %v10697
        %v10700 = vrcp.pop %v10662
        %v10701 = vmul.f32 %v10641, %v10700
        %v10702 = vmul.f32 %v10642, %v10700
        %v10703 = vrcp.pop %v10663
        %v10704 = vmul.f32 %v10643, %v10703
        %v10705 = vmul.f32 %v10644, %v10703
        %v10706 = vrcp.pop %v10664
        %v10707 = vmul.f32 %v10645, %v10706
        %v10708 = vmul.f32 %v10646, %v10706
        %v10709 = vrcp.pop %v10665
        %v10710 = vmul.f32 %v10647, %v10709
        %v10711 = vmul.f32 %v10648, %v10709
        %v10712 = vrcp.pop %v10666
        %v10713 = vmul.f32 %v10649, %v10712
        %v10714 = vmul.f32 %v10650, %v10712
        %v10716 = vlaneseq
        %v10717 = vshrl.u32 %v10716, 7
        %v10718 = vsub.s32 0, %v10717
        %v10719 = vrot.slane %v10303, %v10718
        %v10720 = vlaneseq
        %v10721 = vshrl.u32 %v10720, 7
        %v10722 = vsub.s32 1, %v10721
        %v10723 = vrot.slane %v10303, %v10722
        %v10726 = vadd.f32 %v10668, %v10719
        %v10727 = vadd.f32 %v10669, %v10723
        %v10728 = vadd.f32 %v10671, %v10719
        %v10729 = vadd.f32 %v10672, %v10723
        %v10730 = vadd.f32 %v10674, %v10719
        %v10731 = vadd.f32 %v10675, %v10723
        %v10732 = vadd.f32 %v10677, %v10719
        %v10733 = vadd.f32 %v10678, %v10723
        %v10734 = vadd.f32 %v10680, %v10719
        %v10735 = vadd.f32 %v10681, %v10723
        %v10736 = vadd.f32 %v10683, %v10719
        %v10737 = vadd.f32 %v10684, %v10723
        %v10738 = vadd.f32 %v10686, %v10719
        %v10739 = vadd.f32 %v10687, %v10723
        %v10740 = vadd.f32 %v10689, %v10719
        %v10741 = vadd.f32 %v10690, %v10723
        %v10742 = vadd.f32 %v10692, %v10719
        %v10743 = vadd.f32 %v10693, %v10723
        %v10744 = vadd.f32 %v10695, %v10719
        %v10745 = vadd.f32 %v10696, %v10723
        %v10746 = vadd.f32 %v10698, %v10719
        %v10747 = vadd.f32 %v10699, %v10723
        %v10748 = vadd.f32 %v10701, %v10719
        %v10749 = vadd.f32 %v10702, %v10723
        %v10750 = vadd.f32 %v10704, %v10719
        %v10751 = vadd.f32 %v10705, %v10723
        %v10752 = vadd.f32 %v10707, %v10719
        %v10753 = vadd.f32 %v10708, %v10723
        %v10754 = vadd.f32 %v10710, %v10719
        %v10755 = vadd.f32 %v10711, %v10723
        %v10756 = vadd.f32 %v10713, %v10719
        %v10757 = vadd.f32 %v10714, %v10723
        %v10758 = vld [vmem:[#allocation10] sm:$0xff]
        %v10759 = vld [vmem:[#allocation10 + $0x8] sm:$0xff]
        %v10760 = vld [vmem:[#allocation10 + $0x10] sm:$0xff]
        %v10761 = vld [vmem:[#allocation10 + $0x18] sm:$0xff]
        %v10762 = vld [vmem:[#allocation10 + $0x20] sm:$0xff]
        %v10763 = vld [vmem:[#allocation10 + $0x28] sm:$0xff]
        %v10764 = vld [vmem:[#allocation10 + $0x30] sm:$0xff]
        %v10765 = vld [vmem:[#allocation10 + $0x38] sm:$0xff]
        %v10766 = vld [vmem:[#allocation10 + $0x40] sm:$0xff]
        %v10767 = vld [vmem:[#allocation10 + $0x48] sm:$0xff]
        %v10768 = vld [vmem:[#allocation10 + $0x50] sm:$0xff]
        %v10769 = vld [vmem:[#allocation10 + $0x58] sm:$0xff]
        %v10770 = vld [vmem:[#allocation10 + $0x60] sm:$0xff]
        %v10771 = vld [vmem:[#allocation10 + $0x68] sm:$0xff]
        %v10772 = vld [vmem:[#allocation10 + $0x70] sm:$0xff]
        %v10773 = vld [vmem:[#allocation10 + $0x78] sm:$0xff]
        %v10774 = vld [vmem:[#allocation10 + $0x80] sm:$0xff]
        %v10775 = vld [vmem:[#allocation10 + $0x88] sm:$0xff]
        %v10776 = vld [vmem:[#allocation10 + $0x90] sm:$0xff]
        %v10777 = vld [vmem:[#allocation10 + $0x98] sm:$0xff]
        %v10778 = vld [vmem:[#allocation10 + $0xa0] sm:$0xff]
        %v10779 = vld [vmem:[#allocation10 + $0xa8] sm:$0xff]
        %v10780 = vld [vmem:[#allocation10 + $0xb0] sm:$0xff]
        %v10781 = vld [vmem:[#allocation10 + $0xb8] sm:$0xff]
        %v10782 = vld [vmem:[#allocation10 + $0xc0] sm:$0xff]
        %v10783 = vld [vmem:[#allocation10 + $0xc8] sm:$0xff]
        %v10784 = vld [vmem:[#allocation10 + $0xd0] sm:$0xff]
        %v10785 = vld [vmem:[#allocation10 + $0xd8] sm:$0xff]
        %v10786 = vld [vmem:[#allocation10 + $0xe0] sm:$0xff]
        %v10787 = vld [vmem:[#allocation10 + $0xe8] sm:$0xff]
        %v10788 = vld [vmem:[#allocation10 + $0xf0] sm:$0xff]
        %v10789 = vld [vmem:[#allocation10 + $0xf8] sm:$0xff]
        %v10790 = vld [vmem:[#allocation10 + $0x100] sm:$0xff]
        %v10791 = vld [vmem:[#allocation10 + $0x108] sm:$0xff]
        %v10792 = vld [vmem:[#allocation10 + $0x110] sm:$0xff]
        %v10793 = vld [vmem:[#allocation10 + $0x118] sm:$0xff]
        %v10794 = vld [vmem:[#allocation10 + $0x120] sm:$0xff]
        %v10795 = vld [vmem:[#allocation10 + $0x128] sm:$0xff]
        %v10796 = vld [vmem:[#allocation10 + $0x130] sm:$0xff]
        %v10797 = vld [vmem:[#allocation10 + $0x138] sm:$0xff]
        %v10798 = vld [vmem:[#allocation10 + $0x140] sm:$0xff]
        %v10799 = vld [vmem:[#allocation10 + $0x148] sm:$0xff]
        %v10800 = vld [vmem:[#allocation10 + $0x150] sm:$0xff]
        %v10801 = vld [vmem:[#allocation10 + $0x158] sm:$0xff]
        %v10802 = vld [vmem:[#allocation10 + $0x160] sm:$0xff]
        %v10803 = vld [vmem:[#allocation10 + $0x168] sm:$0xff]
        %v10804 = vld [vmem:[#allocation10 + $0x170] sm:$0xff]
        %v10805 = vld [vmem:[#allocation10 + $0x178] sm:$0xff]
        %v10806 = vld [vmem:[#allocation10 + $0x180] sm:$0xff]
        %v10807 = vld [vmem:[#allocation10 + $0x188] sm:$0xff]
        %v10808 = vld [vmem:[#allocation10 + $0x190] sm:$0xff]
        %v10809 = vld [vmem:[#allocation10 + $0x198] sm:$0xff]
        %v10810 = vld [vmem:[#allocation10 + $0x1a0] sm:$0xff]
        %v10811 = vld [vmem:[#allocation10 + $0x1a8] sm:$0xff]
        %v10812 = vld [vmem:[#allocation10 + $0x1b0] sm:$0xff]
        %v10813 = vld [vmem:[#allocation10 + $0x1b8] sm:$0xff]
        %v10814 = vld [vmem:[#allocation10 + $0x1c0] sm:$0xff]
        %v10815 = vld [vmem:[#allocation10 + $0x1c8] sm:$0xff]
        %v10816 = vld [vmem:[#allocation10 + $0x1d0] sm:$0xff]
        %v10817 = vld [vmem:[#allocation10 + $0x1d8] sm:$0xff]
        %v10818 = vld [vmem:[#allocation10 + $0x1e0] sm:$0xff]
        %v10819 = vld [vmem:[#allocation10 + $0x1e8] sm:$0xff]
        %v10820 = vld [vmem:[#allocation10 + $0x1f0] sm:$0xff]
        %v10821 = vld [vmem:[#allocation10 + $0x1f8] sm:$0xff]
        %v10822 = vld [vmem:[#allocation10 + $0x200] sm:$0xff]
        %v10823 = vld [vmem:[#allocation10 + $0x208] sm:$0xff]
        %v10824 = vld [vmem:[#allocation10 + $0x210] sm:$0xff]
        %v10825 = vld [vmem:[#allocation10 + $0x218] sm:$0xff]
        %v10826 = vld [vmem:[#allocation10 + $0x220] sm:$0xff]
        %v10827 = vld [vmem:[#allocation10 + $0x228] sm:$0xff]
        %v10828 = vld [vmem:[#allocation10 + $0x230] sm:$0xff]
        %v10829 = vld [vmem:[#allocation10 + $0x238] sm:$0xff]
        %v10830 = vld [vmem:[#allocation10 + $0x240] sm:$0xff]
        %v10831 = vld [vmem:[#allocation10 + $0x248] sm:$0xff]
        %v10832 = vld [vmem:[#allocation10 + $0x250] sm:$0xff]
        %v10833 = vld [vmem:[#allocation10 + $0x258] sm:$0xff]
        %v10834 = vld [vmem:[#allocation10 + $0x260] sm:$0xff]
        %v10835 = vld [vmem:[#allocation10 + $0x268] sm:$0xff]
        %v10836 = vld [vmem:[#allocation10 + $0x270] sm:$0xff]
        %v10837 = vld [vmem:[#allocation10 + $0x278] sm:$0xff]
        %v10838 = vld [vmem:[#allocation10 + $0x280] sm:$0xff]
        %v10839 = vld [vmem:[#allocation10 + $0x288] sm:$0xff]
        %v10840 = vld [vmem:[#allocation10 + $0x290] sm:$0xff]
        %v10841 = vld [vmem:[#allocation10 + $0x298] sm:$0xff]
        %v10842 = vld [vmem:[#allocation10 + $0x2a0] sm:$0xff]
        %v10843 = vld [vmem:[#allocation10 + $0x2a8] sm:$0xff]
        %v10844 = vld [vmem:[#allocation10 + $0x2b0] sm:$0xff]
        %v10845 = vld [vmem:[#allocation10 + $0x2b8] sm:$0xff]
        %v10846 = vld [vmem:[#allocation10 + $0x2c0] sm:$0xff]
        %v10847 = vld [vmem:[#allocation10 + $0x2c8] sm:$0xff]
        %v10848 = vld [vmem:[#allocation10 + $0x2d0] sm:$0xff]
        %v10849 = vld [vmem:[#allocation10 + $0x2d8] sm:$0xff]
        %v10850 = vld [vmem:[#allocation10 + $0x2e0] sm:$0xff]
        %v10851 = vld [vmem:[#allocation10 + $0x2e8] sm:$0xff]
        %v10852 = vld [vmem:[#allocation10 + $0x2f0] sm:$0xff]
        %v10853 = vld [vmem:[#allocation10 + $0x2f8] sm:$0xff]
        %v10854 = vld [vmem:[#allocation10 + $0x300] sm:$0xff]
        %v10855 = vld [vmem:[#allocation10 + $0x308] sm:$0xff]
        %v10856 = vld [vmem:[#allocation10 + $0x310] sm:$0xff]
        %v10857 = vld [vmem:[#allocation10 + $0x318] sm:$0xff]
        %v10858 = vld [vmem:[#allocation10 + $0x320] sm:$0xff]
        %v10859 = vld [vmem:[#allocation10 + $0x328] sm:$0xff]
        %v10860 = vld [vmem:[#allocation10 + $0x330] sm:$0xff]
        %v10861 = vld [vmem:[#allocation10 + $0x338] sm:$0xff]
        %v10862 = vld [vmem:[#allocation10 + $0x340] sm:$0xff]
        %v10863 = vld [vmem:[#allocation10 + $0x348] sm:$0xff]
        %v10864 = vld [vmem:[#allocation10 + $0x350] sm:$0xff]
        %v10865 = vld [vmem:[#allocation10 + $0x358] sm:$0xff]
        %v10866 = vld [vmem:[#allocation10 + $0x360] sm:$0xff]
        %v10867 = vld [vmem:[#allocation10 + $0x368] sm:$0xff]
        %v10868 = vld [vmem:[#allocation10 + $0x370] sm:$0xff]
        %v10869 = vld [vmem:[#allocation10 + $0x378] sm:$0xff]
        %v10870 = vld [vmem:[#allocation10 + $0x380] sm:$0xff]
        %v10871 = vld [vmem:[#allocation10 + $0x388] sm:$0xff]
        %v10872 = vld [vmem:[#allocation10 + $0x390] sm:$0xff]
        %v10873 = vld [vmem:[#allocation10 + $0x398] sm:$0xff]
        %v10874 = vld [vmem:[#allocation10 + $0x3a0] sm:$0xff]
        %v10875 = vld [vmem:[#allocation10 + $0x3a8] sm:$0xff]
        %v10876 = vld [vmem:[#allocation10 + $0x3b0] sm:$0xff]
        %v10877 = vld [vmem:[#allocation10 + $0x3b8] sm:$0xff]
        %v10878 = vld [vmem:[#allocation10 + $0x3c0] sm:$0xff]
        %v10879 = vld [vmem:[#allocation10 + $0x3c8] sm:$0xff]
        %v10880 = vld [vmem:[#allocation10 + $0x3d0] sm:$0xff]
        %v10881 = vld [vmem:[#allocation10 + $0x3d8] sm:$0xff]
        %v10882 = vld [vmem:[#allocation10 + $0x3e0] sm:$0xff]
        %v10883 = vld [vmem:[#allocation10 + $0x3e8] sm:$0xff]
        %v10884 = vld [vmem:[#allocation10 + $0x3f0] sm:$0xff]
        %v10885 = vld [vmem:[#allocation10 + $0x3f8] sm:$0xff]
        %v10886 = vld [vmem:[%s9] sm:$0xf]
        %v10888 = vlaneseq
        %v10889 = vshrl.u32 %v10888, 7
        %v10890 = vsub.s32 0, %v10889
        %v10891 = vrot.slane %v10886, %v10890
        %v10892 = vlaneseq
        %v10893 = vshrl.u32 %v10892, 7
        %v10894 = vsub.s32 1, %v10893
        %v10895 = vrot.slane %v10886, %v10894
        %v10896 = vlaneseq
        %v10897 = vshrl.u32 %v10896, 7
        %v10898 = vsub.s32 2, %v10897
        %v10899 = vrot.slane %v10886, %v10898
        %v10900 = vlaneseq
        %v10901 = vshrl.u32 %v10900, 7
        %v10902 = vsub.s32 3, %v10901
        %v10903 = vrot.slane %v10886, %v10902
        %10908 = vmatprep.subr.mxu0 %v10759
        %10909 = vmatpush1.msra.mxu0 %v10758
        %10910 = vmatprep.subr.mxu0 %v10763
        %10911 = vmatpush1.msra.mxu0 %v10762
        %10912 = vmatprep.subr.mxu0 %v10767
        %10913 = vmatpush1.msra.mxu0 %v10766
        %10914 = vmatprep.subr.mxu0 %v10771
        %10915 = vmatpush1.msra.mxu0 %v10770
        %10916 = vmatprep.subr.mxu0 %v10775
        %10917 = vmatpush1.msra.mxu0 %v10774
        %10918 = vmatprep.subr.mxu0 %v10779
        %10919 = vmatpush1.msra.mxu0 %v10778
        %10920 = vmatprep.subr.mxu0 %v10783
        %10921 = vmatpush1.msra.mxu0 %v10782
        %10922 = vmatprep.subr.mxu0 %v10787
        %10923 = vmatpush1.msra.mxu0 %v10786
        %10924 = vmatprep.subr.mxu0 %v10791
        %10925 = vmatpush1.msra.mxu0 %v10790
        %10926 = vmatprep.subr.mxu0 %v10795
        %10927 = vmatpush1.msra.mxu0 %v10794
        %10928 = vmatprep.subr.mxu0 %v10799
        %10929 = vmatpush1.msra.mxu0 %v10798
        %10930 = vmatprep.subr.mxu0 %v10803
        %10931 = vmatpush1.msra.mxu0 %v10802
        %10932 = vmatprep.subr.mxu0 %v10807
        %10933 = vmatpush1.msra.mxu0 %v10806
        %10934 = vmatprep.subr.mxu0 %v10811
        %10935 = vmatpush1.msra.mxu0 %v10810
        %10936 = vmatprep.subr.mxu0 %v10815
        %10937 = vmatpush1.msra.mxu0 %v10814
        %10938 = vmatprep.subr.mxu0 %v10819
        %10939 = vmatpush1.msra.mxu0 %v10818
        %10940 = vmatprep.subr.mxu0 %v10823
        %10941 = vmatpush1.msra.mxu0 %v10822
        %10942 = vmatprep.subr.mxu0 %v10827
        %10943 = vmatpush1.msra.mxu0 %v10826
        %10944 = vmatprep.subr.mxu0 %v10831
        %10945 = vmatpush1.msra.mxu0 %v10830
        %10946 = vmatprep.subr.mxu0 %v10835
        %10947 = vmatpush1.msra.mxu0 %v10834
        %10948 = vmatprep.subr.mxu0 %v10839
        %10949 = vmatpush1.msra.mxu0 %v10838
        %10950 = vmatprep.subr.mxu0 %v10843
        %10951 = vmatpush1.msra.mxu0 %v10842
        %10952 = vmatprep.subr.mxu0 %v10847
        %10953 = vmatpush1.msra.mxu0 %v10846
        %10954 = vmatprep.subr.mxu0 %v10851
        %10955 = vmatpush1.msra.mxu0 %v10850
        %10956 = vmatprep.subr.mxu0 %v10855
        %10957 = vmatpush1.msra.mxu0 %v10854
        %10958 = vmatprep.subr.mxu0 %v10859
        %10959 = vmatpush1.msra.mxu0 %v10858
        %10960 = vmatprep.subr.mxu0 %v10863
        %10961 = vmatpush1.msra.mxu0 %v10862
        %10962 = vmatprep.subr.mxu0 %v10867
        %10963 = vmatpush1.msra.mxu0 %v10866
        %10964 = vmatprep.subr.mxu0 %v10871
        %10965 = vmatpush1.msra.mxu0 %v10870
        %10966 = vmatprep.subr.mxu0 %v10875
        %10967 = vmatpush1.msra.mxu0 %v10874
        %10968 = vmatprep.subr.mxu0 %v10879
        %10969 = vmatpush1.msra.mxu0 %v10878
        %10970 = vmatprep.subr.mxu0 %v10883
        %10971 = vmatpush1.msra.mxu0 %v10882
        %10972 = vmatprep.mubr.f32.mxu0 %v10727
        %10973 = vmatmul.mubr.f32.gmra.mrb[0].mxu0 %v10726
        %v10974 = vpop.f32.mrb[0].mxu0
        %v10975 = vadd.f32 %v10891, %v10974
        %v10976 = vpop.f32.mrb[0].mxu0
        %v10977 = vadd.f32 %v10895, %v10976
        %10978 = vmatprep.mubr.f32.mxu0 %v10729
        %10979 = vmatmul.mubr.f32.gmra.mrb[0].mxu0 %v10728
        %v10980 = vpop.f32.mrb[0].mxu0
        %v10981 = vadd.f32 %v10891, %v10980
        %v10982 = vpop.f32.mrb[0].mxu0
        %v10983 = vadd.f32 %v10895, %v10982
        %10984 = vmatprep.mubr.f32.mxu0 %v10731
        %10985 = vmatmul.mubr.f32.gmra.mrb[0].mxu0 %v10730
        %v10986 = vpop.f32.mrb[0].mxu0
        %v10987 = vadd.f32 %v10891, %v10986
        %v10988 = vpop.f32.mrb[0].mxu0
        %v10989 = vadd.f32 %v10895, %v10988
        %10990 = vmatprep.mubr.f32.mxu0 %v10733
        %10991 = vmatmul.mubr.f32.gmra.mrb[0].mxu0 %v10732
        %v10992 = vpop.f32.mrb[0].mxu0
        %v10993 = vadd.f32 %v10891, %v10992
        %v10994 = vpop.f32.mrb[0].mxu0
        %v10995 = vadd.f32 %v10895, %v10994
        %10996 = vmatprep.mubr.f32.mxu0 %v10735
        %10997 = vmatmul.mubr.f32.gmra.mrb[0].mxu0 %v10734
        %v10998 = vpop.f32.mrb[0].mxu0
        %v10999 = vadd.f32 %v10891, %v10998
        %v11000 = vpop.f32.mrb[0].mxu0
        %v11001 = vadd.f32 %v10895, %v11000
        %11002 = vmatprep.mubr.f32.mxu0 %v10737
        %11003 = vmatmul.mubr.f32.gmra.mrb[0].mxu0 %v10736
        %v11004 = vpop.f32.mrb[0].mxu0
        %v11005 = vadd.f32 %v10891, %v11004
        %v11006 = vpop.f32.mrb[0].mxu0
        %v11007 = vadd.f32 %v10895, %v11006
        %11008 = vmatprep.mubr.f32.mxu0 %v10739
        %11009 = vmatmul.mubr.f32.gmra.mrb[0].mxu0 %v10738
        %v11010 = vpop.f32.mrb[0].mxu0
        %v11011 = vadd.f32 %v10891, %v11010
        %v11012 = vpop.f32.mrb[0].mxu0
        %v11013 = vadd.f32 %v10895, %v11012
        %11014 = vmatprep.mubr.f32.mxu0 %v10741
        %11015 = vmatmul.mubr.f32.gmra.mrb[0].mxu0 %v10740
        %v11016 = vpop.f32.mrb[0].mxu0
        %v11017 = vadd.f32 %v10891, %v11016
        %v11018 = vpop.f32.mrb[0].mxu0
        %v11019 = vadd.f32 %v10895, %v11018
        %11020 = vmatprep.mubr.f32.mxu0 %v10743
        %11021 = vmatmul.mubr.f32.gmra.mrb[0].mxu0 %v10742
        %v11022 = vpop.f32.mrb[0].mxu0
        %v11023 = vadd.f32 %v10891, %v11022
        %v11024 = vpop.f32.mrb[0].mxu0
        %v11025 = vadd.f32 %v10895, %v11024
        %11026 = vmatprep.mubr.f32.mxu0 %v10745
        %11027 = vmatmul.mubr.f32.gmra.mrb[0].mxu0 %v10744
        %v11028 = vpop.f32.mrb[0].mxu0
        %v11029 = vadd.f32 %v10891, %v11028
        %v11030 = vpop.f32.mrb[0].mxu0
        %v11031 = vadd.f32 %v10895, %v11030
        %11032 = vmatprep.mubr.f32.mxu0 %v10747
        %11033 = vmatmul.mubr.f32.gmra.mrb[0].mxu0 %v10746
        %v11034 = vpop.f32.mrb[0].mxu0
        %v11035 = vadd.f32 %v10891, %v11034
        %v11036 = vpop.f32.mrb[0].mxu0
        %v11037 = vadd.f32 %v10895, %v11036
        %11038 = vmatprep.mubr.f32.mxu0 %v10749
        %11039 = vmatmul.mubr.f32.gmra.mrb[0].mxu0 %v10748
        %v11040 = vpop.f32.mrb[0].mxu0
        %v11041 = vadd.f32 %v10891, %v11040
        %v11042 = vpop.f32.mrb[0].mxu0
        %v11043 = vadd.f32 %v10895, %v11042
        %11044 = vmatprep.mubr.f32.mxu0 %v10751
        %11045 = vmatmul.mubr.f32.gmra.mrb[0].mxu0 %v10750
        %v11046 = vpop.f32.mrb[0].mxu0
        %v11047 = vadd.f32 %v10891, %v11046
        %v11048 = vpop.f32.mrb[0].mxu0
        %v11049 = vadd.f32 %v10895, %v11048
        %11050 = vmatprep.mubr.f32.mxu0 %v10753
        %11051 = vmatmul.mubr.f32.gmra.mrb[0].mxu0 %v10752
        %v11052 = vpop.f32.mrb[0].mxu0
        %v11053 = vadd.f32 %v10891, %v11052
        %v11054 = vpop.f32.mrb[0].mxu0
        %v11055 = vadd.f32 %v10895, %v11054
        %11056 = vmatprep.mubr.f32.mxu0 %v10755
        %11057 = vmatmul.mubr.f32.gmra.mrb[0].mxu0 %v10754
        %v11058 = vpop.f32.mrb[0].mxu0
        %v11059 = vadd.f32 %v10891, %v11058
        %v11060 = vpop.f32.mrb[0].mxu0
        %v11061 = vadd.f32 %v10895, %v11060
        %11062 = vmatprep.mubr.f32.mxu0 %v10757
        %11063 = vmatmul.mubr.f32.gmra.mrb[0].mxu0 %v10756
        %v11064 = vpop.f32.mrb[0].mxu0
        %v11065 = vadd.f32 %v10891, %v11064
        %v11066 = vpop.f32.mrb[0].mxu0
        %v11067 = vadd.f32 %v10895, %v11066
        %11068 = vdwg.mxu0
        %11069 = vmatprep.subr.mxu0 %v10761
        %11070 = vmatpush1.msra.mxu0 %v10760
        %11071 = vmatprep.subr.mxu0 %v10765
        %11072 = vmatpush1.msra.mxu0 %v10764
        %11073 = vmatprep.subr.mxu0 %v10769
        %11074 = vmatpush1.msra.mxu0 %v10768
        %11075 = vmatprep.subr.mxu0 %v10773
        %11076 = vmatpush1.msra.mxu0 %v10772
        %11077 = vmatprep.subr.mxu0 %v10777
        %11078 = vmatpush1.msra.mxu0 %v10776
        %11079 = vmatprep.subr.mxu0 %v10781
        %11080 = vmatpush1.msra.mxu0 %v10780
        %11081 = vmatprep.subr.mxu0 %v10785
        %11082 = vmatpush1.msra.mxu0 %v10784
        %11083 = vmatprep.subr.mxu0 %v10789
        %11084 = vmatpush1.msra.mxu0 %v10788
        %11085 = vmatprep.subr.mxu0 %v10793
        %11086 = vmatpush1.msra.mxu0 %v10792
        %11087 = vmatprep.subr.mxu0 %v10797
        %11088 = vmatpush1.msra.mxu0 %v10796
        %11089 = vmatprep.subr.mxu0 %v10801
        %11090 = vmatpush1.msra.mxu0 %v10800
        %11091 = vmatprep.subr.mxu0 %v10805
        %11092 = vmatpush1.msra.mxu0 %v10804
        %11093 = vmatprep.subr.mxu0 %v10809
        %11094 = vmatpush1.msra.mxu0 %v10808
        %11095 = vmatprep.subr.mxu0 %v10813
        %11096 = vmatpush1.msra.mxu0 %v10812
        %11097 = vmatprep.subr.mxu0 %v10817
        %11098 = vmatpush1.msra.mxu0 %v10816
        %11099 = vmatprep.subr.mxu0 %v10821
        %11100 = vmatpush1.msra.mxu0 %v10820
        %11101 = vmatprep.subr.mxu0 %v10825
        %11102 = vmatpush1.msra.mxu0 %v10824
        %11103 = vmatprep.subr.mxu0 %v10829
        %11104 = vmatpush1.msra.mxu0 %v10828
        %11105 = vmatprep.subr.mxu0 %v10833
        %11106 = vmatpush1.msra.mxu0 %v10832
        %11107 = vmatprep.subr.mxu0 %v10837
        %11108 = vmatpush1.msra.mxu0 %v10836
        %11109 = vmatprep.subr.mxu0 %v10841
        %11110 = vmatpush1.msra.mxu0 %v10840
        %11111 = vmatprep.subr.mxu0 %v10845
        %11112 = vmatpush1.msra.mxu0 %v10844
        %11113 = vmatprep.subr.mxu0 %v10849
        %11114 = vmatpush1.msra.mxu0 %v10848
        %11115 = vmatprep.subr.mxu0 %v10853
        %11116 = vmatpush1.msra.mxu0 %v10852
        %11117 = vmatprep.subr.mxu0 %v10857
        %11118 = vmatpush1.msra.mxu0 %v10856
        %11119 = vmatprep.subr.mxu0 %v10861
        %11120 = vmatpush1.msra.mxu0 %v10860
        %11121 = vmatprep.subr.mxu0 %v10865
        %11122 = vmatpush1.msra.mxu0 %v10864
        %11123 = vmatprep.subr.mxu0 %v10869
        %11124 = vmatpush1.msra.mxu0 %v10868
        %11125 = vmatprep.subr.mxu0 %v10873
        %11126 = vmatpush1.msra.mxu0 %v10872
        %11127 = vmatprep.subr.mxu0 %v10877
        %11128 = vmatpush1.msra.mxu0 %v10876
        %11129 = vmatprep.subr.mxu0 %v10881
        %11130 = vmatpush1.msra.mxu0 %v10880
        %11131 = vmatprep.subr.mxu0 %v10885
        %11132 = vmatpush1.msra.mxu0 %v10884
        %11133 = vmatprep.mubr.f32.mxu0 %v10727
        %11134 = vmatmul.mubr.f32.gmra.mrb[0].mxu0 %v10726
        %v11135 = vpop.f32.mrb[0].mxu0
        %v11136 = vadd.f32 %v10899, %v11135
        %v11137 = vpop.f32.mrb[0].mxu0
        %v11138 = vadd.f32 %v10903, %v11137
        %11139 = vmatprep.mubr.f32.mxu0 %v10729
        %11140 = vmatmul.mubr.f32.gmra.mrb[0].mxu0 %v10728
        %v11141 = vpop.f32.mrb[0].mxu0
        %v11142 = vadd.f32 %v10899, %v11141
        %v11143 = vpop.f32.mrb[0].mxu0
        %v11144 = vadd.f32 %v10903, %v11143
        %11145 = vmatprep.mubr.f32.mxu0 %v10731
        %11146 = vmatmul.mubr.f32.gmra.mrb[0].mxu0 %v10730
        %v11147 = vpop.f32.mrb[0].mxu0
        %v11148 = vadd.f32 %v10899, %v11147
        %v11149 = vpop.f32.mrb[0].mxu0
        %v11150 = vadd.f32 %v10903, %v11149
        %11151 = vmatprep.mubr.f32.mxu0 %v10733
        %11152 = vmatmul.mubr.f32.gmra.mrb[0].mxu0 %v10732
        %v11153 = vpop.f32.mrb[0].mxu0
        %v11154 = vadd.f32 %v10899, %v11153
        %v11155 = vpop.f32.mrb[0].mxu0
        %v11156 = vadd.f32 %v10903, %v11155
        %11157 = vmatprep.mubr.f32.mxu0 %v10735
        %11158 = vmatmul.mubr.f32.gmra.mrb[0].mxu0 %v10734
        %v11159 = vpop.f32.mrb[0].mxu0
        %v11160 = vadd.f32 %v10899, %v11159
        %v11161 = vpop.f32.mrb[0].mxu0
        %v11162 = vadd.f32 %v10903, %v11161
        %11163 = vmatprep.mubr.f32.mxu0 %v10737
        %11164 = vmatmul.mubr.f32.gmra.mrb[0].mxu0 %v10736
        %v11165 = vpop.f32.mrb[0].mxu0
        %v11166 = vadd.f32 %v10899, %v11165
        %v11167 = vpop.f32.mrb[0].mxu0
        %v11168 = vadd.f32 %v10903, %v11167
        %11169 = vmatprep.mubr.f32.mxu0 %v10739
        %11170 = vmatmul.mubr.f32.gmra.mrb[0].mxu0 %v10738
        %v11171 = vpop.f32.mrb[0].mxu0
        %v11172 = vadd.f32 %v10899, %v11171
        %v11173 = vpop.f32.mrb[0].mxu0
        %v11174 = vadd.f32 %v10903, %v11173
        %11175 = vmatprep.mubr.f32.mxu0 %v10741
        %11176 = vmatmul.mubr.f32.gmra.mrb[0].mxu0 %v10740
        %v11177 = vpop.f32.mrb[0].mxu0
        %v11178 = vadd.f32 %v10899, %v11177
        %v11179 = vpop.f32.mrb[0].mxu0
        %v11180 = vadd.f32 %v10903, %v11179
        %11181 = vmatprep.mubr.f32.mxu0 %v10743
        %11182 = vmatmul.mubr.f32.gmra.mrb[0].mxu0 %v10742
        %v11183 = vpop.f32.mrb[0].mxu0
        %v11184 = vadd.f32 %v10899, %v11183
        %v11185 = vpop.f32.mrb[0].mxu0
        %v11186 = vadd.f32 %v10903, %v11185
        %11187 = vmatprep.mubr.f32.mxu0 %v10745
        %11188 = vmatmul.mubr.f32.gmra.mrb[0].mxu0 %v10744
        %v11189 = vpop.f32.mrb[0].mxu0
        %v11190 = vadd.f32 %v10899, %v11189
        %v11191 = vpop.f32.mrb[0].mxu0
        %v11192 = vadd.f32 %v10903, %v11191
        %11193 = vmatprep.mubr.f32.mxu0 %v10747
        %11194 = vmatmul.mubr.f32.gmra.mrb[0].mxu0 %v10746
        %v11195 = vpop.f32.mrb[0].mxu0
        %v11196 = vadd.f32 %v10899, %v11195
        %v11197 = vpop.f32.mrb[0].mxu0
        %v11198 = vadd.f32 %v10903, %v11197
        %11199 = vmatprep.mubr.f32.mxu0 %v10749
        %11200 = vmatmul.mubr.f32.gmra.mrb[0].mxu0 %v10748
        %v11201 = vpop.f32.mrb[0].mxu0
        %v11202 = vadd.f32 %v10899, %v11201
        %v11203 = vpop.f32.mrb[0].mxu0
        %v11204 = vadd.f32 %v10903, %v11203
        %11205 = vmatprep.mubr.f32.mxu0 %v10751
        %11206 = vmatmul.mubr.f32.gmra.mrb[0].mxu0 %v10750
        %v11207 = vpop.f32.mrb[0].mxu0
        %v11208 = vadd.f32 %v10899, %v11207
        %v11209 = vpop.f32.mrb[0].mxu0
        %v11210 = vadd.f32 %v10903, %v11209
        %11211 = vmatprep.mubr.f32.mxu0 %v10753
        %11212 = vmatmul.mubr.f32.gmra.mrb[0].mxu0 %v10752
        %v11213 = vpop.f32.mrb[0].mxu0
        %v11214 = vadd.f32 %v10899, %v11213
        %v11215 = vpop.f32.mrb[0].mxu0
        %v11216 = vadd.f32 %v10903, %v11215
        %11217 = vmatprep.mubr.f32.mxu0 %v10755
        %11218 = vmatmul.mubr.f32.gmra.mrb[0].mxu0 %v10754
        %v11219 = vpop.f32.mrb[0].mxu0
        %v11220 = vadd.f32 %v10899, %v11219
        %v11221 = vpop.f32.mrb[0].mxu0
        %v11222 = vadd.f32 %v10903, %v11221
        %11223 = vmatprep.mubr.f32.mxu0 %v10757
        %11224 = vmatmul.mubr.f32.gmra.mrb[0].mxu0 %v10756
        %v11225 = vpop.f32.mrb[0].mxu0
        %v11226 = vadd.f32 %v10899, %v11225
        %v11227 = vpop.f32.mrb[0].mxu0
        %v11228 = vadd.f32 %v10903, %v11227
        %11229 = vdwg.mxu0
        %v11230 = vmax.f32 %v10975, 0.0
        %v11231 = vmax.f32 %v10977, 0.0
        %v11232 = vmax.f32 %v11136, 0.0
        %v11233 = vmax.f32 %v11138, 0.0
        %v11234 = vmax.f32 %v10981, 0.0
        %v11235 = vmax.f32 %v10983, 0.0
        %v11236 = vmax.f32 %v11142, 0.0
        %v11237 = vmax.f32 %v11144, 0.0
        %v11238 = vmax.f32 %v10987, 0.0
        %v11239 = vmax.f32 %v10989, 0.0
        %v11240 = vmax.f32 %v11148, 0.0
        %v11241 = vmax.f32 %v11150, 0.0
        %v11242 = vmax.f32 %v10993, 0.0
        %v11243 = vmax.f32 %v10995, 0.0
        %v11244 = vmax.f32 %v11154, 0.0
        %v11245 = vmax.f32 %v11156, 0.0
        %v11246 = vmax.f32 %v10999, 0.0
        %v11247 = vmax.f32 %v11001, 0.0
        %v11248 = vmax.f32 %v11160, 0.0
        %v11249 = vmax.f32 %v11162, 0.0
        %v11250 = vmax.f32 %v11005, 0.0
        %v11251 = vmax.f32 %v11007, 0.0
        %v11252 = vmax.f32 %v11166, 0.0
        %v11253 = vmax.f32 %v11168, 0.0
        %v11254 = vmax.f32 %v11011, 0.0
        %v11255 = vmax.f32 %v11013, 0.0
        %v11256 = vmax.f32 %v11172, 0.0
        %v11257 = vmax.f32 %v11174, 0.0
        %v11258 = vmax.f32 %v11017, 0.0
        %v11259 = vmax.f32 %v11019, 0.0
        %v11260 = vmax.f32 %v11178, 0.0
        %v11261 = vmax.f32 %v11180, 0.0
        %v11262 = vmax.f32 %v11023, 0.0
        %v11263 = vmax.f32 %v11025, 0.0
        %v11264 = vmax.f32 %v11184, 0.0
        %v11265 = vmax.f32 %v11186, 0.0
        %v11266 = vmax.f32 %v11029, 0.0
        %v11267 = vmax.f32 %v11031, 0.0
        %v11268 = vmax.f32 %v11190, 0.0
        %v11269 = vmax.f32 %v11192, 0.0
        %v11270 = vmax.f32 %v11035, 0.0
        %v11271 = vmax.f32 %v11037, 0.0
        %v11272 = vmax.f32 %v11196, 0.0
        %v11273 = vmax.f32 %v11198, 0.0
        %v11274 = vmax.f32 %v11041, 0.0
        %v11275 = vmax.f32 %v11043, 0.0
        %v11276 = vmax.f32 %v11202, 0.0
        %v11277 = vmax.f32 %v11204, 0.0
        %v11278 = vmax.f32 %v11047, 0.0
        %v11279 = vmax.f32 %v11049, 0.0
        %v11280 = vmax.f32 %v11208, 0.0
        %v11281 = vmax.f32 %v11210, 0.0
        %v11282 = vmax.f32 %v11053, 0.0
        %v11283 = vmax.f32 %v11055, 0.0
        %v11284 = vmax.f32 %v11214, 0.0
        %v11285 = vmax.f32 %v11216, 0.0
        %v11286 = vmax.f32 %v11059, 0.0
        %v11287 = vmax.f32 %v11061, 0.0
        %v11288 = vmax.f32 %v11220, 0.0
        %v11289 = vmax.f32 %v11222, 0.0
        %v11290 = vmax.f32 %v11065, 0.0
        %v11291 = vmax.f32 %v11067, 0.0
        %v11292 = vmax.f32 %v11226, 0.0
        %v11293 = vmax.f32 %v11228, 0.0
        %v11294 = vld [vmem:[#allocation11] sm:$0xff]
        %v11295 = vld [vmem:[#allocation11 + $0x8] sm:$0xff]
        %v11296 = vld [vmem:[#allocation11 + $0x10] sm:$0xff]
        %v11297 = vld [vmem:[#allocation11 + $0x18] sm:$0xff]
        %v11298 = vld [vmem:[#allocation11 + $0x20] sm:$0xff]
        %v11299 = vld [vmem:[#allocation11 + $0x28] sm:$0xff]
        %v11300 = vld [vmem:[#allocation11 + $0x30] sm:$0xff]
        %v11301 = vld [vmem:[#allocation11 + $0x38] sm:$0xff]
        %v11302 = vld [vmem:[#allocation11 + $0x40] sm:$0xff]
        %v11303 = vld [vmem:[#allocation11 + $0x48] sm:$0xff]
        %v11304 = vld [vmem:[#allocation11 + $0x50] sm:$0xff]
        %v11305 = vld [vmem:[#allocation11 + $0x58] sm:$0xff]
        %v11306 = vld [vmem:[#allocation11 + $0x60] sm:$0xff]
        %v11307 = vld [vmem:[#allocation11 + $0x68] sm:$0xff]
        %v11308 = vld [vmem:[#allocation11 + $0x70] sm:$0xff]
        %v11309 = vld [vmem:[#allocation11 + $0x78] sm:$0xff]
        %v11310 = vld [vmem:[#allocation11 + $0x80] sm:$0xff]
        %v11311 = vld [vmem:[#allocation11 + $0x88] sm:$0xff]
        %v11312 = vld [vmem:[#allocation11 + $0x90] sm:$0xff]
        %v11313 = vld [vmem:[#allocation11 + $0x98] sm:$0xff]
        %v11314 = vld [vmem:[#allocation11 + $0xa0] sm:$0xff]
        %v11315 = vld [vmem:[#allocation11 + $0xa8] sm:$0xff]
        %v11316 = vld [vmem:[#allocation11 + $0xb0] sm:$0xff]
        %v11317 = vld [vmem:[#allocation11 + $0xb8] sm:$0xff]
        %v11318 = vld [vmem:[#allocation11 + $0xc0] sm:$0xff]
        %v11319 = vld [vmem:[#allocation11 + $0xc8] sm:$0xff]
        %v11320 = vld [vmem:[#allocation11 + $0xd0] sm:$0xff]
        %v11321 = vld [vmem:[#allocation11 + $0xd8] sm:$0xff]
        %v11322 = vld [vmem:[#allocation11 + $0xe0] sm:$0xff]
        %v11323 = vld [vmem:[#allocation11 + $0xe8] sm:$0xff]
        %v11324 = vld [vmem:[#allocation11 + $0xf0] sm:$0xff]
        %v11325 = vld [vmem:[#allocation11 + $0xf8] sm:$0xff]
        %v11326 = vld [vmem:[#allocation11 + $0x100] sm:$0xff]
        %v11327 = vld [vmem:[#allocation11 + $0x108] sm:$0xff]
        %v11328 = vld [vmem:[#allocation11 + $0x110] sm:$0xff]
        %v11329 = vld [vmem:[#allocation11 + $0x118] sm:$0xff]
        %v11330 = vld [vmem:[#allocation11 + $0x120] sm:$0xff]
        %v11331 = vld [vmem:[#allocation11 + $0x128] sm:$0xff]
        %v11332 = vld [vmem:[#allocation11 + $0x130] sm:$0xff]
        %v11333 = vld [vmem:[#allocation11 + $0x138] sm:$0xff]
        %v11334 = vld [vmem:[#allocation11 + $0x140] sm:$0xff]
        %v11335 = vld [vmem:[#allocation11 + $0x148] sm:$0xff]
        %v11336 = vld [vmem:[#allocation11 + $0x150] sm:$0xff]
        %v11337 = vld [vmem:[#allocation11 + $0x158] sm:$0xff]
        %v11338 = vld [vmem:[#allocation11 + $0x160] sm:$0xff]
        %v11339 = vld [vmem:[#allocation11 + $0x168] sm:$0xff]
        %v11340 = vld [vmem:[#allocation11 + $0x170] sm:$0xff]
        %v11341 = vld [vmem:[#allocation11 + $0x178] sm:$0xff]
        %v11342 = vld [vmem:[#allocation11 + $0x180] sm:$0xff]
        %v11343 = vld [vmem:[#allocation11 + $0x188] sm:$0xff]
        %v11344 = vld [vmem:[#allocation11 + $0x190] sm:$0xff]
        %v11345 = vld [vmem:[#allocation11 + $0x198] sm:$0xff]
        %v11346 = vld [vmem:[#allocation11 + $0x1a0] sm:$0xff]
        %v11347 = vld [vmem:[#allocation11 + $0x1a8] sm:$0xff]
        %v11348 = vld [vmem:[#allocation11 + $0x1b0] sm:$0xff]
        %v11349 = vld [vmem:[#allocation11 + $0x1b8] sm:$0xff]
        %v11350 = vld [vmem:[#allocation11 + $0x1c0] sm:$0xff]
        %v11351 = vld [vmem:[#allocation11 + $0x1c8] sm:$0xff]
        %v11352 = vld [vmem:[#allocation11 + $0x1d0] sm:$0xff]
        %v11353 = vld [vmem:[#allocation11 + $0x1d8] sm:$0xff]
        %v11354 = vld [vmem:[#allocation11 + $0x1e0] sm:$0xff]
        %v11355 = vld [vmem:[#allocation11 + $0x1e8] sm:$0xff]
        %v11356 = vld [vmem:[#allocation11 + $0x1f0] sm:$0xff]
        %v11357 = vld [vmem:[#allocation11 + $0x1f8] sm:$0xff]
        %v11358 = vld [vmem:[#allocation11 + $0x200] sm:$0xff]
        %v11359 = vld [vmem:[#allocation11 + $0x208] sm:$0xff]
        %v11360 = vld [vmem:[#allocation11 + $0x210] sm:$0xff]
        %v11361 = vld [vmem:[#allocation11 + $0x218] sm:$0xff]
        %v11362 = vld [vmem:[#allocation11 + $0x220] sm:$0xff]
        %v11363 = vld [vmem:[#allocation11 + $0x228] sm:$0xff]
        %v11364 = vld [vmem:[#allocation11 + $0x230] sm:$0xff]
        %v11365 = vld [vmem:[#allocation11 + $0x238] sm:$0xff]
        %v11366 = vld [vmem:[#allocation11 + $0x240] sm:$0xff]
        %v11367 = vld [vmem:[#allocation11 + $0x248] sm:$0xff]
        %v11368 = vld [vmem:[#allocation11 + $0x250] sm:$0xff]
        %v11369 = vld [vmem:[#allocation11 + $0x258] sm:$0xff]
        %v11370 = vld [vmem:[#allocation11 + $0x260] sm:$0xff]
        %v11371 = vld [vmem:[#allocation11 + $0x268] sm:$0xff]
        %v11372 = vld [vmem:[#allocation11 + $0x270] sm:$0xff]
        %v11373 = vld [vmem:[#allocation11 + $0x278] sm:$0xff]
        %v11374 = vld [vmem:[#allocation11 + $0x280] sm:$0xff]
        %v11375 = vld [vmem:[#allocation11 + $0x288] sm:$0xff]
        %v11376 = vld [vmem:[#allocation11 + $0x290] sm:$0xff]
        %v11377 = vld [vmem:[#allocation11 + $0x298] sm:$0xff]
        %v11378 = vld [vmem:[#allocation11 + $0x2a0] sm:$0xff]
        %v11379 = vld [vmem:[#allocation11 + $0x2a8] sm:$0xff]
        %v11380 = vld [vmem:[#allocation11 + $0x2b0] sm:$0xff]
        %v11381 = vld [vmem:[#allocation11 + $0x2b8] sm:$0xff]
        %v11382 = vld [vmem:[#allocation11 + $0x2c0] sm:$0xff]
        %v11383 = vld [vmem:[#allocation11 + $0x2c8] sm:$0xff]
        %v11384 = vld [vmem:[#allocation11 + $0x2d0] sm:$0xff]
        %v11385 = vld [vmem:[#allocation11 + $0x2d8] sm:$0xff]
        %v11386 = vld [vmem:[#allocation11 + $0x2e0] sm:$0xff]
        %v11387 = vld [vmem:[#allocation11 + $0x2e8] sm:$0xff]
        %v11388 = vld [vmem:[#allocation11 + $0x2f0] sm:$0xff]
        %v11389 = vld [vmem:[#allocation11 + $0x2f8] sm:$0xff]
        %v11390 = vld [vmem:[#allocation11 + $0x300] sm:$0xff]
        %v11391 = vld [vmem:[#allocation11 + $0x308] sm:$0xff]
        %v11392 = vld [vmem:[#allocation11 + $0x310] sm:$0xff]
        %v11393 = vld [vmem:[#allocation11 + $0x318] sm:$0xff]
        %v11394 = vld [vmem:[#allocation11 + $0x320] sm:$0xff]
        %v11395 = vld [vmem:[#allocation11 + $0x328] sm:$0xff]
        %v11396 = vld [vmem:[#allocation11 + $0x330] sm:$0xff]
        %v11397 = vld [vmem:[#allocation11 + $0x338] sm:$0xff]
        %v11398 = vld [vmem:[#allocation11 + $0x340] sm:$0xff]
        %v11399 = vld [vmem:[#allocation11 + $0x348] sm:$0xff]
        %v11400 = vld [vmem:[#allocation11 + $0x350] sm:$0xff]
        %v11401 = vld [vmem:[#allocation11 + $0x358] sm:$0xff]
        %v11402 = vld [vmem:[#allocation11 + $0x360] sm:$0xff]
        %v11403 = vld [vmem:[#allocation11 + $0x368] sm:$0xff]
        %v11404 = vld [vmem:[#allocation11 + $0x370] sm:$0xff]
        %v11405 = vld [vmem:[#allocation11 + $0x378] sm:$0xff]
        %v11406 = vld [vmem:[#allocation11 + $0x380] sm:$0xff]
        %v11407 = vld [vmem:[#allocation11 + $0x388] sm:$0xff]
        %v11408 = vld [vmem:[#allocation11 + $0x390] sm:$0xff]
        %v11409 = vld [vmem:[#allocation11 + $0x398] sm:$0xff]
        %v11410 = vld [vmem:[#allocation11 + $0x3a0] sm:$0xff]
        %v11411 = vld [vmem:[#allocation11 + $0x3a8] sm:$0xff]
        %v11412 = vld [vmem:[#allocation11 + $0x3b0] sm:$0xff]
        %v11413 = vld [vmem:[#allocation11 + $0x3b8] sm:$0xff]
        %v11414 = vld [vmem:[#allocation11 + $0x3c0] sm:$0xff]
        %v11415 = vld [vmem:[#allocation11 + $0x3c8] sm:$0xff]
        %v11416 = vld [vmem:[#allocation11 + $0x3d0] sm:$0xff]
        %v11417 = vld [vmem:[#allocation11 + $0x3d8] sm:$0xff]
        %v11418 = vld [vmem:[#allocation11 + $0x3e0] sm:$0xff]
        %v11419 = vld [vmem:[#allocation11 + $0x3e8] sm:$0xff]
        %v11420 = vld [vmem:[#allocation11 + $0x3f0] sm:$0xff]
        %v11421 = vld [vmem:[#allocation11 + $0x3f8] sm:$0xff]
        %v11422 = vld [vmem:[%s11] sm:$0x3]
        %v11424 = vlaneseq
        %v11425 = vshrl.u32 %v11424, 7
        %v11426 = vsub.s32 0, %v11425
        %v11427 = vrot.slane %v11422, %v11426
        %v11428 = vlaneseq
        %v11429 = vshrl.u32 %v11428, 7
        %v11430 = vsub.s32 1, %v11429
        %v11431 = vrot.slane %v11422, %v11430
        %11434 = vmatprep.subr.mxu0 %v11295
        %11435 = vmatpush1.msra.mxu0 %v11294
        %11436 = vmatprep.subr.mxu0 %v11297
        %11437 = vmatpush1.msra.mxu0 %v11296
        %11438 = vmatprep.subr.mxu0 %v11299
        %11439 = vmatpush1.msra.mxu0 %v11298
        %11440 = vmatprep.subr.mxu0 %v11301
        %11441 = vmatpush1.msra.mxu0 %v11300
        %11442 = vmatprep.subr.mxu0 %v11303
        %11443 = vmatpush1.msra.mxu0 %v11302
        %11444 = vmatprep.subr.mxu0 %v11305
        %11445 = vmatpush1.msra.mxu0 %v11304
        %11446 = vmatprep.subr.mxu0 %v11307
        %11447 = vmatpush1.msra.mxu0 %v11306
        %11448 = vmatprep.subr.mxu0 %v11309
        %11449 = vmatpush1.msra.mxu0 %v11308
        %11450 = vmatprep.subr.mxu0 %v11311
        %11451 = vmatpush1.msra.mxu0 %v11310
        %11452 = vmatprep.subr.mxu0 %v11313
        %11453 = vmatpush1.msra.mxu0 %v11312
        %11454 = vmatprep.subr.mxu0 %v11315
        %11455 = vmatpush1.msra.mxu0 %v11314
        %11456 = vmatprep.subr.mxu0 %v11317
        %11457 = vmatpush1.msra.mxu0 %v11316
        %11458 = vmatprep.subr.mxu0 %v11319
        %11459 = vmatpush1.msra.mxu0 %v11318
        %11460 = vmatprep.subr.mxu0 %v11321
        %11461 = vmatpush1.msra.mxu0 %v11320
        %11462 = vmatprep.subr.mxu0 %v11323
        %11463 = vmatpush1.msra.mxu0 %v11322
        %11464 = vmatprep.subr.mxu0 %v11325
        %11465 = vmatpush1.msra.mxu0 %v11324
        %11466 = vmatprep.subr.mxu0 %v11327
        %11467 = vmatpush1.msra.mxu0 %v11326
        %11468 = vmatprep.subr.mxu0 %v11329
        %11469 = vmatpush1.msra.mxu0 %v11328
        %11470 = vmatprep.subr.mxu0 %v11331
        %11471 = vmatpush1.msra.mxu0 %v11330
        %11472 = vmatprep.subr.mxu0 %v11333
        %11473 = vmatpush1.msra.mxu0 %v11332
        %11474 = vmatprep.subr.mxu0 %v11335
        %11475 = vmatpush1.msra.mxu0 %v11334
        %11476 = vmatprep.subr.mxu0 %v11337
        %11477 = vmatpush1.msra.mxu0 %v11336
        %11478 = vmatprep.subr.mxu0 %v11339
        %11479 = vmatpush1.msra.mxu0 %v11338
        %11480 = vmatprep.subr.mxu0 %v11341
        %11481 = vmatpush1.msra.mxu0 %v11340
        %11482 = vmatprep.subr.mxu0 %v11343
        %11483 = vmatpush1.msra.mxu0 %v11342
        %11484 = vmatprep.subr.mxu0 %v11345
        %11485 = vmatpush1.msra.mxu0 %v11344
        %11486 = vmatprep.subr.mxu0 %v11347
        %11487 = vmatpush1.msra.mxu0 %v11346
        %11488 = vmatprep.subr.mxu0 %v11349
        %11489 = vmatpush1.msra.mxu0 %v11348
        %11490 = vmatprep.subr.mxu0 %v11351
        %11491 = vmatpush1.msra.mxu0 %v11350
        %11492 = vmatprep.subr.mxu0 %v11353
        %11493 = vmatpush1.msra.mxu0 %v11352
        %11494 = vmatprep.subr.mxu0 %v11355
        %11495 = vmatpush1.msra.mxu0 %v11354
        %11496 = vmatprep.subr.mxu0 %v11357
        %11497 = vmatpush1.msra.mxu0 %v11356
        %11498 = vmatprep.mubr.f32.mxu0 %v11231
        %11499 = vmatmul.mubr.f32.gmra.mrb[0].mxu0 %v11230
        %v11500 = vpop.f32.mrb[0].mxu0
        %v11501 = vadd.f32 %v11427, %v11500
        %v11502 = vpop.f32.mrb[0].mxu0
        %v11503 = vadd.f32 %v11431, %v11502
        %11504 = vmatprep.mubr.f32.mxu0 %v11235
        %11505 = vmatmul.mubr.f32.gmra.mrb[0].mxu0 %v11234
        %v11506 = vpop.f32.mrb[0].mxu0
        %v11507 = vadd.f32 %v11427, %v11506
        %v11508 = vpop.f32.mrb[0].mxu0
        %v11509 = vadd.f32 %v11431, %v11508
        %11510 = vmatprep.mubr.f32.mxu0 %v11239
        %11511 = vmatmul.mubr.f32.gmra.mrb[0].mxu0 %v11238
        %v11512 = vpop.f32.mrb[0].mxu0
        %v11513 = vadd.f32 %v11427, %v11512
        %v11514 = vpop.f32.mrb[0].mxu0
        %v11515 = vadd.f32 %v11431, %v11514
        %11516 = vmatprep.mubr.f32.mxu0 %v11243
        %11517 = vmatmul.mubr.f32.gmra.mrb[0].mxu0 %v11242
        %v11518 = vpop.f32.mrb[0].mxu0
        %v11519 = vadd.f32 %v11427, %v11518
        %v11520 = vpop.f32.mrb[0].mxu0
        %v11521 = vadd.f32 %v11431, %v11520
        %11522 = vmatprep.mubr.f32.mxu0 %v11247
        %11523 = vmatmul.mubr.f32.gmra.mrb[0].mxu0 %v11246
        %v11524 = vpop.f32.mrb[0].mxu0
        %v11525 = vadd.f32 %v11427, %v11524
        %v11526 = vpop.f32.mrb[0].mxu0
        %v11527 = vadd.f32 %v11431, %v11526
        %11528 = vmatprep.mubr.f32.mxu0 %v11251
        %11529 = vmatmul.mubr.f32.gmra.mrb[0].mxu0 %v11250
        %v11530 = vpop.f32.mrb[0].mxu0
        %v11531 = vadd.f32 %v11427, %v11530
        %v11532 = vpop.f32.mrb[0].mxu0
        %v11533 = vadd.f32 %v11431, %v11532
        %11534 = vmatprep.mubr.f32.mxu0 %v11255
        %11535 = vmatmul.mubr.f32.gmra.mrb[0].mxu0 %v11254
        %v11536 = vpop.f32.mrb[0].mxu0
        %v11537 = vadd.f32 %v11427, %v11536
        %v11538 = vpop.f32.mrb[0].mxu0
        %v11539 = vadd.f32 %v11431, %v11538
        %11540 = vmatprep.mubr.f32.mxu0 %v11259
        %11541 = vmatmul.mubr.f32.gmra.mrb[0].mxu0 %v11258
        %v11542 = vpop.f32.mrb[0].mxu0
        %v11543 = vadd.f32 %v11427, %v11542
        %v11544 = vpop.f32.mrb[0].mxu0
        %v11545 = vadd.f32 %v11431, %v11544
        %11546 = vmatprep.mubr.f32.mxu0 %v11263
        %11547 = vmatmul.mubr.f32.gmra.mrb[0].mxu0 %v11262
        %v11548 = vpop.f32.mrb[0].mxu0
        %v11549 = vadd.f32 %v11427, %v11548
        %v11550 = vpop.f32.mrb[0].mxu0
        %v11551 = vadd.f32 %v11431, %v11550
        %11552 = vmatprep.mubr.f32.mxu0 %v11267
        %11553 = vmatmul.mubr.f32.gmra.mrb[0].mxu0 %v11266
        %v11554 = vpop.f32.mrb[0].mxu0
        %v11555 = vadd.f32 %v11427, %v11554
        %v11556 = vpop.f32.mrb[0].mxu0
        %v11557 = vadd.f32 %v11431, %v11556
        %11558 = vmatprep.mubr.f32.mxu0 %v11271
        %11559 = vmatmul.mubr.f32.gmra.mrb[0].mxu0 %v11270
        %v11560 = vpop.f32.mrb[0].mxu0
        %v11561 = vadd.f32 %v11427, %v11560
        %v11562 = vpop.f32.mrb[0].mxu0
        %v11563 = vadd.f32 %v11431, %v11562
        %11564 = vmatprep.mubr.f32.mxu0 %v11275
        %11565 = vmatmul.mubr.f32.gmra.mrb[0].mxu0 %v11274
        %v11566 = vpop.f32.mrb[0].mxu0
        %v11567 = vadd.f32 %v11427, %v11566
        %v11568 = vpop.f32.mrb[0].mxu0
        %v11569 = vadd.f32 %v11431, %v11568
        %11570 = vmatprep.mubr.f32.mxu0 %v11279
        %11571 = vmatmul.mubr.f32.gmra.mrb[0].mxu0 %v11278
        %v11572 = vpop.f32.mrb[0].mxu0
        %v11573 = vadd.f32 %v11427, %v11572
        %v11574 = vpop.f32.mrb[0].mxu0
        %v11575 = vadd.f32 %v11431, %v11574
        %11576 = vmatprep.mubr.f32.mxu0 %v11283
        %11577 = vmatmul.mubr.f32.gmra.mrb[0].mxu0 %v11282
        %v11578 = vpop.f32.mrb[0].mxu0
        %v11579 = vadd.f32 %v11427, %v11578
        %v11580 = vpop.f32.mrb[0].mxu0
        %v11581 = vadd.f32 %v11431, %v11580
        %11582 = vmatprep.mubr.f32.mxu0 %v11287
        %11583 = vmatmul.mubr.f32.gmra.mrb[0].mxu0 %v11286
        %v11584 = vpop.f32.mrb[0].mxu0
        %v11585 = vadd.f32 %v11427, %v11584
        %v11586 = vpop.f32.mrb[0].mxu0
        %v11587 = vadd.f32 %v11431, %v11586
        %11588 = vmatprep.mubr.f32.mxu0 %v11291
        %11589 = vmatmul.mubr.f32.gmra.mrb[0].mxu0 %v11290
        %v11590 = vpop.f32.mrb[0].mxu0
        %v11591 = vadd.f32 %v11427, %v11590
        %v11592 = vpop.f32.mrb[0].mxu0
        %v11593 = vadd.f32 %v11431, %v11592
        %11594 = vdwg.mxu0
        %11595 = vmatprep.subr.mxu0 %v11359
        %11596 = vmatpush1.msra.mxu0 %v11358
        %11597 = vmatprep.subr.mxu0 %v11361
        %11598 = vmatpush1.msra.mxu0 %v11360
        %11599 = vmatprep.subr.mxu0 %v11363
        %11600 = vmatpush1.msra.mxu0 %v11362
        %11601 = vmatprep.subr.mxu0 %v11365
        %11602 = vmatpush1.msra.mxu0 %v11364
        %11603 = vmatprep.subr.mxu0 %v11367
        %11604 = vmatpush1.msra.mxu0 %v11366
        %11605 = vmatprep.subr.mxu0 %v11369
        %11606 = vmatpush1.msra.mxu0 %v11368
        %11607 = vmatprep.subr.mxu0 %v11371
        %11608 = vmatpush1.msra.mxu0 %v11370
        %11609 = vmatprep.subr.mxu0 %v11373
        %11610 = vmatpush1.msra.mxu0 %v11372
        %11611 = vmatprep.subr.mxu0 %v11375
        %11612 = vmatpush1.msra.mxu0 %v11374
        %11613 = vmatprep.subr.mxu0 %v11377
        %11614 = vmatpush1.msra.mxu0 %v11376
        %11615 = vmatprep.subr.mxu0 %v11379
        %11616 = vmatpush1.msra.mxu0 %v11378
        %11617 = vmatprep.subr.mxu0 %v11381
        %11618 = vmatpush1.msra.mxu0 %v11380
        %11619 = vmatprep.subr.mxu0 %v11383
        %11620 = vmatpush1.msra.mxu0 %v11382
        %11621 = vmatprep.subr.mxu0 %v11385
        %11622 = vmatpush1.msra.mxu0 %v11384
        %11623 = vmatprep.subr.mxu0 %v11387
        %11624 = vmatpush1.msra.mxu0 %v11386
        %11625 = vmatprep.subr.mxu0 %v11389
        %11626 = vmatpush1.msra.mxu0 %v11388
        %11627 = vmatprep.subr.mxu0 %v11391
        %11628 = vmatpush1.msra.mxu0 %v11390
        %11629 = vmatprep.subr.mxu0 %v11393
        %11630 = vmatpush1.msra.mxu0 %v11392
        %11631 = vmatprep.subr.mxu0 %v11395
        %11632 = vmatpush1.msra.mxu0 %v11394
        %11633 = vmatprep.subr.mxu0 %v11397
        %11634 = vmatpush1.msra.mxu0 %v11396
        %11635 = vmatprep.subr.mxu0 %v11399
        %11636 = vmatpush1.msra.mxu0 %v11398
        %11637 = vmatprep.subr.mxu0 %v11401
        %11638 = vmatpush1.msra.mxu0 %v11400
        %11639 = vmatprep.subr.mxu0 %v11403
        %11640 = vmatpush1.msra.mxu0 %v11402
        %11641 = vmatprep.subr.mxu0 %v11405
        %11642 = vmatpush1.msra.mxu0 %v11404
        %11643 = vmatprep.subr.mxu0 %v11407
        %11644 = vmatpush1.msra.mxu0 %v11406
        %11645 = vmatprep.subr.mxu0 %v11409
        %11646 = vmatpush1.msra.mxu0 %v11408
        %11647 = vmatprep.subr.mxu0 %v11411
        %11648 = vmatpush1.msra.mxu0 %v11410
        %11649 = vmatprep.subr.mxu0 %v11413
        %11650 = vmatpush1.msra.mxu0 %v11412
        %11651 = vmatprep.subr.mxu0 %v11415
        %11652 = vmatpush1.msra.mxu0 %v11414
        %11653 = vmatprep.subr.mxu0 %v11417
        %11654 = vmatpush1.msra.mxu0 %v11416
        %11655 = vmatprep.subr.mxu0 %v11419
        %11656 = vmatpush1.msra.mxu0 %v11418
        %11657 = vmatprep.subr.mxu0 %v11421
        %11658 = vmatpush1.msra.mxu0 %v11420
        %11659 = vmatprep.mubr.f32.mxu0 %v11233
        %11660 = vmatmul.mubr.f32.gmra.mrb[0].mxu0 %v11232
        %v11661 = vpop.f32.mrb[0].mxu0
        %v11662 = vadd.f32 %v11501, %v11661
        %v11663 = vpop.f32.mrb[0].mxu0
        %v11664 = vadd.f32 %v11503, %v11663
        %11665 = vmatprep.mubr.f32.mxu0 %v11237
        %11666 = vmatmul.mubr.f32.gmra.mrb[0].mxu0 %v11236
        %v11667 = vpop.f32.mrb[0].mxu0
        %v11668 = vadd.f32 %v11507, %v11667
        %v11669 = vpop.f32.mrb[0].mxu0
        %v11670 = vadd.f32 %v11509, %v11669
        %11671 = vmatprep.mubr.f32.mxu0 %v11241
        %11672 = vmatmul.mubr.f32.gmra.mrb[0].mxu0 %v11240
        %v11673 = vpop.f32.mrb[0].mxu0
        %v11674 = vadd.f32 %v11513, %v11673
        %v11675 = vpop.f32.mrb[0].mxu0
        %v11676 = vadd.f32 %v11515, %v11675
        %11677 = vmatprep.mubr.f32.mxu0 %v11245
        %11678 = vmatmul.mubr.f32.gmra.mrb[0].mxu0 %v11244
        %v11679 = vpop.f32.mrb[0].mxu0
        %v11680 = vadd.f32 %v11519, %v11679
        %v11681 = vpop.f32.mrb[0].mxu0
        %v11682 = vadd.f32 %v11521, %v11681
        %11683 = vmatprep.mubr.f32.mxu0 %v11249
        %11684 = vmatmul.mubr.f32.gmra.mrb[0].mxu0 %v11248
        %v11685 = vpop.f32.mrb[0].mxu0
        %v11686 = vadd.f32 %v11525, %v11685
        %v11687 = vpop.f32.mrb[0].mxu0
        %v11688 = vadd.f32 %v11527, %v11687
        %11689 = vmatprep.mubr.f32.mxu0 %v11253
        %11690 = vmatmul.mubr.f32.gmra.mrb[0].mxu0 %v11252
        %v11691 = vpop.f32.mrb[0].mxu0
        %v11692 = vadd.f32 %v11531, %v11691
        %v11693 = vpop.f32.mrb[0].mxu0
        %v11694 = vadd.f32 %v11533, %v11693
        %11695 = vmatprep.mubr.f32.mxu0 %v11257
        %11696 = vmatmul.mubr.f32.gmra.mrb[0].mxu0 %v11256
        %v11697 = vpop.f32.mrb[0].mxu0
        %v11698 = vadd.f32 %v11537, %v11697
        %v11699 = vpop.f32.mrb[0].mxu0
        %v11700 = vadd.f32 %v11539, %v11699
        %11701 = vmatprep.mubr.f32.mxu0 %v11261
        %11702 = vmatmul.mubr.f32.gmra.mrb[0].mxu0 %v11260
        %v11703 = vpop.f32.mrb[0].mxu0
        %v11704 = vadd.f32 %v11543, %v11703
        %v11705 = vpop.f32.mrb[0].mxu0
        %v11706 = vadd.f32 %v11545, %v11705
        %11707 = vmatprep.mubr.f32.mxu0 %v11265
        %11708 = vmatmul.mubr.f32.gmra.mrb[0].mxu0 %v11264
        %v11709 = vpop.f32.mrb[0].mxu0
        %v11710 = vadd.f32 %v11549, %v11709
        %v11711 = vpop.f32.mrb[0].mxu0
        %v11712 = vadd.f32 %v11551, %v11711
        %11713 = vmatprep.mubr.f32.mxu0 %v11269
        %11714 = vmatmul.mubr.f32.gmra.mrb[0].mxu0 %v11268
        %v11715 = vpop.f32.mrb[0].mxu0
        %v11716 = vadd.f32 %v11555, %v11715
        %v11717 = vpop.f32.mrb[0].mxu0
        %v11718 = vadd.f32 %v11557, %v11717
        %11719 = vmatprep.mubr.f32.mxu0 %v11273
        %11720 = vmatmul.mubr.f32.gmra.mrb[0].mxu0 %v11272
        %v11721 = vpop.f32.mrb[0].mxu0
        %v11722 = vadd.f32 %v11561, %v11721
        %v11723 = vpop.f32.mrb[0].mxu0
        %v11724 = vadd.f32 %v11563, %v11723
        %11725 = vmatprep.mubr.f32.mxu0 %v11277
        %11726 = vmatmul.mubr.f32.gmra.mrb[0].mxu0 %v11276
        %v11727 = vpop.f32.mrb[0].mxu0
        %v11728 = vadd.f32 %v11567, %v11727
        %v11729 = vpop.f32.mrb[0].mxu0
        %v11730 = vadd.f32 %v11569, %v11729
        %11731 = vmatprep.mubr.f32.mxu0 %v11281
        %11732 = vmatmul.mubr.f32.gmra.mrb[0].mxu0 %v11280
        %v11733 = vpop.f32.mrb[0].mxu0
        %v11734 = vadd.f32 %v11573, %v11733
        %v11735 = vpop.f32.mrb[0].mxu0
        %v11736 = vadd.f32 %v11575, %v11735
        %11737 = vmatprep.mubr.f32.mxu0 %v11285
        %11738 = vmatmul.mubr.f32.gmra.mrb[0].mxu0 %v11284
        %v11739 = vpop.f32.mrb[0].mxu0
        %v11740 = vadd.f32 %v11579, %v11739
        %v11741 = vpop.f32.mrb[0].mxu0
        %v11742 = vadd.f32 %v11581, %v11741
        %11743 = vmatprep.mubr.f32.mxu0 %v11289
        %11744 = vmatmul.mubr.f32.gmra.mrb[0].mxu0 %v11288
        %v11745 = vpop.f32.mrb[0].mxu0
        %v11746 = vadd.f32 %v11585, %v11745
        %v11747 = vpop.f32.mrb[0].mxu0
        %v11748 = vadd.f32 %v11587, %v11747
        %11749 = vmatprep.mubr.f32.mxu0 %v11293
        %11750 = vmatmul.mubr.f32.gmra.mrb[0].mxu0 %v11292
        %v11751 = vpop.f32.mrb[0].mxu0
        %v11752 = vadd.f32 %v11591, %v11751
        %v11753 = vpop.f32.mrb[0].mxu0
        %v11754 = vadd.f32 %v11593, %v11753
        %11755 = vdwg.mxu0
        %v11756 = vadd.f32 %v10270, %v11662
        %v11757 = vadd.f32 %v10271, %v11664
        %v11758 = vadd.f32 %v10272, %v11668
        %v11759 = vadd.f32 %v10273, %v11670
        %v11760 = vadd.f32 %v10274, %v11674
        %v11761 = vadd.f32 %v10275, %v11676
        %v11762 = vadd.f32 %v10276, %v11680
        %v11763 = vadd.f32 %v10277, %v11682
        %v11764 = vadd.f32 %v10278, %v11686
        %v11765 = vadd.f32 %v10279, %v11688
        %v11766 = vadd.f32 %v10280, %v11692
        %v11767 = vadd.f32 %v10281, %v11694
        %v11768 = vadd.f32 %v10282, %v11698
        %v11769 = vadd.f32 %v10283, %v11700
        %v11770 = vadd.f32 %v10284, %v11704
        %v11771 = vadd.f32 %v10285, %v11706
        %v11772 = vadd.f32 %v10286, %v11710
        %v11773 = vadd.f32 %v10287, %v11712
        %v11774 = vadd.f32 %v10288, %v11716
        %v11775 = vadd.f32 %v10289, %v11718
        %v11776 = vadd.f32 %v10290, %v11722
        %v11777 = vadd.f32 %v10291, %v11724
        %v11778 = vadd.f32 %v10292, %v11728
        %v11779 = vadd.f32 %v10293, %v11730
        %v11780 = vadd.f32 %v10294, %v11734
        %v11781 = vadd.f32 %v10295, %v11736
        %v11782 = vadd.f32 %v10296, %v11740
        %v11783 = vadd.f32 %v10297, %v11742
        %v11784 = vadd.f32 %v10298, %v11746
        %v11785 = vadd.f32 %v10299, %v11748
        %v11786 = vadd.f32 %v10300, %v11752
        %v11787 = vadd.f32 %v10301, %v11754
        %11788 = vst [vmem:[%s513] sm:$0xff] %v11756
        %11789 = vst [vmem:[%s513 + $0x8] sm:$0xff] %v11757
        %11790 = vst [vmem:[%s513 + $0x10] sm:$0xff] %v11758
        %11791 = vst [vmem:[%s513 + $0x18] sm:$0xff] %v11759
        %11792 = vst [vmem:[%s513 + $0x20] sm:$0xff] %v11760
        %11793 = vst [vmem:[%s513 + $0x28] sm:$0xff] %v11761
        %11794 = vst [vmem:[%s513 + $0x30] sm:$0xff] %v11762
        %11795 = vst [vmem:[%s513 + $0x38] sm:$0xff] %v11763
        %11796 = vst [vmem:[%s513 + $0x40] sm:$0xff] %v11764
        %11797 = vst [vmem:[%s513 + $0x48] sm:$0xff] %v11765
        %11798 = vst [vmem:[%s513 + $0x50] sm:$0xff] %v11766
        %11799 = vst [vmem:[%s513 + $0x58] sm:$0xff] %v11767
        %11800 = vst [vmem:[%s513 + $0x60] sm:$0xff] %v11768
        %11801 = vst [vmem:[%s513 + $0x68] sm:$0xff] %v11769
        %11802 = vst [vmem:[%s513 + $0x70] sm:$0xff] %v11770
        %11803 = vst [vmem:[%s513 + $0x78] sm:$0xff] %v11771
        %11804 = vst [vmem:[%s513 + $0x80] sm:$0xff] %v11772
        %11805 = vst [vmem:[%s513 + $0x88] sm:$0xff] %v11773
        %11806 = vst [vmem:[%s513 + $0x90] sm:$0xff] %v11774
        %11807 = vst [vmem:[%s513 + $0x98] sm:$0xff] %v11775
        %11808 = vst [vmem:[%s513 + $0xa0] sm:$0xff] %v11776
        %11809 = vst [vmem:[%s513 + $0xa8] sm:$0xff] %v11777
        %11810 = vst [vmem:[%s513 + $0xb0] sm:$0xff] %v11778
        %11811 = vst [vmem:[%s513 + $0xb8] sm:$0xff] %v11779
        %11812 = vst [vmem:[%s513 + $0xc0] sm:$0xff] %v11780
        %11813 = vst [vmem:[%s513 + $0xc8] sm:$0xff] %v11781
        %11814 = vst [vmem:[%s513 + $0xd0] sm:$0xff] %v11782
        %11815 = vst [vmem:[%s513 + $0xd8] sm:$0xff] %v11783
        %11816 = vst [vmem:[%s513 + $0xe0] sm:$0xff] %v11784
        %11817 = vst [vmem:[%s513 + $0xe8] sm:$0xff] %v11785
        %11818 = vst [vmem:[%s513 + $0xf0] sm:$0xff] %v11786
        %11819 = vst [vmem:[%s513 + $0xf8] sm:$0xff] %v11787
        %s11820 = sand.u32 %s302, 1
        %s11821 = scalar_lea.sflag [#allocation4], %s11820
        %s11822 = sand.u32 %s302, 1
        %s11823 = smul.addr %s11822, 256
        %s11824 = scalar_lea.vmem [#allocation13], %s11823
        // Predicated region
        $region93: #{tpu_custom_call.1} parent=67 // pred_check
          %p11825 = pneg %p312
        $region94: #{tpu_custom_call.1} parent=67 // pred_check_branch
          %11827 = sbr.rel (%p11825) target = $region96
        $region95: #{tpu_custom_call.1} parent=67 // pred_region
          %s11829 = ssub.s32 4096, 4096
          %11830 = vsyncadd %s11821, %s11829
          %s11831 = smul.addr %s32, 32
          %s11832 = smul.addr %s11831, 128
          %s11833 = scalar_lea.hbm %s12, %s11832
          %s11834 = sshll.u32 %s11824, 4
          %s11835 = int_to_ptr.vmem [resolvable:$true] %s11834
          %11840 = dma.vmem_to_hbm [thread:$0]  %s11835, 4096, %s11833, %s11821, 256, 256, 16
        $region96: #{tpu_custom_call.1} parent=67 // pred_fallthru
          _
      $region68: #{tpu_custom_call.1} parent=5 // pred_fallthru
        _
      %p11841 = scmp.le.s32.totalorder 2, %s27
      // Predicated region
      $region97: #{tpu_custom_call.1} parent=5 // pred_check
        %p11842 = pneg %p11841
      $region98: #{tpu_custom_call.1} parent=5 // pred_check_branch
        %11844 = sbr.rel (%p11842) target = $region100
      $region99: #{tpu_custom_call.1} parent=5 // pred_region
        %s11845 = ssub.s32 %s27, 2
        // Predicated region
        $region101: #{tpu_custom_call.1} parent=99 // pred_check
          %p11846 = pneg %p318
        $region102: #{tpu_custom_call.1} parent=99 // pred_check_branch
          %11848 = sbr.rel (%p11846) target = $region104
        $region103: #{tpu_custom_call.1} parent=99 // pred_region
          %s11849 = sand.u32 %s303, 1
          %s11850 = scalar_lea.sflag [#allocation4], %s11849
          %s11851 = sand.u32 %s303, 1
          %s11852 = smul.addr %s11851, 256
          %s11853 = scalar_lea.vmem [#allocation13], %s11852
          %11854 = dma.done %s11850, 4096
        $region104: #{tpu_custom_call.1} parent=99 // pred_fallthru
          _
      $region100: #{tpu_custom_call.1} parent=5 // pred_fallthru
        _
    $region6: #{tpu_custom_call.1} parent=1 // loop_footer
      %s31 = sadd.s32 1, %s27
    $region7: #{tpu_custom_call.1} parent=1 // loop_footer_branch
      %26 = sbr.rel target = $region3
    $region8: #{tpu_custom_call.1} parent=1 // loop_exit
      _
    %11855 = vsyncpa [#allocation3], 1
    %s11856 = scalar_lea.sflag [#allocation3], 1
    %11857 = vsyncpa %s11856, 1
    %11858 = vsyncpa [#allocation6], 1
    %11859 = vsyncpa [#allocation9], 1
    %11860 = vsyncpa [#allocation12], 1
    %11861 = vsyncpa [#allocation4], 1
    %s11862 = scalar_lea.sflag [#allocation4], 1
    %11863 = vsyncpa %s11862, 1

</llo_original>
